<compile_context>
chip_gen: v6e
topology: v6e:2x2x1
jax: 0.10.0
libtpu: 0.0.40
codegen_flags: <defaults>
</compile_context>

<pallas_src>
import math
import functools

import numpy as np
import jax
import jax.numpy as jnp
from jax import lax
from jax.experimental import pallas as pl
from jax.experimental.pallas import tpu as pltpu


def _num_frequencies_nyquist(samples: int) -> int:
    nyquist_rate = 1.0 / (2.0 * (2.0 * 1.0 / samples))
    return int(math.floor(math.log(nyquist_rate, 2)))


def _resolve_num_frequencies(in_features, sidelength=None, fn_samples=None,
                             use_nyquist=True) -> int:
    if in_features == 3:
        return 10
    elif in_features == 2:
        assert sidelength is not None
        if isinstance(sidelength, int):
            sidelength = (sidelength, sidelength)
        nf = 4
        if use_nyquist:
            nf = _num_frequencies_nyquist(min(sidelength[0], sidelength[1]))
        return nf
    elif in_features == 1:
        assert fn_samples is not None
        nf = 4
        if use_nyquist:
            nf = _num_frequencies_nyquist(fn_samples)
        return nf
    raise ValueError(f"unsupported in_features={in_features}")


def _round_up(a: int, b: int) -> int:
    return (a + b - 1) // b * b


def _pos_enc_kernel(scales_ref, x_ref, o_ref, *, in_features, num_frequencies):
    # scales_ref: (1, K) f32   K = 2 * F * nf   (lane k -> pi * 2**(k // (2F)))
    # x_ref:      (tn, F)      coords tile
    # o_ref:      (tn, F + K)  output tile
    F = in_features
    K = 2 * F * num_frequencies

    x = x_ref[...].astype(jnp.float32)                       # (tn, F)
    scales = scales_ref[...]                                  # (1, K)

    # Gathered slab: lane k holds an exact copy of x[:, (k % 2F) // 2].
    # Built from a handful of small lane concats (F <= 3, nf <= 10).
    cols = []
    for j in range(F):
        xj = x[:, j:j + 1]
        cols.append(xj)
        cols.append(xj)
    x_rep = jnp.concatenate(cols, axis=-1)                    # (tn, 2F)
    x_g = jnp.concatenate([x_rep] * num_frequencies, axis=-1)  # (tn, K)

    # Exact per-lane f32 multiply (same rounding as reference's 2**i*pi*c).
    arg = x_g * scales                                        # (tn, K)

    # Even lanes -> sin, odd lanes -> cos (interleaved PyTorch order).
    lane = lax.broadcasted_iota(jnp.int32, (1, K), 1)
    enc = jnp.where(lane % 2 == 0, jnp.sin(arg), jnp.cos(arg))

    o_ref[...] = jnp.concatenate([x, enc], axis=-1).astype(o_ref.dtype)


def pos_encoding_nerf(coords, *, in_features, sidelength=None, fn_samples=None,
                      use_nyquist=True, tile_n=2048):
    """JAX/Pallas equivalent of PosEncodingNeRF.forward.

    coords: array of shape (B, ..., in_features); viewed as (B, N, in_features)
    exactly like `coords.view(coords.shape[0], -1, F)`.
    Returns (B, N, out_dim) with out_dim = F + 2 * F * num_frequencies.
    """
    nf = _resolve_num_frequencies(in_features, sidelength=sidelength,
                                  fn_samples=fn_samples, use_nyquist=use_nyquist)
    F = in_features
    K = 2 * F * nf
    out_dim = F + K

    B = coords.shape[0]
    coords3 = coords.reshape(B, -1, F)            # glue reshape (plain JAX)
    N = coords3.shape[1]
    M = B * N
    flat = coords3.reshape(M, F)

    # Per-lane scale constants in the exact PyTorch channel order.
    scales_np = np.zeros((1, K), dtype=np.float32)
    for i in range(nf):
        s = np.float32((2.0 ** i) * np.pi)
        for j in range(F):
            scales_np[0, 2 * (i * F + j)] = s
            scales_np[0, 2 * (i * F + j) + 1] = s
    scales = jnp.asarray(scales_np)

    # Tile selection: multiple of 8, ragged tail handled by zero padding.
    tn = min(int(tile_n), _round_up(M, 8))
    tn = _round_up(tn, 8)
    M_pad = _round_up(M, tn)
    if M_pad != M:
        flat = jnp.pad(flat, ((0, M_pad - M), (0, 0)))

    kernel = functools.partial(_pos_enc_kernel, in_features=F,
                               num_frequencies=nf)

    # NOTE: out_dim (e.g. 63) < 128 lanes -> masked stores; kept as-is to
    # preserve the exact module output layout/dtype.
    out = pl.pallas_call(
        kernel,
        out_shape=jax.ShapeDtypeStruct((M_pad, out_dim), coords.dtype),
        grid_spec=pltpu.PrefetchScalarGridSpec(
            num_scalar_prefetch=0,
            grid=(M_pad // tn,),
            in_specs=[pl.BlockSpec((1, K), lambda n: (0, 0)),
                      pl.BlockSpec((tn, F), lambda n: (n, 0))],
            out_specs=pl.BlockSpec((tn, out_dim), lambda n: (n, 0)),
        ),
        compiler_params=pltpu.CompilerParams(
            dimension_semantics=("parallel",)),
    )(scales, flat)

    if M_pad != M:
        out = out[:M]
    return out.reshape(B, N, out_dim)


def _reference(coords, in_features, num_frequencies):
    B = coords.shape[0]
    coords = coords.reshape(B, -1, in_features)
    parts = [coords]
    for i in range(num_frequencies):
        for j in range(in_features):
            c = coords[..., j]
            parts.append(jnp.sin((2.0 ** i) * jnp.pi * c)[..., None])
            parts.append(jnp.cos((2.0 ** i) * jnp.pi * c)[..., None])
    return jnp.concatenate(parts, axis=-1)


if __name__ == "__main__":
    key = jax.random.PRNGKey(0)

    # Case 1: in_features=3 -> num_frequencies=10 -> out_dim = 3 + 60 = 63.
    B, N, F = 2, 128, 3
    k1, k2 = jax.random.split(key)
    coords = jax.random.uniform(k1, (B, N, F), dtype=jnp.float32,
                                minval=-1.0, maxval=1.0)
    out = jax.block_until_ready(pos_encoding_nerf(coords, in_features=F))
    ref = _reference(coords, F, 10)
    assert out.shape == (B, N, 63), out.shape
    assert jnp.allclose(out, ref, atol=1e-5, rtol=1e-5)

    # Case 2: in_features=2, sidelength=16 (nyquist -> 2 freqs), ragged N and a
    # small tile to exercise the padding / multi-step grid path.
    B2, N2, F2 = 2, 100, 2
    coords2 = jax.random.uniform(k2, (B2, N2, F2), dtype=jnp.float32,
                                 minval=-1.0, maxval=1.0)
    out2 = jax.block_until_ready(
        pos_encoding_nerf(coords2, in_features=F2, sidelength=16, tile_n=64))
    nf2 = _resolve_num_frequencies(F2, sidelength=16)
    ref2 = _reference(coords2, F2, nf2)
    assert out2.shape == (B2, N2, F2 + 2 * F2 * nf2), out2.shape
    assert jnp.allclose(out2, ref2, atol=1e-5, rtol=1e-5)

    print("KERNEL_OK")
</pallas_src>

<mosaic_0001>
module attributes {stable_mosaic.version = 11 : i64} {
  func.func @_pos_enc_kernel(%arg0: i32, %arg1: memref<1x60xf32, #tpu.memory_space<vmem>>, %arg2: memref<256x3xf32, #tpu.memory_space<vmem>>, %arg3: memref<256x63xf32, #tpu.memory_space<vmem>>) attributes {dimension_semantics = [#tpu.dimension_semantics<parallel>], iteration_bounds = array<i64: 1>, scalar_prefetch = 0 : i64, scratch_operands = 0 : i64, tpu.core_type = #tpu.core_type<tc>, window_params = [{pipeline_mode = #tpu.pipeline_mode<synchronous>, transform_indices = @transform_0, window_bounds = array<i64: 1, 60>}, {transform_indices = @transform_1, window_bounds = array<i64: 256, 3>}, {transform_indices = @transform_2, window_bounds = array<i64: 256, 63>}]} {
    %c0 = arith.constant 0 : index
    %c0_0 = arith.constant 0 : index
    %0 = vector.load %arg2[%c0, %c0_0] : memref<256x3xf32, #tpu.memory_space<vmem>>, vector<256x3xf32>
    %c0_1 = arith.constant 0 : index
    %c0_2 = arith.constant 0 : index
    %1 = vector.load %arg1[%c0_1, %c0_2] : memref<1x60xf32, #tpu.memory_space<vmem>>, vector<1x60xf32>
    %2 = vector.extract_strided_slice %0 {offsets = [0, 0], sizes = [256, 1], strides = [1, 1]} : vector<256x3xf32> to vector<256x1xf32>
    %3 = vector.extract_strided_slice %0 {offsets = [0, 1], sizes = [256, 1], strides = [1, 1]} : vector<256x3xf32> to vector<256x1xf32>
    %4 = vector.extract_strided_slice %0 {offsets = [0, 2], sizes = [256, 1], strides = [1, 1]} : vector<256x3xf32> to vector<256x1xf32>
    %5 = tpu.concatenate %2, %2, %3, %3, %4, %4 in 1 : vector<256x1xf32>, vector<256x1xf32>, vector<256x1xf32>, vector<256x1xf32>, vector<256x1xf32>, vector<256x1xf32> -> vector<256x6xf32>
    %6 = tpu.concatenate %5, %5, %5, %5, %5, %5, %5, %5, %5, %5 in 1 : vector<256x6xf32>, vector<256x6xf32>, vector<256x6xf32>, vector<256x6xf32>, vector<256x6xf32>, vector<256x6xf32>, vector<256x6xf32>, vector<256x6xf32>, vector<256x6xf32>, vector<256x6xf32> -> vector<256x60xf32>
    %7 = vector.broadcast %1 : vector<1x60xf32> to vector<256x60xf32>
    %8 = arith.mulf %6, %7 : vector<256x60xf32>
    %9 = tpu.iota {dimensions = array<i32: 1>} : vector<1x60xi32>
    %c2_i32 = arith.constant 2 : i32
    %c0_i32 = arith.constant 0 : i32
    %10 = arith.cmpi eq, %c2_i32, %c0_i32 : i32
    %c1_i32 = arith.constant 1 : i32
    %11 = arith.select %10, %c1_i32, %c2_i32 : i32
    %12 = vector.broadcast %11 : i32 to vector<1x60xi32>
    %13 = arith.remsi %9, %12 : vector<1x60xi32>
    %c0_i32_3 = arith.constant 0 : i32
    %14 = vector.broadcast %c0_i32_3 : i32 to vector<1x60xi32>
    %15 = arith.cmpi ne, %13, %14 : vector<1x60xi32>
    %c0_i32_4 = arith.constant 0 : i32
    %16 = vector.broadcast %c0_i32_4 : i32 to vector<1x60xi32>
    %17 = arith.cmpi slt, %13, %16 : vector<1x60xi32>
    %c0_i32_5 = arith.constant 0 : i32
    %18 = arith.cmpi slt, %11, %c0_i32_5 : i32
    %19 = vector.broadcast %18 : i1 to vector<1x60xi1>
    %20 = vector.broadcast %19 : vector<1x60xi1> to vector<1x60xi1>
    %21 = arith.xori %17, %20 : vector<1x60xi1>
    %22 = arith.andi %21, %15 : vector<1x60xi1>
    %23 = vector.broadcast %11 : i32 to vector<1x60xi32>
    %24 = arith.addi %13, %23 : vector<1x60xi32>
    %25 = arith.select %22, %24, %13 : vector<1x60xi1>, vector<1x60xi32>
    %c0_i32_6 = arith.constant 0 : i32
    %26 = vector.broadcast %c0_i32_6 : i32 to vector<1x60xi32>
    %27 = arith.cmpi eq, %25, %26 : vector<1x60xi32>
    %28 = math.sin %8 : vector<256x60xf32>
    %29 = math.cos %8 : vector<256x60xf32>
    %30 = vector.shape_cast %27 : vector<1x60xi1> to vector<1x60xi1>
    %31 = vector.broadcast %30 : vector<1x60xi1> to vector<256x60xi1>
    %32 = arith.select %31, %28, %29 : vector<256x60xi1>, vector<256x60xf32>
    %33 = tpu.concatenate %0, %32 in 1 : vector<256x3xf32>, vector<256x60xf32> -> vector<256x63xf32>
    %c0_7 = arith.constant 0 : index
    %c0_8 = arith.constant 0 : index
    %34 = vector.load %arg3[%c0_7, %c0_8] : memref<256x63xf32, #tpu.memory_space<vmem>>, vector<256x63xf32>
    tpu.vector_store %arg3[%c0_7, %c0_8], %33 {strides = array<i32>} : memref<256x63xf32, #tpu.memory_space<vmem>>, vector<256x63xf32>,
    return
  }
  func.func @transform_0(%arg0: i32) -> (i32, i32) {
    %c0_i32 = arith.constant 0 : i32
    %c0_i32_0 = arith.constant 0 : i32
    %c0_i32_1 = arith.constant 0 : i32
    return %c0_i32, %c0_i32_0 : i32, i32
  }
  func.func @transform_1(%arg0: i32) -> (i32, i32) {
    %c0_i32 = arith.constant 0 : i32
    %c0_i32_0 = arith.constant 0 : i32
    return %arg0, %c0_i32 : i32, i32
  }
  func.func @transform_2(%arg0: i32) -> (i32, i32) {
    %c0_i32 = arith.constant 0 : i32
    %c0_i32_0 = arith.constant 0 : i32
    return %arg0, %c0_i32 : i32, i32
  }
}

</mosaic_0001>

<llo_original>
// kernel: tpu_custom_call.1
$region0: #{tpu_custom_call.1}
  #allocation0 [shape = 'u32[]', space=smem, size = 0x4, offset = 0x4, fixed_abs, tag = 'smem constant byte address 0x4 - core index']
  #allocation1 [shape = 'u32[144,128]{1,0:T(1,128)}', space=vmem, size = 0x12000, scoped, tag = 'internal scratch']
  %s0 = inlined_call_operand.vmem [shape: f32[1,60], index: 0, kind: input, shape index: {}]
  %s1 = inlined_call_operand.vmem [shape: f32[256,3], index: 1, kind: input, shape index: {}]
  %s2 = inlined_call_operand.vmem [shape: f32[256,63], index: 2, kind: output, shape index: {}]
  %s3 = sld [smem:[#allocation0]]
  $region18: #{tpu_custom_call.1} parent=0
    _
  %s5 = ssub.s32 1, %s3
  %s6 = scalar_select 0, %s5, %s3
  // Predicated region
  $region2: #{tpu_custom_call.1} parent=0 // pred_check
    _
  $region3: #{tpu_custom_call.1} parent=0 // pred_check_branch
    %8 = sbr.rel (0) target = $region5
  $region4: #{tpu_custom_call.1} parent=0 // pred_region
    _
  $region5: #{tpu_custom_call.1} parent=0 // pred_fallthru
    _
  // Predicated region
  $region6: #{tpu_custom_call.1} parent=0 // pred_check
    _
  $region7: #{tpu_custom_call.1} parent=0 // pred_check_branch
    %10 = sbr.rel (0) target = $region9
  $region8: #{tpu_custom_call.1} parent=0 // pred_region
    _
  $region9: #{tpu_custom_call.1} parent=0 // pred_fallthru
    _
  %v11 = vld [vmem:[%s1] sm:$0xff]
  %v12 = vld [vmem:[%s1 + $0x8] sm:$0xff]
  %v13 = vld [vmem:[%s1 + $0x10] sm:$0xff]
  %v14 = vld [vmem:[%s1 + $0x18] sm:$0xff]
  %v15 = vld [vmem:[%s1 + $0x20] sm:$0xff]
  %v16 = vld [vmem:[%s1 + $0x28] sm:$0xff]
  %v17 = vld [vmem:[%s1 + $0x30] sm:$0xff]
  %v18 = vld [vmem:[%s1 + $0x38] sm:$0xff]
  %v19 = vld [vmem:[%s1 + $0x40] sm:$0xff]
  %v20 = vld [vmem:[%s1 + $0x48] sm:$0xff]
  %v21 = vld [vmem:[%s1 + $0x50] sm:$0xff]
  %v22 = vld [vmem:[%s1 + $0x58] sm:$0xff]
  %v23 = vld [vmem:[%s1 + $0x60] sm:$0xff]
  %v24 = vld [vmem:[%s1 + $0x68] sm:$0xff]
  %v25 = vld [vmem:[%s1 + $0x70] sm:$0xff]
  %v26 = vld [vmem:[%s1 + $0x78] sm:$0xff]
  %v27 = vld [vmem:[%s1 + $0x80] sm:$0xff]
  %v28 = vld [vmem:[%s1 + $0x88] sm:$0xff]
  %v29 = vld [vmem:[%s1 + $0x90] sm:$0xff]
  %v30 = vld [vmem:[%s1 + $0x98] sm:$0xff]
  %v31 = vld [vmem:[%s1 + $0xa0] sm:$0xff]
  %v32 = vld [vmem:[%s1 + $0xa8] sm:$0xff]
  %v33 = vld [vmem:[%s1 + $0xb0] sm:$0xff]
  %v34 = vld [vmem:[%s1 + $0xb8] sm:$0xff]
  %v35 = vld [vmem:[%s1 + $0xc0] sm:$0xff]
  %v36 = vld [vmem:[%s1 + $0xc8] sm:$0xff]
  %v37 = vld [vmem:[%s1 + $0xd0] sm:$0xff]
  %v38 = vld [vmem:[%s1 + $0xd8] sm:$0xff]
  %v39 = vld [vmem:[%s1 + $0xe0] sm:$0xff]
  %v40 = vld [vmem:[%s1 + $0xe8] sm:$0xff]
  %v41 = vld [vmem:[%s1 + $0xf0] sm:$0xff]
  %v42 = vld [vmem:[%s1 + $0xf8] sm:$0xff]
  %v43 = vld [vmem:[%s0] sm:$0x1]
  %76 = vrot.lane.b32.xlu0 %v11, 1
  %v77 = vpop.permute.xlu0 %76
  %78 = vrot.lane.b32.xlu0 %v12, 1
  %v79 = vpop.permute.xlu0 %78
  %80 = vrot.lane.b32.xlu0 %v13, 1
  %v81 = vpop.permute.xlu0 %80
  %82 = vrot.lane.b32.xlu0 %v14, 1
  %v83 = vpop.permute.xlu0 %82
  %84 = vrot.lane.b32.xlu0 %v15, 1
  %v85 = vpop.permute.xlu0 %84
  %86 = vrot.lane.b32.xlu0 %v16, 1
  %v87 = vpop.permute.xlu0 %86
  %88 = vrot.lane.b32.xlu0 %v17, 1
  %v89 = vpop.permute.xlu0 %88
  %90 = vrot.lane.b32.xlu0 %v18, 1
  %v91 = vpop.permute.xlu0 %90
  %92 = vrot.lane.b32.xlu0 %v19, 1
  %v93 = vpop.permute.xlu0 %92
  %94 = vrot.lane.b32.xlu0 %v20, 1
  %v95 = vpop.permute.xlu0 %94
  %96 = vrot.lane.b32.xlu0 %v21, 1
  %v97 = vpop.permute.xlu0 %96
  %98 = vrot.lane.b32.xlu0 %v22, 1
  %v99 = vpop.permute.xlu0 %98
  %100 = vrot.lane.b32.xlu0 %v23, 1
  %v101 = vpop.permute.xlu0 %100
  %102 = vrot.lane.b32.xlu0 %v24, 1
  %v103 = vpop.permute.xlu0 %102
  %104 = vrot.lane.b32.xlu0 %v25, 1
  %v105 = vpop.permute.xlu0 %104
  %106 = vrot.lane.b32.xlu0 %v26, 1
  %v107 = vpop.permute.xlu0 %106
  %108 = vrot.lane.b32.xlu0 %v27, 1
  %v109 = vpop.permute.xlu0 %108
  %110 = vrot.lane.b32.xlu0 %v28, 1
  %v111 = vpop.permute.xlu0 %110
  %112 = vrot.lane.b32.xlu0 %v29, 1
  %v113 = vpop.permute.xlu0 %112
  %114 = vrot.lane.b32.xlu0 %v30, 1
  %v115 = vpop.permute.xlu0 %114
  %116 = vrot.lane.b32.xlu0 %v31, 1
  %v117 = vpop.permute.xlu0 %116
  %118 = vrot.lane.b32.xlu0 %v32, 1
  %v119 = vpop.permute.xlu0 %118
  %120 = vrot.lane.b32.xlu0 %v33, 1
  %v121 = vpop.permute.xlu0 %120
  %122 = vrot.lane.b32.xlu0 %v34, 1
  %v123 = vpop.permute.xlu0 %122
  %124 = vrot.lane.b32.xlu0 %v35, 1
  %v125 = vpop.permute.xlu0 %124
  %126 = vrot.lane.b32.xlu0 %v36, 1
  %v127 = vpop.permute.xlu0 %126
  %128 = vrot.lane.b32.xlu0 %v37, 1
  %v129 = vpop.permute.xlu0 %128
  %130 = vrot.lane.b32.xlu0 %v38, 1
  %v131 = vpop.permute.xlu0 %130
  %132 = vrot.lane.b32.xlu0 %v39, 1
  %v133 = vpop.permute.xlu0 %132
  %134 = vrot.lane.b32.xlu0 %v40, 1
  %v135 = vpop.permute.xlu0 %134
  %136 = vrot.lane.b32.xlu0 %v41, 1
  %v137 = vpop.permute.xlu0 %136
  %138 = vrot.lane.b32.xlu0 %v42, 1
  %v139 = vpop.permute.xlu0 %138
  %172 = vrot.lane.b32.xlu0 %v11, 2
  %v173 = vpop.permute.xlu0 %172
  %174 = vrot.lane.b32.xlu0 %v12, 2
  %v175 = vpop.permute.xlu0 %174
  %176 = vrot.lane.b32.xlu0 %v13, 2
  %v177 = vpop.permute.xlu0 %176
  %178 = vrot.lane.b32.xlu0 %v14, 2
  %v179 = vpop.permute.xlu0 %178
  %180 = vrot.lane.b32.xlu0 %v15, 2
  %v181 = vpop.permute.xlu0 %180
  %182 = vrot.lane.b32.xlu0 %v16, 2
  %v183 = vpop.permute.xlu0 %182
  %184 = vrot.lane.b32.xlu0 %v17, 2
  %v185 = vpop.permute.xlu0 %184
  %186 = vrot.lane.b32.xlu0 %v18, 2
  %v187 = vpop.permute.xlu0 %186
  %188 = vrot.lane.b32.xlu0 %v19, 2
  %v189 = vpop.permute.xlu0 %188
  %190 = vrot.lane.b32.xlu0 %v20, 2
  %v191 = vpop.permute.xlu0 %190
  %192 = vrot.lane.b32.xlu0 %v21, 2
  %v193 = vpop.permute.xlu0 %192
  %194 = vrot.lane.b32.xlu0 %v22, 2
  %v195 = vpop.permute.xlu0 %194
  %196 = vrot.lane.b32.xlu0 %v23, 2
  %v197 = vpop.permute.xlu0 %196
  %198 = vrot.lane.b32.xlu0 %v24, 2
  %v199 = vpop.permute.xlu0 %198
  %200 = vrot.lane.b32.xlu0 %v25, 2
  %v201 = vpop.permute.xlu0 %200
  %202 = vrot.lane.b32.xlu0 %v26, 2
  %v203 = vpop.permute.xlu0 %202
  %204 = vrot.lane.b32.xlu0 %v27, 2
  %v205 = vpop.permute.xlu0 %204
  %206 = vrot.lane.b32.xlu0 %v28, 2
  %v207 = vpop.permute.xlu0 %206
  %208 = vrot.lane.b32.xlu0 %v29, 2
  %v209 = vpop.permute.xlu0 %208
  %210 = vrot.lane.b32.xlu0 %v30, 2
  %v211 = vpop.permute.xlu0 %210
  %212 = vrot.lane.b32.xlu0 %v31, 2
  %v213 = vpop.permute.xlu0 %212
  %214 = vrot.lane.b32.xlu0 %v32, 2
  %v215 = vpop.permute.xlu0 %214
  %216 = vrot.lane.b32.xlu0 %v33, 2
  %v217 = vpop.permute.xlu0 %216
  %218 = vrot.lane.b32.xlu0 %v34, 2
  %v219 = vpop.permute.xlu0 %218
  %220 = vrot.lane.b32.xlu0 %v35, 2
  %v221 = vpop.permute.xlu0 %220
  %222 = vrot.lane.b32.xlu0 %v36, 2
  %v223 = vpop.permute.xlu0 %222
  %224 = vrot.lane.b32.xlu0 %v37, 2
  %v225 = vpop.permute.xlu0 %224
  %226 = vrot.lane.b32.xlu0 %v38, 2
  %v227 = vpop.permute.xlu0 %226
  %228 = vrot.lane.b32.xlu0 %v39, 2
  %v229 = vpop.permute.xlu0 %228
  %230 = vrot.lane.b32.xlu0 %v40, 2
  %v231 = vpop.permute.xlu0 %230
  %232 = vrot.lane.b32.xlu0 %v41, 2
  %v233 = vpop.permute.xlu0 %232
  %234 = vrot.lane.b32.xlu0 %v42, 2
  %v235 = vpop.permute.xlu0 %234
  %268 = vrot.lane.b32.xlu0 %v11, 3
  %v269 = vpop.permute.xlu0 %268
  %270 = vrot.lane.b32.xlu0 %v12, 3
  %v271 = vpop.permute.xlu0 %270
  %272 = vrot.lane.b32.xlu0 %v13, 3
  %v273 = vpop.permute.xlu0 %272
  %274 = vrot.lane.b32.xlu0 %v14, 3
  %v275 = vpop.permute.xlu0 %274
  %276 = vrot.lane.b32.xlu0 %v15, 3
  %v277 = vpop.permute.xlu0 %276
  %278 = vrot.lane.b32.xlu0 %v16, 3
  %v279 = vpop.permute.xlu0 %278
  %280 = vrot.lane.b32.xlu0 %v17, 3
  %v281 = vpop.permute.xlu0 %280
  %282 = vrot.lane.b32.xlu0 %v18, 3
  %v283 = vpop.permute.xlu0 %282
  %284 = vrot.lane.b32.xlu0 %v19, 3
  %v285 = vpop.permute.xlu0 %284
  %286 = vrot.lane.b32.xlu0 %v20, 3
  %v287 = vpop.permute.xlu0 %286
  %288 = vrot.lane.b32.xlu0 %v21, 3
  %v289 = vpop.permute.xlu0 %288
  %290 = vrot.lane.b32.xlu0 %v22, 3
  %v291 = vpop.permute.xlu0 %290
  %292 = vrot.lane.b32.xlu0 %v23, 3
  %v293 = vpop.permute.xlu0 %292
  %294 = vrot.lane.b32.xlu0 %v24, 3
  %v295 = vpop.permute.xlu0 %294
  %296 = vrot.lane.b32.xlu0 %v25, 3
  %v297 = vpop.permute.xlu0 %296
  %298 = vrot.lane.b32.xlu0 %v26, 3
  %v299 = vpop.permute.xlu0 %298
  %300 = vrot.lane.b32.xlu0 %v27, 3
  %v301 = vpop.permute.xlu0 %300
  %302 = vrot.lane.b32.xlu0 %v28, 3
  %v303 = vpop.permute.xlu0 %302
  %304 = vrot.lane.b32.xlu0 %v29, 3
  %v305 = vpop.permute.xlu0 %304
  %306 = vrot.lane.b32.xlu0 %v30, 3
  %v307 = vpop.permute.xlu0 %306
  %308 = vrot.lane.b32.xlu0 %v31, 3
  %v309 = vpop.permute.xlu0 %308
  %310 = vrot.lane.b32.xlu0 %v32, 3
  %v311 = vpop.permute.xlu0 %310
  %312 = vrot.lane.b32.xlu0 %v33, 3
  %v313 = vpop.permute.xlu0 %312
  %314 = vrot.lane.b32.xlu0 %v34, 3
  %v315 = vpop.permute.xlu0 %314
  %316 = vrot.lane.b32.xlu0 %v35, 3
  %v317 = vpop.permute.xlu0 %316
  %318 = vrot.lane.b32.xlu0 %v36, 3
  %v319 = vpop.permute.xlu0 %318
  %320 = vrot.lane.b32.xlu0 %v37, 3
  %v321 = vpop.permute.xlu0 %320
  %322 = vrot.lane.b32.xlu0 %v38, 3
  %v323 = vpop.permute.xlu0 %322
  %324 = vrot.lane.b32.xlu0 %v39, 3
  %v325 = vpop.permute.xlu0 %324
  %326 = vrot.lane.b32.xlu0 %v40, 3
  %v327 = vpop.permute.xlu0 %326
  %328 = vrot.lane.b32.xlu0 %v41, 3
  %v329 = vpop.permute.xlu0 %328
  %330 = vrot.lane.b32.xlu0 %v42, 3
  %v331 = vpop.permute.xlu0 %330
  %vm364 = vcmask 7168
  %v365 = vsel %vm364, %v11, %v77
  %v366 = vsel %vm364, %v12, %v79
  %v367 = vsel %vm364, %v13, %v81
  %v368 = vsel %vm364, %v14, %v83
  %v369 = vsel %vm364, %v15, %v85
  %v370 = vsel %vm364, %v16, %v87
  %v371 = vsel %vm364, %v17, %v89
  %v372 = vsel %vm364, %v18, %v91
  %v373 = vsel %vm364, %v19, %v93
  %v374 = vsel %vm364, %v20, %v95
  %v375 = vsel %vm364, %v21, %v97
  %v376 = vsel %vm364, %v22, %v99
  %v377 = vsel %vm364, %v23, %v101
  %v378 = vsel %vm364, %v24, %v103
  %v379 = vsel %vm364, %v25, %v105
  %v380 = vsel %vm364, %v26, %v107
  %v381 = vsel %vm364, %v27, %v109
  %v382 = vsel %vm364, %v28, %v111
  %v383 = vsel %vm364, %v29, %v113
  %v384 = vsel %vm364, %v30, %v115
  %v385 = vsel %vm364, %v31, %v117
  %v386 = vsel %vm364, %v32, %v119
  %v387 = vsel %vm364, %v33, %v121
  %v388 = vsel %vm364, %v34, %v123
  %v389 = vsel %vm364, %v35, %v125
  %v390 = vsel %vm364, %v36, %v127
  %v391 = vsel %vm364, %v37, %v129
  %v392 = vsel %vm364, %v38, %v131
  %v393 = vsel %vm364, %v39, %v133
  %v394 = vsel %vm364, %v40, %v135
  %v395 = vsel %vm364, %v41, %v137
  %v396 = vsel %vm364, %v42, %v139
  %vm397 = vcmask 15360
  %v398 = vsel %vm397, %v365, %v77
  %v399 = vsel %vm397, %v366, %v79
  %v400 = vsel %vm397, %v367, %v81
  %v401 = vsel %vm397, %v368, %v83
  %v402 = vsel %vm397, %v369, %v85
  %v403 = vsel %vm397, %v370, %v87
  %v404 = vsel %vm397, %v371, %v89
  %v405 = vsel %vm397, %v372, %v91
  %v406 = vsel %vm397, %v373, %v93
  %v407 = vsel %vm397, %v374, %v95
  %v408 = vsel %vm397, %v375, %v97
  %v409 = vsel %vm397, %v376, %v99
  %v410 = vsel %vm397, %v377, %v101
  %v411 = vsel %vm397, %v378, %v103
  %v412 = vsel %vm397, %v379, %v105
  %v413 = vsel %vm397, %v380, %v107
  %v414 = vsel %vm397, %v381, %v109
  %v415 = vsel %vm397, %v382, %v111
  %v416 = vsel %vm397, %v383, %v113
  %v417 = vsel %vm397, %v384, %v115
  %v418 = vsel %vm397, %v385, %v117
  %v419 = vsel %vm397, %v386, %v119
  %v420 = vsel %vm397, %v387, %v121
  %v421 = vsel %vm397, %v388, %v123
  %v422 = vsel %vm397, %v389, %v125
  %v423 = vsel %vm397, %v390, %v127
  %v424 = vsel %vm397, %v391, %v129
  %v425 = vsel %vm397, %v392, %v131
  %v426 = vsel %vm397, %v393, %v133
  %v427 = vsel %vm397, %v394, %v135
  %v428 = vsel %vm397, %v395, %v137
  %v429 = vsel %vm397, %v396, %v139
  %vm430 = vcmask 23552
  %v431 = vsel %vm430, %v398, %v173
  %v432 = vsel %vm430, %v399, %v175
  %v433 = vsel %vm430, %v400, %v177
  %v434 = vsel %vm430, %v401, %v179
  %v435 = vsel %vm430, %v402, %v181
  %v436 = vsel %vm430, %v403, %v183
  %v437 = vsel %vm430, %v404, %v185
  %v438 = vsel %vm430, %v405, %v187
  %v439 = vsel %vm430, %v406, %v189
  %v440 = vsel %vm430, %v407, %v191
  %v441 = vsel %vm430, %v408, %v193
  %v442 = vsel %vm430, %v409, %v195
  %v443 = vsel %vm430, %v410, %v197
  %v444 = vsel %vm430, %v411, %v199
  %v445 = vsel %vm430, %v412, %v201
  %v446 = vsel %vm430, %v413, %v203
  %v447 = vsel %vm430, %v414, %v205
  %v448 = vsel %vm430, %v415, %v207
  %v449 = vsel %vm430, %v416, %v209
  %v450 = vsel %vm430, %v417, %v211
  %v451 = vsel %vm430, %v418, %v213
  %v452 = vsel %vm430, %v419, %v215
  %v453 = vsel %vm430, %v420, %v217
  %v454 = vsel %vm430, %v421, %v219
  %v455 = vsel %vm430, %v422, %v221
  %v456 = vsel %vm430, %v423, %v223
  %v457 = vsel %vm430, %v424, %v225
  %v458 = vsel %vm430, %v425, %v227
  %v459 = vsel %vm430, %v426, %v229
  %v460 = vsel %vm430, %v427, %v231
  %v461 = vsel %vm430, %v428, %v233
  %v462 = vsel %vm430, %v429, %v235
  %vm463 = vcmask 31744
  %v464 = vsel %vm463, %v431, %v173
  %v465 = vsel %vm463, %v432, %v175
  %v466 = vsel %vm463, %v433, %v177
  %v467 = vsel %vm463, %v434, %v179
  %v468 = vsel %vm463, %v435, %v181
  %v469 = vsel %vm463, %v436, %v183
  %v470 = vsel %vm463, %v437, %v185
  %v471 = vsel %vm463, %v438, %v187
  %v472 = vsel %vm463, %v439, %v189
  %v473 = vsel %vm463, %v440, %v191
  %v474 = vsel %vm463, %v441, %v193
  %v475 = vsel %vm463, %v442, %v195
  %v476 = vsel %vm463, %v443, %v197
  %v477 = vsel %vm463, %v444, %v199
  %v478 = vsel %vm463, %v445, %v201
  %v479 = vsel %vm463, %v446, %v203
  %v480 = vsel %vm463, %v447, %v205
  %v481 = vsel %vm463, %v448, %v207
  %v482 = vsel %vm463, %v449, %v209
  %v483 = vsel %vm463, %v450, %v211
  %v484 = vsel %vm463, %v451, %v213
  %v485 = vsel %vm463, %v452, %v215
  %v486 = vsel %vm463, %v453, %v217
  %v487 = vsel %vm463, %v454, %v219
  %v488 = vsel %vm463, %v455, %v221
  %v489 = vsel %vm463, %v456, %v223
  %v490 = vsel %vm463, %v457, %v225
  %v491 = vsel %vm463, %v458, %v227
  %v492 = vsel %vm463, %v459, %v229
  %v493 = vsel %vm463, %v460, %v231
  %v494 = vsel %vm463, %v461, %v233
  %v495 = vsel %vm463, %v462, %v235
  %vm496 = vcmask 39936
  %v497 = vsel %vm496, %v464, %v269
  %v498 = vsel %vm496, %v465, %v271
  %v499 = vsel %vm496, %v466, %v273
  %v500 = vsel %vm496, %v467, %v275
  %v501 = vsel %vm496, %v468, %v277
  %v502 = vsel %vm496, %v469, %v279
  %v503 = vsel %vm496, %v470, %v281
  %v504 = vsel %vm496, %v471, %v283
  %v505 = vsel %vm496, %v472, %v285
  %v506 = vsel %vm496, %v473, %v287
  %v507 = vsel %vm496, %v474, %v289
  %v508 = vsel %vm496, %v475, %v291
  %v509 = vsel %vm496, %v476, %v293
  %v510 = vsel %vm496, %v477, %v295
  %v511 = vsel %vm496, %v478, %v297
  %v512 = vsel %vm496, %v479, %v299
  %v513 = vsel %vm496, %v480, %v301
  %v514 = vsel %vm496, %v481, %v303
  %v515 = vsel %vm496, %v482, %v305
  %v516 = vsel %vm496, %v483, %v307
  %v517 = vsel %vm496, %v484, %v309
  %v518 = vsel %vm496, %v485, %v311
  %v519 = vsel %vm496, %v486, %v313
  %v520 = vsel %vm496, %v487, %v315
  %v521 = vsel %vm496, %v488, %v317
  %v522 = vsel %vm496, %v489, %v319
  %v523 = vsel %vm496, %v490, %v321
  %v524 = vsel %vm496, %v491, %v323
  %v525 = vsel %vm496, %v492, %v325
  %v526 = vsel %vm496, %v493, %v327
  %v527 = vsel %vm496, %v494, %v329
  %v528 = vsel %vm496, %v495, %v331
  %561 = vrot.lane.b32.xlu0 %v497, 6
  %v562 = vpop.permute.xlu0 %561
  %563 = vrot.lane.b32.xlu0 %v498, 6
  %v564 = vpop.permute.xlu0 %563
  %565 = vrot.lane.b32.xlu0 %v499, 6
  %v566 = vpop.permute.xlu0 %565
  %567 = vrot.lane.b32.xlu0 %v500, 6
  %v568 = vpop.permute.xlu0 %567
  %569 = vrot.lane.b32.xlu0 %v501, 6
  %v570 = vpop.permute.xlu0 %569
  %571 = vrot.lane.b32.xlu0 %v502, 6
  %v572 = vpop.permute.xlu0 %571
  %573 = vrot.lane.b32.xlu0 %v503, 6
  %v574 = vpop.permute.xlu0 %573
  %575 = vrot.lane.b32.xlu0 %v504, 6
  %v576 = vpop.permute.xlu0 %575
  %577 = vrot.lane.b32.xlu0 %v505, 6
  %v578 = vpop.permute.xlu0 %577
  %579 = vrot.lane.b32.xlu0 %v506, 6
  %v580 = vpop.permute.xlu0 %579
  %581 = vrot.lane.b32.xlu0 %v507, 6
  %v582 = vpop.permute.xlu0 %581
  %583 = vrot.lane.b32.xlu0 %v508, 6
  %v584 = vpop.permute.xlu0 %583
  %585 = vrot.lane.b32.xlu0 %v509, 6
  %v586 = vpop.permute.xlu0 %585
  %587 = vrot.lane.b32.xlu0 %v510, 6
  %v588 = vpop.permute.xlu0 %587
  %589 = vrot.lane.b32.xlu0 %v511, 6
  %v590 = vpop.permute.xlu0 %589
  %591 = vrot.lane.b32.xlu0 %v512, 6
  %v592 = vpop.permute.xlu0 %591
  %593 = vrot.lane.b32.xlu0 %v513, 6
  %v594 = vpop.permute.xlu0 %593
  %595 = vrot.lane.b32.xlu0 %v514, 6
  %v596 = vpop.permute.xlu0 %595
  %597 = vrot.lane.b32.xlu0 %v515, 6
  %v598 = vpop.permute.xlu0 %597
  %599 = vrot.lane.b32.xlu0 %v516, 6
  %v600 = vpop.permute.xlu0 %599
  %601 = vrot.lane.b32.xlu0 %v517, 6
  %v602 = vpop.permute.xlu0 %601
  %603 = vrot.lane.b32.xlu0 %v518, 6
  %v604 = vpop.permute.xlu0 %603
  %605 = vrot.lane.b32.xlu0 %v519, 6
  %v606 = vpop.permute.xlu0 %605
  %607 = vrot.lane.b32.xlu0 %v520, 6
  %v608 = vpop.permute.xlu0 %607
  %609 = vrot.lane.b32.xlu0 %v521, 6
  %v610 = vpop.permute.xlu0 %609
  %611 = vrot.lane.b32.xlu0 %v522, 6
  %v612 = vpop.permute.xlu0 %611
  %613 = vrot.lane.b32.xlu0 %v523, 6
  %v614 = vpop.permute.xlu0 %613
  %615 = vrot.lane.b32.xlu0 %v524, 6
  %v616 = vpop.permute.xlu0 %615
  %617 = vrot.lane.b32.xlu0 %v525, 6
  %v618 = vpop.permute.xlu0 %617
  %619 = vrot.lane.b32.xlu0 %v526, 6
  %v620 = vpop.permute.xlu0 %619
  %621 = vrot.lane.b32.xlu0 %v527, 6
  %v622 = vpop.permute.xlu0 %621
  %623 = vrot.lane.b32.xlu0 %v528, 6
  %v624 = vpop.permute.xlu0 %623
  %657 = vrot.lane.b32.xlu0 %v497, 12
  %v658 = vpop.permute.xlu0 %657
  %659 = vrot.lane.b32.xlu0 %v498, 12
  %v660 = vpop.permute.xlu0 %659
  %661 = vrot.lane.b32.xlu0 %v499, 12
  %v662 = vpop.permute.xlu0 %661
  %663 = vrot.lane.b32.xlu0 %v500, 12
  %v664 = vpop.permute.xlu0 %663
  %665 = vrot.lane.b32.xlu0 %v501, 12
  %v666 = vpop.permute.xlu0 %665
  %667 = vrot.lane.b32.xlu0 %v502, 12
  %v668 = vpop.permute.xlu0 %667
  %669 = vrot.lane.b32.xlu0 %v503, 12
  %v670 = vpop.permute.xlu0 %669
  %671 = vrot.lane.b32.xlu0 %v504, 12
  %v672 = vpop.permute.xlu0 %671
  %673 = vrot.lane.b32.xlu0 %v505, 12
  %v674 = vpop.permute.xlu0 %673
  %675 = vrot.lane.b32.xlu0 %v506, 12
  %v676 = vpop.permute.xlu0 %675
  %677 = vrot.lane.b32.xlu0 %v507, 12
  %v678 = vpop.permute.xlu0 %677
  %679 = vrot.lane.b32.xlu0 %v508, 12
  %v680 = vpop.permute.xlu0 %679
  %681 = vrot.lane.b32.xlu0 %v509, 12
  %v682 = vpop.permute.xlu0 %681
  %683 = vrot.lane.b32.xlu0 %v510, 12
  %v684 = vpop.permute.xlu0 %683
  %685 = vrot.lane.b32.xlu0 %v511, 12
  %v686 = vpop.permute.xlu0 %685
  %687 = vrot.lane.b32.xlu0 %v512, 12
  %v688 = vpop.permute.xlu0 %687
  %689 = vrot.lane.b32.xlu0 %v513, 12
  %v690 = vpop.permute.xlu0 %689
  %691 = vrot.lane.b32.xlu0 %v514, 12
  %v692 = vpop.permute.xlu0 %691
  %693 = vrot.lane.b32.xlu0 %v515, 12
  %v694 = vpop.permute.xlu0 %693
  %695 = vrot.lane.b32.xlu0 %v516, 12
  %v696 = vpop.permute.xlu0 %695
  %697 = vrot.lane.b32.xlu0 %v517, 12
  %v698 = vpop.permute.xlu0 %697
  %699 = vrot.lane.b32.xlu0 %v518, 12
  %v700 = vpop.permute.xlu0 %699
  %701 = vrot.lane.b32.xlu0 %v519, 12
  %v702 = vpop.permute.xlu0 %701
  %703 = vrot.lane.b32.xlu0 %v520, 12
  %v704 = vpop.permute.xlu0 %703
  %705 = vrot.lane.b32.xlu0 %v521, 12
  %v706 = vpop.permute.xlu0 %705
  %707 = vrot.lane.b32.xlu0 %v522, 12
  %v708 = vpop.permute.xlu0 %707
  %709 = vrot.lane.b32.xlu0 %v523, 12
  %v710 = vpop.permute.xlu0 %709
  %711 = vrot.lane.b32.xlu0 %v524, 12
  %v712 = vpop.permute.xlu0 %711
  %713 = vrot.lane.b32.xlu0 %v525, 12
  %v714 = vpop.permute.xlu0 %713
  %715 = vrot.lane.b32.xlu0 %v526, 12
  %v716 = vpop.permute.xlu0 %715
  %717 = vrot.lane.b32.xlu0 %v527, 12
  %v718 = vpop.permute.xlu0 %717
  %719 = vrot.lane.b32.xlu0 %v528, 12
  %v720 = vpop.permute.xlu0 %719
  %753 = vrot.lane.b32.xlu0 %v497, 18
  %v754 = vpop.permute.xlu0 %753
  %755 = vrot.lane.b32.xlu0 %v498, 18
  %v756 = vpop.permute.xlu0 %755
  %757 = vrot.lane.b32.xlu0 %v499, 18
  %v758 = vpop.permute.xlu0 %757
  %759 = vrot.lane.b32.xlu0 %v500, 18
  %v760 = vpop.permute.xlu0 %759
  %761 = vrot.lane.b32.xlu0 %v501, 18
  %v762 = vpop.permute.xlu0 %761
  %763 = vrot.lane.b32.xlu0 %v502, 18
  %v764 = vpop.permute.xlu0 %763
  %765 = vrot.lane.b32.xlu0 %v503, 18
  %v766 = vpop.permute.xlu0 %765
  %767 = vrot.lane.b32.xlu0 %v504, 18
  %v768 = vpop.permute.xlu0 %767
  %769 = vrot.lane.b32.xlu0 %v505, 18
  %v770 = vpop.permute.xlu0 %769
  %771 = vrot.lane.b32.xlu0 %v506, 18
  %v772 = vpop.permute.xlu0 %771
  %773 = vrot.lane.b32.xlu0 %v507, 18
  %v774 = vpop.permute.xlu0 %773
  %775 = vrot.lane.b32.xlu0 %v508, 18
  %v776 = vpop.permute.xlu0 %775
  %777 = vrot.lane.b32.xlu0 %v509, 18
  %v778 = vpop.permute.xlu0 %777
  %779 = vrot.lane.b32.xlu0 %v510, 18
  %v780 = vpop.permute.xlu0 %779
  %781 = vrot.lane.b32.xlu0 %v511, 18
  %v782 = vpop.permute.xlu0 %781
  %783 = vrot.lane.b32.xlu0 %v512, 18
  %v784 = vpop.permute.xlu0 %783
  %785 = vrot.lane.b32.xlu0 %v513, 18
  %v786 = vpop.permute.xlu0 %785
  %787 = vrot.lane.b32.xlu0 %v514, 18
  %v788 = vpop.permute.xlu0 %787
  %789 = vrot.lane.b32.xlu0 %v515, 18
  %v790 = vpop.permute.xlu0 %789
  %791 = vrot.lane.b32.xlu0 %v516, 18
  %v792 = vpop.permute.xlu0 %791
  %793 = vrot.lane.b32.xlu0 %v517, 18
  %v794 = vpop.permute.xlu0 %793
  %795 = vrot.lane.b32.xlu0 %v518, 18
  %v796 = vpop.permute.xlu0 %795
  %797 = vrot.lane.b32.xlu0 %v519, 18
  %v798 = vpop.permute.xlu0 %797
  %799 = vrot.lane.b32.xlu0 %v520, 18
  %v800 = vpop.permute.xlu0 %799
  %801 = vrot.lane.b32.xlu0 %v521, 18
  %v802 = vpop.permute.xlu0 %801
  %803 = vrot.lane.b32.xlu0 %v522, 18
  %v804 = vpop.permute.xlu0 %803
  %805 = vrot.lane.b32.xlu0 %v523, 18
  %v806 = vpop.permute.xlu0 %805
  %807 = vrot.lane.b32.xlu0 %v524, 18
  %v808 = vpop.permute.xlu0 %807
  %809 = vrot.lane.b32.xlu0 %v525, 18
  %v810 = vpop.permute.xlu0 %809
  %811 = vrot.lane.b32.xlu0 %v526, 18
  %v812 = vpop.permute.xlu0 %811
  %813 = vrot.lane.b32.xlu0 %v527, 18
  %v814 = vpop.permute.xlu0 %813
  %815 = vrot.lane.b32.xlu0 %v528, 18
  %v816 = vpop.permute.xlu0 %815
  %849 = vrot.lane.b32.xlu0 %v497, 24
  %v850 = vpop.permute.xlu0 %849
  %851 = vrot.lane.b32.xlu0 %v498, 24
  %v852 = vpop.permute.xlu0 %851
  %853 = vrot.lane.b32.xlu0 %v499, 24
  %v854 = vpop.permute.xlu0 %853
  %855 = vrot.lane.b32.xlu0 %v500, 24
  %v856 = vpop.permute.xlu0 %855
  %857 = vrot.lane.b32.xlu0 %v501, 24
  %v858 = vpop.permute.xlu0 %857
  %859 = vrot.lane.b32.xlu0 %v502, 24
  %v860 = vpop.permute.xlu0 %859
  %861 = vrot.lane.b32.xlu0 %v503, 24
  %v862 = vpop.permute.xlu0 %861
  %863 = vrot.lane.b32.xlu0 %v504, 24
  %v864 = vpop.permute.xlu0 %863
  %865 = vrot.lane.b32.xlu0 %v505, 24
  %v866 = vpop.permute.xlu0 %865
  %867 = vrot.lane.b32.xlu0 %v506, 24
  %v868 = vpop.permute.xlu0 %867
  %869 = vrot.lane.b32.xlu0 %v507, 24
  %v870 = vpop.permute.xlu0 %869
  %871 = vrot.lane.b32.xlu0 %v508, 24
  %v872 = vpop.permute.xlu0 %871
  %873 = vrot.lane.b32.xlu0 %v509, 24
  %v874 = vpop.permute.xlu0 %873
  %875 = vrot.lane.b32.xlu0 %v510, 24
  %v876 = vpop.permute.xlu0 %875
  %877 = vrot.lane.b32.xlu0 %v511, 24
  %v878 = vpop.permute.xlu0 %877
  %879 = vrot.lane.b32.xlu0 %v512, 24
  %v880 = vpop.permute.xlu0 %879
  %881 = vrot.lane.b32.xlu0 %v513, 24
  %v882 = vpop.permute.xlu0 %881
  %883 = vrot.lane.b32.xlu0 %v514, 24
  %v884 = vpop.permute.xlu0 %883
  %885 = vrot.lane.b32.xlu0 %v515, 24
  %v886 = vpop.permute.xlu0 %885
  %887 = vrot.lane.b32.xlu0 %v516, 24
  %v888 = vpop.permute.xlu0 %887
  %889 = vrot.lane.b32.xlu0 %v517, 24
  %v890 = vpop.permute.xlu0 %889
  %891 = vrot.lane.b32.xlu0 %v518, 24
  %v892 = vpop.permute.xlu0 %891
  %893 = vrot.lane.b32.xlu0 %v519, 24
  %v894 = vpop.permute.xlu0 %893
  %895 = vrot.lane.b32.xlu0 %v520, 24
  %v896 = vpop.permute.xlu0 %895
  %897 = vrot.lane.b32.xlu0 %v521, 24
  %v898 = vpop.permute.xlu0 %897
  %899 = vrot.lane.b32.xlu0 %v522, 24
  %v900 = vpop.permute.xlu0 %899
  %901 = vrot.lane.b32.xlu0 %v523, 24
  %v902 = vpop.permute.xlu0 %901
  %903 = vrot.lane.b32.xlu0 %v524, 24
  %v904 = vpop.permute.xlu0 %903
  %905 = vrot.lane.b32.xlu0 %v525, 24
  %v906 = vpop.permute.xlu0 %905
  %907 = vrot.lane.b32.xlu0 %v526, 24
  %v908 = vpop.permute.xlu0 %907
  %909 = vrot.lane.b32.xlu0 %v527, 24
  %v910 = vpop.permute.xlu0 %909
  %911 = vrot.lane.b32.xlu0 %v528, 24
  %v912 = vpop.permute.xlu0 %911
  %945 = vrot.lane.b32.xlu0 %v497, 30
  %v946 = vpop.permute.xlu0 %945
  %947 = vrot.lane.b32.xlu0 %v498, 30
  %v948 = vpop.permute.xlu0 %947
  %949 = vrot.lane.b32.xlu0 %v499, 30
  %v950 = vpop.permute.xlu0 %949
  %951 = vrot.lane.b32.xlu0 %v500, 30
  %v952 = vpop.permute.xlu0 %951
  %953 = vrot.lane.b32.xlu0 %v501, 30
  %v954 = vpop.permute.xlu0 %953
  %955 = vrot.lane.b32.xlu0 %v502, 30
  %v956 = vpop.permute.xlu0 %955
  %957 = vrot.lane.b32.xlu0 %v503, 30
  %v958 = vpop.permute.xlu0 %957
  %959 = vrot.lane.b32.xlu0 %v504, 30
  %v960 = vpop.permute.xlu0 %959
  %961 = vrot.lane.b32.xlu0 %v505, 30
  %v962 = vpop.permute.xlu0 %961
  %963 = vrot.lane.b32.xlu0 %v506, 30
  %v964 = vpop.permute.xlu0 %963
  %965 = vrot.lane.b32.xlu0 %v507, 30
  %v966 = vpop.permute.xlu0 %965
  %967 = vrot.lane.b32.xlu0 %v508, 30
  %v968 = vpop.permute.xlu0 %967
  %969 = vrot.lane.b32.xlu0 %v509, 30
  %v970 = vpop.permute.xlu0 %969
  %971 = vrot.lane.b32.xlu0 %v510, 30
  %v972 = vpop.permute.xlu0 %971
  %973 = vrot.lane.b32.xlu0 %v511, 30
  %v974 = vpop.permute.xlu0 %973
  %975 = vrot.lane.b32.xlu0 %v512, 30
  %v976 = vpop.permute.xlu0 %975
  %977 = vrot.lane.b32.xlu0 %v513, 30
  %v978 = vpop.permute.xlu0 %977
  %979 = vrot.lane.b32.xlu0 %v514, 30
  %v980 = vpop.permute.xlu0 %979
  %981 = vrot.lane.b32.xlu0 %v515, 30
  %v982 = vpop.permute.xlu0 %981
  %983 = vrot.lane.b32.xlu0 %v516, 30
  %v984 = vpop.permute.xlu0 %983
  %985 = vrot.lane.b32.xlu0 %v517, 30
  %v986 = vpop.permute.xlu0 %985
  %987 = vrot.lane.b32.xlu0 %v518, 30
  %v988 = vpop.permute.xlu0 %987
  %989 = vrot.lane.b32.xlu0 %v519, 30
  %v990 = vpop.permute.xlu0 %989
  %991 = vrot.lane.b32.xlu0 %v520, 30
  %v992 = vpop.permute.xlu0 %991
  %993 = vrot.lane.b32.xlu0 %v521, 30
  %v994 = vpop.permute.xlu0 %993
  %995 = vrot.lane.b32.xlu0 %v522, 30
  %v996 = vpop.permute.xlu0 %995
  %997 = vrot.lane.b32.xlu0 %v523, 30
  %v998 = vpop.permute.xlu0 %997
  %999 = vrot.lane.b32.xlu0 %v524, 30
  %v1000 = vpop.permute.xlu0 %999
  %1001 = vrot.lane.b32.xlu0 %v525, 30
  %v1002 = vpop.permute.xlu0 %1001
  %1003 = vrot.lane.b32.xlu0 %v526, 30
  %v1004 = vpop.permute.xlu0 %1003
  %1005 = vrot.lane.b32.xlu0 %v527, 30
  %v1006 = vpop.permute.xlu0 %1005
  %1007 = vrot.lane.b32.xlu0 %v528, 30
  %v1008 = vpop.permute.xlu0 %1007
  %1041 = vrot.lane.b32.xlu0 %v497, 36
  %v1042 = vpop.permute.xlu0 %1041
  %1043 = vrot.lane.b32.xlu0 %v498, 36
  %v1044 = vpop.permute.xlu0 %1043
  %1045 = vrot.lane.b32.xlu0 %v499, 36
  %v1046 = vpop.permute.xlu0 %1045
  %1047 = vrot.lane.b32.xlu0 %v500, 36
  %v1048 = vpop.permute.xlu0 %1047
  %1049 = vrot.lane.b32.xlu0 %v501, 36
  %v1050 = vpop.permute.xlu0 %1049
  %1051 = vrot.lane.b32.xlu0 %v502, 36
  %v1052 = vpop.permute.xlu0 %1051
  %1053 = vrot.lane.b32.xlu0 %v503, 36
  %v1054 = vpop.permute.xlu0 %1053
  %1055 = vrot.lane.b32.xlu0 %v504, 36
  %v1056 = vpop.permute.xlu0 %1055
  %1057 = vrot.lane.b32.xlu0 %v505, 36
  %v1058 = vpop.permute.xlu0 %1057
  %1059 = vrot.lane.b32.xlu0 %v506, 36
  %v1060 = vpop.permute.xlu0 %1059
  %1061 = vrot.lane.b32.xlu0 %v507, 36
  %v1062 = vpop.permute.xlu0 %1061
  %1063 = vrot.lane.b32.xlu0 %v508, 36
  %v1064 = vpop.permute.xlu0 %1063
  %1065 = vrot.lane.b32.xlu0 %v509, 36
  %v1066 = vpop.permute.xlu0 %1065
  %1067 = vrot.lane.b32.xlu0 %v510, 36
  %v1068 = vpop.permute.xlu0 %1067
  %1069 = vrot.lane.b32.xlu0 %v511, 36
  %v1070 = vpop.permute.xlu0 %1069
  %1071 = vrot.lane.b32.xlu0 %v512, 36
  %v1072 = vpop.permute.xlu0 %1071
  %1073 = vrot.lane.b32.xlu0 %v513, 36
  %v1074 = vpop.permute.xlu0 %1073
  %1075 = vrot.lane.b32.xlu0 %v514, 36
  %v1076 = vpop.permute.xlu0 %1075
  %1077 = vrot.lane.b32.xlu0 %v515, 36
  %v1078 = vpop.permute.xlu0 %1077
  %1079 = vrot.lane.b32.xlu0 %v516, 36
  %v1080 = vpop.permute.xlu0 %1079
  %1081 = vrot.lane.b32.xlu0 %v517, 36
  %v1082 = vpop.permute.xlu0 %1081
  %1083 = vrot.lane.b32.xlu0 %v518, 36
  %v1084 = vpop.permute.xlu0 %1083
  %1085 = vrot.lane.b32.xlu0 %v519, 36
  %v1086 = vpop.permute.xlu0 %1085
  %1087 = vrot.lane.b32.xlu0 %v520, 36
  %v1088 = vpop.permute.xlu0 %1087
  %1089 = vrot.lane.b32.xlu0 %v521, 36
  %v1090 = vpop.permute.xlu0 %1089
  %1091 = vrot.lane.b32.xlu0 %v522, 36
  %v1092 = vpop.permute.xlu0 %1091
  %1093 = vrot.lane.b32.xlu0 %v523, 36
  %v1094 = vpop.permute.xlu0 %1093
  %1095 = vrot.lane.b32.xlu0 %v524, 36
  %v1096 = vpop.permute.xlu0 %1095
  %1097 = vrot.lane.b32.xlu0 %v525, 36
  %v1098 = vpop.permute.xlu0 %1097
  %1099 = vrot.lane.b32.xlu0 %v526, 36
  %v1100 = vpop.permute.xlu0 %1099
  %1101 = vrot.lane.b32.xlu0 %v527, 36
  %v1102 = vpop.permute.xlu0 %1101
  %1103 = vrot.lane.b32.xlu0 %v528, 36
  %v1104 = vpop.permute.xlu0 %1103
  %1137 = vrot.lane.b32.xlu0 %v497, 42
  %v1138 = vpop.permute.xlu0 %1137
  %1139 = vrot.lane.b32.xlu0 %v498, 42
  %v1140 = vpop.permute.xlu0 %1139
  %1141 = vrot.lane.b32.xlu0 %v499, 42
  %v1142 = vpop.permute.xlu0 %1141
  %1143 = vrot.lane.b32.xlu0 %v500, 42
  %v1144 = vpop.permute.xlu0 %1143
  %1145 = vrot.lane.b32.xlu0 %v501, 42
  %v1146 = vpop.permute.xlu0 %1145
  %1147 = vrot.lane.b32.xlu0 %v502, 42
  %v1148 = vpop.permute.xlu0 %1147
  %1149 = vrot.lane.b32.xlu0 %v503, 42
  %v1150 = vpop.permute.xlu0 %1149
  %1151 = vrot.lane.b32.xlu0 %v504, 42
  %v1152 = vpop.permute.xlu0 %1151
  %1153 = vrot.lane.b32.xlu0 %v505, 42
  %v1154 = vpop.permute.xlu0 %1153
  %1155 = vrot.lane.b32.xlu0 %v506, 42
  %v1156 = vpop.permute.xlu0 %1155
  %1157 = vrot.lane.b32.xlu0 %v507, 42
  %v1158 = vpop.permute.xlu0 %1157
  %1159 = vrot.lane.b32.xlu0 %v508, 42
  %v1160 = vpop.permute.xlu0 %1159
  %1161 = vrot.lane.b32.xlu0 %v509, 42
  %v1162 = vpop.permute.xlu0 %1161
  %1163 = vrot.lane.b32.xlu0 %v510, 42
  %v1164 = vpop.permute.xlu0 %1163
  %1165 = vrot.lane.b32.xlu0 %v511, 42
  %v1166 = vpop.permute.xlu0 %1165
  %1167 = vrot.lane.b32.xlu0 %v512, 42
  %v1168 = vpop.permute.xlu0 %1167
  %1169 = vrot.lane.b32.xlu0 %v513, 42
  %v1170 = vpop.permute.xlu0 %1169
  %1171 = vrot.lane.b32.xlu0 %v514, 42
  %v1172 = vpop.permute.xlu0 %1171
  %1173 = vrot.lane.b32.xlu0 %v515, 42
  %v1174 = vpop.permute.xlu0 %1173
  %1175 = vrot.lane.b32.xlu0 %v516, 42
  %v1176 = vpop.permute.xlu0 %1175
  %1177 = vrot.lane.b32.xlu0 %v517, 42
  %v1178 = vpop.permute.xlu0 %1177
  %1179 = vrot.lane.b32.xlu0 %v518, 42
  %v1180 = vpop.permute.xlu0 %1179
  %1181 = vrot.lane.b32.xlu0 %v519, 42
  %v1182 = vpop.permute.xlu0 %1181
  %1183 = vrot.lane.b32.xlu0 %v520, 42
  %v1184 = vpop.permute.xlu0 %1183
  %1185 = vrot.lane.b32.xlu0 %v521, 42
  %v1186 = vpop.permute.xlu0 %1185
  %1187 = vrot.lane.b32.xlu0 %v522, 42
  %v1188 = vpop.permute.xlu0 %1187
  %1189 = vrot.lane.b32.xlu0 %v523, 42
  %v1190 = vpop.permute.xlu0 %1189
  %1191 = vrot.lane.b32.xlu0 %v524, 42
  %v1192 = vpop.permute.xlu0 %1191
  %1193 = vrot.lane.b32.xlu0 %v525, 42
  %v1194 = vpop.permute.xlu0 %1193
  %1195 = vrot.lane.b32.xlu0 %v526, 42
  %v1196 = vpop.permute.xlu0 %1195
  %1197 = vrot.lane.b32.xlu0 %v527, 42
  %v1198 = vpop.permute.xlu0 %1197
  %1199 = vrot.lane.b32.xlu0 %v528, 42
  %v1200 = vpop.permute.xlu0 %1199
  %1233 = vrot.lane.b32.xlu0 %v497, 48
  %v1234 = vpop.permute.xlu0 %1233
  %1235 = vrot.lane.b32.xlu0 %v498, 48
  %v1236 = vpop.permute.xlu0 %1235
  %1237 = vrot.lane.b32.xlu0 %v499, 48
  %v1238 = vpop.permute.xlu0 %1237
  %1239 = vrot.lane.b32.xlu0 %v500, 48
  %v1240 = vpop.permute.xlu0 %1239
  %1241 = vrot.lane.b32.xlu0 %v501, 48
  %v1242 = vpop.permute.xlu0 %1241
  %1243 = vrot.lane.b32.xlu0 %v502, 48
  %v1244 = vpop.permute.xlu0 %1243
  %1245 = vrot.lane.b32.xlu0 %v503, 48
  %v1246 = vpop.permute.xlu0 %1245
  %1247 = vrot.lane.b32.xlu0 %v504, 48
  %v1248 = vpop.permute.xlu0 %1247
  %1249 = vrot.lane.b32.xlu0 %v505, 48
  %v1250 = vpop.permute.xlu0 %1249
  %1251 = vrot.lane.b32.xlu0 %v506, 48
  %v1252 = vpop.permute.xlu0 %1251
  %1253 = vrot.lane.b32.xlu0 %v507, 48
  %v1254 = vpop.permute.xlu0 %1253
  %1255 = vrot.lane.b32.xlu0 %v508, 48
  %v1256 = vpop.permute.xlu0 %1255
  %1257 = vrot.lane.b32.xlu0 %v509, 48
  %v1258 = vpop.permute.xlu0 %1257
  %1259 = vrot.lane.b32.xlu0 %v510, 48
  %v1260 = vpop.permute.xlu0 %1259
  %1261 = vrot.lane.b32.xlu0 %v511, 48
  %v1262 = vpop.permute.xlu0 %1261
  %1263 = vrot.lane.b32.xlu0 %v512, 48
  %v1264 = vpop.permute.xlu0 %1263
  %1265 = vrot.lane.b32.xlu0 %v513, 48
  %v1266 = vpop.permute.xlu0 %1265
  %1267 = vrot.lane.b32.xlu0 %v514, 48
  %v1268 = vpop.permute.xlu0 %1267
  %1269 = vrot.lane.b32.xlu0 %v515, 48
  %v1270 = vpop.permute.xlu0 %1269
  %1271 = vrot.lane.b32.xlu0 %v516, 48
  %v1272 = vpop.permute.xlu0 %1271
  %1273 = vrot.lane.b32.xlu0 %v517, 48
  %v1274 = vpop.permute.xlu0 %1273
  %1275 = vrot.lane.b32.xlu0 %v518, 48
  %v1276 = vpop.permute.xlu0 %1275
  %1277 = vrot.lane.b32.xlu0 %v519, 48
  %v1278 = vpop.permute.xlu0 %1277
  %1279 = vrot.lane.b32.xlu0 %v520, 48
  %v1280 = vpop.permute.xlu0 %1279
  %1281 = vrot.lane.b32.xlu0 %v521, 48
  %v1282 = vpop.permute.xlu0 %1281
  %1283 = vrot.lane.b32.xlu0 %v522, 48
  %v1284 = vpop.permute.xlu0 %1283
  %1285 = vrot.lane.b32.xlu0 %v523, 48
  %v1286 = vpop.permute.xlu0 %1285
  %1287 = vrot.lane.b32.xlu0 %v524, 48
  %v1288 = vpop.permute.xlu0 %1287
  %1289 = vrot.lane.b32.xlu0 %v525, 48
  %v1290 = vpop.permute.xlu0 %1289
  %1291 = vrot.lane.b32.xlu0 %v526, 48
  %v1292 = vpop.permute.xlu0 %1291
  %1293 = vrot.lane.b32.xlu0 %v527, 48
  %v1294 = vpop.permute.xlu0 %1293
  %1295 = vrot.lane.b32.xlu0 %v528, 48
  %v1296 = vpop.permute.xlu0 %1295
  %1329 = vrot.lane.b32.xlu0 %v497, 54
  %v1330 = vpop.permute.xlu0 %1329
  %1331 = vrot.lane.b32.xlu0 %v498, 54
  %v1332 = vpop.permute.xlu0 %1331
  %1333 = vrot.lane.b32.xlu0 %v499, 54
  %v1334 = vpop.permute.xlu0 %1333
  %1335 = vrot.lane.b32.xlu0 %v500, 54
  %v1336 = vpop.permute.xlu0 %1335
  %1337 = vrot.lane.b32.xlu0 %v501, 54
  %v1338 = vpop.permute.xlu0 %1337
  %1339 = vrot.lane.b32.xlu0 %v502, 54
  %v1340 = vpop.permute.xlu0 %1339
  %1341 = vrot.lane.b32.xlu0 %v503, 54
  %v1342 = vpop.permute.xlu0 %1341
  %1343 = vrot.lane.b32.xlu0 %v504, 54
  %v1344 = vpop.permute.xlu0 %1343
  %1345 = vrot.lane.b32.xlu0 %v505, 54
  %v1346 = vpop.permute.xlu0 %1345
  %1347 = vrot.lane.b32.xlu0 %v506, 54
  %v1348 = vpop.permute.xlu0 %1347
  %1349 = vrot.lane.b32.xlu0 %v507, 54
  %v1350 = vpop.permute.xlu0 %1349
  %1351 = vrot.lane.b32.xlu0 %v508, 54
  %v1352 = vpop.permute.xlu0 %1351
  %1353 = vrot.lane.b32.xlu0 %v509, 54
  %v1354 = vpop.permute.xlu0 %1353
  %1355 = vrot.lane.b32.xlu0 %v510, 54
  %v1356 = vpop.permute.xlu0 %1355
  %1357 = vrot.lane.b32.xlu0 %v511, 54
  %v1358 = vpop.permute.xlu0 %1357
  %1359 = vrot.lane.b32.xlu0 %v512, 54
  %v1360 = vpop.permute.xlu0 %1359
  %1361 = vrot.lane.b32.xlu0 %v513, 54
  %v1362 = vpop.permute.xlu0 %1361
  %1363 = vrot.lane.b32.xlu0 %v514, 54
  %v1364 = vpop.permute.xlu0 %1363
  %1365 = vrot.lane.b32.xlu0 %v515, 54
  %v1366 = vpop.permute.xlu0 %1365
  %1367 = vrot.lane.b32.xlu0 %v516, 54
  %v1368 = vpop.permute.xlu0 %1367
  %1369 = vrot.lane.b32.xlu0 %v517, 54
  %v1370 = vpop.permute.xlu0 %1369
  %1371 = vrot.lane.b32.xlu0 %v518, 54
  %v1372 = vpop.permute.xlu0 %1371
  %1373 = vrot.lane.b32.xlu0 %v519, 54
  %v1374 = vpop.permute.xlu0 %1373
  %1375 = vrot.lane.b32.xlu0 %v520, 54
  %v1376 = vpop.permute.xlu0 %1375
  %1377 = vrot.lane.b32.xlu0 %v521, 54
  %v1378 = vpop.permute.xlu0 %1377
  %1379 = vrot.lane.b32.xlu0 %v522, 54
  %v1380 = vpop.permute.xlu0 %1379
  %1381 = vrot.lane.b32.xlu0 %v523, 54
  %v1382 = vpop.permute.xlu0 %1381
  %1383 = vrot.lane.b32.xlu0 %v524, 54
  %v1384 = vpop.permute.xlu0 %1383
  %1385 = vrot.lane.b32.xlu0 %v525, 54
  %v1386 = vpop.permute.xlu0 %1385
  %1387 = vrot.lane.b32.xlu0 %v526, 54
  %v1388 = vpop.permute.xlu0 %1387
  %1389 = vrot.lane.b32.xlu0 %v527, 54
  %v1390 = vpop.permute.xlu0 %1389
  %1391 = vrot.lane.b32.xlu0 %v528, 54
  %v1392 = vpop.permute.xlu0 %1391
  %vm1425 = vcmask 48128
  %v1426 = vsel %vm1425, %v497, %v562
  %v1427 = vsel %vm1425, %v498, %v564
  %v1428 = vsel %vm1425, %v499, %v566
  %v1429 = vsel %vm1425, %v500, %v568
  %v1430 = vsel %vm1425, %v501, %v570
  %v1431 = vsel %vm1425, %v502, %v572
  %v1432 = vsel %vm1425, %v503, %v574
  %v1433 = vsel %vm1425, %v504, %v576
  %v1434 = vsel %vm1425, %v505, %v578
  %v1435 = vsel %vm1425, %v506, %v580
  %v1436 = vsel %vm1425, %v507, %v582
  %v1437 = vsel %vm1425, %v508, %v584
  %v1438 = vsel %vm1425, %v509, %v586
  %v1439 = vsel %vm1425, %v510, %v588
  %v1440 = vsel %vm1425, %v511, %v590
  %v1441 = vsel %vm1425, %v512, %v592
  %v1442 = vsel %vm1425, %v513, %v594
  %v1443 = vsel %vm1425, %v514, %v596
  %v1444 = vsel %vm1425, %v515, %v598
  %v1445 = vsel %vm1425, %v516, %v600
  %v1446 = vsel %vm1425, %v517, %v602
  %v1447 = vsel %vm1425, %v518, %v604
  %v1448 = vsel %vm1425, %v519, %v606
  %v1449 = vsel %vm1425, %v520, %v608
  %v1450 = vsel %vm1425, %v521, %v610
  %v1451 = vsel %vm1425, %v522, %v612
  %v1452 = vsel %vm1425, %v523, %v614
  %v1453 = vsel %vm1425, %v524, %v616
  %v1454 = vsel %vm1425, %v525, %v618
  %v1455 = vsel %vm1425, %v526, %v620
  %v1456 = vsel %vm1425, %v527, %v622
  %v1457 = vsel %vm1425, %v528, %v624
  %vm1458 = vcmask 97280
  %v1459 = vsel %vm1458, %v1426, %v658
  %v1460 = vsel %vm1458, %v1427, %v660
  %v1461 = vsel %vm1458, %v1428, %v662
  %v1462 = vsel %vm1458, %v1429, %v664
  %v1463 = vsel %vm1458, %v1430, %v666
  %v1464 = vsel %vm1458, %v1431, %v668
  %v1465 = vsel %vm1458, %v1432, %v670
  %v1466 = vsel %vm1458, %v1433, %v672
  %v1467 = vsel %vm1458, %v1434, %v674
  %v1468 = vsel %vm1458, %v1435, %v676
  %v1469 = vsel %vm1458, %v1436, %v678
  %v1470 = vsel %vm1458, %v1437, %v680
  %v1471 = vsel %vm1458, %v1438, %v682
  %v1472 = vsel %vm1458, %v1439, %v684
  %v1473 = vsel %vm1458, %v1440, %v686
  %v1474 = vsel %vm1458, %v1441, %v688
  %v1475 = vsel %vm1458, %v1442, %v690
  %v1476 = vsel %vm1458, %v1443, %v692
  %v1477 = vsel %vm1458, %v1444, %v694
  %v1478 = vsel %vm1458, %v1445, %v696
  %v1479 = vsel %vm1458, %v1446, %v698
  %v1480 = vsel %vm1458, %v1447, %v700
  %v1481 = vsel %vm1458, %v1448, %v702
  %v1482 = vsel %vm1458, %v1449, %v704
  %v1483 = vsel %vm1458, %v1450, %v706
  %v1484 = vsel %vm1458, %v1451, %v708
  %v1485 = vsel %vm1458, %v1452, %v710
  %v1486 = vsel %vm1458, %v1453, %v712
  %v1487 = vsel %vm1458, %v1454, %v714
  %v1488 = vsel %vm1458, %v1455, %v716
  %v1489 = vsel %vm1458, %v1456, %v718
  %v1490 = vsel %vm1458, %v1457, %v720
  %vm1491 = vcmask 146432
  %v1492 = vsel %vm1491, %v1459, %v754
  %v1493 = vsel %vm1491, %v1460, %v756
  %v1494 = vsel %vm1491, %v1461, %v758
  %v1495 = vsel %vm1491, %v1462, %v760
  %v1496 = vsel %vm1491, %v1463, %v762
  %v1497 = vsel %vm1491, %v1464, %v764
  %v1498 = vsel %vm1491, %v1465, %v766
  %v1499 = vsel %vm1491, %v1466, %v768
  %v1500 = vsel %vm1491, %v1467, %v770
  %v1501 = vsel %vm1491, %v1468, %v772
  %v1502 = vsel %vm1491, %v1469, %v774
  %v1503 = vsel %vm1491, %v1470, %v776
  %v1504 = vsel %vm1491, %v1471, %v778
  %v1505 = vsel %vm1491, %v1472, %v780
  %v1506 = vsel %vm1491, %v1473, %v782
  %v1507 = vsel %vm1491, %v1474, %v784
  %v1508 = vsel %vm1491, %v1475, %v786
  %v1509 = vsel %vm1491, %v1476, %v788
  %v1510 = vsel %vm1491, %v1477, %v790
  %v1511 = vsel %vm1491, %v1478, %v792
  %v1512 = vsel %vm1491, %v1479, %v794
  %v1513 = vsel %vm1491, %v1480, %v796
  %v1514 = vsel %vm1491, %v1481, %v798
  %v1515 = vsel %vm1491, %v1482, %v800
  %v1516 = vsel %vm1491, %v1483, %v802
  %v1517 = vsel %vm1491, %v1484, %v804
  %v1518 = vsel %vm1491, %v1485, %v806
  %v1519 = vsel %vm1491, %v1486, %v808
  %v1520 = vsel %vm1491, %v1487, %v810
  %v1521 = vsel %vm1491, %v1488, %v812
  %v1522 = vsel %vm1491, %v1489, %v814
  %v1523 = vsel %vm1491, %v1490, %v816
  %vm1524 = vcmask 195584
  %v1525 = vsel %vm1524, %v1492, %v850
  %v1526 = vsel %vm1524, %v1493, %v852
  %v1527 = vsel %vm1524, %v1494, %v854
  %v1528 = vsel %vm1524, %v1495, %v856
  %v1529 = vsel %vm1524, %v1496, %v858
  %v1530 = vsel %vm1524, %v1497, %v860
  %v1531 = vsel %vm1524, %v1498, %v862
  %v1532 = vsel %vm1524, %v1499, %v864
  %v1533 = vsel %vm1524, %v1500, %v866
  %v1534 = vsel %vm1524, %v1501, %v868
  %v1535 = vsel %vm1524, %v1502, %v870
  %v1536 = vsel %vm1524, %v1503, %v872
  %v1537 = vsel %vm1524, %v1504, %v874
  %v1538 = vsel %vm1524, %v1505, %v876
  %v1539 = vsel %vm1524, %v1506, %v878
  %v1540 = vsel %vm1524, %v1507, %v880
  %v1541 = vsel %vm1524, %v1508, %v882
  %v1542 = vsel %vm1524, %v1509, %v884
  %v1543 = vsel %vm1524, %v1510, %v886
  %v1544 = vsel %vm1524, %v1511, %v888
  %v1545 = vsel %vm1524, %v1512, %v890
  %v1546 = vsel %vm1524, %v1513, %v892
  %v1547 = vsel %vm1524, %v1514, %v894
  %v1548 = vsel %vm1524, %v1515, %v896
  %v1549 = vsel %vm1524, %v1516, %v898
  %v1550 = vsel %vm1524, %v1517, %v900
  %v1551 = vsel %vm1524, %v1518, %v902
  %v1552 = vsel %vm1524, %v1519, %v904
  %v1553 = vsel %vm1524, %v1520, %v906
  %v1554 = vsel %vm1524, %v1521, %v908
  %v1555 = vsel %vm1524, %v1522, %v910
  %v1556 = vsel %vm1524, %v1523, %v912
  %vm1557 = vcmask 244736
  %v1558 = vsel %vm1557, %v1525, %v946
  %v1559 = vsel %vm1557, %v1526, %v948
  %v1560 = vsel %vm1557, %v1527, %v950
  %v1561 = vsel %vm1557, %v1528, %v952
  %v1562 = vsel %vm1557, %v1529, %v954
  %v1563 = vsel %vm1557, %v1530, %v956
  %v1564 = vsel %vm1557, %v1531, %v958
  %v1565 = vsel %vm1557, %v1532, %v960
  %v1566 = vsel %vm1557, %v1533, %v962
  %v1567 = vsel %vm1557, %v1534, %v964
  %v1568 = vsel %vm1557, %v1535, %v966
  %v1569 = vsel %vm1557, %v1536, %v968
  %v1570 = vsel %vm1557, %v1537, %v970
  %v1571 = vsel %vm1557, %v1538, %v972
  %v1572 = vsel %vm1557, %v1539, %v974
  %v1573 = vsel %vm1557, %v1540, %v976
  %v1574 = vsel %vm1557, %v1541, %v978
  %v1575 = vsel %vm1557, %v1542, %v980
  %v1576 = vsel %vm1557, %v1543, %v982
  %v1577 = vsel %vm1557, %v1544, %v984
  %v1578 = vsel %vm1557, %v1545, %v986
  %v1579 = vsel %vm1557, %v1546, %v988
  %v1580 = vsel %vm1557, %v1547, %v990
  %v1581 = vsel %vm1557, %v1548, %v992
  %v1582 = vsel %vm1557, %v1549, %v994
  %v1583 = vsel %vm1557, %v1550, %v996
  %v1584 = vsel %vm1557, %v1551, %v998
  %v1585 = vsel %vm1557, %v1552, %v1000
  %v1586 = vsel %vm1557, %v1553, %v1002
  %v1587 = vsel %vm1557, %v1554, %v1004
  %v1588 = vsel %vm1557, %v1555, %v1006
  %v1589 = vsel %vm1557, %v1556, %v1008
  %vm1590 = vcmask 293888
  %v1591 = vsel %vm1590, %v1558, %v1042
  %v1592 = vsel %vm1590, %v1559, %v1044
  %v1593 = vsel %vm1590, %v1560, %v1046
  %v1594 = vsel %vm1590, %v1561, %v1048
  %v1595 = vsel %vm1590, %v1562, %v1050
  %v1596 = vsel %vm1590, %v1563, %v1052
  %v1597 = vsel %vm1590, %v1564, %v1054
  %v1598 = vsel %vm1590, %v1565, %v1056
  %v1599 = vsel %vm1590, %v1566, %v1058
  %v1600 = vsel %vm1590, %v1567, %v1060
  %v1601 = vsel %vm1590, %v1568, %v1062
  %v1602 = vsel %vm1590, %v1569, %v1064
  %v1603 = vsel %vm1590, %v1570, %v1066
  %v1604 = vsel %vm1590, %v1571, %v1068
  %v1605 = vsel %vm1590, %v1572, %v1070
  %v1606 = vsel %vm1590, %v1573, %v1072
  %v1607 = vsel %vm1590, %v1574, %v1074
  %v1608 = vsel %vm1590, %v1575, %v1076
  %v1609 = vsel %vm1590, %v1576, %v1078
  %v1610 = vsel %vm1590, %v1577, %v1080
  %v1611 = vsel %vm1590, %v1578, %v1082
  %v1612 = vsel %vm1590, %v1579, %v1084
  %v1613 = vsel %vm1590, %v1580, %v1086
  %v1614 = vsel %vm1590, %v1581, %v1088
  %v1615 = vsel %vm1590, %v1582, %v1090
  %v1616 = vsel %vm1590, %v1583, %v1092
  %v1617 = vsel %vm1590, %v1584, %v1094
  %v1618 = vsel %vm1590, %v1585, %v1096
  %v1619 = vsel %vm1590, %v1586, %v1098
  %v1620 = vsel %vm1590, %v1587, %v1100
  %v1621 = vsel %vm1590, %v1588, %v1102
  %v1622 = vsel %vm1590, %v1589, %v1104
  %vm1623 = vcmask 343040
  %v1624 = vsel %vm1623, %v1591, %v1138
  %v1625 = vsel %vm1623, %v1592, %v1140
  %v1626 = vsel %vm1623, %v1593, %v1142
  %v1627 = vsel %vm1623, %v1594, %v1144
  %v1628 = vsel %vm1623, %v1595, %v1146
  %v1629 = vsel %vm1623, %v1596, %v1148
  %v1630 = vsel %vm1623, %v1597, %v1150
  %v1631 = vsel %vm1623, %v1598, %v1152
  %v1632 = vsel %vm1623, %v1599, %v1154
  %v1633 = vsel %vm1623, %v1600, %v1156
  %v1634 = vsel %vm1623, %v1601, %v1158
  %v1635 = vsel %vm1623, %v1602, %v1160
  %v1636 = vsel %vm1623, %v1603, %v1162
  %v1637 = vsel %vm1623, %v1604, %v1164
  %v1638 = vsel %vm1623, %v1605, %v1166
  %v1639 = vsel %vm1623, %v1606, %v1168
  %v1640 = vsel %vm1623, %v1607, %v1170
  %v1641 = vsel %vm1623, %v1608, %v1172
  %v1642 = vsel %vm1623, %v1609, %v1174
  %v1643 = vsel %vm1623, %v1610, %v1176
  %v1644 = vsel %vm1623, %v1611, %v1178
  %v1645 = vsel %vm1623, %v1612, %v1180
  %v1646 = vsel %vm1623, %v1613, %v1182
  %v1647 = vsel %vm1623, %v1614, %v1184
  %v1648 = vsel %vm1623, %v1615, %v1186
  %v1649 = vsel %vm1623, %v1616, %v1188
  %v1650 = vsel %vm1623, %v1617, %v1190
  %v1651 = vsel %vm1623, %v1618, %v1192
  %v1652 = vsel %vm1623, %v1619, %v1194
  %v1653 = vsel %vm1623, %v1620, %v1196
  %v1654 = vsel %vm1623, %v1621, %v1198
  %v1655 = vsel %vm1623, %v1622, %v1200
  %vm1656 = vcmask 392192
  %v1657 = vsel %vm1656, %v1624, %v1234
  %v1658 = vsel %vm1656, %v1625, %v1236
  %v1659 = vsel %vm1656, %v1626, %v1238
  %v1660 = vsel %vm1656, %v1627, %v1240
  %v1661 = vsel %vm1656, %v1628, %v1242
  %v1662 = vsel %vm1656, %v1629, %v1244
  %v1663 = vsel %vm1656, %v1630, %v1246
  %v1664 = vsel %vm1656, %v1631, %v1248
  %v1665 = vsel %vm1656, %v1632, %v1250
  %v1666 = vsel %vm1656, %v1633, %v1252
  %v1667 = vsel %vm1656, %v1634, %v1254
  %v1668 = vsel %vm1656, %v1635, %v1256
  %v1669 = vsel %vm1656, %v1636, %v1258
  %v1670 = vsel %vm1656, %v1637, %v1260
  %v1671 = vsel %vm1656, %v1638, %v1262
  %v1672 = vsel %vm1656, %v1639, %v1264
  %v1673 = vsel %vm1656, %v1640, %v1266
  %v1674 = vsel %vm1656, %v1641, %v1268
  %v1675 = vsel %vm1656, %v1642, %v1270
  %v1676 = vsel %vm1656, %v1643, %v1272
  %v1677 = vsel %vm1656, %v1644, %v1274
  %v1678 = vsel %vm1656, %v1645, %v1276
  %v1679 = vsel %vm1656, %v1646, %v1278
  %v1680 = vsel %vm1656, %v1647, %v1280
  %v1681 = vsel %vm1656, %v1648, %v1282
  %v1682 = vsel %vm1656, %v1649, %v1284
  %v1683 = vsel %vm1656, %v1650, %v1286
  %v1684 = vsel %vm1656, %v1651, %v1288
  %v1685 = vsel %vm1656, %v1652, %v1290
  %v1686 = vsel %vm1656, %v1653, %v1292
  %v1687 = vsel %vm1656, %v1654, %v1294
  %v1688 = vsel %vm1656, %v1655, %v1296
  %vm1689 = vcmask 441344
  %v1690 = vsel %vm1689, %v1657, %v1330
  %v1691 = vsel %vm1689, %v1658, %v1332
  %v1692 = vsel %vm1689, %v1659, %v1334
  %v1693 = vsel %vm1689, %v1660, %v1336
  %v1694 = vsel %vm1689, %v1661, %v1338
  %v1695 = vsel %vm1689, %v1662, %v1340
  %v1696 = vsel %vm1689, %v1663, %v1342
  %v1697 = vsel %vm1689, %v1664, %v1344
  %v1698 = vsel %vm1689, %v1665, %v1346
  %v1699 = vsel %vm1689, %v1666, %v1348
  %v1700 = vsel %vm1689, %v1667, %v1350
  %v1701 = vsel %vm1689, %v1668, %v1352
  %v1702 = vsel %vm1689, %v1669, %v1354
  %v1703 = vsel %vm1689, %v1670, %v1356
  %v1704 = vsel %vm1689, %v1671, %v1358
  %v1705 = vsel %vm1689, %v1672, %v1360
  %v1706 = vsel %vm1689, %v1673, %v1362
  %v1707 = vsel %vm1689, %v1674, %v1364
  %v1708 = vsel %vm1689, %v1675, %v1366
  %v1709 = vsel %vm1689, %v1676, %v1368
  %v1710 = vsel %vm1689, %v1677, %v1370
  %v1711 = vsel %vm1689, %v1678, %v1372
  %v1712 = vsel %vm1689, %v1679, %v1374
  %v1713 = vsel %vm1689, %v1680, %v1376
  %v1714 = vsel %vm1689, %v1681, %v1378
  %v1715 = vsel %vm1689, %v1682, %v1380
  %v1716 = vsel %vm1689, %v1683, %v1382
  %v1717 = vsel %vm1689, %v1684, %v1384
  %v1718 = vsel %vm1689, %v1685, %v1386
  %v1719 = vsel %vm1689, %v1686, %v1388
  %v1720 = vsel %vm1689, %v1687, %v1390
  %v1721 = vsel %vm1689, %v1688, %v1392
  %v1723 = vlaneseq
  %v1724 = vshrl.u32 %v1723, 7
  %v1725 = vsub.s32 0, %v1724
  %v1726 = vrot.slane %v43, %v1725
  %v1728 = vmul.f32 %v1690, %v1726
  %v1729 = vmul.f32 %v1691, %v1726
  %v1730 = vmul.f32 %v1692, %v1726
  %v1731 = vmul.f32 %v1693, %v1726
  %v1732 = vmul.f32 %v1694, %v1726
  %v1733 = vmul.f32 %v1695, %v1726
  %v1734 = vmul.f32 %v1696, %v1726
  %v1735 = vmul.f32 %v1697, %v1726
  %v1736 = vmul.f32 %v1698, %v1726
  %v1737 = vmul.f32 %v1699, %v1726
  %v1738 = vmul.f32 %v1700, %v1726
  %v1739 = vmul.f32 %v1701, %v1726
  %v1740 = vmul.f32 %v1702, %v1726
  %v1741 = vmul.f32 %v1703, %v1726
  %v1742 = vmul.f32 %v1704, %v1726
  %v1743 = vmul.f32 %v1705, %v1726
  %v1744 = vmul.f32 %v1706, %v1726
  %v1745 = vmul.f32 %v1707, %v1726
  %v1746 = vmul.f32 %v1708, %v1726
  %v1747 = vmul.f32 %v1709, %v1726
  %v1748 = vmul.f32 %v1710, %v1726
  %v1749 = vmul.f32 %v1711, %v1726
  %v1750 = vmul.f32 %v1712, %v1726
  %v1751 = vmul.f32 %v1713, %v1726
  %v1752 = vmul.f32 %v1714, %v1726
  %v1753 = vmul.f32 %v1715, %v1726
  %v1754 = vmul.f32 %v1716, %v1726
  %v1755 = vmul.f32 %v1717, %v1726
  %v1756 = vmul.f32 %v1718, %v1726
  %v1757 = vmul.f32 %v1719, %v1726
  %v1758 = vmul.f32 %v1720, %v1726
  %v1759 = vmul.f32 %v1721, %v1726
  %v1760 = vlaneseq
  %v1761 = vand.u32 %v1760, 127
  %vm1762 = vcmp.lt.s32.totalorder %v1761, 0
  %v1763 = vsub.s32 0, %v1761
  %v1764 = vsel %vm1762, %v1763, %v1761
  %v1765 = vshrl.u32 %v1764, 1
  %v1766 = vand.u32 %v1764, 1
  %v1767 = vsub.s32 0, %v1766
  %v1768 = vsel %vm1762, %v1767, %v1766
  %vm1769 = vcmp.ne.s32.totalorder %v1768, 0
  %vm1770 = vcmp.lt.s32.totalorder %v1768, 0
  %vm1771 = vmand %vm1770, %vm1769
  %v1772 = vadd.s32 %v1768, 2
  %v1773 = vsel %vm1771, %v1772, %v1768
  %vm1774 = vcmp.eq.s32.totalorder %v1773, 0
  %v1775 = vand.u32 2147483647, %v1728
  %vm1776 = vcmp.le.f32.partialorder %v1775, 0.7853982
  %vm1777 = vcmp.lt.s32.totalorder %v1728, 0
  %v1778 = vand.u32 %v1728, 2139095040
  %v1779 = vshrl.u32 %v1778, 23
  %v1780 = vsub.s32 %v1779, 127
  %v1781 = vand.u32 2147483647, %v1728
  %v1782 = vand.u32 %v1781, 8388607
  %v1783 = vor.u32 %v1782, 8388608
  %v1784 = vsub.s32 0, %v1783
  %v1785 = vadd.s32 %v1780, 1
  %vm1786 = vcmp.gt.s32.totalorder %v1785, 0
  %v1787 = vsel %vm1786, %v1785, 0
  %v1788 = vshrl.u32 %v1787, 5
  %v1789 = vand.u32 %v1787, 31
  %v1790 = vsub.s32 32, %v1789
  %v1791 = vshrl.u32 683565275, %v1790
  %v1792 = vshll.u32 683565275, %v1789
  %v1793 = vshrl.u32 2475754826, %v1790
  %v1794 = vor.u32 %v1792, %v1793
  %v1795 = vshll.u32 2475754826, %v1789
  %v1796 = vshrl.u32 2131351028, %v1790
  %v1797 = vor.u32 %v1795, %v1796
  %v1798 = vshll.u32 2131351028, %v1789
  %v1799 = vshrl.u32 2102212464, %v1790
  %v1800 = vor.u32 %v1798, %v1799
  %v1801 = vshll.u32 2102212464, %v1789
  %v1802 = vshrl.u32 920167782, %v1790
  %v1803 = vor.u32 %v1801, %v1802
  %v1804 = vshll.u32 920167782, %v1789
  %v1805 = vshrl.u32 1326507024, %v1790
  %v1806 = vor.u32 %v1804, %v1805
  %vm1807 = vcmp.lt.s32.totalorder %v1788, 1
  %vm1808 = vcmp.lt.s32.totalorder %v1788, 2
  %vm1809 = vcmp.lt.s32.totalorder %v1788, 3
  %vm1810 = vcmp.lt.s32.totalorder %v1788, 4
  %v1811 = vsel %vm1807, %v1791, %v1794
  %v1812 = vsel %vm1810, %v1800, 2102212464
  %v1813 = vsel %vm1809, %v1797, %v1812
  %v1814 = vsel %vm1808, %v1811, %v1813
  %v1815 = vsel %vm1807, %v1794, %v1797
  %v1816 = vsel %vm1810, %v1803, 920167782
  %v1817 = vsel %vm1809, %v1800, %v1816
  %v1818 = vsel %vm1808, %v1815, %v1817
  %v1819 = vsel %vm1807, %v1797, %v1800
  %v1820 = vsel %vm1810, %v1806, 1326507024
  %v1821 = vsel %vm1809, %v1803, %v1820
  %v1822 = vsel %vm1808, %v1819, %v1821
  %v1823 = vshll.u32 %v1783, 8
  %v1824 = vmul.u32.u64.compose %v1823, %v1822
  %v1825 = vextract.low.u32 %v1824
  %v1826 = vextract.high.u32 %v1824
  %v1827 = vmul.u32.u64.compose %v1823, %v1818
  %v1828 = vextract.low.u32 %v1827
  %v1829 = vextract.high.u32 %v1827
  %v1830 = vmul.u32 %v1823, %v1814
  %v1831 = vadd.s32 %v1826, %v1828
  %vm1832 = vc.u32 %v1826, %v1828
  %v1833 = vadd.s32 %v1829, 1
  %v1834 = vsel %vm1832, %v1833, %v1829
  %v1835 = vadd.s32 %v1830, %v1834
  %v1836 = vadd.s32 %v1835, 536870912
  %v1837 = vshrl.u32 %v1836, 30
  %v1838 = vshll.u32 %v1837, 30
  %v1839 = vsub.s32 %v1835, %v1838
  %vm1840 = vcmp.lt.s32.totalorder %v1839, 0
  %v1841 = vsub.s32 0, %v1839
  %v1842 = vsel %vm1840, %v1841, %v1839
  %v1843 = vclz %v1842
  %v1844 = vsub.s32 %v1843, 2
  %vm1845 = vcmp.gt.s32.totalorder 0, %v1844
  %v1846 = vsel %vm1845, 0, %v1844
  %v1847 = vsub.s32 32, %v1846
  %v1848 = vshll.u32 %v1839, %v1846
  %v1849 = vshrl.u32 %v1831, %v1847
  %v1850 = vor.u32 %v1848, %v1849
  %v1851 = vsub.s32 4294967266, %v1846
  %v1852 = vadd.s32 %v1851, 127
  %v1853 = vshll.u32 %v1852, 23
  %v1854 = vor.u32 4788187, %v1853
  %v1855 = vand.u32 2147483647, %v1854
  %v1857 = vcvt.s32.f32 %v1850
  %v1858 = vmul.f32 %v1857, %v1855
  %v1859 = vxor.u32 %v1858, 2147483648
  %v1860 = vsel %vm1777, %v1859, %v1858
  %v1861 = vsub.s32 4, %v1837
  %v1862 = vsel %vm1777, %v1861, %v1837
  %v1863 = vsel %vm1776, %v1728, %v1860
  %v1864 = vsel %vm1776, 0, %v1862
  %v1865 = vcosq.f32.pop %v1863
  %v1866 = vsinq.f32.pop %v1863
  %vm1867 = vweird.f32 %v1728
  %v1868 = vadd.s32 %v1864, 3
  %v1869 = vand.u32 %v1868, 3
  %vm1870 = vcmp.lt.s32.totalorder %v1869, 2
  %vm1871 = vcmp.eq.s32.totalorder %v1869, 0
  %v1872 = vxor.u32 %v1866, 2147483648
  %v1873 = vsel %vm1871, %v1865, %v1872
  %vm1874 = vcmp.eq.s32.totalorder %v1869, 2
  %v1875 = vxor.u32 %v1865, 2147483648
  %v1876 = vsel %vm1874, %v1875, %v1866
  %v1877 = vsel %vm1870, %v1873, %v1876
  %v1878 = vsel %vm1867, nan, %v1877
  %v1879 = vand.u32 2147483647, %v1729
  %vm1880 = vcmp.le.f32.partialorder %v1879, 0.7853982
  %vm1881 = vcmp.lt.s32.totalorder %v1729, 0
  %v1882 = vand.u32 %v1729, 2139095040
  %v1883 = vshrl.u32 %v1882, 23
  %v1884 = vsub.s32 %v1883, 127
  %v1885 = vand.u32 2147483647, %v1729
  %v1886 = vand.u32 %v1885, 8388607
  %v1887 = vor.u32 %v1886, 8388608
  %v1888 = vsub.s32 0, %v1887
  %v1889 = vadd.s32 %v1884, 1
  %vm1890 = vcmp.gt.s32.totalorder %v1889, 0
  %v1891 = vsel %vm1890, %v1889, 0
  %v1892 = vshrl.u32 %v1891, 5
  %v1893 = vand.u32 %v1891, 31
  %v1894 = vsub.s32 32, %v1893
  %v1895 = vshrl.u32 683565275, %v1894
  %v1896 = vshll.u32 683565275, %v1893
  %v1897 = vshrl.u32 2475754826, %v1894
  %v1898 = vor.u32 %v1896, %v1897
  %v1899 = vshll.u32 2475754826, %v1893
  %v1900 = vshrl.u32 2131351028, %v1894
  %v1901 = vor.u32 %v1899, %v1900
  %v1902 = vshll.u32 2131351028, %v1893
  %v1903 = vshrl.u32 2102212464, %v1894
  %v1904 = vor.u32 %v1902, %v1903
  %v1905 = vshll.u32 2102212464, %v1893
  %v1906 = vshrl.u32 920167782, %v1894
  %v1907 = vor.u32 %v1905, %v1906
  %v1908 = vshll.u32 920167782, %v1893
  %v1909 = vshrl.u32 1326507024, %v1894
  %v1910 = vor.u32 %v1908, %v1909
  %vm1911 = vcmp.lt.s32.totalorder %v1892, 1
  %vm1912 = vcmp.lt.s32.totalorder %v1892, 2
  %vm1913 = vcmp.lt.s32.totalorder %v1892, 3
  %vm1914 = vcmp.lt.s32.totalorder %v1892, 4
  %v1915 = vsel %vm1911, %v1895, %v1898
  %v1916 = vsel %vm1914, %v1904, 2102212464
  %v1917 = vsel %vm1913, %v1901, %v1916
  %v1918 = vsel %vm1912, %v1915, %v1917
  %v1919 = vsel %vm1911, %v1898, %v1901
  %v1920 = vsel %vm1914, %v1907, 920167782
  %v1921 = vsel %vm1913, %v1904, %v1920
  %v1922 = vsel %vm1912, %v1919, %v1921
  %v1923 = vsel %vm1911, %v1901, %v1904
  %v1924 = vsel %vm1914, %v1910, 1326507024
  %v1925 = vsel %vm1913, %v1907, %v1924
  %v1926 = vsel %vm1912, %v1923, %v1925
  %v1927 = vshll.u32 %v1887, 8
  %v1928 = vmul.u32.u64.compose %v1927, %v1926
  %v1929 = vextract.low.u32 %v1928
  %v1930 = vextract.high.u32 %v1928
  %v1931 = vmul.u32.u64.compose %v1927, %v1922
  %v1932 = vextract.low.u32 %v1931
  %v1933 = vextract.high.u32 %v1931
  %v1934 = vmul.u32 %v1927, %v1918
  %v1935 = vadd.s32 %v1930, %v1932
  %vm1936 = vc.u32 %v1930, %v1932
  %v1937 = vadd.s32 %v1933, 1
  %v1938 = vsel %vm1936, %v1937, %v1933
  %v1939 = vadd.s32 %v1934, %v1938
  %v1940 = vadd.s32 %v1939, 536870912
  %v1941 = vshrl.u32 %v1940, 30
  %v1942 = vshll.u32 %v1941, 30
  %v1943 = vsub.s32 %v1939, %v1942
  %vm1944 = vcmp.lt.s32.totalorder %v1943, 0
  %v1945 = vsub.s32 0, %v1943
  %v1946 = vsel %vm1944, %v1945, %v1943
  %v1947 = vclz %v1946
  %v1948 = vsub.s32 %v1947, 2
  %vm1949 = vcmp.gt.s32.totalorder 0, %v1948
  %v1950 = vsel %vm1949, 0, %v1948
  %v1951 = vsub.s32 32, %v1950
  %v1952 = vshll.u32 %v1943, %v1950
  %v1953 = vshrl.u32 %v1935, %v1951
  %v1954 = vor.u32 %v1952, %v1953
  %v1955 = vsub.s32 4294967266, %v1950
  %v1956 = vadd.s32 %v1955, 127
  %v1957 = vshll.u32 %v1956, 23
  %v1958 = vor.u32 4788187, %v1957
  %v1959 = vand.u32 2147483647, %v1958
  %v1961 = vcvt.s32.f32 %v1954
  %v1962 = vmul.f32 %v1961, %v1959
  %v1963 = vxor.u32 %v1962, 2147483648
  %v1964 = vsel %vm1881, %v1963, %v1962
  %v1965 = vsub.s32 4, %v1941
  %v1966 = vsel %vm1881, %v1965, %v1941
  %v1967 = vsel %vm1880, %v1729, %v1964
  %v1968 = vsel %vm1880, 0, %v1966
  %v1969 = vcosq.f32.pop %v1967
  %v1970 = vsinq.f32.pop %v1967
  %vm1971 = vweird.f32 %v1729
  %v1972 = vadd.s32 %v1968, 3
  %v1973 = vand.u32 %v1972, 3
  %vm1974 = vcmp.lt.s32.totalorder %v1973, 2
  %vm1975 = vcmp.eq.s32.totalorder %v1973, 0
  %v1976 = vxor.u32 %v1970, 2147483648
  %v1977 = vsel %vm1975, %v1969, %v1976
  %vm1978 = vcmp.eq.s32.totalorder %v1973, 2
  %v1979 = vxor.u32 %v1969, 2147483648
  %v1980 = vsel %vm1978, %v1979, %v1970
  %v1981 = vsel %vm1974, %v1977, %v1980
  %v1982 = vsel %vm1971, nan, %v1981
  %v1983 = vand.u32 2147483647, %v1730
  %vm1984 = vcmp.le.f32.partialorder %v1983, 0.7853982
  %vm1985 = vcmp.lt.s32.totalorder %v1730, 0
  %v1986 = vand.u32 %v1730, 2139095040
  %v1987 = vshrl.u32 %v1986, 23
  %v1988 = vsub.s32 %v1987, 127
  %v1989 = vand.u32 2147483647, %v1730
  %v1990 = vand.u32 %v1989, 8388607
  %v1991 = vor.u32 %v1990, 8388608
  %v1992 = vsub.s32 0, %v1991
  %v1993 = vadd.s32 %v1988, 1
  %vm1994 = vcmp.gt.s32.totalorder %v1993, 0
  %v1995 = vsel %vm1994, %v1993, 0
  %v1996 = vshrl.u32 %v1995, 5
  %v1997 = vand.u32 %v1995, 31
  %v1998 = vsub.s32 32, %v1997
  %v1999 = vshrl.u32 683565275, %v1998
  %v2000 = vshll.u32 683565275, %v1997
  %v2001 = vshrl.u32 2475754826, %v1998
  %v2002 = vor.u32 %v2000, %v2001
  %v2003 = vshll.u32 2475754826, %v1997
  %v2004 = vshrl.u32 2131351028, %v1998
  %v2005 = vor.u32 %v2003, %v2004
  %v2006 = vshll.u32 2131351028, %v1997
  %v2007 = vshrl.u32 2102212464, %v1998
  %v2008 = vor.u32 %v2006, %v2007
  %v2009 = vshll.u32 2102212464, %v1997
  %v2010 = vshrl.u32 920167782, %v1998
  %v2011 = vor.u32 %v2009, %v2010
  %v2012 = vshll.u32 920167782, %v1997
  %v2013 = vshrl.u32 1326507024, %v1998
  %v2014 = vor.u32 %v2012, %v2013
  %vm2015 = vcmp.lt.s32.totalorder %v1996, 1
  %vm2016 = vcmp.lt.s32.totalorder %v1996, 2
  %vm2017 = vcmp.lt.s32.totalorder %v1996, 3
  %vm2018 = vcmp.lt.s32.totalorder %v1996, 4
  %v2019 = vsel %vm2015, %v1999, %v2002
  %v2020 = vsel %vm2018, %v2008, 2102212464
  %v2021 = vsel %vm2017, %v2005, %v2020
  %v2022 = vsel %vm2016, %v2019, %v2021
  %v2023 = vsel %vm2015, %v2002, %v2005
  %v2024 = vsel %vm2018, %v2011, 920167782
  %v2025 = vsel %vm2017, %v2008, %v2024
  %v2026 = vsel %vm2016, %v2023, %v2025
  %v2027 = vsel %vm2015, %v2005, %v2008
  %v2028 = vsel %vm2018, %v2014, 1326507024
  %v2029 = vsel %vm2017, %v2011, %v2028
  %v2030 = vsel %vm2016, %v2027, %v2029
  %v2031 = vshll.u32 %v1991, 8
  %v2032 = vmul.u32.u64.compose %v2031, %v2030
  %v2033 = vextract.low.u32 %v2032
  %v2034 = vextract.high.u32 %v2032
  %v2035 = vmul.u32.u64.compose %v2031, %v2026
  %v2036 = vextract.low.u32 %v2035
  %v2037 = vextract.high.u32 %v2035
  %v2038 = vmul.u32 %v2031, %v2022
  %v2039 = vadd.s32 %v2034, %v2036
  %vm2040 = vc.u32 %v2034, %v2036
  %v2041 = vadd.s32 %v2037, 1
  %v2042 = vsel %vm2040, %v2041, %v2037
  %v2043 = vadd.s32 %v2038, %v2042
  %v2044 = vadd.s32 %v2043, 536870912
  %v2045 = vshrl.u32 %v2044, 30
  %v2046 = vshll.u32 %v2045, 30
  %v2047 = vsub.s32 %v2043, %v2046
  %vm2048 = vcmp.lt.s32.totalorder %v2047, 0
  %v2049 = vsub.s32 0, %v2047
  %v2050 = vsel %vm2048, %v2049, %v2047
  %v2051 = vclz %v2050
  %v2052 = vsub.s32 %v2051, 2
  %vm2053 = vcmp.gt.s32.totalorder 0, %v2052
  %v2054 = vsel %vm2053, 0, %v2052
  %v2055 = vsub.s32 32, %v2054
  %v2056 = vshll.u32 %v2047, %v2054
  %v2057 = vshrl.u32 %v2039, %v2055
  %v2058 = vor.u32 %v2056, %v2057
  %v2059 = vsub.s32 4294967266, %v2054
  %v2060 = vadd.s32 %v2059, 127
  %v2061 = vshll.u32 %v2060, 23
  %v2062 = vor.u32 4788187, %v2061
  %v2063 = vand.u32 2147483647, %v2062
  %v2065 = vcvt.s32.f32 %v2058
  %v2066 = vmul.f32 %v2065, %v2063
  %v2067 = vxor.u32 %v2066, 2147483648
  %v2068 = vsel %vm1985, %v2067, %v2066
  %v2069 = vsub.s32 4, %v2045
  %v2070 = vsel %vm1985, %v2069, %v2045
  %v2071 = vsel %vm1984, %v1730, %v2068
  %v2072 = vsel %vm1984, 0, %v2070
  %v2073 = vcosq.f32.pop %v2071
  %v2074 = vsinq.f32.pop %v2071
  %vm2075 = vweird.f32 %v1730
  %v2076 = vadd.s32 %v2072, 3
  %v2077 = vand.u32 %v2076, 3
  %vm2078 = vcmp.lt.s32.totalorder %v2077, 2
  %vm2079 = vcmp.eq.s32.totalorder %v2077, 0
  %v2080 = vxor.u32 %v2074, 2147483648
  %v2081 = vsel %vm2079, %v2073, %v2080
  %vm2082 = vcmp.eq.s32.totalorder %v2077, 2
  %v2083 = vxor.u32 %v2073, 2147483648
  %v2084 = vsel %vm2082, %v2083, %v2074
  %v2085 = vsel %vm2078, %v2081, %v2084
  %v2086 = vsel %vm2075, nan, %v2085
  %v2087 = vand.u32 2147483647, %v1731
  %vm2088 = vcmp.le.f32.partialorder %v2087, 0.7853982
  %vm2089 = vcmp.lt.s32.totalorder %v1731, 0
  %v2090 = vand.u32 %v1731, 2139095040
  %v2091 = vshrl.u32 %v2090, 23
  %v2092 = vsub.s32 %v2091, 127
  %v2093 = vand.u32 2147483647, %v1731
  %v2094 = vand.u32 %v2093, 8388607
  %v2095 = vor.u32 %v2094, 8388608
  %v2096 = vsub.s32 0, %v2095
  %v2097 = vadd.s32 %v2092, 1
  %vm2098 = vcmp.gt.s32.totalorder %v2097, 0
  %v2099 = vsel %vm2098, %v2097, 0
  %v2100 = vshrl.u32 %v2099, 5
  %v2101 = vand.u32 %v2099, 31
  %v2102 = vsub.s32 32, %v2101
  %v2103 = vshrl.u32 683565275, %v2102
  %v2104 = vshll.u32 683565275, %v2101
  %v2105 = vshrl.u32 2475754826, %v2102
  %v2106 = vor.u32 %v2104, %v2105
  %v2107 = vshll.u32 2475754826, %v2101
  %v2108 = vshrl.u32 2131351028, %v2102
  %v2109 = vor.u32 %v2107, %v2108
  %v2110 = vshll.u32 2131351028, %v2101
  %v2111 = vshrl.u32 2102212464, %v2102
  %v2112 = vor.u32 %v2110, %v2111
  %v2113 = vshll.u32 2102212464, %v2101
  %v2114 = vshrl.u32 920167782, %v2102
  %v2115 = vor.u32 %v2113, %v2114
  %v2116 = vshll.u32 920167782, %v2101
  %v2117 = vshrl.u32 1326507024, %v2102
  %v2118 = vor.u32 %v2116, %v2117
  %vm2119 = vcmp.lt.s32.totalorder %v2100, 1
  %vm2120 = vcmp.lt.s32.totalorder %v2100, 2
  %vm2121 = vcmp.lt.s32.totalorder %v2100, 3
  %vm2122 = vcmp.lt.s32.totalorder %v2100, 4
  %v2123 = vsel %vm2119, %v2103, %v2106
  %v2124 = vsel %vm2122, %v2112, 2102212464
  %v2125 = vsel %vm2121, %v2109, %v2124
  %v2126 = vsel %vm2120, %v2123, %v2125
  %v2127 = vsel %vm2119, %v2106, %v2109
  %v2128 = vsel %vm2122, %v2115, 920167782
  %v2129 = vsel %vm2121, %v2112, %v2128
  %v2130 = vsel %vm2120, %v2127, %v2129
  %v2131 = vsel %vm2119, %v2109, %v2112
  %v2132 = vsel %vm2122, %v2118, 1326507024
  %v2133 = vsel %vm2121, %v2115, %v2132
  %v2134 = vsel %vm2120, %v2131, %v2133
  %v2135 = vshll.u32 %v2095, 8
  %v2136 = vmul.u32.u64.compose %v2135, %v2134
  %v2137 = vextract.low.u32 %v2136
  %v2138 = vextract.high.u32 %v2136
  %v2139 = vmul.u32.u64.compose %v2135, %v2130
  %v2140 = vextract.low.u32 %v2139
  %v2141 = vextract.high.u32 %v2139
  %v2142 = vmul.u32 %v2135, %v2126
  %v2143 = vadd.s32 %v2138, %v2140
  %vm2144 = vc.u32 %v2138, %v2140
  %v2145 = vadd.s32 %v2141, 1
  %v2146 = vsel %vm2144, %v2145, %v2141
  %v2147 = vadd.s32 %v2142, %v2146
  %v2148 = vadd.s32 %v2147, 536870912
  %v2149 = vshrl.u32 %v2148, 30
  %v2150 = vshll.u32 %v2149, 30
  %v2151 = vsub.s32 %v2147, %v2150
  %vm2152 = vcmp.lt.s32.totalorder %v2151, 0
  %v2153 = vsub.s32 0, %v2151
  %v2154 = vsel %vm2152, %v2153, %v2151
  %v2155 = vclz %v2154
  %v2156 = vsub.s32 %v2155, 2
  %vm2157 = vcmp.gt.s32.totalorder 0, %v2156
  %v2158 = vsel %vm2157, 0, %v2156
  %v2159 = vsub.s32 32, %v2158
  %v2160 = vshll.u32 %v2151, %v2158
  %v2161 = vshrl.u32 %v2143, %v2159
  %v2162 = vor.u32 %v2160, %v2161
  %v2163 = vsub.s32 4294967266, %v2158
  %v2164 = vadd.s32 %v2163, 127
  %v2165 = vshll.u32 %v2164, 23
  %v2166 = vor.u32 4788187, %v2165
  %v2167 = vand.u32 2147483647, %v2166
  %v2169 = vcvt.s32.f32 %v2162
  %v2170 = vmul.f32 %v2169, %v2167
  %v2171 = vxor.u32 %v2170, 2147483648
  %v2172 = vsel %vm2089, %v2171, %v2170
  %v2173 = vsub.s32 4, %v2149
  %v2174 = vsel %vm2089, %v2173, %v2149
  %v2175 = vsel %vm2088, %v1731, %v2172
  %v2176 = vsel %vm2088, 0, %v2174
  %v2177 = vcosq.f32.pop %v2175
  %v2178 = vsinq.f32.pop %v2175
  %vm2179 = vweird.f32 %v1731
  %v2180 = vadd.s32 %v2176, 3
  %v2181 = vand.u32 %v2180, 3
  %vm2182 = vcmp.lt.s32.totalorder %v2181, 2
  %vm2183 = vcmp.eq.s32.totalorder %v2181, 0
  %v2184 = vxor.u32 %v2178, 2147483648
  %v2185 = vsel %vm2183, %v2177, %v2184
  %vm2186 = vcmp.eq.s32.totalorder %v2181, 2
  %v2187 = vxor.u32 %v2177, 2147483648
  %v2188 = vsel %vm2186, %v2187, %v2178
  %v2189 = vsel %vm2182, %v2185, %v2188
  %v2190 = vsel %vm2179, nan, %v2189
  %v2191 = vand.u32 2147483647, %v1732
  %vm2192 = vcmp.le.f32.partialorder %v2191, 0.7853982
  %vm2193 = vcmp.lt.s32.totalorder %v1732, 0
  %v2194 = vand.u32 %v1732, 2139095040
  %v2195 = vshrl.u32 %v2194, 23
  %v2196 = vsub.s32 %v2195, 127
  %v2197 = vand.u32 2147483647, %v1732
  %v2198 = vand.u32 %v2197, 8388607
  %v2199 = vor.u32 %v2198, 8388608
  %v2200 = vsub.s32 0, %v2199
  %v2201 = vadd.s32 %v2196, 1
  %vm2202 = vcmp.gt.s32.totalorder %v2201, 0
  %v2203 = vsel %vm2202, %v2201, 0
  %v2204 = vshrl.u32 %v2203, 5
  %v2205 = vand.u32 %v2203, 31
  %v2206 = vsub.s32 32, %v2205
  %v2207 = vshrl.u32 683565275, %v2206
  %v2208 = vshll.u32 683565275, %v2205
  %v2209 = vshrl.u32 2475754826, %v2206
  %v2210 = vor.u32 %v2208, %v2209
  %v2211 = vshll.u32 2475754826, %v2205
  %v2212 = vshrl.u32 2131351028, %v2206
  %v2213 = vor.u32 %v2211, %v2212
  %v2214 = vshll.u32 2131351028, %v2205
  %v2215 = vshrl.u32 2102212464, %v2206
  %v2216 = vor.u32 %v2214, %v2215
  %v2217 = vshll.u32 2102212464, %v2205
  %v2218 = vshrl.u32 920167782, %v2206
  %v2219 = vor.u32 %v2217, %v2218
  %v2220 = vshll.u32 920167782, %v2205
  %v2221 = vshrl.u32 1326507024, %v2206
  %v2222 = vor.u32 %v2220, %v2221
  %vm2223 = vcmp.lt.s32.totalorder %v2204, 1
  %vm2224 = vcmp.lt.s32.totalorder %v2204, 2
  %vm2225 = vcmp.lt.s32.totalorder %v2204, 3
  %vm2226 = vcmp.lt.s32.totalorder %v2204, 4
  %v2227 = vsel %vm2223, %v2207, %v2210
  %v2228 = vsel %vm2226, %v2216, 2102212464
  %v2229 = vsel %vm2225, %v2213, %v2228
  %v2230 = vsel %vm2224, %v2227, %v2229
  %v2231 = vsel %vm2223, %v2210, %v2213
  %v2232 = vsel %vm2226, %v2219, 920167782
  %v2233 = vsel %vm2225, %v2216, %v2232
  %v2234 = vsel %vm2224, %v2231, %v2233
  %v2235 = vsel %vm2223, %v2213, %v2216
  %v2236 = vsel %vm2226, %v2222, 1326507024
  %v2237 = vsel %vm2225, %v2219, %v2236
  %v2238 = vsel %vm2224, %v2235, %v2237
  %v2239 = vshll.u32 %v2199, 8
  %v2240 = vmul.u32.u64.compose %v2239, %v2238
  %v2241 = vextract.low.u32 %v2240
  %v2242 = vextract.high.u32 %v2240
  %v2243 = vmul.u32.u64.compose %v2239, %v2234
  %v2244 = vextract.low.u32 %v2243
  %v2245 = vextract.high.u32 %v2243
  %v2246 = vmul.u32 %v2239, %v2230
  %v2247 = vadd.s32 %v2242, %v2244
  %vm2248 = vc.u32 %v2242, %v2244
  %v2249 = vadd.s32 %v2245, 1
  %v2250 = vsel %vm2248, %v2249, %v2245
  %v2251 = vadd.s32 %v2246, %v2250
  %v2252 = vadd.s32 %v2251, 536870912
  %v2253 = vshrl.u32 %v2252, 30
  %v2254 = vshll.u32 %v2253, 30
  %v2255 = vsub.s32 %v2251, %v2254
  %vm2256 = vcmp.lt.s32.totalorder %v2255, 0
  %v2257 = vsub.s32 0, %v2255
  %v2258 = vsel %vm2256, %v2257, %v2255
  %v2259 = vclz %v2258
  %v2260 = vsub.s32 %v2259, 2
  %vm2261 = vcmp.gt.s32.totalorder 0, %v2260
  %v2262 = vsel %vm2261, 0, %v2260
  %v2263 = vsub.s32 32, %v2262
  %v2264 = vshll.u32 %v2255, %v2262
  %v2265 = vshrl.u32 %v2247, %v2263
  %v2266 = vor.u32 %v2264, %v2265
  %v2267 = vsub.s32 4294967266, %v2262
  %v2268 = vadd.s32 %v2267, 127
  %v2269 = vshll.u32 %v2268, 23
  %v2270 = vor.u32 4788187, %v2269
  %v2271 = vand.u32 2147483647, %v2270
  %v2273 = vcvt.s32.f32 %v2266
  %v2274 = vmul.f32 %v2273, %v2271
  %v2275 = vxor.u32 %v2274, 2147483648
  %v2276 = vsel %vm2193, %v2275, %v2274
  %v2277 = vsub.s32 4, %v2253
  %v2278 = vsel %vm2193, %v2277, %v2253
  %v2279 = vsel %vm2192, %v1732, %v2276
  %v2280 = vsel %vm2192, 0, %v2278
  %v2281 = vcosq.f32.pop %v2279
  %v2282 = vsinq.f32.pop %v2279
  %vm2283 = vweird.f32 %v1732
  %v2284 = vadd.s32 %v2280, 3
  %v2285 = vand.u32 %v2284, 3
  %vm2286 = vcmp.lt.s32.totalorder %v2285, 2
  %vm2287 = vcmp.eq.s32.totalorder %v2285, 0
  %v2288 = vxor.u32 %v2282, 2147483648
  %v2289 = vsel %vm2287, %v2281, %v2288
  %vm2290 = vcmp.eq.s32.totalorder %v2285, 2
  %v2291 = vxor.u32 %v2281, 2147483648
  %v2292 = vsel %vm2290, %v2291, %v2282
  %v2293 = vsel %vm2286, %v2289, %v2292
  %v2294 = vsel %vm2283, nan, %v2293
  %v2295 = vand.u32 2147483647, %v1733
  %vm2296 = vcmp.le.f32.partialorder %v2295, 0.7853982
  %vm2297 = vcmp.lt.s32.totalorder %v1733, 0
  %v2298 = vand.u32 %v1733, 2139095040
  %v2299 = vshrl.u32 %v2298, 23
  %v2300 = vsub.s32 %v2299, 127
  %v2301 = vand.u32 2147483647, %v1733
  %v2302 = vand.u32 %v2301, 8388607
  %v2303 = vor.u32 %v2302, 8388608
  %v2304 = vsub.s32 0, %v2303
  %v2305 = vadd.s32 %v2300, 1
  %vm2306 = vcmp.gt.s32.totalorder %v2305, 0
  %v2307 = vsel %vm2306, %v2305, 0
  %v2308 = vshrl.u32 %v2307, 5
  %v2309 = vand.u32 %v2307, 31
  %v2310 = vsub.s32 32, %v2309
  %v2311 = vshrl.u32 683565275, %v2310
  %v2312 = vshll.u32 683565275, %v2309
  %v2313 = vshrl.u32 2475754826, %v2310
  %v2314 = vor.u32 %v2312, %v2313
  %v2315 = vshll.u32 2475754826, %v2309
  %v2316 = vshrl.u32 2131351028, %v2310
  %v2317 = vor.u32 %v2315, %v2316
  %v2318 = vshll.u32 2131351028, %v2309
  %v2319 = vshrl.u32 2102212464, %v2310
  %v2320 = vor.u32 %v2318, %v2319
  %v2321 = vshll.u32 2102212464, %v2309
  %v2322 = vshrl.u32 920167782, %v2310
  %v2323 = vor.u32 %v2321, %v2322
  %v2324 = vshll.u32 920167782, %v2309
  %v2325 = vshrl.u32 1326507024, %v2310
  %v2326 = vor.u32 %v2324, %v2325
  %vm2327 = vcmp.lt.s32.totalorder %v2308, 1
  %vm2328 = vcmp.lt.s32.totalorder %v2308, 2
  %vm2329 = vcmp.lt.s32.totalorder %v2308, 3
  %vm2330 = vcmp.lt.s32.totalorder %v2308, 4
  %v2331 = vsel %vm2327, %v2311, %v2314
  %v2332 = vsel %vm2330, %v2320, 2102212464
  %v2333 = vsel %vm2329, %v2317, %v2332
  %v2334 = vsel %vm2328, %v2331, %v2333
  %v2335 = vsel %vm2327, %v2314, %v2317
  %v2336 = vsel %vm2330, %v2323, 920167782
  %v2337 = vsel %vm2329, %v2320, %v2336
  %v2338 = vsel %vm2328, %v2335, %v2337
  %v2339 = vsel %vm2327, %v2317, %v2320
  %v2340 = vsel %vm2330, %v2326, 1326507024
  %v2341 = vsel %vm2329, %v2323, %v2340
  %v2342 = vsel %vm2328, %v2339, %v2341
  %v2343 = vshll.u32 %v2303, 8
  %v2344 = vmul.u32.u64.compose %v2343, %v2342
  %v2345 = vextract.low.u32 %v2344
  %v2346 = vextract.high.u32 %v2344
  %v2347 = vmul.u32.u64.compose %v2343, %v2338
  %v2348 = vextract.low.u32 %v2347
  %v2349 = vextract.high.u32 %v2347
  %v2350 = vmul.u32 %v2343, %v2334
  %v2351 = vadd.s32 %v2346, %v2348
  %vm2352 = vc.u32 %v2346, %v2348
  %v2353 = vadd.s32 %v2349, 1
  %v2354 = vsel %vm2352, %v2353, %v2349
  %v2355 = vadd.s32 %v2350, %v2354
  %v2356 = vadd.s32 %v2355, 536870912
  %v2357 = vshrl.u32 %v2356, 30
  %v2358 = vshll.u32 %v2357, 30
  %v2359 = vsub.s32 %v2355, %v2358
  %vm2360 = vcmp.lt.s32.totalorder %v2359, 0
  %v2361 = vsub.s32 0, %v2359
  %v2362 = vsel %vm2360, %v2361, %v2359
  %v2363 = vclz %v2362
  %v2364 = vsub.s32 %v2363, 2
  %vm2365 = vcmp.gt.s32.totalorder 0, %v2364
  %v2366 = vsel %vm2365, 0, %v2364
  %v2367 = vsub.s32 32, %v2366
  %v2368 = vshll.u32 %v2359, %v2366
  %v2369 = vshrl.u32 %v2351, %v2367
  %v2370 = vor.u32 %v2368, %v2369
  %v2371 = vsub.s32 4294967266, %v2366
  %v2372 = vadd.s32 %v2371, 127
  %v2373 = vshll.u32 %v2372, 23
  %v2374 = vor.u32 4788187, %v2373
  %v2375 = vand.u32 2147483647, %v2374
  %v2377 = vcvt.s32.f32 %v2370
  %v2378 = vmul.f32 %v2377, %v2375
  %v2379 = vxor.u32 %v2378, 2147483648
  %v2380 = vsel %vm2297, %v2379, %v2378
  %v2381 = vsub.s32 4, %v2357
  %v2382 = vsel %vm2297, %v2381, %v2357
  %v2383 = vsel %vm2296, %v1733, %v2380
  %v2384 = vsel %vm2296, 0, %v2382
  %v2385 = vcosq.f32.pop %v2383
  %v2386 = vsinq.f32.pop %v2383
  %vm2387 = vweird.f32 %v1733
  %v2388 = vadd.s32 %v2384, 3
  %v2389 = vand.u32 %v2388, 3
  %vm2390 = vcmp.lt.s32.totalorder %v2389, 2
  %vm2391 = vcmp.eq.s32.totalorder %v2389, 0
  %v2392 = vxor.u32 %v2386, 2147483648
  %v2393 = vsel %vm2391, %v2385, %v2392
  %vm2394 = vcmp.eq.s32.totalorder %v2389, 2
  %v2395 = vxor.u32 %v2385, 2147483648
  %v2396 = vsel %vm2394, %v2395, %v2386
  %v2397 = vsel %vm2390, %v2393, %v2396
  %v2398 = vsel %vm2387, nan, %v2397
  %v2399 = vand.u32 2147483647, %v1734
  %vm2400 = vcmp.le.f32.partialorder %v2399, 0.7853982
  %vm2401 = vcmp.lt.s32.totalorder %v1734, 0
  %v2402 = vand.u32 %v1734, 2139095040
  %v2403 = vshrl.u32 %v2402, 23
  %v2404 = vsub.s32 %v2403, 127
  %v2405 = vand.u32 2147483647, %v1734
  %v2406 = vand.u32 %v2405, 8388607
  %v2407 = vor.u32 %v2406, 8388608
  %v2408 = vsub.s32 0, %v2407
  %v2409 = vadd.s32 %v2404, 1
  %vm2410 = vcmp.gt.s32.totalorder %v2409, 0
  %v2411 = vsel %vm2410, %v2409, 0
  %v2412 = vshrl.u32 %v2411, 5
  %v2413 = vand.u32 %v2411, 31
  %v2414 = vsub.s32 32, %v2413
  %v2415 = vshrl.u32 683565275, %v2414
  %v2416 = vshll.u32 683565275, %v2413
  %v2417 = vshrl.u32 2475754826, %v2414
  %v2418 = vor.u32 %v2416, %v2417
  %v2419 = vshll.u32 2475754826, %v2413
  %v2420 = vshrl.u32 2131351028, %v2414
  %v2421 = vor.u32 %v2419, %v2420
  %v2422 = vshll.u32 2131351028, %v2413
  %v2423 = vshrl.u32 2102212464, %v2414
  %v2424 = vor.u32 %v2422, %v2423
  %v2425 = vshll.u32 2102212464, %v2413
  %v2426 = vshrl.u32 920167782, %v2414
  %v2427 = vor.u32 %v2425, %v2426
  %v2428 = vshll.u32 920167782, %v2413
  %v2429 = vshrl.u32 1326507024, %v2414
  %v2430 = vor.u32 %v2428, %v2429
  %vm2431 = vcmp.lt.s32.totalorder %v2412, 1
  %vm2432 = vcmp.lt.s32.totalorder %v2412, 2
  %vm2433 = vcmp.lt.s32.totalorder %v2412, 3
  %vm2434 = vcmp.lt.s32.totalorder %v2412, 4
  %v2435 = vsel %vm2431, %v2415, %v2418
  %v2436 = vsel %vm2434, %v2424, 2102212464
  %v2437 = vsel %vm2433, %v2421, %v2436
  %v2438 = vsel %vm2432, %v2435, %v2437
  %v2439 = vsel %vm2431, %v2418, %v2421
  %v2440 = vsel %vm2434, %v2427, 920167782
  %v2441 = vsel %vm2433, %v2424, %v2440
  %v2442 = vsel %vm2432, %v2439, %v2441
  %v2443 = vsel %vm2431, %v2421, %v2424
  %v2444 = vsel %vm2434, %v2430, 1326507024
  %v2445 = vsel %vm2433, %v2427, %v2444
  %v2446 = vsel %vm2432, %v2443, %v2445
  %v2447 = vshll.u32 %v2407, 8
  %v2448 = vmul.u32.u64.compose %v2447, %v2446
  %v2449 = vextract.low.u32 %v2448
  %v2450 = vextract.high.u32 %v2448
  %v2451 = vmul.u32.u64.compose %v2447, %v2442
  %v2452 = vextract.low.u32 %v2451
  %v2453 = vextract.high.u32 %v2451
  %v2454 = vmul.u32 %v2447, %v2438
  %v2455 = vadd.s32 %v2450, %v2452
  %vm2456 = vc.u32 %v2450, %v2452
  %v2457 = vadd.s32 %v2453, 1
  %v2458 = vsel %vm2456, %v2457, %v2453
  %v2459 = vadd.s32 %v2454, %v2458
  %v2460 = vadd.s32 %v2459, 536870912
  %v2461 = vshrl.u32 %v2460, 30
  %v2462 = vshll.u32 %v2461, 30
  %v2463 = vsub.s32 %v2459, %v2462
  %vm2464 = vcmp.lt.s32.totalorder %v2463, 0
  %v2465 = vsub.s32 0, %v2463
  %v2466 = vsel %vm2464, %v2465, %v2463
  %v2467 = vclz %v2466
  %v2468 = vsub.s32 %v2467, 2
  %vm2469 = vcmp.gt.s32.totalorder 0, %v2468
  %v2470 = vsel %vm2469, 0, %v2468
  %v2471 = vsub.s32 32, %v2470
  %v2472 = vshll.u32 %v2463, %v2470
  %v2473 = vshrl.u32 %v2455, %v2471
  %v2474 = vor.u32 %v2472, %v2473
  %v2475 = vsub.s32 4294967266, %v2470
  %v2476 = vadd.s32 %v2475, 127
  %v2477 = vshll.u32 %v2476, 23
  %v2478 = vor.u32 4788187, %v2477
  %v2479 = vand.u32 2147483647, %v2478
  %v2481 = vcvt.s32.f32 %v2474
  %v2482 = vmul.f32 %v2481, %v2479
  %v2483 = vxor.u32 %v2482, 2147483648
  %v2484 = vsel %vm2401, %v2483, %v2482
  %v2485 = vsub.s32 4, %v2461
  %v2486 = vsel %vm2401, %v2485, %v2461
  %v2487 = vsel %vm2400, %v1734, %v2484
  %v2488 = vsel %vm2400, 0, %v2486
  %v2489 = vcosq.f32.pop %v2487
  %v2490 = vsinq.f32.pop %v2487
  %vm2491 = vweird.f32 %v1734
  %v2492 = vadd.s32 %v2488, 3
  %v2493 = vand.u32 %v2492, 3
  %vm2494 = vcmp.lt.s32.totalorder %v2493, 2
  %vm2495 = vcmp.eq.s32.totalorder %v2493, 0
  %v2496 = vxor.u32 %v2490, 2147483648
  %v2497 = vsel %vm2495, %v2489, %v2496
  %vm2498 = vcmp.eq.s32.totalorder %v2493, 2
  %v2499 = vxor.u32 %v2489, 2147483648
  %v2500 = vsel %vm2498, %v2499, %v2490
  %v2501 = vsel %vm2494, %v2497, %v2500
  %v2502 = vsel %vm2491, nan, %v2501
  %v2503 = vand.u32 2147483647, %v1735
  %vm2504 = vcmp.le.f32.partialorder %v2503, 0.7853982
  %vm2505 = vcmp.lt.s32.totalorder %v1735, 0
  %v2506 = vand.u32 %v1735, 2139095040
  %v2507 = vshrl.u32 %v2506, 23
  %v2508 = vsub.s32 %v2507, 127
  %v2509 = vand.u32 2147483647, %v1735
  %v2510 = vand.u32 %v2509, 8388607
  %v2511 = vor.u32 %v2510, 8388608
  %v2512 = vsub.s32 0, %v2511
  %v2513 = vadd.s32 %v2508, 1
  %vm2514 = vcmp.gt.s32.totalorder %v2513, 0
  %v2515 = vsel %vm2514, %v2513, 0
  %v2516 = vshrl.u32 %v2515, 5
  %v2517 = vand.u32 %v2515, 31
  %v2518 = vsub.s32 32, %v2517
  %v2519 = vshrl.u32 683565275, %v2518
  %v2520 = vshll.u32 683565275, %v2517
  %v2521 = vshrl.u32 2475754826, %v2518
  %v2522 = vor.u32 %v2520, %v2521
  %v2523 = vshll.u32 2475754826, %v2517
  %v2524 = vshrl.u32 2131351028, %v2518
  %v2525 = vor.u32 %v2523, %v2524
  %v2526 = vshll.u32 2131351028, %v2517
  %v2527 = vshrl.u32 2102212464, %v2518
  %v2528 = vor.u32 %v2526, %v2527
  %v2529 = vshll.u32 2102212464, %v2517
  %v2530 = vshrl.u32 920167782, %v2518
  %v2531 = vor.u32 %v2529, %v2530
  %v2532 = vshll.u32 920167782, %v2517
  %v2533 = vshrl.u32 1326507024, %v2518
  %v2534 = vor.u32 %v2532, %v2533
  %vm2535 = vcmp.lt.s32.totalorder %v2516, 1
  %vm2536 = vcmp.lt.s32.totalorder %v2516, 2
  %vm2537 = vcmp.lt.s32.totalorder %v2516, 3
  %vm2538 = vcmp.lt.s32.totalorder %v2516, 4
  %v2539 = vsel %vm2535, %v2519, %v2522
  %v2540 = vsel %vm2538, %v2528, 2102212464
  %v2541 = vsel %vm2537, %v2525, %v2540
  %v2542 = vsel %vm2536, %v2539, %v2541
  %v2543 = vsel %vm2535, %v2522, %v2525
  %v2544 = vsel %vm2538, %v2531, 920167782
  %v2545 = vsel %vm2537, %v2528, %v2544
  %v2546 = vsel %vm2536, %v2543, %v2545
  %v2547 = vsel %vm2535, %v2525, %v2528
  %v2548 = vsel %vm2538, %v2534, 1326507024
  %v2549 = vsel %vm2537, %v2531, %v2548
  %v2550 = vsel %vm2536, %v2547, %v2549
  %v2551 = vshll.u32 %v2511, 8
  %v2552 = vmul.u32.u64.compose %v2551, %v2550
  %v2553 = vextract.low.u32 %v2552
  %v2554 = vextract.high.u32 %v2552
  %v2555 = vmul.u32.u64.compose %v2551, %v2546
  %v2556 = vextract.low.u32 %v2555
  %v2557 = vextract.high.u32 %v2555
  %v2558 = vmul.u32 %v2551, %v2542
  %v2559 = vadd.s32 %v2554, %v2556
  %vm2560 = vc.u32 %v2554, %v2556
  %v2561 = vadd.s32 %v2557, 1
  %v2562 = vsel %vm2560, %v2561, %v2557
  %v2563 = vadd.s32 %v2558, %v2562
  %v2564 = vadd.s32 %v2563, 536870912
  %v2565 = vshrl.u32 %v2564, 30
  %v2566 = vshll.u32 %v2565, 30
  %v2567 = vsub.s32 %v2563, %v2566
  %vm2568 = vcmp.lt.s32.totalorder %v2567, 0
  %v2569 = vsub.s32 0, %v2567
  %v2570 = vsel %vm2568, %v2569, %v2567
  %v2571 = vclz %v2570
  %v2572 = vsub.s32 %v2571, 2
  %vm2573 = vcmp.gt.s32.totalorder 0, %v2572
  %v2574 = vsel %vm2573, 0, %v2572
  %v2575 = vsub.s32 32, %v2574
  %v2576 = vshll.u32 %v2567, %v2574
  %v2577 = vshrl.u32 %v2559, %v2575
  %v2578 = vor.u32 %v2576, %v2577
  %v2579 = vsub.s32 4294967266, %v2574
  %v2580 = vadd.s32 %v2579, 127
  %v2581 = vshll.u32 %v2580, 23
  %v2582 = vor.u32 4788187, %v2581
  %v2583 = vand.u32 2147483647, %v2582
  %v2585 = vcvt.s32.f32 %v2578
  %v2586 = vmul.f32 %v2585, %v2583
  %v2587 = vxor.u32 %v2586, 2147483648
  %v2588 = vsel %vm2505, %v2587, %v2586
  %v2589 = vsub.s32 4, %v2565
  %v2590 = vsel %vm2505, %v2589, %v2565
  %v2591 = vsel %vm2504, %v1735, %v2588
  %v2592 = vsel %vm2504, 0, %v2590
  %v2593 = vcosq.f32.pop %v2591
  %v2594 = vsinq.f32.pop %v2591
  %vm2595 = vweird.f32 %v1735
  %v2596 = vadd.s32 %v2592, 3
  %v2597 = vand.u32 %v2596, 3
  %vm2598 = vcmp.lt.s32.totalorder %v2597, 2
  %vm2599 = vcmp.eq.s32.totalorder %v2597, 0
  %v2600 = vxor.u32 %v2594, 2147483648
  %v2601 = vsel %vm2599, %v2593, %v2600
  %vm2602 = vcmp.eq.s32.totalorder %v2597, 2
  %v2603 = vxor.u32 %v2593, 2147483648
  %v2604 = vsel %vm2602, %v2603, %v2594
  %v2605 = vsel %vm2598, %v2601, %v2604
  %v2606 = vsel %vm2595, nan, %v2605
  %v2607 = vand.u32 2147483647, %v1736
  %vm2608 = vcmp.le.f32.partialorder %v2607, 0.7853982
  %vm2609 = vcmp.lt.s32.totalorder %v1736, 0
  %v2610 = vand.u32 %v1736, 2139095040
  %v2611 = vshrl.u32 %v2610, 23
  %v2612 = vsub.s32 %v2611, 127
  %v2613 = vand.u32 2147483647, %v1736
  %v2614 = vand.u32 %v2613, 8388607
  %v2615 = vor.u32 %v2614, 8388608
  %v2616 = vsub.s32 0, %v2615
  %v2617 = vadd.s32 %v2612, 1
  %vm2618 = vcmp.gt.s32.totalorder %v2617, 0
  %v2619 = vsel %vm2618, %v2617, 0
  %v2620 = vshrl.u32 %v2619, 5
  %v2621 = vand.u32 %v2619, 31
  %v2622 = vsub.s32 32, %v2621
  %v2623 = vshrl.u32 683565275, %v2622
  %v2624 = vshll.u32 683565275, %v2621
  %v2625 = vshrl.u32 2475754826, %v2622
  %v2626 = vor.u32 %v2624, %v2625
  %v2627 = vshll.u32 2475754826, %v2621
  %v2628 = vshrl.u32 2131351028, %v2622
  %v2629 = vor.u32 %v2627, %v2628
  %v2630 = vshll.u32 2131351028, %v2621
  %v2631 = vshrl.u32 2102212464, %v2622
  %v2632 = vor.u32 %v2630, %v2631
  %v2633 = vshll.u32 2102212464, %v2621
  %v2634 = vshrl.u32 920167782, %v2622
  %v2635 = vor.u32 %v2633, %v2634
  %v2636 = vshll.u32 920167782, %v2621
  %v2637 = vshrl.u32 1326507024, %v2622
  %v2638 = vor.u32 %v2636, %v2637
  %vm2639 = vcmp.lt.s32.totalorder %v2620, 1
  %vm2640 = vcmp.lt.s32.totalorder %v2620, 2
  %vm2641 = vcmp.lt.s32.totalorder %v2620, 3
  %vm2642 = vcmp.lt.s32.totalorder %v2620, 4
  %v2643 = vsel %vm2639, %v2623, %v2626
  %v2644 = vsel %vm2642, %v2632, 2102212464
  %v2645 = vsel %vm2641, %v2629, %v2644
  %v2646 = vsel %vm2640, %v2643, %v2645
  %v2647 = vsel %vm2639, %v2626, %v2629
  %v2648 = vsel %vm2642, %v2635, 920167782
  %v2649 = vsel %vm2641, %v2632, %v2648
  %v2650 = vsel %vm2640, %v2647, %v2649
  %v2651 = vsel %vm2639, %v2629, %v2632
  %v2652 = vsel %vm2642, %v2638, 1326507024
  %v2653 = vsel %vm2641, %v2635, %v2652
  %v2654 = vsel %vm2640, %v2651, %v2653
  %v2655 = vshll.u32 %v2615, 8
  %v2656 = vmul.u32.u64.compose %v2655, %v2654
  %v2657 = vextract.low.u32 %v2656
  %v2658 = vextract.high.u32 %v2656
  %v2659 = vmul.u32.u64.compose %v2655, %v2650
  %v2660 = vextract.low.u32 %v2659
  %v2661 = vextract.high.u32 %v2659
  %v2662 = vmul.u32 %v2655, %v2646
  %v2663 = vadd.s32 %v2658, %v2660
  %vm2664 = vc.u32 %v2658, %v2660
  %v2665 = vadd.s32 %v2661, 1
  %v2666 = vsel %vm2664, %v2665, %v2661
  %v2667 = vadd.s32 %v2662, %v2666
  %v2668 = vadd.s32 %v2667, 536870912
  %v2669 = vshrl.u32 %v2668, 30
  %v2670 = vshll.u32 %v2669, 30
  %v2671 = vsub.s32 %v2667, %v2670
  %vm2672 = vcmp.lt.s32.totalorder %v2671, 0
  %v2673 = vsub.s32 0, %v2671
  %v2674 = vsel %vm2672, %v2673, %v2671
  %v2675 = vclz %v2674
  %v2676 = vsub.s32 %v2675, 2
  %vm2677 = vcmp.gt.s32.totalorder 0, %v2676
  %v2678 = vsel %vm2677, 0, %v2676
  %v2679 = vsub.s32 32, %v2678
  %v2680 = vshll.u32 %v2671, %v2678
  %v2681 = vshrl.u32 %v2663, %v2679
  %v2682 = vor.u32 %v2680, %v2681
  %v2683 = vsub.s32 4294967266, %v2678
  %v2684 = vadd.s32 %v2683, 127
  %v2685 = vshll.u32 %v2684, 23
  %v2686 = vor.u32 4788187, %v2685
  %v2687 = vand.u32 2147483647, %v2686
  %v2689 = vcvt.s32.f32 %v2682
  %v2690 = vmul.f32 %v2689, %v2687
  %v2691 = vxor.u32 %v2690, 2147483648
  %v2692 = vsel %vm2609, %v2691, %v2690
  %v2693 = vsub.s32 4, %v2669
  %v2694 = vsel %vm2609, %v2693, %v2669
  %v2695 = vsel %vm2608, %v1736, %v2692
  %v2696 = vsel %vm2608, 0, %v2694
  %v2697 = vcosq.f32.pop %v2695
  %v2698 = vsinq.f32.pop %v2695
  %vm2699 = vweird.f32 %v1736
  %v2700 = vadd.s32 %v2696, 3
  %v2701 = vand.u32 %v2700, 3
  %vm2702 = vcmp.lt.s32.totalorder %v2701, 2
  %vm2703 = vcmp.eq.s32.totalorder %v2701, 0
  %v2704 = vxor.u32 %v2698, 2147483648
  %v2705 = vsel %vm2703, %v2697, %v2704
  %vm2706 = vcmp.eq.s32.totalorder %v2701, 2
  %v2707 = vxor.u32 %v2697, 2147483648
  %v2708 = vsel %vm2706, %v2707, %v2698
  %v2709 = vsel %vm2702, %v2705, %v2708
  %v2710 = vsel %vm2699, nan, %v2709
  %v2711 = vand.u32 2147483647, %v1737
  %vm2712 = vcmp.le.f32.partialorder %v2711, 0.7853982
  %vm2713 = vcmp.lt.s32.totalorder %v1737, 0
  %v2714 = vand.u32 %v1737, 2139095040
  %v2715 = vshrl.u32 %v2714, 23
  %v2716 = vsub.s32 %v2715, 127
  %v2717 = vand.u32 2147483647, %v1737
  %v2718 = vand.u32 %v2717, 8388607
  %v2719 = vor.u32 %v2718, 8388608
  %v2720 = vsub.s32 0, %v2719
  %v2721 = vadd.s32 %v2716, 1
  %vm2722 = vcmp.gt.s32.totalorder %v2721, 0
  %v2723 = vsel %vm2722, %v2721, 0
  %v2724 = vshrl.u32 %v2723, 5
  %v2725 = vand.u32 %v2723, 31
  %v2726 = vsub.s32 32, %v2725
  %v2727 = vshrl.u32 683565275, %v2726
  %v2728 = vshll.u32 683565275, %v2725
  %v2729 = vshrl.u32 2475754826, %v2726
  %v2730 = vor.u32 %v2728, %v2729
  %v2731 = vshll.u32 2475754826, %v2725
  %v2732 = vshrl.u32 2131351028, %v2726
  %v2733 = vor.u32 %v2731, %v2732
  %v2734 = vshll.u32 2131351028, %v2725
  %v2735 = vshrl.u32 2102212464, %v2726
  %v2736 = vor.u32 %v2734, %v2735
  %v2737 = vshll.u32 2102212464, %v2725
  %v2738 = vshrl.u32 920167782, %v2726
  %v2739 = vor.u32 %v2737, %v2738
  %v2740 = vshll.u32 920167782, %v2725
  %v2741 = vshrl.u32 1326507024, %v2726
  %v2742 = vor.u32 %v2740, %v2741
  %vm2743 = vcmp.lt.s32.totalorder %v2724, 1
  %vm2744 = vcmp.lt.s32.totalorder %v2724, 2
  %vm2745 = vcmp.lt.s32.totalorder %v2724, 3
  %vm2746 = vcmp.lt.s32.totalorder %v2724, 4
  %v2747 = vsel %vm2743, %v2727, %v2730
  %v2748 = vsel %vm2746, %v2736, 2102212464
  %v2749 = vsel %vm2745, %v2733, %v2748
  %v2750 = vsel %vm2744, %v2747, %v2749
  %v2751 = vsel %vm2743, %v2730, %v2733
  %v2752 = vsel %vm2746, %v2739, 920167782
  %v2753 = vsel %vm2745, %v2736, %v2752
  %v2754 = vsel %vm2744, %v2751, %v2753
  %v2755 = vsel %vm2743, %v2733, %v2736
  %v2756 = vsel %vm2746, %v2742, 1326507024
  %v2757 = vsel %vm2745, %v2739, %v2756
  %v2758 = vsel %vm2744, %v2755, %v2757
  %v2759 = vshll.u32 %v2719, 8
  %v2760 = vmul.u32.u64.compose %v2759, %v2758
  %v2761 = vextract.low.u32 %v2760
  %v2762 = vextract.high.u32 %v2760
  %v2763 = vmul.u32.u64.compose %v2759, %v2754
  %v2764 = vextract.low.u32 %v2763
  %v2765 = vextract.high.u32 %v2763
  %v2766 = vmul.u32 %v2759, %v2750
  %v2767 = vadd.s32 %v2762, %v2764
  %vm2768 = vc.u32 %v2762, %v2764
  %v2769 = vadd.s32 %v2765, 1
  %v2770 = vsel %vm2768, %v2769, %v2765
  %v2771 = vadd.s32 %v2766, %v2770
  %v2772 = vadd.s32 %v2771, 536870912
  %v2773 = vshrl.u32 %v2772, 30
  %v2774 = vshll.u32 %v2773, 30
  %v2775 = vsub.s32 %v2771, %v2774
  %vm2776 = vcmp.lt.s32.totalorder %v2775, 0
  %v2777 = vsub.s32 0, %v2775
  %v2778 = vsel %vm2776, %v2777, %v2775
  %v2779 = vclz %v2778
  %v2780 = vsub.s32 %v2779, 2
  %vm2781 = vcmp.gt.s32.totalorder 0, %v2780
  %v2782 = vsel %vm2781, 0, %v2780
  %v2783 = vsub.s32 32, %v2782
  %v2784 = vshll.u32 %v2775, %v2782
  %v2785 = vshrl.u32 %v2767, %v2783
  %v2786 = vor.u32 %v2784, %v2785
  %v2787 = vsub.s32 4294967266, %v2782
  %v2788 = vadd.s32 %v2787, 127
  %v2789 = vshll.u32 %v2788, 23
  %v2790 = vor.u32 4788187, %v2789
  %v2791 = vand.u32 2147483647, %v2790
  %v2793 = vcvt.s32.f32 %v2786
  %v2794 = vmul.f32 %v2793, %v2791
  %v2795 = vxor.u32 %v2794, 2147483648
  %v2796 = vsel %vm2713, %v2795, %v2794
  %v2797 = vsub.s32 4, %v2773
  %v2798 = vsel %vm2713, %v2797, %v2773
  %v2799 = vsel %vm2712, %v1737, %v2796
  %v2800 = vsel %vm2712, 0, %v2798
  %v2801 = vcosq.f32.pop %v2799
  %v2802 = vsinq.f32.pop %v2799
  %vm2803 = vweird.f32 %v1737
  %v2804 = vadd.s32 %v2800, 3
  %v2805 = vand.u32 %v2804, 3
  %vm2806 = vcmp.lt.s32.totalorder %v2805, 2
  %vm2807 = vcmp.eq.s32.totalorder %v2805, 0
  %v2808 = vxor.u32 %v2802, 2147483648
  %v2809 = vsel %vm2807, %v2801, %v2808
  %vm2810 = vcmp.eq.s32.totalorder %v2805, 2
  %v2811 = vxor.u32 %v2801, 2147483648
  %v2812 = vsel %vm2810, %v2811, %v2802
  %v2813 = vsel %vm2806, %v2809, %v2812
  %v2814 = vsel %vm2803, nan, %v2813
  %v2815 = vand.u32 2147483647, %v1738
  %vm2816 = vcmp.le.f32.partialorder %v2815, 0.7853982
  %vm2817 = vcmp.lt.s32.totalorder %v1738, 0
  %v2818 = vand.u32 %v1738, 2139095040
  %v2819 = vshrl.u32 %v2818, 23
  %v2820 = vsub.s32 %v2819, 127
  %v2821 = vand.u32 2147483647, %v1738
  %v2822 = vand.u32 %v2821, 8388607
  %v2823 = vor.u32 %v2822, 8388608
  %v2824 = vsub.s32 0, %v2823
  %v2825 = vadd.s32 %v2820, 1
  %vm2826 = vcmp.gt.s32.totalorder %v2825, 0
  %v2827 = vsel %vm2826, %v2825, 0
  %v2828 = vshrl.u32 %v2827, 5
  %v2829 = vand.u32 %v2827, 31
  %v2830 = vsub.s32 32, %v2829
  %v2831 = vshrl.u32 683565275, %v2830
  %v2832 = vshll.u32 683565275, %v2829
  %v2833 = vshrl.u32 2475754826, %v2830
  %v2834 = vor.u32 %v2832, %v2833
  %v2835 = vshll.u32 2475754826, %v2829
  %v2836 = vshrl.u32 2131351028, %v2830
  %v2837 = vor.u32 %v2835, %v2836
  %v2838 = vshll.u32 2131351028, %v2829
  %v2839 = vshrl.u32 2102212464, %v2830
  %v2840 = vor.u32 %v2838, %v2839
  %v2841 = vshll.u32 2102212464, %v2829
  %v2842 = vshrl.u32 920167782, %v2830
  %v2843 = vor.u32 %v2841, %v2842
  %v2844 = vshll.u32 920167782, %v2829
  %v2845 = vshrl.u32 1326507024, %v2830
  %v2846 = vor.u32 %v2844, %v2845
  %vm2847 = vcmp.lt.s32.totalorder %v2828, 1
  %vm2848 = vcmp.lt.s32.totalorder %v2828, 2
  %vm2849 = vcmp.lt.s32.totalorder %v2828, 3
  %vm2850 = vcmp.lt.s32.totalorder %v2828, 4
  %v2851 = vsel %vm2847, %v2831, %v2834
  %v2852 = vsel %vm2850, %v2840, 2102212464
  %v2853 = vsel %vm2849, %v2837, %v2852
  %v2854 = vsel %vm2848, %v2851, %v2853
  %v2855 = vsel %vm2847, %v2834, %v2837
  %v2856 = vsel %vm2850, %v2843, 920167782
  %v2857 = vsel %vm2849, %v2840, %v2856
  %v2858 = vsel %vm2848, %v2855, %v2857
  %v2859 = vsel %vm2847, %v2837, %v2840
  %v2860 = vsel %vm2850, %v2846, 1326507024
  %v2861 = vsel %vm2849, %v2843, %v2860
  %v2862 = vsel %vm2848, %v2859, %v2861
  %v2863 = vshll.u32 %v2823, 8
  %v2864 = vmul.u32.u64.compose %v2863, %v2862
  %v2865 = vextract.low.u32 %v2864
  %v2866 = vextract.high.u32 %v2864
  %v2867 = vmul.u32.u64.compose %v2863, %v2858
  %v2868 = vextract.low.u32 %v2867
  %v2869 = vextract.high.u32 %v2867
  %v2870 = vmul.u32 %v2863, %v2854
  %v2871 = vadd.s32 %v2866, %v2868
  %vm2872 = vc.u32 %v2866, %v2868
  %v2873 = vadd.s32 %v2869, 1
  %v2874 = vsel %vm2872, %v2873, %v2869
  %v2875 = vadd.s32 %v2870, %v2874
  %v2876 = vadd.s32 %v2875, 536870912
  %v2877 = vshrl.u32 %v2876, 30
  %v2878 = vshll.u32 %v2877, 30
  %v2879 = vsub.s32 %v2875, %v2878
  %vm2880 = vcmp.lt.s32.totalorder %v2879, 0
  %v2881 = vsub.s32 0, %v2879
  %v2882 = vsel %vm2880, %v2881, %v2879
  %v2883 = vclz %v2882
  %v2884 = vsub.s32 %v2883, 2
  %vm2885 = vcmp.gt.s32.totalorder 0, %v2884
  %v2886 = vsel %vm2885, 0, %v2884
  %v2887 = vsub.s32 32, %v2886
  %v2888 = vshll.u32 %v2879, %v2886
  %v2889 = vshrl.u32 %v2871, %v2887
  %v2890 = vor.u32 %v2888, %v2889
  %v2891 = vsub.s32 4294967266, %v2886
  %v2892 = vadd.s32 %v2891, 127
  %v2893 = vshll.u32 %v2892, 23
  %v2894 = vor.u32 4788187, %v2893
  %v2895 = vand.u32 2147483647, %v2894
  %v2897 = vcvt.s32.f32 %v2890
  %v2898 = vmul.f32 %v2897, %v2895
  %v2899 = vxor.u32 %v2898, 2147483648
  %v2900 = vsel %vm2817, %v2899, %v2898
  %v2901 = vsub.s32 4, %v2877
  %v2902 = vsel %vm2817, %v2901, %v2877
  %v2903 = vsel %vm2816, %v1738, %v2900
  %v2904 = vsel %vm2816, 0, %v2902
  %v2905 = vcosq.f32.pop %v2903
  %v2906 = vsinq.f32.pop %v2903
  %vm2907 = vweird.f32 %v1738
  %v2908 = vadd.s32 %v2904, 3
  %v2909 = vand.u32 %v2908, 3
  %vm2910 = vcmp.lt.s32.totalorder %v2909, 2
  %vm2911 = vcmp.eq.s32.totalorder %v2909, 0
  %v2912 = vxor.u32 %v2906, 2147483648
  %v2913 = vsel %vm2911, %v2905, %v2912
  %vm2914 = vcmp.eq.s32.totalorder %v2909, 2
  %v2915 = vxor.u32 %v2905, 2147483648
  %v2916 = vsel %vm2914, %v2915, %v2906
  %v2917 = vsel %vm2910, %v2913, %v2916
  %v2918 = vsel %vm2907, nan, %v2917
  %v2919 = vand.u32 2147483647, %v1739
  %vm2920 = vcmp.le.f32.partialorder %v2919, 0.7853982
  %vm2921 = vcmp.lt.s32.totalorder %v1739, 0
  %v2922 = vand.u32 %v1739, 2139095040
  %v2923 = vshrl.u32 %v2922, 23
  %v2924 = vsub.s32 %v2923, 127
  %v2925 = vand.u32 2147483647, %v1739
  %v2926 = vand.u32 %v2925, 8388607
  %v2927 = vor.u32 %v2926, 8388608
  %v2928 = vsub.s32 0, %v2927
  %v2929 = vadd.s32 %v2924, 1
  %vm2930 = vcmp.gt.s32.totalorder %v2929, 0
  %v2931 = vsel %vm2930, %v2929, 0
  %v2932 = vshrl.u32 %v2931, 5
  %v2933 = vand.u32 %v2931, 31
  %v2934 = vsub.s32 32, %v2933
  %v2935 = vshrl.u32 683565275, %v2934
  %v2936 = vshll.u32 683565275, %v2933
  %v2937 = vshrl.u32 2475754826, %v2934
  %v2938 = vor.u32 %v2936, %v2937
  %v2939 = vshll.u32 2475754826, %v2933
  %v2940 = vshrl.u32 2131351028, %v2934
  %v2941 = vor.u32 %v2939, %v2940
  %v2942 = vshll.u32 2131351028, %v2933
  %v2943 = vshrl.u32 2102212464, %v2934
  %v2944 = vor.u32 %v2942, %v2943
  %v2945 = vshll.u32 2102212464, %v2933
  %v2946 = vshrl.u32 920167782, %v2934
  %v2947 = vor.u32 %v2945, %v2946
  %v2948 = vshll.u32 920167782, %v2933
  %v2949 = vshrl.u32 1326507024, %v2934
  %v2950 = vor.u32 %v2948, %v2949
  %vm2951 = vcmp.lt.s32.totalorder %v2932, 1
  %vm2952 = vcmp.lt.s32.totalorder %v2932, 2
  %vm2953 = vcmp.lt.s32.totalorder %v2932, 3
  %vm2954 = vcmp.lt.s32.totalorder %v2932, 4
  %v2955 = vsel %vm2951, %v2935, %v2938
  %v2956 = vsel %vm2954, %v2944, 2102212464
  %v2957 = vsel %vm2953, %v2941, %v2956
  %v2958 = vsel %vm2952, %v2955, %v2957
  %v2959 = vsel %vm2951, %v2938, %v2941
  %v2960 = vsel %vm2954, %v2947, 920167782
  %v2961 = vsel %vm2953, %v2944, %v2960
  %v2962 = vsel %vm2952, %v2959, %v2961
  %v2963 = vsel %vm2951, %v2941, %v2944
  %v2964 = vsel %vm2954, %v2950, 1326507024
  %v2965 = vsel %vm2953, %v2947, %v2964
  %v2966 = vsel %vm2952, %v2963, %v2965
  %v2967 = vshll.u32 %v2927, 8
  %v2968 = vmul.u32.u64.compose %v2967, %v2966
  %v2969 = vextract.low.u32 %v2968
  %v2970 = vextract.high.u32 %v2968
  %v2971 = vmul.u32.u64.compose %v2967, %v2962
  %v2972 = vextract.low.u32 %v2971
  %v2973 = vextract.high.u32 %v2971
  %v2974 = vmul.u32 %v2967, %v2958
  %v2975 = vadd.s32 %v2970, %v2972
  %vm2976 = vc.u32 %v2970, %v2972
  %v2977 = vadd.s32 %v2973, 1
  %v2978 = vsel %vm2976, %v2977, %v2973
  %v2979 = vadd.s32 %v2974, %v2978
  %v2980 = vadd.s32 %v2979, 536870912
  %v2981 = vshrl.u32 %v2980, 30
  %v2982 = vshll.u32 %v2981, 30
  %v2983 = vsub.s32 %v2979, %v2982
  %vm2984 = vcmp.lt.s32.totalorder %v2983, 0
  %v2985 = vsub.s32 0, %v2983
  %v2986 = vsel %vm2984, %v2985, %v2983
  %v2987 = vclz %v2986
  %v2988 = vsub.s32 %v2987, 2
  %vm2989 = vcmp.gt.s32.totalorder 0, %v2988
  %v2990 = vsel %vm2989, 0, %v2988
  %v2991 = vsub.s32 32, %v2990
  %v2992 = vshll.u32 %v2983, %v2990
  %v2993 = vshrl.u32 %v2975, %v2991
  %v2994 = vor.u32 %v2992, %v2993
  %v2995 = vsub.s32 4294967266, %v2990
  %v2996 = vadd.s32 %v2995, 127
  %v2997 = vshll.u32 %v2996, 23
  %v2998 = vor.u32 4788187, %v2997
  %v2999 = vand.u32 2147483647, %v2998
  %v3001 = vcvt.s32.f32 %v2994
  %v3002 = vmul.f32 %v3001, %v2999
  %v3003 = vxor.u32 %v3002, 2147483648
  %v3004 = vsel %vm2921, %v3003, %v3002
  %v3005 = vsub.s32 4, %v2981
  %v3006 = vsel %vm2921, %v3005, %v2981
  %v3007 = vsel %vm2920, %v1739, %v3004
  %v3008 = vsel %vm2920, 0, %v3006
  %v3009 = vcosq.f32.pop %v3007
  %v3010 = vsinq.f32.pop %v3007
  %vm3011 = vweird.f32 %v1739
  %v3012 = vadd.s32 %v3008, 3
  %v3013 = vand.u32 %v3012, 3
  %vm3014 = vcmp.lt.s32.totalorder %v3013, 2
  %vm3015 = vcmp.eq.s32.totalorder %v3013, 0
  %v3016 = vxor.u32 %v3010, 2147483648
  %v3017 = vsel %vm3015, %v3009, %v3016
  %vm3018 = vcmp.eq.s32.totalorder %v3013, 2
  %v3019 = vxor.u32 %v3009, 2147483648
  %v3020 = vsel %vm3018, %v3019, %v3010
  %v3021 = vsel %vm3014, %v3017, %v3020
  %v3022 = vsel %vm3011, nan, %v3021
  %v3023 = vand.u32 2147483647, %v1740
  %vm3024 = vcmp.le.f32.partialorder %v3023, 0.7853982
  %vm3025 = vcmp.lt.s32.totalorder %v1740, 0
  %v3026 = vand.u32 %v1740, 2139095040
  %v3027 = vshrl.u32 %v3026, 23
  %v3028 = vsub.s32 %v3027, 127
  %v3029 = vand.u32 2147483647, %v1740
  %v3030 = vand.u32 %v3029, 8388607
  %v3031 = vor.u32 %v3030, 8388608
  %v3032 = vsub.s32 0, %v3031
  %v3033 = vadd.s32 %v3028, 1
  %vm3034 = vcmp.gt.s32.totalorder %v3033, 0
  %v3035 = vsel %vm3034, %v3033, 0
  %v3036 = vshrl.u32 %v3035, 5
  %v3037 = vand.u32 %v3035, 31
  %v3038 = vsub.s32 32, %v3037
  %v3039 = vshrl.u32 683565275, %v3038
  %v3040 = vshll.u32 683565275, %v3037
  %v3041 = vshrl.u32 2475754826, %v3038
  %v3042 = vor.u32 %v3040, %v3041
  %v3043 = vshll.u32 2475754826, %v3037
  %v3044 = vshrl.u32 2131351028, %v3038
  %v3045 = vor.u32 %v3043, %v3044
  %v3046 = vshll.u32 2131351028, %v3037
  %v3047 = vshrl.u32 2102212464, %v3038
  %v3048 = vor.u32 %v3046, %v3047
  %v3049 = vshll.u32 2102212464, %v3037
  %v3050 = vshrl.u32 920167782, %v3038
  %v3051 = vor.u32 %v3049, %v3050
  %v3052 = vshll.u32 920167782, %v3037
  %v3053 = vshrl.u32 1326507024, %v3038
  %v3054 = vor.u32 %v3052, %v3053
  %vm3055 = vcmp.lt.s32.totalorder %v3036, 1
  %vm3056 = vcmp.lt.s32.totalorder %v3036, 2
  %vm3057 = vcmp.lt.s32.totalorder %v3036, 3
  %vm3058 = vcmp.lt.s32.totalorder %v3036, 4
  %v3059 = vsel %vm3055, %v3039, %v3042
  %v3060 = vsel %vm3058, %v3048, 2102212464
  %v3061 = vsel %vm3057, %v3045, %v3060
  %v3062 = vsel %vm3056, %v3059, %v3061
  %v3063 = vsel %vm3055, %v3042, %v3045
  %v3064 = vsel %vm3058, %v3051, 920167782
  %v3065 = vsel %vm3057, %v3048, %v3064
  %v3066 = vsel %vm3056, %v3063, %v3065
  %v3067 = vsel %vm3055, %v3045, %v3048
  %v3068 = vsel %vm3058, %v3054, 1326507024
  %v3069 = vsel %vm3057, %v3051, %v3068
  %v3070 = vsel %vm3056, %v3067, %v3069
  %v3071 = vshll.u32 %v3031, 8
  %v3072 = vmul.u32.u64.compose %v3071, %v3070
  %v3073 = vextract.low.u32 %v3072
  %v3074 = vextract.high.u32 %v3072
  %v3075 = vmul.u32.u64.compose %v3071, %v3066
  %v3076 = vextract.low.u32 %v3075
  %v3077 = vextract.high.u32 %v3075
  %v3078 = vmul.u32 %v3071, %v3062
  %v3079 = vadd.s32 %v3074, %v3076
  %vm3080 = vc.u32 %v3074, %v3076
  %v3081 = vadd.s32 %v3077, 1
  %v3082 = vsel %vm3080, %v3081, %v3077
  %v3083 = vadd.s32 %v3078, %v3082
  %v3084 = vadd.s32 %v3083, 536870912
  %v3085 = vshrl.u32 %v3084, 30
  %v3086 = vshll.u32 %v3085, 30
  %v3087 = vsub.s32 %v3083, %v3086
  %vm3088 = vcmp.lt.s32.totalorder %v3087, 0
  %v3089 = vsub.s32 0, %v3087
  %v3090 = vsel %vm3088, %v3089, %v3087
  %v3091 = vclz %v3090
  %v3092 = vsub.s32 %v3091, 2
  %vm3093 = vcmp.gt.s32.totalorder 0, %v3092
  %v3094 = vsel %vm3093, 0, %v3092
  %v3095 = vsub.s32 32, %v3094
  %v3096 = vshll.u32 %v3087, %v3094
  %v3097 = vshrl.u32 %v3079, %v3095
  %v3098 = vor.u32 %v3096, %v3097
  %v3099 = vsub.s32 4294967266, %v3094
  %v3100 = vadd.s32 %v3099, 127
  %v3101 = vshll.u32 %v3100, 23
  %v3102 = vor.u32 4788187, %v3101
  %v3103 = vand.u32 2147483647, %v3102
  %v3105 = vcvt.s32.f32 %v3098
  %v3106 = vmul.f32 %v3105, %v3103
  %v3107 = vxor.u32 %v3106, 2147483648
  %v3108 = vsel %vm3025, %v3107, %v3106
  %v3109 = vsub.s32 4, %v3085
  %v3110 = vsel %vm3025, %v3109, %v3085
  %v3111 = vsel %vm3024, %v1740, %v3108
  %v3112 = vsel %vm3024, 0, %v3110
  %v3113 = vcosq.f32.pop %v3111
  %v3114 = vsinq.f32.pop %v3111
  %vm3115 = vweird.f32 %v1740
  %v3116 = vadd.s32 %v3112, 3
  %v3117 = vand.u32 %v3116, 3
  %vm3118 = vcmp.lt.s32.totalorder %v3117, 2
  %vm3119 = vcmp.eq.s32.totalorder %v3117, 0
  %v3120 = vxor.u32 %v3114, 2147483648
  %v3121 = vsel %vm3119, %v3113, %v3120
  %vm3122 = vcmp.eq.s32.totalorder %v3117, 2
  %v3123 = vxor.u32 %v3113, 2147483648
  %v3124 = vsel %vm3122, %v3123, %v3114
  %v3125 = vsel %vm3118, %v3121, %v3124
  %v3126 = vsel %vm3115, nan, %v3125
  %v3127 = vand.u32 2147483647, %v1741
  %vm3128 = vcmp.le.f32.partialorder %v3127, 0.7853982
  %vm3129 = vcmp.lt.s32.totalorder %v1741, 0
  %v3130 = vand.u32 %v1741, 2139095040
  %v3131 = vshrl.u32 %v3130, 23
  %v3132 = vsub.s32 %v3131, 127
  %v3133 = vand.u32 2147483647, %v1741
  %v3134 = vand.u32 %v3133, 8388607
  %v3135 = vor.u32 %v3134, 8388608
  %v3136 = vsub.s32 0, %v3135
  %v3137 = vadd.s32 %v3132, 1
  %vm3138 = vcmp.gt.s32.totalorder %v3137, 0
  %v3139 = vsel %vm3138, %v3137, 0
  %v3140 = vshrl.u32 %v3139, 5
  %v3141 = vand.u32 %v3139, 31
  %v3142 = vsub.s32 32, %v3141
  %v3143 = vshrl.u32 683565275, %v3142
  %v3144 = vshll.u32 683565275, %v3141
  %v3145 = vshrl.u32 2475754826, %v3142
  %v3146 = vor.u32 %v3144, %v3145
  %v3147 = vshll.u32 2475754826, %v3141
  %v3148 = vshrl.u32 2131351028, %v3142
  %v3149 = vor.u32 %v3147, %v3148
  %v3150 = vshll.u32 2131351028, %v3141
  %v3151 = vshrl.u32 2102212464, %v3142
  %v3152 = vor.u32 %v3150, %v3151
  %v3153 = vshll.u32 2102212464, %v3141
  %v3154 = vshrl.u32 920167782, %v3142
  %v3155 = vor.u32 %v3153, %v3154
  %v3156 = vshll.u32 920167782, %v3141
  %v3157 = vshrl.u32 1326507024, %v3142
  %v3158 = vor.u32 %v3156, %v3157
  %vm3159 = vcmp.lt.s32.totalorder %v3140, 1
  %vm3160 = vcmp.lt.s32.totalorder %v3140, 2
  %vm3161 = vcmp.lt.s32.totalorder %v3140, 3
  %vm3162 = vcmp.lt.s32.totalorder %v3140, 4
  %v3163 = vsel %vm3159, %v3143, %v3146
  %v3164 = vsel %vm3162, %v3152, 2102212464
  %v3165 = vsel %vm3161, %v3149, %v3164
  %v3166 = vsel %vm3160, %v3163, %v3165
  %v3167 = vsel %vm3159, %v3146, %v3149
  %v3168 = vsel %vm3162, %v3155, 920167782
  %v3169 = vsel %vm3161, %v3152, %v3168
  %v3170 = vsel %vm3160, %v3167, %v3169
  %v3171 = vsel %vm3159, %v3149, %v3152
  %v3172 = vsel %vm3162, %v3158, 1326507024
  %v3173 = vsel %vm3161, %v3155, %v3172
  %v3174 = vsel %vm3160, %v3171, %v3173
  %v3175 = vshll.u32 %v3135, 8
  %v3176 = vmul.u32.u64.compose %v3175, %v3174
  %v3177 = vextract.low.u32 %v3176
  %v3178 = vextract.high.u32 %v3176
  %v3179 = vmul.u32.u64.compose %v3175, %v3170
  %v3180 = vextract.low.u32 %v3179
  %v3181 = vextract.high.u32 %v3179
  %v3182 = vmul.u32 %v3175, %v3166
  %v3183 = vadd.s32 %v3178, %v3180
  %vm3184 = vc.u32 %v3178, %v3180
  %v3185 = vadd.s32 %v3181, 1
  %v3186 = vsel %vm3184, %v3185, %v3181
  %v3187 = vadd.s32 %v3182, %v3186
  %v3188 = vadd.s32 %v3187, 536870912
  %v3189 = vshrl.u32 %v3188, 30
  %v3190 = vshll.u32 %v3189, 30
  %v3191 = vsub.s32 %v3187, %v3190
  %vm3192 = vcmp.lt.s32.totalorder %v3191, 0
  %v3193 = vsub.s32 0, %v3191
  %v3194 = vsel %vm3192, %v3193, %v3191
  %v3195 = vclz %v3194
  %v3196 = vsub.s32 %v3195, 2
  %vm3197 = vcmp.gt.s32.totalorder 0, %v3196
  %v3198 = vsel %vm3197, 0, %v3196
  %v3199 = vsub.s32 32, %v3198
  %v3200 = vshll.u32 %v3191, %v3198
  %v3201 = vshrl.u32 %v3183, %v3199
  %v3202 = vor.u32 %v3200, %v3201
  %v3203 = vsub.s32 4294967266, %v3198
  %v3204 = vadd.s32 %v3203, 127
  %v3205 = vshll.u32 %v3204, 23
  %v3206 = vor.u32 4788187, %v3205
  %v3207 = vand.u32 2147483647, %v3206
  %v3209 = vcvt.s32.f32 %v3202
  %v3210 = vmul.f32 %v3209, %v3207
  %v3211 = vxor.u32 %v3210, 2147483648
  %v3212 = vsel %vm3129, %v3211, %v3210
  %v3213 = vsub.s32 4, %v3189
  %v3214 = vsel %vm3129, %v3213, %v3189
  %v3215 = vsel %vm3128, %v1741, %v3212
  %v3216 = vsel %vm3128, 0, %v3214
  %v3217 = vcosq.f32.pop %v3215
  %v3218 = vsinq.f32.pop %v3215
  %vm3219 = vweird.f32 %v1741
  %v3220 = vadd.s32 %v3216, 3
  %v3221 = vand.u32 %v3220, 3
  %vm3222 = vcmp.lt.s32.totalorder %v3221, 2
  %vm3223 = vcmp.eq.s32.totalorder %v3221, 0
  %v3224 = vxor.u32 %v3218, 2147483648
  %v3225 = vsel %vm3223, %v3217, %v3224
  %vm3226 = vcmp.eq.s32.totalorder %v3221, 2
  %v3227 = vxor.u32 %v3217, 2147483648
  %v3228 = vsel %vm3226, %v3227, %v3218
  %v3229 = vsel %vm3222, %v3225, %v3228
  %v3230 = vsel %vm3219, nan, %v3229
  %v3231 = vand.u32 2147483647, %v1742
  %vm3232 = vcmp.le.f32.partialorder %v3231, 0.7853982
  %vm3233 = vcmp.lt.s32.totalorder %v1742, 0
  %v3234 = vand.u32 %v1742, 2139095040
  %v3235 = vshrl.u32 %v3234, 23
  %v3236 = vsub.s32 %v3235, 127
  %v3237 = vand.u32 2147483647, %v1742
  %v3238 = vand.u32 %v3237, 8388607
  %v3239 = vor.u32 %v3238, 8388608
  %v3240 = vsub.s32 0, %v3239
  %v3241 = vadd.s32 %v3236, 1
  %vm3242 = vcmp.gt.s32.totalorder %v3241, 0
  %v3243 = vsel %vm3242, %v3241, 0
  %v3244 = vshrl.u32 %v3243, 5
  %v3245 = vand.u32 %v3243, 31
  %v3246 = vsub.s32 32, %v3245
  %v3247 = vshrl.u32 683565275, %v3246
  %v3248 = vshll.u32 683565275, %v3245
  %v3249 = vshrl.u32 2475754826, %v3246
  %v3250 = vor.u32 %v3248, %v3249
  %v3251 = vshll.u32 2475754826, %v3245
  %v3252 = vshrl.u32 2131351028, %v3246
  %v3253 = vor.u32 %v3251, %v3252
  %v3254 = vshll.u32 2131351028, %v3245
  %v3255 = vshrl.u32 2102212464, %v3246
  %v3256 = vor.u32 %v3254, %v3255
  %v3257 = vshll.u32 2102212464, %v3245
  %v3258 = vshrl.u32 920167782, %v3246
  %v3259 = vor.u32 %v3257, %v3258
  %v3260 = vshll.u32 920167782, %v3245
  %v3261 = vshrl.u32 1326507024, %v3246
  %v3262 = vor.u32 %v3260, %v3261
  %vm3263 = vcmp.lt.s32.totalorder %v3244, 1
  %vm3264 = vcmp.lt.s32.totalorder %v3244, 2
  %vm3265 = vcmp.lt.s32.totalorder %v3244, 3
  %vm3266 = vcmp.lt.s32.totalorder %v3244, 4
  %v3267 = vsel %vm3263, %v3247, %v3250
  %v3268 = vsel %vm3266, %v3256, 2102212464
  %v3269 = vsel %vm3265, %v3253, %v3268
  %v3270 = vsel %vm3264, %v3267, %v3269
  %v3271 = vsel %vm3263, %v3250, %v3253
  %v3272 = vsel %vm3266, %v3259, 920167782
  %v3273 = vsel %vm3265, %v3256, %v3272
  %v3274 = vsel %vm3264, %v3271, %v3273
  %v3275 = vsel %vm3263, %v3253, %v3256
  %v3276 = vsel %vm3266, %v3262, 1326507024
  %v3277 = vsel %vm3265, %v3259, %v3276
  %v3278 = vsel %vm3264, %v3275, %v3277
  %v3279 = vshll.u32 %v3239, 8
  %v3280 = vmul.u32.u64.compose %v3279, %v3278
  %v3281 = vextract.low.u32 %v3280
  %v3282 = vextract.high.u32 %v3280
  %v3283 = vmul.u32.u64.compose %v3279, %v3274
  %v3284 = vextract.low.u32 %v3283
  %v3285 = vextract.high.u32 %v3283
  %v3286 = vmul.u32 %v3279, %v3270
  %v3287 = vadd.s32 %v3282, %v3284
  %vm3288 = vc.u32 %v3282, %v3284
  %v3289 = vadd.s32 %v3285, 1
  %v3290 = vsel %vm3288, %v3289, %v3285
  %v3291 = vadd.s32 %v3286, %v3290
  %v3292 = vadd.s32 %v3291, 536870912
  %v3293 = vshrl.u32 %v3292, 30
  %v3294 = vshll.u32 %v3293, 30
  %v3295 = vsub.s32 %v3291, %v3294
  %vm3296 = vcmp.lt.s32.totalorder %v3295, 0
  %v3297 = vsub.s32 0, %v3295
  %v3298 = vsel %vm3296, %v3297, %v3295
  %v3299 = vclz %v3298
  %v3300 = vsub.s32 %v3299, 2
  %vm3301 = vcmp.gt.s32.totalorder 0, %v3300
  %v3302 = vsel %vm3301, 0, %v3300
  %v3303 = vsub.s32 32, %v3302
  %v3304 = vshll.u32 %v3295, %v3302
  %v3305 = vshrl.u32 %v3287, %v3303
  %v3306 = vor.u32 %v3304, %v3305
  %v3307 = vsub.s32 4294967266, %v3302
  %v3308 = vadd.s32 %v3307, 127
  %v3309 = vshll.u32 %v3308, 23
  %v3310 = vor.u32 4788187, %v3309
  %v3311 = vand.u32 2147483647, %v3310
  %v3313 = vcvt.s32.f32 %v3306
  %v3314 = vmul.f32 %v3313, %v3311
  %v3315 = vxor.u32 %v3314, 2147483648
  %v3316 = vsel %vm3233, %v3315, %v3314
  %v3317 = vsub.s32 4, %v3293
  %v3318 = vsel %vm3233, %v3317, %v3293
  %v3319 = vsel %vm3232, %v1742, %v3316
  %v3320 = vsel %vm3232, 0, %v3318
  %v3321 = vcosq.f32.pop %v3319
  %v3322 = vsinq.f32.pop %v3319
  %vm3323 = vweird.f32 %v1742
  %v3324 = vadd.s32 %v3320, 3
  %v3325 = vand.u32 %v3324, 3
  %vm3326 = vcmp.lt.s32.totalorder %v3325, 2
  %vm3327 = vcmp.eq.s32.totalorder %v3325, 0
  %v3328 = vxor.u32 %v3322, 2147483648
  %v3329 = vsel %vm3327, %v3321, %v3328
  %vm3330 = vcmp.eq.s32.totalorder %v3325, 2
  %v3331 = vxor.u32 %v3321, 2147483648
  %v3332 = vsel %vm3330, %v3331, %v3322
  %v3333 = vsel %vm3326, %v3329, %v3332
  %v3334 = vsel %vm3323, nan, %v3333
  %v3335 = vand.u32 2147483647, %v1743
  %vm3336 = vcmp.le.f32.partialorder %v3335, 0.7853982
  %vm3337 = vcmp.lt.s32.totalorder %v1743, 0
  %v3338 = vand.u32 %v1743, 2139095040
  %v3339 = vshrl.u32 %v3338, 23
  %v3340 = vsub.s32 %v3339, 127
  %v3341 = vand.u32 2147483647, %v1743
  %v3342 = vand.u32 %v3341, 8388607
  %v3343 = vor.u32 %v3342, 8388608
  %v3344 = vsub.s32 0, %v3343
  %v3345 = vadd.s32 %v3340, 1
  %vm3346 = vcmp.gt.s32.totalorder %v3345, 0
  %v3347 = vsel %vm3346, %v3345, 0
  %v3348 = vshrl.u32 %v3347, 5
  %v3349 = vand.u32 %v3347, 31
  %v3350 = vsub.s32 32, %v3349
  %v3351 = vshrl.u32 683565275, %v3350
  %v3352 = vshll.u32 683565275, %v3349
  %v3353 = vshrl.u32 2475754826, %v3350
  %v3354 = vor.u32 %v3352, %v3353
  %v3355 = vshll.u32 2475754826, %v3349
  %v3356 = vshrl.u32 2131351028, %v3350
  %v3357 = vor.u32 %v3355, %v3356
  %v3358 = vshll.u32 2131351028, %v3349
  %v3359 = vshrl.u32 2102212464, %v3350
  %v3360 = vor.u32 %v3358, %v3359
  %v3361 = vshll.u32 2102212464, %v3349
  %v3362 = vshrl.u32 920167782, %v3350
  %v3363 = vor.u32 %v3361, %v3362
  %v3364 = vshll.u32 920167782, %v3349
  %v3365 = vshrl.u32 1326507024, %v3350
  %v3366 = vor.u32 %v3364, %v3365
  %vm3367 = vcmp.lt.s32.totalorder %v3348, 1
  %vm3368 = vcmp.lt.s32.totalorder %v3348, 2
  %vm3369 = vcmp.lt.s32.totalorder %v3348, 3
  %vm3370 = vcmp.lt.s32.totalorder %v3348, 4
  %v3371 = vsel %vm3367, %v3351, %v3354
  %v3372 = vsel %vm3370, %v3360, 2102212464
  %v3373 = vsel %vm3369, %v3357, %v3372
  %v3374 = vsel %vm3368, %v3371, %v3373
  %v3375 = vsel %vm3367, %v3354, %v3357
  %v3376 = vsel %vm3370, %v3363, 920167782
  %v3377 = vsel %vm3369, %v3360, %v3376
  %v3378 = vsel %vm3368, %v3375, %v3377
  %v3379 = vsel %vm3367, %v3357, %v3360
  %v3380 = vsel %vm3370, %v3366, 1326507024
  %v3381 = vsel %vm3369, %v3363, %v3380
  %v3382 = vsel %vm3368, %v3379, %v3381
  %v3383 = vshll.u32 %v3343, 8
  %v3384 = vmul.u32.u64.compose %v3383, %v3382
  %v3385 = vextract.low.u32 %v3384
  %v3386 = vextract.high.u32 %v3384
  %v3387 = vmul.u32.u64.compose %v3383, %v3378
  %v3388 = vextract.low.u32 %v3387
  %v3389 = vextract.high.u32 %v3387
  %v3390 = vmul.u32 %v3383, %v3374
  %v3391 = vadd.s32 %v3386, %v3388
  %vm3392 = vc.u32 %v3386, %v3388
  %v3393 = vadd.s32 %v3389, 1
  %v3394 = vsel %vm3392, %v3393, %v3389
  %v3395 = vadd.s32 %v3390, %v3394
  %v3396 = vadd.s32 %v3395, 536870912
  %v3397 = vshrl.u32 %v3396, 30
  %v3398 = vshll.u32 %v3397, 30
  %v3399 = vsub.s32 %v3395, %v3398
  %vm3400 = vcmp.lt.s32.totalorder %v3399, 0
  %v3401 = vsub.s32 0, %v3399
  %v3402 = vsel %vm3400, %v3401, %v3399
  %v3403 = vclz %v3402
  %v3404 = vsub.s32 %v3403, 2
  %vm3405 = vcmp.gt.s32.totalorder 0, %v3404
  %v3406 = vsel %vm3405, 0, %v3404
  %v3407 = vsub.s32 32, %v3406
  %v3408 = vshll.u32 %v3399, %v3406
  %v3409 = vshrl.u32 %v3391, %v3407
  %v3410 = vor.u32 %v3408, %v3409
  %v3411 = vsub.s32 4294967266, %v3406
  %v3412 = vadd.s32 %v3411, 127
  %v3413 = vshll.u32 %v3412, 23
  %v3414 = vor.u32 4788187, %v3413
  %v3415 = vand.u32 2147483647, %v3414
  %v3417 = vcvt.s32.f32 %v3410
  %v3418 = vmul.f32 %v3417, %v3415
  %v3419 = vxor.u32 %v3418, 2147483648
  %v3420 = vsel %vm3337, %v3419, %v3418
  %v3421 = vsub.s32 4, %v3397
  %v3422 = vsel %vm3337, %v3421, %v3397
  %v3423 = vsel %vm3336, %v1743, %v3420
  %v3424 = vsel %vm3336, 0, %v3422
  %v3425 = vcosq.f32.pop %v3423
  %v3426 = vsinq.f32.pop %v3423
  %vm3427 = vweird.f32 %v1743
  %v3428 = vadd.s32 %v3424, 3
  %v3429 = vand.u32 %v3428, 3
  %vm3430 = vcmp.lt.s32.totalorder %v3429, 2
  %vm3431 = vcmp.eq.s32.totalorder %v3429, 0
  %v3432 = vxor.u32 %v3426, 2147483648
  %v3433 = vsel %vm3431, %v3425, %v3432
  %vm3434 = vcmp.eq.s32.totalorder %v3429, 2
  %v3435 = vxor.u32 %v3425, 2147483648
  %v3436 = vsel %vm3434, %v3435, %v3426
  %v3437 = vsel %vm3430, %v3433, %v3436
  %v3438 = vsel %vm3427, nan, %v3437
  %v3439 = vand.u32 2147483647, %v1744
  %vm3440 = vcmp.le.f32.partialorder %v3439, 0.7853982
  %vm3441 = vcmp.lt.s32.totalorder %v1744, 0
  %v3442 = vand.u32 %v1744, 2139095040
  %v3443 = vshrl.u32 %v3442, 23
  %v3444 = vsub.s32 %v3443, 127
  %v3445 = vand.u32 2147483647, %v1744
  %v3446 = vand.u32 %v3445, 8388607
  %v3447 = vor.u32 %v3446, 8388608
  %v3448 = vsub.s32 0, %v3447
  %v3449 = vadd.s32 %v3444, 1
  %vm3450 = vcmp.gt.s32.totalorder %v3449, 0
  %v3451 = vsel %vm3450, %v3449, 0
  %v3452 = vshrl.u32 %v3451, 5
  %v3453 = vand.u32 %v3451, 31
  %v3454 = vsub.s32 32, %v3453
  %v3455 = vshrl.u32 683565275, %v3454
  %v3456 = vshll.u32 683565275, %v3453
  %v3457 = vshrl.u32 2475754826, %v3454
  %v3458 = vor.u32 %v3456, %v3457
  %v3459 = vshll.u32 2475754826, %v3453
  %v3460 = vshrl.u32 2131351028, %v3454
  %v3461 = vor.u32 %v3459, %v3460
  %v3462 = vshll.u32 2131351028, %v3453
  %v3463 = vshrl.u32 2102212464, %v3454
  %v3464 = vor.u32 %v3462, %v3463
  %v3465 = vshll.u32 2102212464, %v3453
  %v3466 = vshrl.u32 920167782, %v3454
  %v3467 = vor.u32 %v3465, %v3466
  %v3468 = vshll.u32 920167782, %v3453
  %v3469 = vshrl.u32 1326507024, %v3454
  %v3470 = vor.u32 %v3468, %v3469
  %vm3471 = vcmp.lt.s32.totalorder %v3452, 1
  %vm3472 = vcmp.lt.s32.totalorder %v3452, 2
  %vm3473 = vcmp.lt.s32.totalorder %v3452, 3
  %vm3474 = vcmp.lt.s32.totalorder %v3452, 4
  %v3475 = vsel %vm3471, %v3455, %v3458
  %v3476 = vsel %vm3474, %v3464, 2102212464
  %v3477 = vsel %vm3473, %v3461, %v3476
  %v3478 = vsel %vm3472, %v3475, %v3477
  %v3479 = vsel %vm3471, %v3458, %v3461
  %v3480 = vsel %vm3474, %v3467, 920167782
  %v3481 = vsel %vm3473, %v3464, %v3480
  %v3482 = vsel %vm3472, %v3479, %v3481
  %v3483 = vsel %vm3471, %v3461, %v3464
  %v3484 = vsel %vm3474, %v3470, 1326507024
  %v3485 = vsel %vm3473, %v3467, %v3484
  %v3486 = vsel %vm3472, %v3483, %v3485
  %v3487 = vshll.u32 %v3447, 8
  %v3488 = vmul.u32.u64.compose %v3487, %v3486
  %v3489 = vextract.low.u32 %v3488
  %v3490 = vextract.high.u32 %v3488
  %v3491 = vmul.u32.u64.compose %v3487, %v3482
  %v3492 = vextract.low.u32 %v3491
  %v3493 = vextract.high.u32 %v3491
  %v3494 = vmul.u32 %v3487, %v3478
  %v3495 = vadd.s32 %v3490, %v3492
  %vm3496 = vc.u32 %v3490, %v3492
  %v3497 = vadd.s32 %v3493, 1
  %v3498 = vsel %vm3496, %v3497, %v3493
  %v3499 = vadd.s32 %v3494, %v3498
  %v3500 = vadd.s32 %v3499, 536870912
  %v3501 = vshrl.u32 %v3500, 30
  %v3502 = vshll.u32 %v3501, 30
  %v3503 = vsub.s32 %v3499, %v3502
  %vm3504 = vcmp.lt.s32.totalorder %v3503, 0
  %v3505 = vsub.s32 0, %v3503
  %v3506 = vsel %vm3504, %v3505, %v3503
  %v3507 = vclz %v3506
  %v3508 = vsub.s32 %v3507, 2
  %vm3509 = vcmp.gt.s32.totalorder 0, %v3508
  %v3510 = vsel %vm3509, 0, %v3508
  %v3511 = vsub.s32 32, %v3510
  %v3512 = vshll.u32 %v3503, %v3510
  %v3513 = vshrl.u32 %v3495, %v3511
  %v3514 = vor.u32 %v3512, %v3513
  %v3515 = vsub.s32 4294967266, %v3510
  %v3516 = vadd.s32 %v3515, 127
  %v3517 = vshll.u32 %v3516, 23
  %v3518 = vor.u32 4788187, %v3517
  %v3519 = vand.u32 2147483647, %v3518
  %v3521 = vcvt.s32.f32 %v3514
  %v3522 = vmul.f32 %v3521, %v3519
  %v3523 = vxor.u32 %v3522, 2147483648
  %v3524 = vsel %vm3441, %v3523, %v3522
  %v3525 = vsub.s32 4, %v3501
  %v3526 = vsel %vm3441, %v3525, %v3501
  %v3527 = vsel %vm3440, %v1744, %v3524
  %v3528 = vsel %vm3440, 0, %v3526
  %v3529 = vcosq.f32.pop %v3527
  %v3530 = vsinq.f32.pop %v3527
  %vm3531 = vweird.f32 %v1744
  %v3532 = vadd.s32 %v3528, 3
  %v3533 = vand.u32 %v3532, 3
  %vm3534 = vcmp.lt.s32.totalorder %v3533, 2
  %vm3535 = vcmp.eq.s32.totalorder %v3533, 0
  %v3536 = vxor.u32 %v3530, 2147483648
  %v3537 = vsel %vm3535, %v3529, %v3536
  %vm3538 = vcmp.eq.s32.totalorder %v3533, 2
  %v3539 = vxor.u32 %v3529, 2147483648
  %v3540 = vsel %vm3538, %v3539, %v3530
  %v3541 = vsel %vm3534, %v3537, %v3540
  %v3542 = vsel %vm3531, nan, %v3541
  %v3543 = vand.u32 2147483647, %v1745
  %vm3544 = vcmp.le.f32.partialorder %v3543, 0.7853982
  %vm3545 = vcmp.lt.s32.totalorder %v1745, 0
  %v3546 = vand.u32 %v1745, 2139095040
  %v3547 = vshrl.u32 %v3546, 23
  %v3548 = vsub.s32 %v3547, 127
  %v3549 = vand.u32 2147483647, %v1745
  %v3550 = vand.u32 %v3549, 8388607
  %v3551 = vor.u32 %v3550, 8388608
  %v3552 = vsub.s32 0, %v3551
  %v3553 = vadd.s32 %v3548, 1
  %vm3554 = vcmp.gt.s32.totalorder %v3553, 0
  %v3555 = vsel %vm3554, %v3553, 0
  %v3556 = vshrl.u32 %v3555, 5
  %v3557 = vand.u32 %v3555, 31
  %v3558 = vsub.s32 32, %v3557
  %v3559 = vshrl.u32 683565275, %v3558
  %v3560 = vshll.u32 683565275, %v3557
  %v3561 = vshrl.u32 2475754826, %v3558
  %v3562 = vor.u32 %v3560, %v3561
  %v3563 = vshll.u32 2475754826, %v3557
  %v3564 = vshrl.u32 2131351028, %v3558
  %v3565 = vor.u32 %v3563, %v3564
  %v3566 = vshll.u32 2131351028, %v3557
  %v3567 = vshrl.u32 2102212464, %v3558
  %v3568 = vor.u32 %v3566, %v3567
  %v3569 = vshll.u32 2102212464, %v3557
  %v3570 = vshrl.u32 920167782, %v3558
  %v3571 = vor.u32 %v3569, %v3570
  %v3572 = vshll.u32 920167782, %v3557
  %v3573 = vshrl.u32 1326507024, %v3558
  %v3574 = vor.u32 %v3572, %v3573
  %vm3575 = vcmp.lt.s32.totalorder %v3556, 1
  %vm3576 = vcmp.lt.s32.totalorder %v3556, 2
  %vm3577 = vcmp.lt.s32.totalorder %v3556, 3
  %vm3578 = vcmp.lt.s32.totalorder %v3556, 4
  %v3579 = vsel %vm3575, %v3559, %v3562
  %v3580 = vsel %vm3578, %v3568, 2102212464
  %v3581 = vsel %vm3577, %v3565, %v3580
  %v3582 = vsel %vm3576, %v3579, %v3581
  %v3583 = vsel %vm3575, %v3562, %v3565
  %v3584 = vsel %vm3578, %v3571, 920167782
  %v3585 = vsel %vm3577, %v3568, %v3584
  %v3586 = vsel %vm3576, %v3583, %v3585
  %v3587 = vsel %vm3575, %v3565, %v3568
  %v3588 = vsel %vm3578, %v3574, 1326507024
  %v3589 = vsel %vm3577, %v3571, %v3588
  %v3590 = vsel %vm3576, %v3587, %v3589
  %v3591 = vshll.u32 %v3551, 8
  %v3592 = vmul.u32.u64.compose %v3591, %v3590
  %v3593 = vextract.low.u32 %v3592
  %v3594 = vextract.high.u32 %v3592
  %v3595 = vmul.u32.u64.compose %v3591, %v3586
  %v3596 = vextract.low.u32 %v3595
  %v3597 = vextract.high.u32 %v3595
  %v3598 = vmul.u32 %v3591, %v3582
  %v3599 = vadd.s32 %v3594, %v3596
  %vm3600 = vc.u32 %v3594, %v3596
  %v3601 = vadd.s32 %v3597, 1
  %v3602 = vsel %vm3600, %v3601, %v3597
  %v3603 = vadd.s32 %v3598, %v3602
  %v3604 = vadd.s32 %v3603, 536870912
  %v3605 = vshrl.u32 %v3604, 30
  %v3606 = vshll.u32 %v3605, 30
  %v3607 = vsub.s32 %v3603, %v3606
  %vm3608 = vcmp.lt.s32.totalorder %v3607, 0
  %v3609 = vsub.s32 0, %v3607
  %v3610 = vsel %vm3608, %v3609, %v3607
  %v3611 = vclz %v3610
  %v3612 = vsub.s32 %v3611, 2
  %vm3613 = vcmp.gt.s32.totalorder 0, %v3612
  %v3614 = vsel %vm3613, 0, %v3612
  %v3615 = vsub.s32 32, %v3614
  %v3616 = vshll.u32 %v3607, %v3614
  %v3617 = vshrl.u32 %v3599, %v3615
  %v3618 = vor.u32 %v3616, %v3617
  %v3619 = vsub.s32 4294967266, %v3614
  %v3620 = vadd.s32 %v3619, 127
  %v3621 = vshll.u32 %v3620, 23
  %v3622 = vor.u32 4788187, %v3621
  %v3623 = vand.u32 2147483647, %v3622
  %v3625 = vcvt.s32.f32 %v3618
  %v3626 = vmul.f32 %v3625, %v3623
  %v3627 = vxor.u32 %v3626, 2147483648
  %v3628 = vsel %vm3545, %v3627, %v3626
  %v3629 = vsub.s32 4, %v3605
  %v3630 = vsel %vm3545, %v3629, %v3605
  %v3631 = vsel %vm3544, %v1745, %v3628
  %v3632 = vsel %vm3544, 0, %v3630
  %v3633 = vcosq.f32.pop %v3631
  %v3634 = vsinq.f32.pop %v3631
  %vm3635 = vweird.f32 %v1745
  %v3636 = vadd.s32 %v3632, 3
  %v3637 = vand.u32 %v3636, 3
  %vm3638 = vcmp.lt.s32.totalorder %v3637, 2
  %vm3639 = vcmp.eq.s32.totalorder %v3637, 0
  %v3640 = vxor.u32 %v3634, 2147483648
  %v3641 = vsel %vm3639, %v3633, %v3640
  %vm3642 = vcmp.eq.s32.totalorder %v3637, 2
  %v3643 = vxor.u32 %v3633, 2147483648
  %v3644 = vsel %vm3642, %v3643, %v3634
  %v3645 = vsel %vm3638, %v3641, %v3644
  %v3646 = vsel %vm3635, nan, %v3645
  %v3647 = vand.u32 2147483647, %v1746
  %vm3648 = vcmp.le.f32.partialorder %v3647, 0.7853982
  %vm3649 = vcmp.lt.s32.totalorder %v1746, 0
  %v3650 = vand.u32 %v1746, 2139095040
  %v3651 = vshrl.u32 %v3650, 23
  %v3652 = vsub.s32 %v3651, 127
  %v3653 = vand.u32 2147483647, %v1746
  %v3654 = vand.u32 %v3653, 8388607
  %v3655 = vor.u32 %v3654, 8388608
  %v3656 = vsub.s32 0, %v3655
  %v3657 = vadd.s32 %v3652, 1
  %vm3658 = vcmp.gt.s32.totalorder %v3657, 0
  %v3659 = vsel %vm3658, %v3657, 0
  %v3660 = vshrl.u32 %v3659, 5
  %v3661 = vand.u32 %v3659, 31
  %v3662 = vsub.s32 32, %v3661
  %v3663 = vshrl.u32 683565275, %v3662
  %v3664 = vshll.u32 683565275, %v3661
  %v3665 = vshrl.u32 2475754826, %v3662
  %v3666 = vor.u32 %v3664, %v3665
  %v3667 = vshll.u32 2475754826, %v3661
  %v3668 = vshrl.u32 2131351028, %v3662
  %v3669 = vor.u32 %v3667, %v3668
  %v3670 = vshll.u32 2131351028, %v3661
  %v3671 = vshrl.u32 2102212464, %v3662
  %v3672 = vor.u32 %v3670, %v3671
  %v3673 = vshll.u32 2102212464, %v3661
  %v3674 = vshrl.u32 920167782, %v3662
  %v3675 = vor.u32 %v3673, %v3674
  %v3676 = vshll.u32 920167782, %v3661
  %v3677 = vshrl.u32 1326507024, %v3662
  %v3678 = vor.u32 %v3676, %v3677
  %vm3679 = vcmp.lt.s32.totalorder %v3660, 1
  %vm3680 = vcmp.lt.s32.totalorder %v3660, 2
  %vm3681 = vcmp.lt.s32.totalorder %v3660, 3
  %vm3682 = vcmp.lt.s32.totalorder %v3660, 4
  %v3683 = vsel %vm3679, %v3663, %v3666
  %v3684 = vsel %vm3682, %v3672, 2102212464
  %v3685 = vsel %vm3681, %v3669, %v3684
  %v3686 = vsel %vm3680, %v3683, %v3685
  %v3687 = vsel %vm3679, %v3666, %v3669
  %v3688 = vsel %vm3682, %v3675, 920167782
  %v3689 = vsel %vm3681, %v3672, %v3688
  %v3690 = vsel %vm3680, %v3687, %v3689
  %v3691 = vsel %vm3679, %v3669, %v3672
  %v3692 = vsel %vm3682, %v3678, 1326507024
  %v3693 = vsel %vm3681, %v3675, %v3692
  %v3694 = vsel %vm3680, %v3691, %v3693
  %v3695 = vshll.u32 %v3655, 8
  %v3696 = vmul.u32.u64.compose %v3695, %v3694
  %v3697 = vextract.low.u32 %v3696
  %v3698 = vextract.high.u32 %v3696
  %v3699 = vmul.u32.u64.compose %v3695, %v3690
  %v3700 = vextract.low.u32 %v3699
  %v3701 = vextract.high.u32 %v3699
  %v3702 = vmul.u32 %v3695, %v3686
  %v3703 = vadd.s32 %v3698, %v3700
  %vm3704 = vc.u32 %v3698, %v3700
  %v3705 = vadd.s32 %v3701, 1
  %v3706 = vsel %vm3704, %v3705, %v3701
  %v3707 = vadd.s32 %v3702, %v3706
  %v3708 = vadd.s32 %v3707, 536870912
  %v3709 = vshrl.u32 %v3708, 30
  %v3710 = vshll.u32 %v3709, 30
  %v3711 = vsub.s32 %v3707, %v3710
  %vm3712 = vcmp.lt.s32.totalorder %v3711, 0
  %v3713 = vsub.s32 0, %v3711
  %v3714 = vsel %vm3712, %v3713, %v3711
  %v3715 = vclz %v3714
  %v3716 = vsub.s32 %v3715, 2
  %vm3717 = vcmp.gt.s32.totalorder 0, %v3716
  %v3718 = vsel %vm3717, 0, %v3716
  %v3719 = vsub.s32 32, %v3718
  %v3720 = vshll.u32 %v3711, %v3718
  %v3721 = vshrl.u32 %v3703, %v3719
  %v3722 = vor.u32 %v3720, %v3721
  %v3723 = vsub.s32 4294967266, %v3718
  %v3724 = vadd.s32 %v3723, 127
  %v3725 = vshll.u32 %v3724, 23
  %v3726 = vor.u32 4788187, %v3725
  %v3727 = vand.u32 2147483647, %v3726
  %v3729 = vcvt.s32.f32 %v3722
  %v3730 = vmul.f32 %v3729, %v3727
  %v3731 = vxor.u32 %v3730, 2147483648
  %v3732 = vsel %vm3649, %v3731, %v3730
  %v3733 = vsub.s32 4, %v3709
  %v3734 = vsel %vm3649, %v3733, %v3709
  %v3735 = vsel %vm3648, %v1746, %v3732
  %v3736 = vsel %vm3648, 0, %v3734
  %v3737 = vcosq.f32.pop %v3735
  %v3738 = vsinq.f32.pop %v3735
  %vm3739 = vweird.f32 %v1746
  %v3740 = vadd.s32 %v3736, 3
  %v3741 = vand.u32 %v3740, 3
  %vm3742 = vcmp.lt.s32.totalorder %v3741, 2
  %vm3743 = vcmp.eq.s32.totalorder %v3741, 0
  %v3744 = vxor.u32 %v3738, 2147483648
  %v3745 = vsel %vm3743, %v3737, %v3744
  %vm3746 = vcmp.eq.s32.totalorder %v3741, 2
  %v3747 = vxor.u32 %v3737, 2147483648
  %v3748 = vsel %vm3746, %v3747, %v3738
  %v3749 = vsel %vm3742, %v3745, %v3748
  %v3750 = vsel %vm3739, nan, %v3749
  %v3751 = vand.u32 2147483647, %v1747
  %vm3752 = vcmp.le.f32.partialorder %v3751, 0.7853982
  %vm3753 = vcmp.lt.s32.totalorder %v1747, 0
  %v3754 = vand.u32 %v1747, 2139095040
  %v3755 = vshrl.u32 %v3754, 23
  %v3756 = vsub.s32 %v3755, 127
  %v3757 = vand.u32 2147483647, %v1747
  %v3758 = vand.u32 %v3757, 8388607
  %v3759 = vor.u32 %v3758, 8388608
  %v3760 = vsub.s32 0, %v3759
  %v3761 = vadd.s32 %v3756, 1
  %vm3762 = vcmp.gt.s32.totalorder %v3761, 0
  %v3763 = vsel %vm3762, %v3761, 0
  %v3764 = vshrl.u32 %v3763, 5
  %v3765 = vand.u32 %v3763, 31
  %v3766 = vsub.s32 32, %v3765
  %v3767 = vshrl.u32 683565275, %v3766
  %v3768 = vshll.u32 683565275, %v3765
  %v3769 = vshrl.u32 2475754826, %v3766
  %v3770 = vor.u32 %v3768, %v3769
  %v3771 = vshll.u32 2475754826, %v3765
  %v3772 = vshrl.u32 2131351028, %v3766
  %v3773 = vor.u32 %v3771, %v3772
  %v3774 = vshll.u32 2131351028, %v3765
  %v3775 = vshrl.u32 2102212464, %v3766
  %v3776 = vor.u32 %v3774, %v3775
  %v3777 = vshll.u32 2102212464, %v3765
  %v3778 = vshrl.u32 920167782, %v3766
  %v3779 = vor.u32 %v3777, %v3778
  %v3780 = vshll.u32 920167782, %v3765
  %v3781 = vshrl.u32 1326507024, %v3766
  %v3782 = vor.u32 %v3780, %v3781
  %vm3783 = vcmp.lt.s32.totalorder %v3764, 1
  %vm3784 = vcmp.lt.s32.totalorder %v3764, 2
  %vm3785 = vcmp.lt.s32.totalorder %v3764, 3
  %vm3786 = vcmp.lt.s32.totalorder %v3764, 4
  %v3787 = vsel %vm3783, %v3767, %v3770
  %v3788 = vsel %vm3786, %v3776, 2102212464
  %v3789 = vsel %vm3785, %v3773, %v3788
  %v3790 = vsel %vm3784, %v3787, %v3789
  %v3791 = vsel %vm3783, %v3770, %v3773
  %v3792 = vsel %vm3786, %v3779, 920167782
  %v3793 = vsel %vm3785, %v3776, %v3792
  %v3794 = vsel %vm3784, %v3791, %v3793
  %v3795 = vsel %vm3783, %v3773, %v3776
  %v3796 = vsel %vm3786, %v3782, 1326507024
  %v3797 = vsel %vm3785, %v3779, %v3796
  %v3798 = vsel %vm3784, %v3795, %v3797
  %v3799 = vshll.u32 %v3759, 8
  %v3800 = vmul.u32.u64.compose %v3799, %v3798
  %v3801 = vextract.low.u32 %v3800
  %v3802 = vextract.high.u32 %v3800
  %v3803 = vmul.u32.u64.compose %v3799, %v3794
  %v3804 = vextract.low.u32 %v3803
  %v3805 = vextract.high.u32 %v3803
  %v3806 = vmul.u32 %v3799, %v3790
  %v3807 = vadd.s32 %v3802, %v3804
  %vm3808 = vc.u32 %v3802, %v3804
  %v3809 = vadd.s32 %v3805, 1
  %v3810 = vsel %vm3808, %v3809, %v3805
  %v3811 = vadd.s32 %v3806, %v3810
  %v3812 = vadd.s32 %v3811, 536870912
  %v3813 = vshrl.u32 %v3812, 30
  %v3814 = vshll.u32 %v3813, 30
  %v3815 = vsub.s32 %v3811, %v3814
  %vm3816 = vcmp.lt.s32.totalorder %v3815, 0
  %v3817 = vsub.s32 0, %v3815
  %v3818 = vsel %vm3816, %v3817, %v3815
  %v3819 = vclz %v3818
  %v3820 = vsub.s32 %v3819, 2
  %vm3821 = vcmp.gt.s32.totalorder 0, %v3820
  %v3822 = vsel %vm3821, 0, %v3820
  %v3823 = vsub.s32 32, %v3822
  %v3824 = vshll.u32 %v3815, %v3822
  %v3825 = vshrl.u32 %v3807, %v3823
  %v3826 = vor.u32 %v3824, %v3825
  %v3827 = vsub.s32 4294967266, %v3822
  %v3828 = vadd.s32 %v3827, 127
  %v3829 = vshll.u32 %v3828, 23
  %v3830 = vor.u32 4788187, %v3829
  %v3831 = vand.u32 2147483647, %v3830
  %v3833 = vcvt.s32.f32 %v3826
  %v3834 = vmul.f32 %v3833, %v3831
  %v3835 = vxor.u32 %v3834, 2147483648
  %v3836 = vsel %vm3753, %v3835, %v3834
  %v3837 = vsub.s32 4, %v3813
  %v3838 = vsel %vm3753, %v3837, %v3813
  %v3839 = vsel %vm3752, %v1747, %v3836
  %v3840 = vsel %vm3752, 0, %v3838
  %v3841 = vcosq.f32.pop %v3839
  %v3842 = vsinq.f32.pop %v3839
  %vm3843 = vweird.f32 %v1747
  %v3844 = vadd.s32 %v3840, 3
  %v3845 = vand.u32 %v3844, 3
  %vm3846 = vcmp.lt.s32.totalorder %v3845, 2
  %vm3847 = vcmp.eq.s32.totalorder %v3845, 0
  %v3848 = vxor.u32 %v3842, 2147483648
  %v3849 = vsel %vm3847, %v3841, %v3848
  %vm3850 = vcmp.eq.s32.totalorder %v3845, 2
  %v3851 = vxor.u32 %v3841, 2147483648
  %v3852 = vsel %vm3850, %v3851, %v3842
  %v3853 = vsel %vm3846, %v3849, %v3852
  %v3854 = vsel %vm3843, nan, %v3853
  %v3855 = vand.u32 2147483647, %v1748
  %vm3856 = vcmp.le.f32.partialorder %v3855, 0.7853982
  %vm3857 = vcmp.lt.s32.totalorder %v1748, 0
  %v3858 = vand.u32 %v1748, 2139095040
  %v3859 = vshrl.u32 %v3858, 23
  %v3860 = vsub.s32 %v3859, 127
  %v3861 = vand.u32 2147483647, %v1748
  %v3862 = vand.u32 %v3861, 8388607
  %v3863 = vor.u32 %v3862, 8388608
  %v3864 = vsub.s32 0, %v3863
  %v3865 = vadd.s32 %v3860, 1
  %vm3866 = vcmp.gt.s32.totalorder %v3865, 0
  %v3867 = vsel %vm3866, %v3865, 0
  %v3868 = vshrl.u32 %v3867, 5
  %v3869 = vand.u32 %v3867, 31
  %v3870 = vsub.s32 32, %v3869
  %v3871 = vshrl.u32 683565275, %v3870
  %v3872 = vshll.u32 683565275, %v3869
  %v3873 = vshrl.u32 2475754826, %v3870
  %v3874 = vor.u32 %v3872, %v3873
  %v3875 = vshll.u32 2475754826, %v3869
  %v3876 = vshrl.u32 2131351028, %v3870
  %v3877 = vor.u32 %v3875, %v3876
  %v3878 = vshll.u32 2131351028, %v3869
  %v3879 = vshrl.u32 2102212464, %v3870
  %v3880 = vor.u32 %v3878, %v3879
  %v3881 = vshll.u32 2102212464, %v3869
  %v3882 = vshrl.u32 920167782, %v3870
  %v3883 = vor.u32 %v3881, %v3882
  %v3884 = vshll.u32 920167782, %v3869
  %v3885 = vshrl.u32 1326507024, %v3870
  %v3886 = vor.u32 %v3884, %v3885
  %vm3887 = vcmp.lt.s32.totalorder %v3868, 1
  %vm3888 = vcmp.lt.s32.totalorder %v3868, 2
  %vm3889 = vcmp.lt.s32.totalorder %v3868, 3
  %vm3890 = vcmp.lt.s32.totalorder %v3868, 4
  %v3891 = vsel %vm3887, %v3871, %v3874
  %v3892 = vsel %vm3890, %v3880, 2102212464
  %v3893 = vsel %vm3889, %v3877, %v3892
  %v3894 = vsel %vm3888, %v3891, %v3893
  %v3895 = vsel %vm3887, %v3874, %v3877
  %v3896 = vsel %vm3890, %v3883, 920167782
  %v3897 = vsel %vm3889, %v3880, %v3896
  %v3898 = vsel %vm3888, %v3895, %v3897
  %v3899 = vsel %vm3887, %v3877, %v3880
  %v3900 = vsel %vm3890, %v3886, 1326507024
  %v3901 = vsel %vm3889, %v3883, %v3900
  %v3902 = vsel %vm3888, %v3899, %v3901
  %v3903 = vshll.u32 %v3863, 8
  %v3904 = vmul.u32.u64.compose %v3903, %v3902
  %v3905 = vextract.low.u32 %v3904
  %v3906 = vextract.high.u32 %v3904
  %v3907 = vmul.u32.u64.compose %v3903, %v3898
  %v3908 = vextract.low.u32 %v3907
  %v3909 = vextract.high.u32 %v3907
  %v3910 = vmul.u32 %v3903, %v3894
  %v3911 = vadd.s32 %v3906, %v3908
  %vm3912 = vc.u32 %v3906, %v3908
  %v3913 = vadd.s32 %v3909, 1
  %v3914 = vsel %vm3912, %v3913, %v3909
  %v3915 = vadd.s32 %v3910, %v3914
  %v3916 = vadd.s32 %v3915, 536870912
  %v3917 = vshrl.u32 %v3916, 30
  %v3918 = vshll.u32 %v3917, 30
  %v3919 = vsub.s32 %v3915, %v3918
  %vm3920 = vcmp.lt.s32.totalorder %v3919, 0
  %v3921 = vsub.s32 0, %v3919
  %v3922 = vsel %vm3920, %v3921, %v3919
  %v3923 = vclz %v3922
  %v3924 = vsub.s32 %v3923, 2
  %vm3925 = vcmp.gt.s32.totalorder 0, %v3924
  %v3926 = vsel %vm3925, 0, %v3924
  %v3927 = vsub.s32 32, %v3926
  %v3928 = vshll.u32 %v3919, %v3926
  %v3929 = vshrl.u32 %v3911, %v3927
  %v3930 = vor.u32 %v3928, %v3929
  %v3931 = vsub.s32 4294967266, %v3926
  %v3932 = vadd.s32 %v3931, 127
  %v3933 = vshll.u32 %v3932, 23
  %v3934 = vor.u32 4788187, %v3933
  %v3935 = vand.u32 2147483647, %v3934
  %v3937 = vcvt.s32.f32 %v3930
  %v3938 = vmul.f32 %v3937, %v3935
  %v3939 = vxor.u32 %v3938, 2147483648
  %v3940 = vsel %vm3857, %v3939, %v3938
  %v3941 = vsub.s32 4, %v3917
  %v3942 = vsel %vm3857, %v3941, %v3917
  %v3943 = vsel %vm3856, %v1748, %v3940
  %v3944 = vsel %vm3856, 0, %v3942
  %v3945 = vcosq.f32.pop %v3943
  %v3946 = vsinq.f32.pop %v3943
  %vm3947 = vweird.f32 %v1748
  %v3948 = vadd.s32 %v3944, 3
  %v3949 = vand.u32 %v3948, 3
  %vm3950 = vcmp.lt.s32.totalorder %v3949, 2
  %vm3951 = vcmp.eq.s32.totalorder %v3949, 0
  %v3952 = vxor.u32 %v3946, 2147483648
  %v3953 = vsel %vm3951, %v3945, %v3952
  %vm3954 = vcmp.eq.s32.totalorder %v3949, 2
  %v3955 = vxor.u32 %v3945, 2147483648
  %v3956 = vsel %vm3954, %v3955, %v3946
  %v3957 = vsel %vm3950, %v3953, %v3956
  %v3958 = vsel %vm3947, nan, %v3957
  %v3959 = vand.u32 2147483647, %v1749
  %vm3960 = vcmp.le.f32.partialorder %v3959, 0.7853982
  %vm3961 = vcmp.lt.s32.totalorder %v1749, 0
  %v3962 = vand.u32 %v1749, 2139095040
  %v3963 = vshrl.u32 %v3962, 23
  %v3964 = vsub.s32 %v3963, 127
  %v3965 = vand.u32 2147483647, %v1749
  %v3966 = vand.u32 %v3965, 8388607
  %v3967 = vor.u32 %v3966, 8388608
  %v3968 = vsub.s32 0, %v3967
  %v3969 = vadd.s32 %v3964, 1
  %vm3970 = vcmp.gt.s32.totalorder %v3969, 0
  %v3971 = vsel %vm3970, %v3969, 0
  %v3972 = vshrl.u32 %v3971, 5
  %v3973 = vand.u32 %v3971, 31
  %v3974 = vsub.s32 32, %v3973
  %v3975 = vshrl.u32 683565275, %v3974
  %v3976 = vshll.u32 683565275, %v3973
  %v3977 = vshrl.u32 2475754826, %v3974
  %v3978 = vor.u32 %v3976, %v3977
  %v3979 = vshll.u32 2475754826, %v3973
  %v3980 = vshrl.u32 2131351028, %v3974
  %v3981 = vor.u32 %v3979, %v3980
  %v3982 = vshll.u32 2131351028, %v3973
  %v3983 = vshrl.u32 2102212464, %v3974
  %v3984 = vor.u32 %v3982, %v3983
  %v3985 = vshll.u32 2102212464, %v3973
  %v3986 = vshrl.u32 920167782, %v3974
  %v3987 = vor.u32 %v3985, %v3986
  %v3988 = vshll.u32 920167782, %v3973
  %v3989 = vshrl.u32 1326507024, %v3974
  %v3990 = vor.u32 %v3988, %v3989
  %vm3991 = vcmp.lt.s32.totalorder %v3972, 1
  %vm3992 = vcmp.lt.s32.totalorder %v3972, 2
  %vm3993 = vcmp.lt.s32.totalorder %v3972, 3
  %vm3994 = vcmp.lt.s32.totalorder %v3972, 4
  %v3995 = vsel %vm3991, %v3975, %v3978
  %v3996 = vsel %vm3994, %v3984, 2102212464
  %v3997 = vsel %vm3993, %v3981, %v3996
  %v3998 = vsel %vm3992, %v3995, %v3997
  %v3999 = vsel %vm3991, %v3978, %v3981
  %v4000 = vsel %vm3994, %v3987, 920167782
  %v4001 = vsel %vm3993, %v3984, %v4000
  %v4002 = vsel %vm3992, %v3999, %v4001
  %v4003 = vsel %vm3991, %v3981, %v3984
  %v4004 = vsel %vm3994, %v3990, 1326507024
  %v4005 = vsel %vm3993, %v3987, %v4004
  %v4006 = vsel %vm3992, %v4003, %v4005
  %v4007 = vshll.u32 %v3967, 8
  %v4008 = vmul.u32.u64.compose %v4007, %v4006
  %v4009 = vextract.low.u32 %v4008
  %v4010 = vextract.high.u32 %v4008
  %v4011 = vmul.u32.u64.compose %v4007, %v4002
  %v4012 = vextract.low.u32 %v4011
  %v4013 = vextract.high.u32 %v4011
  %v4014 = vmul.u32 %v4007, %v3998
  %v4015 = vadd.s32 %v4010, %v4012
  %vm4016 = vc.u32 %v4010, %v4012
  %v4017 = vadd.s32 %v4013, 1
  %v4018 = vsel %vm4016, %v4017, %v4013
  %v4019 = vadd.s32 %v4014, %v4018
  %v4020 = vadd.s32 %v4019, 536870912
  %v4021 = vshrl.u32 %v4020, 30
  %v4022 = vshll.u32 %v4021, 30
  %v4023 = vsub.s32 %v4019, %v4022
  %vm4024 = vcmp.lt.s32.totalorder %v4023, 0
  %v4025 = vsub.s32 0, %v4023
  %v4026 = vsel %vm4024, %v4025, %v4023
  %v4027 = vclz %v4026
  %v4028 = vsub.s32 %v4027, 2
  %vm4029 = vcmp.gt.s32.totalorder 0, %v4028
  %v4030 = vsel %vm4029, 0, %v4028
  %v4031 = vsub.s32 32, %v4030
  %v4032 = vshll.u32 %v4023, %v4030
  %v4033 = vshrl.u32 %v4015, %v4031
  %v4034 = vor.u32 %v4032, %v4033
  %v4035 = vsub.s32 4294967266, %v4030
  %v4036 = vadd.s32 %v4035, 127
  %v4037 = vshll.u32 %v4036, 23
  %v4038 = vor.u32 4788187, %v4037
  %v4039 = vand.u32 2147483647, %v4038
  %v4041 = vcvt.s32.f32 %v4034
  %v4042 = vmul.f32 %v4041, %v4039
  %v4043 = vxor.u32 %v4042, 2147483648
  %v4044 = vsel %vm3961, %v4043, %v4042
  %v4045 = vsub.s32 4, %v4021
  %v4046 = vsel %vm3961, %v4045, %v4021
  %v4047 = vsel %vm3960, %v1749, %v4044
  %v4048 = vsel %vm3960, 0, %v4046
  %v4049 = vcosq.f32.pop %v4047
  %v4050 = vsinq.f32.pop %v4047
  %vm4051 = vweird.f32 %v1749
  %v4052 = vadd.s32 %v4048, 3
  %v4053 = vand.u32 %v4052, 3
  %vm4054 = vcmp.lt.s32.totalorder %v4053, 2
  %vm4055 = vcmp.eq.s32.totalorder %v4053, 0
  %v4056 = vxor.u32 %v4050, 2147483648
  %v4057 = vsel %vm4055, %v4049, %v4056
  %vm4058 = vcmp.eq.s32.totalorder %v4053, 2
  %v4059 = vxor.u32 %v4049, 2147483648
  %v4060 = vsel %vm4058, %v4059, %v4050
  %v4061 = vsel %vm4054, %v4057, %v4060
  %v4062 = vsel %vm4051, nan, %v4061
  %v4063 = vand.u32 2147483647, %v1750
  %vm4064 = vcmp.le.f32.partialorder %v4063, 0.7853982
  %vm4065 = vcmp.lt.s32.totalorder %v1750, 0
  %v4066 = vand.u32 %v1750, 2139095040
  %v4067 = vshrl.u32 %v4066, 23
  %v4068 = vsub.s32 %v4067, 127
  %v4069 = vand.u32 2147483647, %v1750
  %v4070 = vand.u32 %v4069, 8388607
  %v4071 = vor.u32 %v4070, 8388608
  %v4072 = vsub.s32 0, %v4071
  %v4073 = vadd.s32 %v4068, 1
  %vm4074 = vcmp.gt.s32.totalorder %v4073, 0
  %v4075 = vsel %vm4074, %v4073, 0
  %v4076 = vshrl.u32 %v4075, 5
  %v4077 = vand.u32 %v4075, 31
  %v4078 = vsub.s32 32, %v4077
  %v4079 = vshrl.u32 683565275, %v4078
  %v4080 = vshll.u32 683565275, %v4077
  %v4081 = vshrl.u32 2475754826, %v4078
  %v4082 = vor.u32 %v4080, %v4081
  %v4083 = vshll.u32 2475754826, %v4077
  %v4084 = vshrl.u32 2131351028, %v4078
  %v4085 = vor.u32 %v4083, %v4084
  %v4086 = vshll.u32 2131351028, %v4077
  %v4087 = vshrl.u32 2102212464, %v4078
  %v4088 = vor.u32 %v4086, %v4087
  %v4089 = vshll.u32 2102212464, %v4077
  %v4090 = vshrl.u32 920167782, %v4078
  %v4091 = vor.u32 %v4089, %v4090
  %v4092 = vshll.u32 920167782, %v4077
  %v4093 = vshrl.u32 1326507024, %v4078
  %v4094 = vor.u32 %v4092, %v4093
  %vm4095 = vcmp.lt.s32.totalorder %v4076, 1
  %vm4096 = vcmp.lt.s32.totalorder %v4076, 2
  %vm4097 = vcmp.lt.s32.totalorder %v4076, 3
  %vm4098 = vcmp.lt.s32.totalorder %v4076, 4
  %v4099 = vsel %vm4095, %v4079, %v4082
  %v4100 = vsel %vm4098, %v4088, 2102212464
  %v4101 = vsel %vm4097, %v4085, %v4100
  %v4102 = vsel %vm4096, %v4099, %v4101
  %v4103 = vsel %vm4095, %v4082, %v4085
  %v4104 = vsel %vm4098, %v4091, 920167782
  %v4105 = vsel %vm4097, %v4088, %v4104
  %v4106 = vsel %vm4096, %v4103, %v4105
  %v4107 = vsel %vm4095, %v4085, %v4088
  %v4108 = vsel %vm4098, %v4094, 1326507024
  %v4109 = vsel %vm4097, %v4091, %v4108
  %v4110 = vsel %vm4096, %v4107, %v4109
  %v4111 = vshll.u32 %v4071, 8
  %v4112 = vmul.u32.u64.compose %v4111, %v4110
  %v4113 = vextract.low.u32 %v4112
  %v4114 = vextract.high.u32 %v4112
  %v4115 = vmul.u32.u64.compose %v4111, %v4106
  %v4116 = vextract.low.u32 %v4115
  %v4117 = vextract.high.u32 %v4115
  %v4118 = vmul.u32 %v4111, %v4102
  %v4119 = vadd.s32 %v4114, %v4116
  %vm4120 = vc.u32 %v4114, %v4116
  %v4121 = vadd.s32 %v4117, 1
  %v4122 = vsel %vm4120, %v4121, %v4117
  %v4123 = vadd.s32 %v4118, %v4122
  %v4124 = vadd.s32 %v4123, 536870912
  %v4125 = vshrl.u32 %v4124, 30
  %v4126 = vshll.u32 %v4125, 30
  %v4127 = vsub.s32 %v4123, %v4126
  %vm4128 = vcmp.lt.s32.totalorder %v4127, 0
  %v4129 = vsub.s32 0, %v4127
  %v4130 = vsel %vm4128, %v4129, %v4127
  %v4131 = vclz %v4130
  %v4132 = vsub.s32 %v4131, 2
  %vm4133 = vcmp.gt.s32.totalorder 0, %v4132
  %v4134 = vsel %vm4133, 0, %v4132
  %v4135 = vsub.s32 32, %v4134
  %v4136 = vshll.u32 %v4127, %v4134
  %v4137 = vshrl.u32 %v4119, %v4135
  %v4138 = vor.u32 %v4136, %v4137
  %v4139 = vsub.s32 4294967266, %v4134
  %v4140 = vadd.s32 %v4139, 127
  %v4141 = vshll.u32 %v4140, 23
  %v4142 = vor.u32 4788187, %v4141
  %v4143 = vand.u32 2147483647, %v4142
  %v4145 = vcvt.s32.f32 %v4138
  %v4146 = vmul.f32 %v4145, %v4143
  %v4147 = vxor.u32 %v4146, 2147483648
  %v4148 = vsel %vm4065, %v4147, %v4146
  %v4149 = vsub.s32 4, %v4125
  %v4150 = vsel %vm4065, %v4149, %v4125
  %v4151 = vsel %vm4064, %v1750, %v4148
  %v4152 = vsel %vm4064, 0, %v4150
  %v4153 = vcosq.f32.pop %v4151
  %v4154 = vsinq.f32.pop %v4151
  %vm4155 = vweird.f32 %v1750
  %v4156 = vadd.s32 %v4152, 3
  %v4157 = vand.u32 %v4156, 3
  %vm4158 = vcmp.lt.s32.totalorder %v4157, 2
  %vm4159 = vcmp.eq.s32.totalorder %v4157, 0
  %v4160 = vxor.u32 %v4154, 2147483648
  %v4161 = vsel %vm4159, %v4153, %v4160
  %vm4162 = vcmp.eq.s32.totalorder %v4157, 2
  %v4163 = vxor.u32 %v4153, 2147483648
  %v4164 = vsel %vm4162, %v4163, %v4154
  %v4165 = vsel %vm4158, %v4161, %v4164
  %v4166 = vsel %vm4155, nan, %v4165
  %v4167 = vand.u32 2147483647, %v1751
  %vm4168 = vcmp.le.f32.partialorder %v4167, 0.7853982
  %vm4169 = vcmp.lt.s32.totalorder %v1751, 0
  %v4170 = vand.u32 %v1751, 2139095040
  %v4171 = vshrl.u32 %v4170, 23
  %v4172 = vsub.s32 %v4171, 127
  %v4173 = vand.u32 2147483647, %v1751
  %v4174 = vand.u32 %v4173, 8388607
  %v4175 = vor.u32 %v4174, 8388608
  %v4176 = vsub.s32 0, %v4175
  %v4177 = vadd.s32 %v4172, 1
  %vm4178 = vcmp.gt.s32.totalorder %v4177, 0
  %v4179 = vsel %vm4178, %v4177, 0
  %v4180 = vshrl.u32 %v4179, 5
  %v4181 = vand.u32 %v4179, 31
  %v4182 = vsub.s32 32, %v4181
  %v4183 = vshrl.u32 683565275, %v4182
  %v4184 = vshll.u32 683565275, %v4181
  %v4185 = vshrl.u32 2475754826, %v4182
  %v4186 = vor.u32 %v4184, %v4185
  %v4187 = vshll.u32 2475754826, %v4181
  %v4188 = vshrl.u32 2131351028, %v4182
  %v4189 = vor.u32 %v4187, %v4188
  %v4190 = vshll.u32 2131351028, %v4181
  %v4191 = vshrl.u32 2102212464, %v4182
  %v4192 = vor.u32 %v4190, %v4191
  %v4193 = vshll.u32 2102212464, %v4181
  %v4194 = vshrl.u32 920167782, %v4182
  %v4195 = vor.u32 %v4193, %v4194
  %v4196 = vshll.u32 920167782, %v4181
  %v4197 = vshrl.u32 1326507024, %v4182
  %v4198 = vor.u32 %v4196, %v4197
  %vm4199 = vcmp.lt.s32.totalorder %v4180, 1
  %vm4200 = vcmp.lt.s32.totalorder %v4180, 2
  %vm4201 = vcmp.lt.s32.totalorder %v4180, 3
  %vm4202 = vcmp.lt.s32.totalorder %v4180, 4
  %v4203 = vsel %vm4199, %v4183, %v4186
  %v4204 = vsel %vm4202, %v4192, 2102212464
  %v4205 = vsel %vm4201, %v4189, %v4204
  %v4206 = vsel %vm4200, %v4203, %v4205
  %v4207 = vsel %vm4199, %v4186, %v4189
  %v4208 = vsel %vm4202, %v4195, 920167782
  %v4209 = vsel %vm4201, %v4192, %v4208
  %v4210 = vsel %vm4200, %v4207, %v4209
  %v4211 = vsel %vm4199, %v4189, %v4192
  %v4212 = vsel %vm4202, %v4198, 1326507024
  %v4213 = vsel %vm4201, %v4195, %v4212
  %v4214 = vsel %vm4200, %v4211, %v4213
  %v4215 = vshll.u32 %v4175, 8
  %v4216 = vmul.u32.u64.compose %v4215, %v4214
  %v4217 = vextract.low.u32 %v4216
  %v4218 = vextract.high.u32 %v4216
  %v4219 = vmul.u32.u64.compose %v4215, %v4210
  %v4220 = vextract.low.u32 %v4219
  %v4221 = vextract.high.u32 %v4219
  %v4222 = vmul.u32 %v4215, %v4206
  %v4223 = vadd.s32 %v4218, %v4220
  %vm4224 = vc.u32 %v4218, %v4220
  %v4225 = vadd.s32 %v4221, 1
  %v4226 = vsel %vm4224, %v4225, %v4221
  %v4227 = vadd.s32 %v4222, %v4226
  %v4228 = vadd.s32 %v4227, 536870912
  %v4229 = vshrl.u32 %v4228, 30
  %v4230 = vshll.u32 %v4229, 30
  %v4231 = vsub.s32 %v4227, %v4230
  %vm4232 = vcmp.lt.s32.totalorder %v4231, 0
  %v4233 = vsub.s32 0, %v4231
  %v4234 = vsel %vm4232, %v4233, %v4231
  %v4235 = vclz %v4234
  %v4236 = vsub.s32 %v4235, 2
  %vm4237 = vcmp.gt.s32.totalorder 0, %v4236
  %v4238 = vsel %vm4237, 0, %v4236
  %v4239 = vsub.s32 32, %v4238
  %v4240 = vshll.u32 %v4231, %v4238
  %v4241 = vshrl.u32 %v4223, %v4239
  %v4242 = vor.u32 %v4240, %v4241
  %v4243 = vsub.s32 4294967266, %v4238
  %v4244 = vadd.s32 %v4243, 127
  %v4245 = vshll.u32 %v4244, 23
  %v4246 = vor.u32 4788187, %v4245
  %v4247 = vand.u32 2147483647, %v4246
  %v4249 = vcvt.s32.f32 %v4242
  %v4250 = vmul.f32 %v4249, %v4247
  %v4251 = vxor.u32 %v4250, 2147483648
  %v4252 = vsel %vm4169, %v4251, %v4250
  %v4253 = vsub.s32 4, %v4229
  %v4254 = vsel %vm4169, %v4253, %v4229
  %v4255 = vsel %vm4168, %v1751, %v4252
  %v4256 = vsel %vm4168, 0, %v4254
  %v4257 = vcosq.f32.pop %v4255
  %v4258 = vsinq.f32.pop %v4255
  %vm4259 = vweird.f32 %v1751
  %v4260 = vadd.s32 %v4256, 3
  %v4261 = vand.u32 %v4260, 3
  %vm4262 = vcmp.lt.s32.totalorder %v4261, 2
  %vm4263 = vcmp.eq.s32.totalorder %v4261, 0
  %v4264 = vxor.u32 %v4258, 2147483648
  %v4265 = vsel %vm4263, %v4257, %v4264
  %vm4266 = vcmp.eq.s32.totalorder %v4261, 2
  %v4267 = vxor.u32 %v4257, 2147483648
  %v4268 = vsel %vm4266, %v4267, %v4258
  %v4269 = vsel %vm4262, %v4265, %v4268
  %v4270 = vsel %vm4259, nan, %v4269
  %v4271 = vand.u32 2147483647, %v1752
  %vm4272 = vcmp.le.f32.partialorder %v4271, 0.7853982
  %vm4273 = vcmp.lt.s32.totalorder %v1752, 0
  %v4274 = vand.u32 %v1752, 2139095040
  %v4275 = vshrl.u32 %v4274, 23
  %v4276 = vsub.s32 %v4275, 127
  %v4277 = vand.u32 2147483647, %v1752
  %v4278 = vand.u32 %v4277, 8388607
  %v4279 = vor.u32 %v4278, 8388608
  %v4280 = vsub.s32 0, %v4279
  %v4281 = vadd.s32 %v4276, 1
  %vm4282 = vcmp.gt.s32.totalorder %v4281, 0
  %v4283 = vsel %vm4282, %v4281, 0
  %v4284 = vshrl.u32 %v4283, 5
  %v4285 = vand.u32 %v4283, 31
  %v4286 = vsub.s32 32, %v4285
  %v4287 = vshrl.u32 683565275, %v4286
  %v4288 = vshll.u32 683565275, %v4285
  %v4289 = vshrl.u32 2475754826, %v4286
  %v4290 = vor.u32 %v4288, %v4289
  %v4291 = vshll.u32 2475754826, %v4285
  %v4292 = vshrl.u32 2131351028, %v4286
  %v4293 = vor.u32 %v4291, %v4292
  %v4294 = vshll.u32 2131351028, %v4285
  %v4295 = vshrl.u32 2102212464, %v4286
  %v4296 = vor.u32 %v4294, %v4295
  %v4297 = vshll.u32 2102212464, %v4285
  %v4298 = vshrl.u32 920167782, %v4286
  %v4299 = vor.u32 %v4297, %v4298
  %v4300 = vshll.u32 920167782, %v4285
  %v4301 = vshrl.u32 1326507024, %v4286
  %v4302 = vor.u32 %v4300, %v4301
  %vm4303 = vcmp.lt.s32.totalorder %v4284, 1
  %vm4304 = vcmp.lt.s32.totalorder %v4284, 2
  %vm4305 = vcmp.lt.s32.totalorder %v4284, 3
  %vm4306 = vcmp.lt.s32.totalorder %v4284, 4
  %v4307 = vsel %vm4303, %v4287, %v4290
  %v4308 = vsel %vm4306, %v4296, 2102212464
  %v4309 = vsel %vm4305, %v4293, %v4308
  %v4310 = vsel %vm4304, %v4307, %v4309
  %v4311 = vsel %vm4303, %v4290, %v4293
  %v4312 = vsel %vm4306, %v4299, 920167782
  %v4313 = vsel %vm4305, %v4296, %v4312
  %v4314 = vsel %vm4304, %v4311, %v4313
  %v4315 = vsel %vm4303, %v4293, %v4296
  %v4316 = vsel %vm4306, %v4302, 1326507024
  %v4317 = vsel %vm4305, %v4299, %v4316
  %v4318 = vsel %vm4304, %v4315, %v4317
  %v4319 = vshll.u32 %v4279, 8
  %v4320 = vmul.u32.u64.compose %v4319, %v4318
  %v4321 = vextract.low.u32 %v4320
  %v4322 = vextract.high.u32 %v4320
  %v4323 = vmul.u32.u64.compose %v4319, %v4314
  %v4324 = vextract.low.u32 %v4323
  %v4325 = vextract.high.u32 %v4323
  %v4326 = vmul.u32 %v4319, %v4310
  %v4327 = vadd.s32 %v4322, %v4324
  %vm4328 = vc.u32 %v4322, %v4324
  %v4329 = vadd.s32 %v4325, 1
  %v4330 = vsel %vm4328, %v4329, %v4325
  %v4331 = vadd.s32 %v4326, %v4330
  %v4332 = vadd.s32 %v4331, 536870912
  %v4333 = vshrl.u32 %v4332, 30
  %v4334 = vshll.u32 %v4333, 30
  %v4335 = vsub.s32 %v4331, %v4334
  %vm4336 = vcmp.lt.s32.totalorder %v4335, 0
  %v4337 = vsub.s32 0, %v4335
  %v4338 = vsel %vm4336, %v4337, %v4335
  %v4339 = vclz %v4338
  %v4340 = vsub.s32 %v4339, 2
  %vm4341 = vcmp.gt.s32.totalorder 0, %v4340
  %v4342 = vsel %vm4341, 0, %v4340
  %v4343 = vsub.s32 32, %v4342
  %v4344 = vshll.u32 %v4335, %v4342
  %v4345 = vshrl.u32 %v4327, %v4343
  %v4346 = vor.u32 %v4344, %v4345
  %v4347 = vsub.s32 4294967266, %v4342
  %v4348 = vadd.s32 %v4347, 127
  %v4349 = vshll.u32 %v4348, 23
  %v4350 = vor.u32 4788187, %v4349
  %v4351 = vand.u32 2147483647, %v4350
  %v4353 = vcvt.s32.f32 %v4346
  %v4354 = vmul.f32 %v4353, %v4351
  %v4355 = vxor.u32 %v4354, 2147483648
  %v4356 = vsel %vm4273, %v4355, %v4354
  %v4357 = vsub.s32 4, %v4333
  %v4358 = vsel %vm4273, %v4357, %v4333
  %v4359 = vsel %vm4272, %v1752, %v4356
  %v4360 = vsel %vm4272, 0, %v4358
  %v4361 = vcosq.f32.pop %v4359
  %v4362 = vsinq.f32.pop %v4359
  %vm4363 = vweird.f32 %v1752
  %v4364 = vadd.s32 %v4360, 3
  %v4365 = vand.u32 %v4364, 3
  %vm4366 = vcmp.lt.s32.totalorder %v4365, 2
  %vm4367 = vcmp.eq.s32.totalorder %v4365, 0
  %v4368 = vxor.u32 %v4362, 2147483648
  %v4369 = vsel %vm4367, %v4361, %v4368
  %vm4370 = vcmp.eq.s32.totalorder %v4365, 2
  %v4371 = vxor.u32 %v4361, 2147483648
  %v4372 = vsel %vm4370, %v4371, %v4362
  %v4373 = vsel %vm4366, %v4369, %v4372
  %v4374 = vsel %vm4363, nan, %v4373
  %v4375 = vand.u32 2147483647, %v1753
  %vm4376 = vcmp.le.f32.partialorder %v4375, 0.7853982
  %vm4377 = vcmp.lt.s32.totalorder %v1753, 0
  %v4378 = vand.u32 %v1753, 2139095040
  %v4379 = vshrl.u32 %v4378, 23
  %v4380 = vsub.s32 %v4379, 127
  %v4381 = vand.u32 2147483647, %v1753
  %v4382 = vand.u32 %v4381, 8388607
  %v4383 = vor.u32 %v4382, 8388608
  %v4384 = vsub.s32 0, %v4383
  %v4385 = vadd.s32 %v4380, 1
  %vm4386 = vcmp.gt.s32.totalorder %v4385, 0
  %v4387 = vsel %vm4386, %v4385, 0
  %v4388 = vshrl.u32 %v4387, 5
  %v4389 = vand.u32 %v4387, 31
  %v4390 = vsub.s32 32, %v4389
  %v4391 = vshrl.u32 683565275, %v4390
  %v4392 = vshll.u32 683565275, %v4389
  %v4393 = vshrl.u32 2475754826, %v4390
  %v4394 = vor.u32 %v4392, %v4393
  %v4395 = vshll.u32 2475754826, %v4389
  %v4396 = vshrl.u32 2131351028, %v4390
  %v4397 = vor.u32 %v4395, %v4396
  %v4398 = vshll.u32 2131351028, %v4389
  %v4399 = vshrl.u32 2102212464, %v4390
  %v4400 = vor.u32 %v4398, %v4399
  %v4401 = vshll.u32 2102212464, %v4389
  %v4402 = vshrl.u32 920167782, %v4390
  %v4403 = vor.u32 %v4401, %v4402
  %v4404 = vshll.u32 920167782, %v4389
  %v4405 = vshrl.u32 1326507024, %v4390
  %v4406 = vor.u32 %v4404, %v4405
  %vm4407 = vcmp.lt.s32.totalorder %v4388, 1
  %vm4408 = vcmp.lt.s32.totalorder %v4388, 2
  %vm4409 = vcmp.lt.s32.totalorder %v4388, 3
  %vm4410 = vcmp.lt.s32.totalorder %v4388, 4
  %v4411 = vsel %vm4407, %v4391, %v4394
  %v4412 = vsel %vm4410, %v4400, 2102212464
  %v4413 = vsel %vm4409, %v4397, %v4412
  %v4414 = vsel %vm4408, %v4411, %v4413
  %v4415 = vsel %vm4407, %v4394, %v4397
  %v4416 = vsel %vm4410, %v4403, 920167782
  %v4417 = vsel %vm4409, %v4400, %v4416
  %v4418 = vsel %vm4408, %v4415, %v4417
  %v4419 = vsel %vm4407, %v4397, %v4400
  %v4420 = vsel %vm4410, %v4406, 1326507024
  %v4421 = vsel %vm4409, %v4403, %v4420
  %v4422 = vsel %vm4408, %v4419, %v4421
  %v4423 = vshll.u32 %v4383, 8
  %v4424 = vmul.u32.u64.compose %v4423, %v4422
  %v4425 = vextract.low.u32 %v4424
  %v4426 = vextract.high.u32 %v4424
  %v4427 = vmul.u32.u64.compose %v4423, %v4418
  %v4428 = vextract.low.u32 %v4427
  %v4429 = vextract.high.u32 %v4427
  %v4430 = vmul.u32 %v4423, %v4414
  %v4431 = vadd.s32 %v4426, %v4428
  %vm4432 = vc.u32 %v4426, %v4428
  %v4433 = vadd.s32 %v4429, 1
  %v4434 = vsel %vm4432, %v4433, %v4429
  %v4435 = vadd.s32 %v4430, %v4434
  %v4436 = vadd.s32 %v4435, 536870912
  %v4437 = vshrl.u32 %v4436, 30
  %v4438 = vshll.u32 %v4437, 30
  %v4439 = vsub.s32 %v4435, %v4438
  %vm4440 = vcmp.lt.s32.totalorder %v4439, 0
  %v4441 = vsub.s32 0, %v4439
  %v4442 = vsel %vm4440, %v4441, %v4439
  %v4443 = vclz %v4442
  %v4444 = vsub.s32 %v4443, 2
  %vm4445 = vcmp.gt.s32.totalorder 0, %v4444
  %v4446 = vsel %vm4445, 0, %v4444
  %v4447 = vsub.s32 32, %v4446
  %v4448 = vshll.u32 %v4439, %v4446
  %v4449 = vshrl.u32 %v4431, %v4447
  %v4450 = vor.u32 %v4448, %v4449
  %v4451 = vsub.s32 4294967266, %v4446
  %v4452 = vadd.s32 %v4451, 127
  %v4453 = vshll.u32 %v4452, 23
  %v4454 = vor.u32 4788187, %v4453
  %v4455 = vand.u32 2147483647, %v4454
  %v4457 = vcvt.s32.f32 %v4450
  %v4458 = vmul.f32 %v4457, %v4455
  %v4459 = vxor.u32 %v4458, 2147483648
  %v4460 = vsel %vm4377, %v4459, %v4458
  %v4461 = vsub.s32 4, %v4437
  %v4462 = vsel %vm4377, %v4461, %v4437
  %v4463 = vsel %vm4376, %v1753, %v4460
  %v4464 = vsel %vm4376, 0, %v4462
  %v4465 = vcosq.f32.pop %v4463
  %v4466 = vsinq.f32.pop %v4463
  %vm4467 = vweird.f32 %v1753
  %v4468 = vadd.s32 %v4464, 3
  %v4469 = vand.u32 %v4468, 3
  %vm4470 = vcmp.lt.s32.totalorder %v4469, 2
  %vm4471 = vcmp.eq.s32.totalorder %v4469, 0
  %v4472 = vxor.u32 %v4466, 2147483648
  %v4473 = vsel %vm4471, %v4465, %v4472
  %vm4474 = vcmp.eq.s32.totalorder %v4469, 2
  %v4475 = vxor.u32 %v4465, 2147483648
  %v4476 = vsel %vm4474, %v4475, %v4466
  %v4477 = vsel %vm4470, %v4473, %v4476
  %v4478 = vsel %vm4467, nan, %v4477
  %v4479 = vand.u32 2147483647, %v1754
  %vm4480 = vcmp.le.f32.partialorder %v4479, 0.7853982
  %vm4481 = vcmp.lt.s32.totalorder %v1754, 0
  %v4482 = vand.u32 %v1754, 2139095040
  %v4483 = vshrl.u32 %v4482, 23
  %v4484 = vsub.s32 %v4483, 127
  %v4485 = vand.u32 2147483647, %v1754
  %v4486 = vand.u32 %v4485, 8388607
  %v4487 = vor.u32 %v4486, 8388608
  %v4488 = vsub.s32 0, %v4487
  %v4489 = vadd.s32 %v4484, 1
  %vm4490 = vcmp.gt.s32.totalorder %v4489, 0
  %v4491 = vsel %vm4490, %v4489, 0
  %v4492 = vshrl.u32 %v4491, 5
  %v4493 = vand.u32 %v4491, 31
  %v4494 = vsub.s32 32, %v4493
  %v4495 = vshrl.u32 683565275, %v4494
  %v4496 = vshll.u32 683565275, %v4493
  %v4497 = vshrl.u32 2475754826, %v4494
  %v4498 = vor.u32 %v4496, %v4497
  %v4499 = vshll.u32 2475754826, %v4493
  %v4500 = vshrl.u32 2131351028, %v4494
  %v4501 = vor.u32 %v4499, %v4500
  %v4502 = vshll.u32 2131351028, %v4493
  %v4503 = vshrl.u32 2102212464, %v4494
  %v4504 = vor.u32 %v4502, %v4503
  %v4505 = vshll.u32 2102212464, %v4493
  %v4506 = vshrl.u32 920167782, %v4494
  %v4507 = vor.u32 %v4505, %v4506
  %v4508 = vshll.u32 920167782, %v4493
  %v4509 = vshrl.u32 1326507024, %v4494
  %v4510 = vor.u32 %v4508, %v4509
  %vm4511 = vcmp.lt.s32.totalorder %v4492, 1
  %vm4512 = vcmp.lt.s32.totalorder %v4492, 2
  %vm4513 = vcmp.lt.s32.totalorder %v4492, 3
  %vm4514 = vcmp.lt.s32.totalorder %v4492, 4
  %v4515 = vsel %vm4511, %v4495, %v4498
  %v4516 = vsel %vm4514, %v4504, 2102212464
  %v4517 = vsel %vm4513, %v4501, %v4516
  %v4518 = vsel %vm4512, %v4515, %v4517
  %v4519 = vsel %vm4511, %v4498, %v4501
  %v4520 = vsel %vm4514, %v4507, 920167782
  %v4521 = vsel %vm4513, %v4504, %v4520
  %v4522 = vsel %vm4512, %v4519, %v4521
  %v4523 = vsel %vm4511, %v4501, %v4504
  %v4524 = vsel %vm4514, %v4510, 1326507024
  %v4525 = vsel %vm4513, %v4507, %v4524
  %v4526 = vsel %vm4512, %v4523, %v4525
  %v4527 = vshll.u32 %v4487, 8
  %v4528 = vmul.u32.u64.compose %v4527, %v4526
  %v4529 = vextract.low.u32 %v4528
  %v4530 = vextract.high.u32 %v4528
  %v4531 = vmul.u32.u64.compose %v4527, %v4522
  %v4532 = vextract.low.u32 %v4531
  %v4533 = vextract.high.u32 %v4531
  %v4534 = vmul.u32 %v4527, %v4518
  %v4535 = vadd.s32 %v4530, %v4532
  %vm4536 = vc.u32 %v4530, %v4532
  %v4537 = vadd.s32 %v4533, 1
  %v4538 = vsel %vm4536, %v4537, %v4533
  %v4539 = vadd.s32 %v4534, %v4538
  %v4540 = vadd.s32 %v4539, 536870912
  %v4541 = vshrl.u32 %v4540, 30
  %v4542 = vshll.u32 %v4541, 30
  %v4543 = vsub.s32 %v4539, %v4542
  %vm4544 = vcmp.lt.s32.totalorder %v4543, 0
  %v4545 = vsub.s32 0, %v4543
  %v4546 = vsel %vm4544, %v4545, %v4543
  %v4547 = vclz %v4546
  %v4548 = vsub.s32 %v4547, 2
  %vm4549 = vcmp.gt.s32.totalorder 0, %v4548
  %v4550 = vsel %vm4549, 0, %v4548
  %v4551 = vsub.s32 32, %v4550
  %v4552 = vshll.u32 %v4543, %v4550
  %v4553 = vshrl.u32 %v4535, %v4551
  %v4554 = vor.u32 %v4552, %v4553
  %v4555 = vsub.s32 4294967266, %v4550
  %v4556 = vadd.s32 %v4555, 127
  %v4557 = vshll.u32 %v4556, 23
  %v4558 = vor.u32 4788187, %v4557
  %v4559 = vand.u32 2147483647, %v4558
  %v4561 = vcvt.s32.f32 %v4554
  %v4562 = vmul.f32 %v4561, %v4559
  %v4563 = vxor.u32 %v4562, 2147483648
  %v4564 = vsel %vm4481, %v4563, %v4562
  %v4565 = vsub.s32 4, %v4541
  %v4566 = vsel %vm4481, %v4565, %v4541
  %v4567 = vsel %vm4480, %v1754, %v4564
  %v4568 = vsel %vm4480, 0, %v4566
  %v4569 = vcosq.f32.pop %v4567
  %v4570 = vsinq.f32.pop %v4567
  %vm4571 = vweird.f32 %v1754
  %v4572 = vadd.s32 %v4568, 3
  %v4573 = vand.u32 %v4572, 3
  %vm4574 = vcmp.lt.s32.totalorder %v4573, 2
  %vm4575 = vcmp.eq.s32.totalorder %v4573, 0
  %v4576 = vxor.u32 %v4570, 2147483648
  %v4577 = vsel %vm4575, %v4569, %v4576
  %vm4578 = vcmp.eq.s32.totalorder %v4573, 2
  %v4579 = vxor.u32 %v4569, 2147483648
  %v4580 = vsel %vm4578, %v4579, %v4570
  %v4581 = vsel %vm4574, %v4577, %v4580
  %v4582 = vsel %vm4571, nan, %v4581
  %v4583 = vand.u32 2147483647, %v1755
  %vm4584 = vcmp.le.f32.partialorder %v4583, 0.7853982
  %vm4585 = vcmp.lt.s32.totalorder %v1755, 0
  %v4586 = vand.u32 %v1755, 2139095040
  %v4587 = vshrl.u32 %v4586, 23
  %v4588 = vsub.s32 %v4587, 127
  %v4589 = vand.u32 2147483647, %v1755
  %v4590 = vand.u32 %v4589, 8388607
  %v4591 = vor.u32 %v4590, 8388608
  %v4592 = vsub.s32 0, %v4591
  %v4593 = vadd.s32 %v4588, 1
  %vm4594 = vcmp.gt.s32.totalorder %v4593, 0
  %v4595 = vsel %vm4594, %v4593, 0
  %v4596 = vshrl.u32 %v4595, 5
  %v4597 = vand.u32 %v4595, 31
  %v4598 = vsub.s32 32, %v4597
  %v4599 = vshrl.u32 683565275, %v4598
  %v4600 = vshll.u32 683565275, %v4597
  %v4601 = vshrl.u32 2475754826, %v4598
  %v4602 = vor.u32 %v4600, %v4601
  %v4603 = vshll.u32 2475754826, %v4597
  %v4604 = vshrl.u32 2131351028, %v4598
  %v4605 = vor.u32 %v4603, %v4604
  %v4606 = vshll.u32 2131351028, %v4597
  %v4607 = vshrl.u32 2102212464, %v4598
  %v4608 = vor.u32 %v4606, %v4607
  %v4609 = vshll.u32 2102212464, %v4597
  %v4610 = vshrl.u32 920167782, %v4598
  %v4611 = vor.u32 %v4609, %v4610
  %v4612 = vshll.u32 920167782, %v4597
  %v4613 = vshrl.u32 1326507024, %v4598
  %v4614 = vor.u32 %v4612, %v4613
  %vm4615 = vcmp.lt.s32.totalorder %v4596, 1
  %vm4616 = vcmp.lt.s32.totalorder %v4596, 2
  %vm4617 = vcmp.lt.s32.totalorder %v4596, 3
  %vm4618 = vcmp.lt.s32.totalorder %v4596, 4
  %v4619 = vsel %vm4615, %v4599, %v4602
  %v4620 = vsel %vm4618, %v4608, 2102212464
  %v4621 = vsel %vm4617, %v4605, %v4620
  %v4622 = vsel %vm4616, %v4619, %v4621
  %v4623 = vsel %vm4615, %v4602, %v4605
  %v4624 = vsel %vm4618, %v4611, 920167782
  %v4625 = vsel %vm4617, %v4608, %v4624
  %v4626 = vsel %vm4616, %v4623, %v4625
  %v4627 = vsel %vm4615, %v4605, %v4608
  %v4628 = vsel %vm4618, %v4614, 1326507024
  %v4629 = vsel %vm4617, %v4611, %v4628
  %v4630 = vsel %vm4616, %v4627, %v4629
  %v4631 = vshll.u32 %v4591, 8
  %v4632 = vmul.u32.u64.compose %v4631, %v4630
  %v4633 = vextract.low.u32 %v4632
  %v4634 = vextract.high.u32 %v4632
  %v4635 = vmul.u32.u64.compose %v4631, %v4626
  %v4636 = vextract.low.u32 %v4635
  %v4637 = vextract.high.u32 %v4635
  %v4638 = vmul.u32 %v4631, %v4622
  %v4639 = vadd.s32 %v4634, %v4636
  %vm4640 = vc.u32 %v4634, %v4636
  %v4641 = vadd.s32 %v4637, 1
  %v4642 = vsel %vm4640, %v4641, %v4637
  %v4643 = vadd.s32 %v4638, %v4642
  %v4644 = vadd.s32 %v4643, 536870912
  %v4645 = vshrl.u32 %v4644, 30
  %v4646 = vshll.u32 %v4645, 30
  %v4647 = vsub.s32 %v4643, %v4646
  %vm4648 = vcmp.lt.s32.totalorder %v4647, 0
  %v4649 = vsub.s32 0, %v4647
  %v4650 = vsel %vm4648, %v4649, %v4647
  %v4651 = vclz %v4650
  %v4652 = vsub.s32 %v4651, 2
  %vm4653 = vcmp.gt.s32.totalorder 0, %v4652
  %v4654 = vsel %vm4653, 0, %v4652
  %v4655 = vsub.s32 32, %v4654
  %v4656 = vshll.u32 %v4647, %v4654
  %v4657 = vshrl.u32 %v4639, %v4655
  %v4658 = vor.u32 %v4656, %v4657
  %v4659 = vsub.s32 4294967266, %v4654
  %v4660 = vadd.s32 %v4659, 127
  %v4661 = vshll.u32 %v4660, 23
  %v4662 = vor.u32 4788187, %v4661
  %v4663 = vand.u32 2147483647, %v4662
  %v4665 = vcvt.s32.f32 %v4658
  %v4666 = vmul.f32 %v4665, %v4663
  %v4667 = vxor.u32 %v4666, 2147483648
  %v4668 = vsel %vm4585, %v4667, %v4666
  %v4669 = vsub.s32 4, %v4645
  %v4670 = vsel %vm4585, %v4669, %v4645
  %v4671 = vsel %vm4584, %v1755, %v4668
  %v4672 = vsel %vm4584, 0, %v4670
  %v4673 = vcosq.f32.pop %v4671
  %v4674 = vsinq.f32.pop %v4671
  %vm4675 = vweird.f32 %v1755
  %v4676 = vadd.s32 %v4672, 3
  %v4677 = vand.u32 %v4676, 3
  %vm4678 = vcmp.lt.s32.totalorder %v4677, 2
  %vm4679 = vcmp.eq.s32.totalorder %v4677, 0
  %v4680 = vxor.u32 %v4674, 2147483648
  %v4681 = vsel %vm4679, %v4673, %v4680
  %vm4682 = vcmp.eq.s32.totalorder %v4677, 2
  %v4683 = vxor.u32 %v4673, 2147483648
  %v4684 = vsel %vm4682, %v4683, %v4674
  %v4685 = vsel %vm4678, %v4681, %v4684
  %v4686 = vsel %vm4675, nan, %v4685
  %v4687 = vand.u32 2147483647, %v1756
  %vm4688 = vcmp.le.f32.partialorder %v4687, 0.7853982
  %vm4689 = vcmp.lt.s32.totalorder %v1756, 0
  %v4690 = vand.u32 %v1756, 2139095040
  %v4691 = vshrl.u32 %v4690, 23
  %v4692 = vsub.s32 %v4691, 127
  %v4693 = vand.u32 2147483647, %v1756
  %v4694 = vand.u32 %v4693, 8388607
  %v4695 = vor.u32 %v4694, 8388608
  %v4696 = vsub.s32 0, %v4695
  %v4697 = vadd.s32 %v4692, 1
  %vm4698 = vcmp.gt.s32.totalorder %v4697, 0
  %v4699 = vsel %vm4698, %v4697, 0
  %v4700 = vshrl.u32 %v4699, 5
  %v4701 = vand.u32 %v4699, 31
  %v4702 = vsub.s32 32, %v4701
  %v4703 = vshrl.u32 683565275, %v4702
  %v4704 = vshll.u32 683565275, %v4701
  %v4705 = vshrl.u32 2475754826, %v4702
  %v4706 = vor.u32 %v4704, %v4705
  %v4707 = vshll.u32 2475754826, %v4701
  %v4708 = vshrl.u32 2131351028, %v4702
  %v4709 = vor.u32 %v4707, %v4708
  %v4710 = vshll.u32 2131351028, %v4701
  %v4711 = vshrl.u32 2102212464, %v4702
  %v4712 = vor.u32 %v4710, %v4711
  %v4713 = vshll.u32 2102212464, %v4701
  %v4714 = vshrl.u32 920167782, %v4702
  %v4715 = vor.u32 %v4713, %v4714
  %v4716 = vshll.u32 920167782, %v4701
  %v4717 = vshrl.u32 1326507024, %v4702
  %v4718 = vor.u32 %v4716, %v4717
  %vm4719 = vcmp.lt.s32.totalorder %v4700, 1
  %vm4720 = vcmp.lt.s32.totalorder %v4700, 2
  %vm4721 = vcmp.lt.s32.totalorder %v4700, 3
  %vm4722 = vcmp.lt.s32.totalorder %v4700, 4
  %v4723 = vsel %vm4719, %v4703, %v4706
  %v4724 = vsel %vm4722, %v4712, 2102212464
  %v4725 = vsel %vm4721, %v4709, %v4724
  %v4726 = vsel %vm4720, %v4723, %v4725
  %v4727 = vsel %vm4719, %v4706, %v4709
  %v4728 = vsel %vm4722, %v4715, 920167782
  %v4729 = vsel %vm4721, %v4712, %v4728
  %v4730 = vsel %vm4720, %v4727, %v4729
  %v4731 = vsel %vm4719, %v4709, %v4712
  %v4732 = vsel %vm4722, %v4718, 1326507024
  %v4733 = vsel %vm4721, %v4715, %v4732
  %v4734 = vsel %vm4720, %v4731, %v4733
  %v4735 = vshll.u32 %v4695, 8
  %v4736 = vmul.u32.u64.compose %v4735, %v4734
  %v4737 = vextract.low.u32 %v4736
  %v4738 = vextract.high.u32 %v4736
  %v4739 = vmul.u32.u64.compose %v4735, %v4730
  %v4740 = vextract.low.u32 %v4739
  %v4741 = vextract.high.u32 %v4739
  %v4742 = vmul.u32 %v4735, %v4726
  %v4743 = vadd.s32 %v4738, %v4740
  %vm4744 = vc.u32 %v4738, %v4740
  %v4745 = vadd.s32 %v4741, 1
  %v4746 = vsel %vm4744, %v4745, %v4741
  %v4747 = vadd.s32 %v4742, %v4746
  %v4748 = vadd.s32 %v4747, 536870912
  %v4749 = vshrl.u32 %v4748, 30
  %v4750 = vshll.u32 %v4749, 30
  %v4751 = vsub.s32 %v4747, %v4750
  %vm4752 = vcmp.lt.s32.totalorder %v4751, 0
  %v4753 = vsub.s32 0, %v4751
  %v4754 = vsel %vm4752, %v4753, %v4751
  %v4755 = vclz %v4754
  %v4756 = vsub.s32 %v4755, 2
  %vm4757 = vcmp.gt.s32.totalorder 0, %v4756
  %v4758 = vsel %vm4757, 0, %v4756
  %v4759 = vsub.s32 32, %v4758
  %v4760 = vshll.u32 %v4751, %v4758
  %v4761 = vshrl.u32 %v4743, %v4759
  %v4762 = vor.u32 %v4760, %v4761
  %v4763 = vsub.s32 4294967266, %v4758
  %v4764 = vadd.s32 %v4763, 127
  %v4765 = vshll.u32 %v4764, 23
  %v4766 = vor.u32 4788187, %v4765
  %v4767 = vand.u32 2147483647, %v4766
  %v4769 = vcvt.s32.f32 %v4762
  %v4770 = vmul.f32 %v4769, %v4767
  %v4771 = vxor.u32 %v4770, 2147483648
  %v4772 = vsel %vm4689, %v4771, %v4770
  %v4773 = vsub.s32 4, %v4749
  %v4774 = vsel %vm4689, %v4773, %v4749
  %v4775 = vsel %vm4688, %v1756, %v4772
  %v4776 = vsel %vm4688, 0, %v4774
  %v4777 = vcosq.f32.pop %v4775
  %v4778 = vsinq.f32.pop %v4775
  %vm4779 = vweird.f32 %v1756
  %v4780 = vadd.s32 %v4776, 3
  %v4781 = vand.u32 %v4780, 3
  %vm4782 = vcmp.lt.s32.totalorder %v4781, 2
  %vm4783 = vcmp.eq.s32.totalorder %v4781, 0
  %v4784 = vxor.u32 %v4778, 2147483648
  %v4785 = vsel %vm4783, %v4777, %v4784
  %vm4786 = vcmp.eq.s32.totalorder %v4781, 2
  %v4787 = vxor.u32 %v4777, 2147483648
  %v4788 = vsel %vm4786, %v4787, %v4778
  %v4789 = vsel %vm4782, %v4785, %v4788
  %v4790 = vsel %vm4779, nan, %v4789
  %v4791 = vand.u32 2147483647, %v1757
  %vm4792 = vcmp.le.f32.partialorder %v4791, 0.7853982
  %vm4793 = vcmp.lt.s32.totalorder %v1757, 0
  %v4794 = vand.u32 %v1757, 2139095040
  %v4795 = vshrl.u32 %v4794, 23
  %v4796 = vsub.s32 %v4795, 127
  %v4797 = vand.u32 2147483647, %v1757
  %v4798 = vand.u32 %v4797, 8388607
  %v4799 = vor.u32 %v4798, 8388608
  %v4800 = vsub.s32 0, %v4799
  %v4801 = vadd.s32 %v4796, 1
  %vm4802 = vcmp.gt.s32.totalorder %v4801, 0
  %v4803 = vsel %vm4802, %v4801, 0
  %v4804 = vshrl.u32 %v4803, 5
  %v4805 = vand.u32 %v4803, 31
  %v4806 = vsub.s32 32, %v4805
  %v4807 = vshrl.u32 683565275, %v4806
  %v4808 = vshll.u32 683565275, %v4805
  %v4809 = vshrl.u32 2475754826, %v4806
  %v4810 = vor.u32 %v4808, %v4809
  %v4811 = vshll.u32 2475754826, %v4805
  %v4812 = vshrl.u32 2131351028, %v4806
  %v4813 = vor.u32 %v4811, %v4812
  %v4814 = vshll.u32 2131351028, %v4805
  %v4815 = vshrl.u32 2102212464, %v4806
  %v4816 = vor.u32 %v4814, %v4815
  %v4817 = vshll.u32 2102212464, %v4805
  %v4818 = vshrl.u32 920167782, %v4806
  %v4819 = vor.u32 %v4817, %v4818
  %v4820 = vshll.u32 920167782, %v4805
  %v4821 = vshrl.u32 1326507024, %v4806
  %v4822 = vor.u32 %v4820, %v4821
  %vm4823 = vcmp.lt.s32.totalorder %v4804, 1
  %vm4824 = vcmp.lt.s32.totalorder %v4804, 2
  %vm4825 = vcmp.lt.s32.totalorder %v4804, 3
  %vm4826 = vcmp.lt.s32.totalorder %v4804, 4
  %v4827 = vsel %vm4823, %v4807, %v4810
  %v4828 = vsel %vm4826, %v4816, 2102212464
  %v4829 = vsel %vm4825, %v4813, %v4828
  %v4830 = vsel %vm4824, %v4827, %v4829
  %v4831 = vsel %vm4823, %v4810, %v4813
  %v4832 = vsel %vm4826, %v4819, 920167782
  %v4833 = vsel %vm4825, %v4816, %v4832
  %v4834 = vsel %vm4824, %v4831, %v4833
  %v4835 = vsel %vm4823, %v4813, %v4816
  %v4836 = vsel %vm4826, %v4822, 1326507024
  %v4837 = vsel %vm4825, %v4819, %v4836
  %v4838 = vsel %vm4824, %v4835, %v4837
  %v4839 = vshll.u32 %v4799, 8
  %v4840 = vmul.u32.u64.compose %v4839, %v4838
  %v4841 = vextract.low.u32 %v4840
  %v4842 = vextract.high.u32 %v4840
  %v4843 = vmul.u32.u64.compose %v4839, %v4834
  %v4844 = vextract.low.u32 %v4843
  %v4845 = vextract.high.u32 %v4843
  %v4846 = vmul.u32 %v4839, %v4830
  %v4847 = vadd.s32 %v4842, %v4844
  %vm4848 = vc.u32 %v4842, %v4844
  %v4849 = vadd.s32 %v4845, 1
  %v4850 = vsel %vm4848, %v4849, %v4845
  %v4851 = vadd.s32 %v4846, %v4850
  %v4852 = vadd.s32 %v4851, 536870912
  %v4853 = vshrl.u32 %v4852, 30
  %v4854 = vshll.u32 %v4853, 30
  %v4855 = vsub.s32 %v4851, %v4854
  %vm4856 = vcmp.lt.s32.totalorder %v4855, 0
  %v4857 = vsub.s32 0, %v4855
  %v4858 = vsel %vm4856, %v4857, %v4855
  %v4859 = vclz %v4858
  %v4860 = vsub.s32 %v4859, 2
  %vm4861 = vcmp.gt.s32.totalorder 0, %v4860
  %v4862 = vsel %vm4861, 0, %v4860
  %v4863 = vsub.s32 32, %v4862
  %v4864 = vshll.u32 %v4855, %v4862
  %v4865 = vshrl.u32 %v4847, %v4863
  %v4866 = vor.u32 %v4864, %v4865
  %v4867 = vsub.s32 4294967266, %v4862
  %v4868 = vadd.s32 %v4867, 127
  %v4869 = vshll.u32 %v4868, 23
  %v4870 = vor.u32 4788187, %v4869
  %v4871 = vand.u32 2147483647, %v4870
  %v4873 = vcvt.s32.f32 %v4866
  %v4874 = vmul.f32 %v4873, %v4871
  %v4875 = vxor.u32 %v4874, 2147483648
  %v4876 = vsel %vm4793, %v4875, %v4874
  %v4877 = vsub.s32 4, %v4853
  %v4878 = vsel %vm4793, %v4877, %v4853
  %v4879 = vsel %vm4792, %v1757, %v4876
  %v4880 = vsel %vm4792, 0, %v4878
  %v4881 = vcosq.f32.pop %v4879
  %v4882 = vsinq.f32.pop %v4879
  %vm4883 = vweird.f32 %v1757
  %v4884 = vadd.s32 %v4880, 3
  %v4885 = vand.u32 %v4884, 3
  %vm4886 = vcmp.lt.s32.totalorder %v4885, 2
  %vm4887 = vcmp.eq.s32.totalorder %v4885, 0
  %v4888 = vxor.u32 %v4882, 2147483648
  %v4889 = vsel %vm4887, %v4881, %v4888
  %vm4890 = vcmp.eq.s32.totalorder %v4885, 2
  %v4891 = vxor.u32 %v4881, 2147483648
  %v4892 = vsel %vm4890, %v4891, %v4882
  %v4893 = vsel %vm4886, %v4889, %v4892
  %v4894 = vsel %vm4883, nan, %v4893
  %v4895 = vand.u32 2147483647, %v1758
  %vm4896 = vcmp.le.f32.partialorder %v4895, 0.7853982
  %vm4897 = vcmp.lt.s32.totalorder %v1758, 0
  %v4898 = vand.u32 %v1758, 2139095040
  %v4899 = vshrl.u32 %v4898, 23
  %v4900 = vsub.s32 %v4899, 127
  %v4901 = vand.u32 2147483647, %v1758
  %v4902 = vand.u32 %v4901, 8388607
  %v4903 = vor.u32 %v4902, 8388608
  %v4904 = vsub.s32 0, %v4903
  %v4905 = vadd.s32 %v4900, 1
  %vm4906 = vcmp.gt.s32.totalorder %v4905, 0
  %v4907 = vsel %vm4906, %v4905, 0
  %v4908 = vshrl.u32 %v4907, 5
  %v4909 = vand.u32 %v4907, 31
  %v4910 = vsub.s32 32, %v4909
  %v4911 = vshrl.u32 683565275, %v4910
  %v4912 = vshll.u32 683565275, %v4909
  %v4913 = vshrl.u32 2475754826, %v4910
  %v4914 = vor.u32 %v4912, %v4913
  %v4915 = vshll.u32 2475754826, %v4909
  %v4916 = vshrl.u32 2131351028, %v4910
  %v4917 = vor.u32 %v4915, %v4916
  %v4918 = vshll.u32 2131351028, %v4909
  %v4919 = vshrl.u32 2102212464, %v4910
  %v4920 = vor.u32 %v4918, %v4919
  %v4921 = vshll.u32 2102212464, %v4909
  %v4922 = vshrl.u32 920167782, %v4910
  %v4923 = vor.u32 %v4921, %v4922
  %v4924 = vshll.u32 920167782, %v4909
  %v4925 = vshrl.u32 1326507024, %v4910
  %v4926 = vor.u32 %v4924, %v4925
  %vm4927 = vcmp.lt.s32.totalorder %v4908, 1
  %vm4928 = vcmp.lt.s32.totalorder %v4908, 2
  %vm4929 = vcmp.lt.s32.totalorder %v4908, 3
  %vm4930 = vcmp.lt.s32.totalorder %v4908, 4
  %v4931 = vsel %vm4927, %v4911, %v4914
  %v4932 = vsel %vm4930, %v4920, 2102212464
  %v4933 = vsel %vm4929, %v4917, %v4932
  %v4934 = vsel %vm4928, %v4931, %v4933
  %v4935 = vsel %vm4927, %v4914, %v4917
  %v4936 = vsel %vm4930, %v4923, 920167782
  %v4937 = vsel %vm4929, %v4920, %v4936
  %v4938 = vsel %vm4928, %v4935, %v4937
  %v4939 = vsel %vm4927, %v4917, %v4920
  %v4940 = vsel %vm4930, %v4926, 1326507024
  %v4941 = vsel %vm4929, %v4923, %v4940
  %v4942 = vsel %vm4928, %v4939, %v4941
  %v4943 = vshll.u32 %v4903, 8
  %v4944 = vmul.u32.u64.compose %v4943, %v4942
  %v4945 = vextract.low.u32 %v4944
  %v4946 = vextract.high.u32 %v4944
  %v4947 = vmul.u32.u64.compose %v4943, %v4938
  %v4948 = vextract.low.u32 %v4947
  %v4949 = vextract.high.u32 %v4947
  %v4950 = vmul.u32 %v4943, %v4934
  %v4951 = vadd.s32 %v4946, %v4948
  %vm4952 = vc.u32 %v4946, %v4948
  %v4953 = vadd.s32 %v4949, 1
  %v4954 = vsel %vm4952, %v4953, %v4949
  %v4955 = vadd.s32 %v4950, %v4954
  %v4956 = vadd.s32 %v4955, 536870912
  %v4957 = vshrl.u32 %v4956, 30
  %v4958 = vshll.u32 %v4957, 30
  %v4959 = vsub.s32 %v4955, %v4958
  %vm4960 = vcmp.lt.s32.totalorder %v4959, 0
  %v4961 = vsub.s32 0, %v4959
  %v4962 = vsel %vm4960, %v4961, %v4959
  %v4963 = vclz %v4962
  %v4964 = vsub.s32 %v4963, 2
  %vm4965 = vcmp.gt.s32.totalorder 0, %v4964
  %v4966 = vsel %vm4965, 0, %v4964
  %v4967 = vsub.s32 32, %v4966
  %v4968 = vshll.u32 %v4959, %v4966
  %v4969 = vshrl.u32 %v4951, %v4967
  %v4970 = vor.u32 %v4968, %v4969
  %v4971 = vsub.s32 4294967266, %v4966
  %v4972 = vadd.s32 %v4971, 127
  %v4973 = vshll.u32 %v4972, 23
  %v4974 = vor.u32 4788187, %v4973
  %v4975 = vand.u32 2147483647, %v4974
  %v4977 = vcvt.s32.f32 %v4970
  %v4978 = vmul.f32 %v4977, %v4975
  %v4979 = vxor.u32 %v4978, 2147483648
  %v4980 = vsel %vm4897, %v4979, %v4978
  %v4981 = vsub.s32 4, %v4957
  %v4982 = vsel %vm4897, %v4981, %v4957
  %v4983 = vsel %vm4896, %v1758, %v4980
  %v4984 = vsel %vm4896, 0, %v4982
  %v4985 = vcosq.f32.pop %v4983
  %v4986 = vsinq.f32.pop %v4983
  %vm4987 = vweird.f32 %v1758
  %v4988 = vadd.s32 %v4984, 3
  %v4989 = vand.u32 %v4988, 3
  %vm4990 = vcmp.lt.s32.totalorder %v4989, 2
  %vm4991 = vcmp.eq.s32.totalorder %v4989, 0
  %v4992 = vxor.u32 %v4986, 2147483648
  %v4993 = vsel %vm4991, %v4985, %v4992
  %vm4994 = vcmp.eq.s32.totalorder %v4989, 2
  %v4995 = vxor.u32 %v4985, 2147483648
  %v4996 = vsel %vm4994, %v4995, %v4986
  %v4997 = vsel %vm4990, %v4993, %v4996
  %v4998 = vsel %vm4987, nan, %v4997
  %v4999 = vand.u32 2147483647, %v1759
  %vm5000 = vcmp.le.f32.partialorder %v4999, 0.7853982
  %vm5001 = vcmp.lt.s32.totalorder %v1759, 0
  %v5002 = vand.u32 %v1759, 2139095040
  %v5003 = vshrl.u32 %v5002, 23
  %v5004 = vsub.s32 %v5003, 127
  %v5005 = vand.u32 2147483647, %v1759
  %v5006 = vand.u32 %v5005, 8388607
  %v5007 = vor.u32 %v5006, 8388608
  %v5008 = vsub.s32 0, %v5007
  %v5009 = vadd.s32 %v5004, 1
  %vm5010 = vcmp.gt.s32.totalorder %v5009, 0
  %v5011 = vsel %vm5010, %v5009, 0
  %v5012 = vshrl.u32 %v5011, 5
  %v5013 = vand.u32 %v5011, 31
  %v5014 = vsub.s32 32, %v5013
  %v5015 = vshrl.u32 683565275, %v5014
  %v5016 = vshll.u32 683565275, %v5013
  %v5017 = vshrl.u32 2475754826, %v5014
  %v5018 = vor.u32 %v5016, %v5017
  %v5019 = vshll.u32 2475754826, %v5013
  %v5020 = vshrl.u32 2131351028, %v5014
  %v5021 = vor.u32 %v5019, %v5020
  %v5022 = vshll.u32 2131351028, %v5013
  %v5023 = vshrl.u32 2102212464, %v5014
  %v5024 = vor.u32 %v5022, %v5023
  %v5025 = vshll.u32 2102212464, %v5013
  %v5026 = vshrl.u32 920167782, %v5014
  %v5027 = vor.u32 %v5025, %v5026
  %v5028 = vshll.u32 920167782, %v5013
  %v5029 = vshrl.u32 1326507024, %v5014
  %v5030 = vor.u32 %v5028, %v5029
  %vm5031 = vcmp.lt.s32.totalorder %v5012, 1
  %vm5032 = vcmp.lt.s32.totalorder %v5012, 2
  %vm5033 = vcmp.lt.s32.totalorder %v5012, 3
  %vm5034 = vcmp.lt.s32.totalorder %v5012, 4
  %v5035 = vsel %vm5031, %v5015, %v5018
  %v5036 = vsel %vm5034, %v5024, 2102212464
  %v5037 = vsel %vm5033, %v5021, %v5036
  %v5038 = vsel %vm5032, %v5035, %v5037
  %v5039 = vsel %vm5031, %v5018, %v5021
  %v5040 = vsel %vm5034, %v5027, 920167782
  %v5041 = vsel %vm5033, %v5024, %v5040
  %v5042 = vsel %vm5032, %v5039, %v5041
  %v5043 = vsel %vm5031, %v5021, %v5024
  %v5044 = vsel %vm5034, %v5030, 1326507024
  %v5045 = vsel %vm5033, %v5027, %v5044
  %v5046 = vsel %vm5032, %v5043, %v5045
  %v5047 = vshll.u32 %v5007, 8
  %v5048 = vmul.u32.u64.compose %v5047, %v5046
  %v5049 = vextract.low.u32 %v5048
  %v5050 = vextract.high.u32 %v5048
  %v5051 = vmul.u32.u64.compose %v5047, %v5042
  %v5052 = vextract.low.u32 %v5051
  %v5053 = vextract.high.u32 %v5051
  %v5054 = vmul.u32 %v5047, %v5038
  %v5055 = vadd.s32 %v5050, %v5052
  %vm5056 = vc.u32 %v5050, %v5052
  %v5057 = vadd.s32 %v5053, 1
  %v5058 = vsel %vm5056, %v5057, %v5053
  %v5059 = vadd.s32 %v5054, %v5058
  %v5060 = vadd.s32 %v5059, 536870912
  %v5061 = vshrl.u32 %v5060, 30
  %v5062 = vshll.u32 %v5061, 30
  %v5063 = vsub.s32 %v5059, %v5062
  %vm5064 = vcmp.lt.s32.totalorder %v5063, 0
  %v5065 = vsub.s32 0, %v5063
  %v5066 = vsel %vm5064, %v5065, %v5063
  %v5067 = vclz %v5066
  %v5068 = vsub.s32 %v5067, 2
  %vm5069 = vcmp.gt.s32.totalorder 0, %v5068
  %v5070 = vsel %vm5069, 0, %v5068
  %v5071 = vsub.s32 32, %v5070
  %v5072 = vshll.u32 %v5063, %v5070
  %v5073 = vshrl.u32 %v5055, %v5071
  %v5074 = vor.u32 %v5072, %v5073
  %v5075 = vsub.s32 4294967266, %v5070
  %v5076 = vadd.s32 %v5075, 127
  %v5077 = vshll.u32 %v5076, 23
  %v5078 = vor.u32 4788187, %v5077
  %v5079 = vand.u32 2147483647, %v5078
  %v5081 = vcvt.s32.f32 %v5074
  %v5082 = vmul.f32 %v5081, %v5079
  %v5083 = vxor.u32 %v5082, 2147483648
  %v5084 = vsel %vm5001, %v5083, %v5082
  %v5085 = vsub.s32 4, %v5061
  %v5086 = vsel %vm5001, %v5085, %v5061
  %v5087 = vsel %vm5000, %v1759, %v5084
  %v5088 = vsel %vm5000, 0, %v5086
  %v5089 = vcosq.f32.pop %v5087
  %v5090 = vsinq.f32.pop %v5087
  %vm5091 = vweird.f32 %v1759
  %v5092 = vadd.s32 %v5088, 3
  %v5093 = vand.u32 %v5092, 3
  %vm5094 = vcmp.lt.s32.totalorder %v5093, 2
  %vm5095 = vcmp.eq.s32.totalorder %v5093, 0
  %v5096 = vxor.u32 %v5090, 2147483648
  %v5097 = vsel %vm5095, %v5089, %v5096
  %vm5098 = vcmp.eq.s32.totalorder %v5093, 2
  %v5099 = vxor.u32 %v5089, 2147483648
  %v5100 = vsel %vm5098, %v5099, %v5090
  %v5101 = vsel %vm5094, %v5097, %v5100
  %v5102 = vsel %vm5091, nan, %v5101
  %v5103 = vand.u32 2147483647, %v1728
  %vm5104 = vcmp.le.f32.partialorder %v5103, 0.7853982
  %vm5105 = vcmp.lt.s32.totalorder %v1728, 0
  %v5106 = vand.u32 %v1728, 2139095040
  %v5107 = vshrl.u32 %v5106, 23
  %v5108 = vsub.s32 %v5107, 127
  %v5109 = vand.u32 2147483647, %v1728
  %v5110 = vand.u32 %v5109, 8388607
  %v5111 = vor.u32 %v5110, 8388608
  %v5112 = vsub.s32 0, %v5111
  %v5113 = vadd.s32 %v5108, 1
  %vm5114 = vcmp.gt.s32.totalorder %v5113, 0
  %v5115 = vsel %vm5114, %v5113, 0
  %v5116 = vshrl.u32 %v5115, 5
  %v5117 = vand.u32 %v5115, 31
  %v5118 = vsub.s32 32, %v5117
  %v5119 = vshrl.u32 683565275, %v5118
  %v5120 = vshll.u32 683565275, %v5117
  %v5121 = vshrl.u32 2475754826, %v5118
  %v5122 = vor.u32 %v5120, %v5121
  %v5123 = vshll.u32 2475754826, %v5117
  %v5124 = vshrl.u32 2131351028, %v5118
  %v5125 = vor.u32 %v5123, %v5124
  %v5126 = vshll.u32 2131351028, %v5117
  %v5127 = vshrl.u32 2102212464, %v5118
  %v5128 = vor.u32 %v5126, %v5127
  %v5129 = vshll.u32 2102212464, %v5117
  %v5130 = vshrl.u32 920167782, %v5118
  %v5131 = vor.u32 %v5129, %v5130
  %v5132 = vshll.u32 920167782, %v5117
  %v5133 = vshrl.u32 1326507024, %v5118
  %v5134 = vor.u32 %v5132, %v5133
  %vm5135 = vcmp.lt.s32.totalorder %v5116, 1
  %vm5136 = vcmp.lt.s32.totalorder %v5116, 2
  %vm5137 = vcmp.lt.s32.totalorder %v5116, 3
  %vm5138 = vcmp.lt.s32.totalorder %v5116, 4
  %v5139 = vsel %vm5135, %v5119, %v5122
  %v5140 = vsel %vm5138, %v5128, 2102212464
  %v5141 = vsel %vm5137, %v5125, %v5140
  %v5142 = vsel %vm5136, %v5139, %v5141
  %v5143 = vsel %vm5135, %v5122, %v5125
  %v5144 = vsel %vm5138, %v5131, 920167782
  %v5145 = vsel %vm5137, %v5128, %v5144
  %v5146 = vsel %vm5136, %v5143, %v5145
  %v5147 = vsel %vm5135, %v5125, %v5128
  %v5148 = vsel %vm5138, %v5134, 1326507024
  %v5149 = vsel %vm5137, %v5131, %v5148
  %v5150 = vsel %vm5136, %v5147, %v5149
  %v5151 = vshll.u32 %v5111, 8
  %v5152 = vmul.u32.u64.compose %v5151, %v5150
  %v5153 = vextract.low.u32 %v5152
  %v5154 = vextract.high.u32 %v5152
  %v5155 = vmul.u32.u64.compose %v5151, %v5146
  %v5156 = vextract.low.u32 %v5155
  %v5157 = vextract.high.u32 %v5155
  %v5158 = vmul.u32 %v5151, %v5142
  %v5159 = vadd.s32 %v5154, %v5156
  %vm5160 = vc.u32 %v5154, %v5156
  %v5161 = vadd.s32 %v5157, 1
  %v5162 = vsel %vm5160, %v5161, %v5157
  %v5163 = vadd.s32 %v5158, %v5162
  %v5164 = vadd.s32 %v5163, 536870912
  %v5165 = vshrl.u32 %v5164, 30
  %v5166 = vshll.u32 %v5165, 30
  %v5167 = vsub.s32 %v5163, %v5166
  %vm5168 = vcmp.lt.s32.totalorder %v5167, 0
  %v5169 = vsub.s32 0, %v5167
  %v5170 = vsel %vm5168, %v5169, %v5167
  %v5171 = vclz %v5170
  %v5172 = vsub.s32 %v5171, 2
  %vm5173 = vcmp.gt.s32.totalorder 0, %v5172
  %v5174 = vsel %vm5173, 0, %v5172
  %v5175 = vsub.s32 32, %v5174
  %v5176 = vshll.u32 %v5167, %v5174
  %v5177 = vshrl.u32 %v5159, %v5175
  %v5178 = vor.u32 %v5176, %v5177
  %v5179 = vsub.s32 4294967266, %v5174
  %v5180 = vadd.s32 %v5179, 127
  %v5181 = vshll.u32 %v5180, 23
  %v5182 = vor.u32 4788187, %v5181
  %v5183 = vand.u32 2147483647, %v5182
  %v5185 = vcvt.s32.f32 %v5178
  %v5186 = vmul.f32 %v5185, %v5183
  %v5187 = vxor.u32 %v5186, 2147483648
  %v5188 = vsel %vm5105, %v5187, %v5186
  %v5189 = vsub.s32 4, %v5165
  %v5190 = vsel %vm5105, %v5189, %v5165
  %v5191 = vsel %vm5104, %v1728, %v5188
  %v5192 = vsel %vm5104, 0, %v5190
  %v5193 = vcosq.f32.pop %v5191
  %v5194 = vsinq.f32.pop %v5191
  %vm5195 = vweird.f32 %v1728
  %v5196 = vand.u32 %v5192, 3
  %vm5197 = vcmp.lt.s32.totalorder %v5196, 2
  %vm5198 = vcmp.eq.s32.totalorder %v5196, 0
  %v5199 = vxor.u32 %v5194, 2147483648
  %v5200 = vsel %vm5198, %v5193, %v5199
  %vm5201 = vcmp.eq.s32.totalorder %v5196, 2
  %v5202 = vxor.u32 %v5193, 2147483648
  %v5203 = vsel %vm5201, %v5202, %v5194
  %v5204 = vsel %vm5197, %v5200, %v5203
  %v5205 = vsel %vm5195, nan, %v5204
  %v5206 = vand.u32 2147483647, %v1729
  %vm5207 = vcmp.le.f32.partialorder %v5206, 0.7853982
  %vm5208 = vcmp.lt.s32.totalorder %v1729, 0
  %v5209 = vand.u32 %v1729, 2139095040
  %v5210 = vshrl.u32 %v5209, 23
  %v5211 = vsub.s32 %v5210, 127
  %v5212 = vand.u32 2147483647, %v1729
  %v5213 = vand.u32 %v5212, 8388607
  %v5214 = vor.u32 %v5213, 8388608
  %v5215 = vsub.s32 0, %v5214
  %v5216 = vadd.s32 %v5211, 1
  %vm5217 = vcmp.gt.s32.totalorder %v5216, 0
  %v5218 = vsel %vm5217, %v5216, 0
  %v5219 = vshrl.u32 %v5218, 5
  %v5220 = vand.u32 %v5218, 31
  %v5221 = vsub.s32 32, %v5220
  %v5222 = vshrl.u32 683565275, %v5221
  %v5223 = vshll.u32 683565275, %v5220
  %v5224 = vshrl.u32 2475754826, %v5221
  %v5225 = vor.u32 %v5223, %v5224
  %v5226 = vshll.u32 2475754826, %v5220
  %v5227 = vshrl.u32 2131351028, %v5221
  %v5228 = vor.u32 %v5226, %v5227
  %v5229 = vshll.u32 2131351028, %v5220
  %v5230 = vshrl.u32 2102212464, %v5221
  %v5231 = vor.u32 %v5229, %v5230
  %v5232 = vshll.u32 2102212464, %v5220
  %v5233 = vshrl.u32 920167782, %v5221
  %v5234 = vor.u32 %v5232, %v5233
  %v5235 = vshll.u32 920167782, %v5220
  %v5236 = vshrl.u32 1326507024, %v5221
  %v5237 = vor.u32 %v5235, %v5236
  %vm5238 = vcmp.lt.s32.totalorder %v5219, 1
  %vm5239 = vcmp.lt.s32.totalorder %v5219, 2
  %vm5240 = vcmp.lt.s32.totalorder %v5219, 3
  %vm5241 = vcmp.lt.s32.totalorder %v5219, 4
  %v5242 = vsel %vm5238, %v5222, %v5225
  %v5243 = vsel %vm5241, %v5231, 2102212464
  %v5244 = vsel %vm5240, %v5228, %v5243
  %v5245 = vsel %vm5239, %v5242, %v5244
  %v5246 = vsel %vm5238, %v5225, %v5228
  %v5247 = vsel %vm5241, %v5234, 920167782
  %v5248 = vsel %vm5240, %v5231, %v5247
  %v5249 = vsel %vm5239, %v5246, %v5248
  %v5250 = vsel %vm5238, %v5228, %v5231
  %v5251 = vsel %vm5241, %v5237, 1326507024
  %v5252 = vsel %vm5240, %v5234, %v5251
  %v5253 = vsel %vm5239, %v5250, %v5252
  %v5254 = vshll.u32 %v5214, 8
  %v5255 = vmul.u32.u64.compose %v5254, %v5253
  %v5256 = vextract.low.u32 %v5255
  %v5257 = vextract.high.u32 %v5255
  %v5258 = vmul.u32.u64.compose %v5254, %v5249
  %v5259 = vextract.low.u32 %v5258
  %v5260 = vextract.high.u32 %v5258
  %v5261 = vmul.u32 %v5254, %v5245
  %v5262 = vadd.s32 %v5257, %v5259
  %vm5263 = vc.u32 %v5257, %v5259
  %v5264 = vadd.s32 %v5260, 1
  %v5265 = vsel %vm5263, %v5264, %v5260
  %v5266 = vadd.s32 %v5261, %v5265
  %v5267 = vadd.s32 %v5266, 536870912
  %v5268 = vshrl.u32 %v5267, 30
  %v5269 = vshll.u32 %v5268, 30
  %v5270 = vsub.s32 %v5266, %v5269
  %vm5271 = vcmp.lt.s32.totalorder %v5270, 0
  %v5272 = vsub.s32 0, %v5270
  %v5273 = vsel %vm5271, %v5272, %v5270
  %v5274 = vclz %v5273
  %v5275 = vsub.s32 %v5274, 2
  %vm5276 = vcmp.gt.s32.totalorder 0, %v5275
  %v5277 = vsel %vm5276, 0, %v5275
  %v5278 = vsub.s32 32, %v5277
  %v5279 = vshll.u32 %v5270, %v5277
  %v5280 = vshrl.u32 %v5262, %v5278
  %v5281 = vor.u32 %v5279, %v5280
  %v5282 = vsub.s32 4294967266, %v5277
  %v5283 = vadd.s32 %v5282, 127
  %v5284 = vshll.u32 %v5283, 23
  %v5285 = vor.u32 4788187, %v5284
  %v5286 = vand.u32 2147483647, %v5285
  %v5288 = vcvt.s32.f32 %v5281
  %v5289 = vmul.f32 %v5288, %v5286
  %v5290 = vxor.u32 %v5289, 2147483648
  %v5291 = vsel %vm5208, %v5290, %v5289
  %v5292 = vsub.s32 4, %v5268
  %v5293 = vsel %vm5208, %v5292, %v5268
  %v5294 = vsel %vm5207, %v1729, %v5291
  %v5295 = vsel %vm5207, 0, %v5293
  %v5296 = vcosq.f32.pop %v5294
  %v5297 = vsinq.f32.pop %v5294
  %vm5298 = vweird.f32 %v1729
  %v5299 = vand.u32 %v5295, 3
  %vm5300 = vcmp.lt.s32.totalorder %v5299, 2
  %vm5301 = vcmp.eq.s32.totalorder %v5299, 0
  %v5302 = vxor.u32 %v5297, 2147483648
  %v5303 = vsel %vm5301, %v5296, %v5302
  %vm5304 = vcmp.eq.s32.totalorder %v5299, 2
  %v5305 = vxor.u32 %v5296, 2147483648
  %v5306 = vsel %vm5304, %v5305, %v5297
  %v5307 = vsel %vm5300, %v5303, %v5306
  %v5308 = vsel %vm5298, nan, %v5307
  %v5309 = vand.u32 2147483647, %v1730
  %vm5310 = vcmp.le.f32.partialorder %v5309, 0.7853982
  %vm5311 = vcmp.lt.s32.totalorder %v1730, 0
  %v5312 = vand.u32 %v1730, 2139095040
  %v5313 = vshrl.u32 %v5312, 23
  %v5314 = vsub.s32 %v5313, 127
  %v5315 = vand.u32 2147483647, %v1730
  %v5316 = vand.u32 %v5315, 8388607
  %v5317 = vor.u32 %v5316, 8388608
  %v5318 = vsub.s32 0, %v5317
  %v5319 = vadd.s32 %v5314, 1
  %vm5320 = vcmp.gt.s32.totalorder %v5319, 0
  %v5321 = vsel %vm5320, %v5319, 0
  %v5322 = vshrl.u32 %v5321, 5
  %v5323 = vand.u32 %v5321, 31
  %v5324 = vsub.s32 32, %v5323
  %v5325 = vshrl.u32 683565275, %v5324
  %v5326 = vshll.u32 683565275, %v5323
  %v5327 = vshrl.u32 2475754826, %v5324
  %v5328 = vor.u32 %v5326, %v5327
  %v5329 = vshll.u32 2475754826, %v5323
  %v5330 = vshrl.u32 2131351028, %v5324
  %v5331 = vor.u32 %v5329, %v5330
  %v5332 = vshll.u32 2131351028, %v5323
  %v5333 = vshrl.u32 2102212464, %v5324
  %v5334 = vor.u32 %v5332, %v5333
  %v5335 = vshll.u32 2102212464, %v5323
  %v5336 = vshrl.u32 920167782, %v5324
  %v5337 = vor.u32 %v5335, %v5336
  %v5338 = vshll.u32 920167782, %v5323
  %v5339 = vshrl.u32 1326507024, %v5324
  %v5340 = vor.u32 %v5338, %v5339
  %vm5341 = vcmp.lt.s32.totalorder %v5322, 1
  %vm5342 = vcmp.lt.s32.totalorder %v5322, 2
  %vm5343 = vcmp.lt.s32.totalorder %v5322, 3
  %vm5344 = vcmp.lt.s32.totalorder %v5322, 4
  %v5345 = vsel %vm5341, %v5325, %v5328
  %v5346 = vsel %vm5344, %v5334, 2102212464
  %v5347 = vsel %vm5343, %v5331, %v5346
  %v5348 = vsel %vm5342, %v5345, %v5347
  %v5349 = vsel %vm5341, %v5328, %v5331
  %v5350 = vsel %vm5344, %v5337, 920167782
  %v5351 = vsel %vm5343, %v5334, %v5350
  %v5352 = vsel %vm5342, %v5349, %v5351
  %v5353 = vsel %vm5341, %v5331, %v5334
  %v5354 = vsel %vm5344, %v5340, 1326507024
  %v5355 = vsel %vm5343, %v5337, %v5354
  %v5356 = vsel %vm5342, %v5353, %v5355
  %v5357 = vshll.u32 %v5317, 8
  %v5358 = vmul.u32.u64.compose %v5357, %v5356
  %v5359 = vextract.low.u32 %v5358
  %v5360 = vextract.high.u32 %v5358
  %v5361 = vmul.u32.u64.compose %v5357, %v5352
  %v5362 = vextract.low.u32 %v5361
  %v5363 = vextract.high.u32 %v5361
  %v5364 = vmul.u32 %v5357, %v5348
  %v5365 = vadd.s32 %v5360, %v5362
  %vm5366 = vc.u32 %v5360, %v5362
  %v5367 = vadd.s32 %v5363, 1
  %v5368 = vsel %vm5366, %v5367, %v5363
  %v5369 = vadd.s32 %v5364, %v5368
  %v5370 = vadd.s32 %v5369, 536870912
  %v5371 = vshrl.u32 %v5370, 30
  %v5372 = vshll.u32 %v5371, 30
  %v5373 = vsub.s32 %v5369, %v5372
  %vm5374 = vcmp.lt.s32.totalorder %v5373, 0
  %v5375 = vsub.s32 0, %v5373
  %v5376 = vsel %vm5374, %v5375, %v5373
  %v5377 = vclz %v5376
  %v5378 = vsub.s32 %v5377, 2
  %vm5379 = vcmp.gt.s32.totalorder 0, %v5378
  %v5380 = vsel %vm5379, 0, %v5378
  %v5381 = vsub.s32 32, %v5380
  %v5382 = vshll.u32 %v5373, %v5380
  %v5383 = vshrl.u32 %v5365, %v5381
  %v5384 = vor.u32 %v5382, %v5383
  %v5385 = vsub.s32 4294967266, %v5380
  %v5386 = vadd.s32 %v5385, 127
  %v5387 = vshll.u32 %v5386, 23
  %v5388 = vor.u32 4788187, %v5387
  %v5389 = vand.u32 2147483647, %v5388
  %v5391 = vcvt.s32.f32 %v5384
  %v5392 = vmul.f32 %v5391, %v5389
  %v5393 = vxor.u32 %v5392, 2147483648
  %v5394 = vsel %vm5311, %v5393, %v5392
  %v5395 = vsub.s32 4, %v5371
  %v5396 = vsel %vm5311, %v5395, %v5371
  %v5397 = vsel %vm5310, %v1730, %v5394
  %v5398 = vsel %vm5310, 0, %v5396
  %v5399 = vcosq.f32.pop %v5397
  %v5400 = vsinq.f32.pop %v5397
  %vm5401 = vweird.f32 %v1730
  %v5402 = vand.u32 %v5398, 3
  %vm5403 = vcmp.lt.s32.totalorder %v5402, 2
  %vm5404 = vcmp.eq.s32.totalorder %v5402, 0
  %v5405 = vxor.u32 %v5400, 2147483648
  %v5406 = vsel %vm5404, %v5399, %v5405
  %vm5407 = vcmp.eq.s32.totalorder %v5402, 2
  %v5408 = vxor.u32 %v5399, 2147483648
  %v5409 = vsel %vm5407, %v5408, %v5400
  %v5410 = vsel %vm5403, %v5406, %v5409
  %v5411 = vsel %vm5401, nan, %v5410
  %v5412 = vand.u32 2147483647, %v1731
  %vm5413 = vcmp.le.f32.partialorder %v5412, 0.7853982
  %vm5414 = vcmp.lt.s32.totalorder %v1731, 0
  %v5415 = vand.u32 %v1731, 2139095040
  %v5416 = vshrl.u32 %v5415, 23
  %v5417 = vsub.s32 %v5416, 127
  %v5418 = vand.u32 2147483647, %v1731
  %v5419 = vand.u32 %v5418, 8388607
  %v5420 = vor.u32 %v5419, 8388608
  %v5421 = vsub.s32 0, %v5420
  %v5422 = vadd.s32 %v5417, 1
  %vm5423 = vcmp.gt.s32.totalorder %v5422, 0
  %v5424 = vsel %vm5423, %v5422, 0
  %v5425 = vshrl.u32 %v5424, 5
  %v5426 = vand.u32 %v5424, 31
  %v5427 = vsub.s32 32, %v5426
  %v5428 = vshrl.u32 683565275, %v5427
  %v5429 = vshll.u32 683565275, %v5426
  %v5430 = vshrl.u32 2475754826, %v5427
  %v5431 = vor.u32 %v5429, %v5430
  %v5432 = vshll.u32 2475754826, %v5426
  %v5433 = vshrl.u32 2131351028, %v5427
  %v5434 = vor.u32 %v5432, %v5433
  %v5435 = vshll.u32 2131351028, %v5426
  %v5436 = vshrl.u32 2102212464, %v5427
  %v5437 = vor.u32 %v5435, %v5436
  %v5438 = vshll.u32 2102212464, %v5426
  %v5439 = vshrl.u32 920167782, %v5427
  %v5440 = vor.u32 %v5438, %v5439
  %v5441 = vshll.u32 920167782, %v5426
  %v5442 = vshrl.u32 1326507024, %v5427
  %v5443 = vor.u32 %v5441, %v5442
  %vm5444 = vcmp.lt.s32.totalorder %v5425, 1
  %vm5445 = vcmp.lt.s32.totalorder %v5425, 2
  %vm5446 = vcmp.lt.s32.totalorder %v5425, 3
  %vm5447 = vcmp.lt.s32.totalorder %v5425, 4
  %v5448 = vsel %vm5444, %v5428, %v5431
  %v5449 = vsel %vm5447, %v5437, 2102212464
  %v5450 = vsel %vm5446, %v5434, %v5449
  %v5451 = vsel %vm5445, %v5448, %v5450
  %v5452 = vsel %vm5444, %v5431, %v5434
  %v5453 = vsel %vm5447, %v5440, 920167782
  %v5454 = vsel %vm5446, %v5437, %v5453
  %v5455 = vsel %vm5445, %v5452, %v5454
  %v5456 = vsel %vm5444, %v5434, %v5437
  %v5457 = vsel %vm5447, %v5443, 1326507024
  %v5458 = vsel %vm5446, %v5440, %v5457
  %v5459 = vsel %vm5445, %v5456, %v5458
  %v5460 = vshll.u32 %v5420, 8
  %v5461 = vmul.u32.u64.compose %v5460, %v5459
  %v5462 = vextract.low.u32 %v5461
  %v5463 = vextract.high.u32 %v5461
  %v5464 = vmul.u32.u64.compose %v5460, %v5455
  %v5465 = vextract.low.u32 %v5464
  %v5466 = vextract.high.u32 %v5464
  %v5467 = vmul.u32 %v5460, %v5451
  %v5468 = vadd.s32 %v5463, %v5465
  %vm5469 = vc.u32 %v5463, %v5465
  %v5470 = vadd.s32 %v5466, 1
  %v5471 = vsel %vm5469, %v5470, %v5466
  %v5472 = vadd.s32 %v5467, %v5471
  %v5473 = vadd.s32 %v5472, 536870912
  %v5474 = vshrl.u32 %v5473, 30
  %v5475 = vshll.u32 %v5474, 30
  %v5476 = vsub.s32 %v5472, %v5475
  %vm5477 = vcmp.lt.s32.totalorder %v5476, 0
  %v5478 = vsub.s32 0, %v5476
  %v5479 = vsel %vm5477, %v5478, %v5476
  %v5480 = vclz %v5479
  %v5481 = vsub.s32 %v5480, 2
  %vm5482 = vcmp.gt.s32.totalorder 0, %v5481
  %v5483 = vsel %vm5482, 0, %v5481
  %v5484 = vsub.s32 32, %v5483
  %v5485 = vshll.u32 %v5476, %v5483
  %v5486 = vshrl.u32 %v5468, %v5484
  %v5487 = vor.u32 %v5485, %v5486
  %v5488 = vsub.s32 4294967266, %v5483
  %v5489 = vadd.s32 %v5488, 127
  %v5490 = vshll.u32 %v5489, 23
  %v5491 = vor.u32 4788187, %v5490
  %v5492 = vand.u32 2147483647, %v5491
  %v5494 = vcvt.s32.f32 %v5487
  %v5495 = vmul.f32 %v5494, %v5492
  %v5496 = vxor.u32 %v5495, 2147483648
  %v5497 = vsel %vm5414, %v5496, %v5495
  %v5498 = vsub.s32 4, %v5474
  %v5499 = vsel %vm5414, %v5498, %v5474
  %v5500 = vsel %vm5413, %v1731, %v5497
  %v5501 = vsel %vm5413, 0, %v5499
  %v5502 = vcosq.f32.pop %v5500
  %v5503 = vsinq.f32.pop %v5500
  %vm5504 = vweird.f32 %v1731
  %v5505 = vand.u32 %v5501, 3
  %vm5506 = vcmp.lt.s32.totalorder %v5505, 2
  %vm5507 = vcmp.eq.s32.totalorder %v5505, 0
  %v5508 = vxor.u32 %v5503, 2147483648
  %v5509 = vsel %vm5507, %v5502, %v5508
  %vm5510 = vcmp.eq.s32.totalorder %v5505, 2
  %v5511 = vxor.u32 %v5502, 2147483648
  %v5512 = vsel %vm5510, %v5511, %v5503
  %v5513 = vsel %vm5506, %v5509, %v5512
  %v5514 = vsel %vm5504, nan, %v5513
  %v5515 = vand.u32 2147483647, %v1732
  %vm5516 = vcmp.le.f32.partialorder %v5515, 0.7853982
  %vm5517 = vcmp.lt.s32.totalorder %v1732, 0
  %v5518 = vand.u32 %v1732, 2139095040
  %v5519 = vshrl.u32 %v5518, 23
  %v5520 = vsub.s32 %v5519, 127
  %v5521 = vand.u32 2147483647, %v1732
  %v5522 = vand.u32 %v5521, 8388607
  %v5523 = vor.u32 %v5522, 8388608
  %v5524 = vsub.s32 0, %v5523
  %v5525 = vadd.s32 %v5520, 1
  %vm5526 = vcmp.gt.s32.totalorder %v5525, 0
  %v5527 = vsel %vm5526, %v5525, 0
  %v5528 = vshrl.u32 %v5527, 5
  %v5529 = vand.u32 %v5527, 31
  %v5530 = vsub.s32 32, %v5529
  %v5531 = vshrl.u32 683565275, %v5530
  %v5532 = vshll.u32 683565275, %v5529
  %v5533 = vshrl.u32 2475754826, %v5530
  %v5534 = vor.u32 %v5532, %v5533
  %v5535 = vshll.u32 2475754826, %v5529
  %v5536 = vshrl.u32 2131351028, %v5530
  %v5537 = vor.u32 %v5535, %v5536
  %v5538 = vshll.u32 2131351028, %v5529
  %v5539 = vshrl.u32 2102212464, %v5530
  %v5540 = vor.u32 %v5538, %v5539
  %v5541 = vshll.u32 2102212464, %v5529
  %v5542 = vshrl.u32 920167782, %v5530
  %v5543 = vor.u32 %v5541, %v5542
  %v5544 = vshll.u32 920167782, %v5529
  %v5545 = vshrl.u32 1326507024, %v5530
  %v5546 = vor.u32 %v5544, %v5545
  %vm5547 = vcmp.lt.s32.totalorder %v5528, 1
  %vm5548 = vcmp.lt.s32.totalorder %v5528, 2
  %vm5549 = vcmp.lt.s32.totalorder %v5528, 3
  %vm5550 = vcmp.lt.s32.totalorder %v5528, 4
  %v5551 = vsel %vm5547, %v5531, %v5534
  %v5552 = vsel %vm5550, %v5540, 2102212464
  %v5553 = vsel %vm5549, %v5537, %v5552
  %v5554 = vsel %vm5548, %v5551, %v5553
  %v5555 = vsel %vm5547, %v5534, %v5537
  %v5556 = vsel %vm5550, %v5543, 920167782
  %v5557 = vsel %vm5549, %v5540, %v5556
  %v5558 = vsel %vm5548, %v5555, %v5557
  %v5559 = vsel %vm5547, %v5537, %v5540
  %v5560 = vsel %vm5550, %v5546, 1326507024
  %v5561 = vsel %vm5549, %v5543, %v5560
  %v5562 = vsel %vm5548, %v5559, %v5561
  %v5563 = vshll.u32 %v5523, 8
  %v5564 = vmul.u32.u64.compose %v5563, %v5562
  %v5565 = vextract.low.u32 %v5564
  %v5566 = vextract.high.u32 %v5564
  %v5567 = vmul.u32.u64.compose %v5563, %v5558
  %v5568 = vextract.low.u32 %v5567
  %v5569 = vextract.high.u32 %v5567
  %v5570 = vmul.u32 %v5563, %v5554
  %v5571 = vadd.s32 %v5566, %v5568
  %vm5572 = vc.u32 %v5566, %v5568
  %v5573 = vadd.s32 %v5569, 1
  %v5574 = vsel %vm5572, %v5573, %v5569
  %v5575 = vadd.s32 %v5570, %v5574
  %v5576 = vadd.s32 %v5575, 536870912
  %v5577 = vshrl.u32 %v5576, 30
  %v5578 = vshll.u32 %v5577, 30
  %v5579 = vsub.s32 %v5575, %v5578
  %vm5580 = vcmp.lt.s32.totalorder %v5579, 0
  %v5581 = vsub.s32 0, %v5579
  %v5582 = vsel %vm5580, %v5581, %v5579
  %v5583 = vclz %v5582
  %v5584 = vsub.s32 %v5583, 2
  %vm5585 = vcmp.gt.s32.totalorder 0, %v5584
  %v5586 = vsel %vm5585, 0, %v5584
  %v5587 = vsub.s32 32, %v5586
  %v5588 = vshll.u32 %v5579, %v5586
  %v5589 = vshrl.u32 %v5571, %v5587
  %v5590 = vor.u32 %v5588, %v5589
  %v5591 = vsub.s32 4294967266, %v5586
  %v5592 = vadd.s32 %v5591, 127
  %v5593 = vshll.u32 %v5592, 23
  %v5594 = vor.u32 4788187, %v5593
  %v5595 = vand.u32 2147483647, %v5594
  %v5597 = vcvt.s32.f32 %v5590
  %v5598 = vmul.f32 %v5597, %v5595
  %v5599 = vxor.u32 %v5598, 2147483648
  %v5600 = vsel %vm5517, %v5599, %v5598
  %v5601 = vsub.s32 4, %v5577
  %v5602 = vsel %vm5517, %v5601, %v5577
  %v5603 = vsel %vm5516, %v1732, %v5600
  %v5604 = vsel %vm5516, 0, %v5602
  %v5605 = vcosq.f32.pop %v5603
  %v5606 = vsinq.f32.pop %v5603
  %vm5607 = vweird.f32 %v1732
  %v5608 = vand.u32 %v5604, 3
  %vm5609 = vcmp.lt.s32.totalorder %v5608, 2
  %vm5610 = vcmp.eq.s32.totalorder %v5608, 0
  %v5611 = vxor.u32 %v5606, 2147483648
  %v5612 = vsel %vm5610, %v5605, %v5611
  %vm5613 = vcmp.eq.s32.totalorder %v5608, 2
  %v5614 = vxor.u32 %v5605, 2147483648
  %v5615 = vsel %vm5613, %v5614, %v5606
  %v5616 = vsel %vm5609, %v5612, %v5615
  %v5617 = vsel %vm5607, nan, %v5616
  %v5618 = vand.u32 2147483647, %v1733
  %vm5619 = vcmp.le.f32.partialorder %v5618, 0.7853982
  %vm5620 = vcmp.lt.s32.totalorder %v1733, 0
  %v5621 = vand.u32 %v1733, 2139095040
  %v5622 = vshrl.u32 %v5621, 23
  %v5623 = vsub.s32 %v5622, 127
  %v5624 = vand.u32 2147483647, %v1733
  %v5625 = vand.u32 %v5624, 8388607
  %v5626 = vor.u32 %v5625, 8388608
  %v5627 = vsub.s32 0, %v5626
  %v5628 = vadd.s32 %v5623, 1
  %vm5629 = vcmp.gt.s32.totalorder %v5628, 0
  %v5630 = vsel %vm5629, %v5628, 0
  %v5631 = vshrl.u32 %v5630, 5
  %v5632 = vand.u32 %v5630, 31
  %v5633 = vsub.s32 32, %v5632
  %v5634 = vshrl.u32 683565275, %v5633
  %v5635 = vshll.u32 683565275, %v5632
  %v5636 = vshrl.u32 2475754826, %v5633
  %v5637 = vor.u32 %v5635, %v5636
  %v5638 = vshll.u32 2475754826, %v5632
  %v5639 = vshrl.u32 2131351028, %v5633
  %v5640 = vor.u32 %v5638, %v5639
  %v5641 = vshll.u32 2131351028, %v5632
  %v5642 = vshrl.u32 2102212464, %v5633
  %v5643 = vor.u32 %v5641, %v5642
  %v5644 = vshll.u32 2102212464, %v5632
  %v5645 = vshrl.u32 920167782, %v5633
  %v5646 = vor.u32 %v5644, %v5645
  %v5647 = vshll.u32 920167782, %v5632
  %v5648 = vshrl.u32 1326507024, %v5633
  %v5649 = vor.u32 %v5647, %v5648
  %vm5650 = vcmp.lt.s32.totalorder %v5631, 1
  %vm5651 = vcmp.lt.s32.totalorder %v5631, 2
  %vm5652 = vcmp.lt.s32.totalorder %v5631, 3
  %vm5653 = vcmp.lt.s32.totalorder %v5631, 4
  %v5654 = vsel %vm5650, %v5634, %v5637
  %v5655 = vsel %vm5653, %v5643, 2102212464
  %v5656 = vsel %vm5652, %v5640, %v5655
  %v5657 = vsel %vm5651, %v5654, %v5656
  %v5658 = vsel %vm5650, %v5637, %v5640
  %v5659 = vsel %vm5653, %v5646, 920167782
  %v5660 = vsel %vm5652, %v5643, %v5659
  %v5661 = vsel %vm5651, %v5658, %v5660
  %v5662 = vsel %vm5650, %v5640, %v5643
  %v5663 = vsel %vm5653, %v5649, 1326507024
  %v5664 = vsel %vm5652, %v5646, %v5663
  %v5665 = vsel %vm5651, %v5662, %v5664
  %v5666 = vshll.u32 %v5626, 8
  %v5667 = vmul.u32.u64.compose %v5666, %v5665
  %v5668 = vextract.low.u32 %v5667
  %v5669 = vextract.high.u32 %v5667
  %v5670 = vmul.u32.u64.compose %v5666, %v5661
  %v5671 = vextract.low.u32 %v5670
  %v5672 = vextract.high.u32 %v5670
  %v5673 = vmul.u32 %v5666, %v5657
  %v5674 = vadd.s32 %v5669, %v5671
  %vm5675 = vc.u32 %v5669, %v5671
  %v5676 = vadd.s32 %v5672, 1
  %v5677 = vsel %vm5675, %v5676, %v5672
  %v5678 = vadd.s32 %v5673, %v5677
  %v5679 = vadd.s32 %v5678, 536870912
  %v5680 = vshrl.u32 %v5679, 30
  %v5681 = vshll.u32 %v5680, 30
  %v5682 = vsub.s32 %v5678, %v5681
  %vm5683 = vcmp.lt.s32.totalorder %v5682, 0
  %v5684 = vsub.s32 0, %v5682
  %v5685 = vsel %vm5683, %v5684, %v5682
  %v5686 = vclz %v5685
  %v5687 = vsub.s32 %v5686, 2
  %vm5688 = vcmp.gt.s32.totalorder 0, %v5687
  %v5689 = vsel %vm5688, 0, %v5687
  %v5690 = vsub.s32 32, %v5689
  %v5691 = vshll.u32 %v5682, %v5689
  %v5692 = vshrl.u32 %v5674, %v5690
  %v5693 = vor.u32 %v5691, %v5692
  %v5694 = vsub.s32 4294967266, %v5689
  %v5695 = vadd.s32 %v5694, 127
  %v5696 = vshll.u32 %v5695, 23
  %v5697 = vor.u32 4788187, %v5696
  %v5698 = vand.u32 2147483647, %v5697
  %v5700 = vcvt.s32.f32 %v5693
  %v5701 = vmul.f32 %v5700, %v5698
  %v5702 = vxor.u32 %v5701, 2147483648
  %v5703 = vsel %vm5620, %v5702, %v5701
  %v5704 = vsub.s32 4, %v5680
  %v5705 = vsel %vm5620, %v5704, %v5680
  %v5706 = vsel %vm5619, %v1733, %v5703
  %v5707 = vsel %vm5619, 0, %v5705
  %v5708 = vcosq.f32.pop %v5706
  %v5709 = vsinq.f32.pop %v5706
  %vm5710 = vweird.f32 %v1733
  %v5711 = vand.u32 %v5707, 3
  %vm5712 = vcmp.lt.s32.totalorder %v5711, 2
  %vm5713 = vcmp.eq.s32.totalorder %v5711, 0
  %v5714 = vxor.u32 %v5709, 2147483648
  %v5715 = vsel %vm5713, %v5708, %v5714
  %vm5716 = vcmp.eq.s32.totalorder %v5711, 2
  %v5717 = vxor.u32 %v5708, 2147483648
  %v5718 = vsel %vm5716, %v5717, %v5709
  %v5719 = vsel %vm5712, %v5715, %v5718
  %v5720 = vsel %vm5710, nan, %v5719
  %v5721 = vand.u32 2147483647, %v1734
  %vm5722 = vcmp.le.f32.partialorder %v5721, 0.7853982
  %vm5723 = vcmp.lt.s32.totalorder %v1734, 0
  %v5724 = vand.u32 %v1734, 2139095040
  %v5725 = vshrl.u32 %v5724, 23
  %v5726 = vsub.s32 %v5725, 127
  %v5727 = vand.u32 2147483647, %v1734
  %v5728 = vand.u32 %v5727, 8388607
  %v5729 = vor.u32 %v5728, 8388608
  %v5730 = vsub.s32 0, %v5729
  %v5731 = vadd.s32 %v5726, 1
  %vm5732 = vcmp.gt.s32.totalorder %v5731, 0
  %v5733 = vsel %vm5732, %v5731, 0
  %v5734 = vshrl.u32 %v5733, 5
  %v5735 = vand.u32 %v5733, 31
  %v5736 = vsub.s32 32, %v5735
  %v5737 = vshrl.u32 683565275, %v5736
  %v5738 = vshll.u32 683565275, %v5735
  %v5739 = vshrl.u32 2475754826, %v5736
  %v5740 = vor.u32 %v5738, %v5739
  %v5741 = vshll.u32 2475754826, %v5735
  %v5742 = vshrl.u32 2131351028, %v5736
  %v5743 = vor.u32 %v5741, %v5742
  %v5744 = vshll.u32 2131351028, %v5735
  %v5745 = vshrl.u32 2102212464, %v5736
  %v5746 = vor.u32 %v5744, %v5745
  %v5747 = vshll.u32 2102212464, %v5735
  %v5748 = vshrl.u32 920167782, %v5736
  %v5749 = vor.u32 %v5747, %v5748
  %v5750 = vshll.u32 920167782, %v5735
  %v5751 = vshrl.u32 1326507024, %v5736
  %v5752 = vor.u32 %v5750, %v5751
  %vm5753 = vcmp.lt.s32.totalorder %v5734, 1
  %vm5754 = vcmp.lt.s32.totalorder %v5734, 2
  %vm5755 = vcmp.lt.s32.totalorder %v5734, 3
  %vm5756 = vcmp.lt.s32.totalorder %v5734, 4
  %v5757 = vsel %vm5753, %v5737, %v5740
  %v5758 = vsel %vm5756, %v5746, 2102212464
  %v5759 = vsel %vm5755, %v5743, %v5758
  %v5760 = vsel %vm5754, %v5757, %v5759
  %v5761 = vsel %vm5753, %v5740, %v5743
  %v5762 = vsel %vm5756, %v5749, 920167782
  %v5763 = vsel %vm5755, %v5746, %v5762
  %v5764 = vsel %vm5754, %v5761, %v5763
  %v5765 = vsel %vm5753, %v5743, %v5746
  %v5766 = vsel %vm5756, %v5752, 1326507024
  %v5767 = vsel %vm5755, %v5749, %v5766
  %v5768 = vsel %vm5754, %v5765, %v5767
  %v5769 = vshll.u32 %v5729, 8
  %v5770 = vmul.u32.u64.compose %v5769, %v5768
  %v5771 = vextract.low.u32 %v5770
  %v5772 = vextract.high.u32 %v5770
  %v5773 = vmul.u32.u64.compose %v5769, %v5764
  %v5774 = vextract.low.u32 %v5773
  %v5775 = vextract.high.u32 %v5773
  %v5776 = vmul.u32 %v5769, %v5760
  %v5777 = vadd.s32 %v5772, %v5774
  %vm5778 = vc.u32 %v5772, %v5774
  %v5779 = vadd.s32 %v5775, 1
  %v5780 = vsel %vm5778, %v5779, %v5775
  %v5781 = vadd.s32 %v5776, %v5780
  %v5782 = vadd.s32 %v5781, 536870912
  %v5783 = vshrl.u32 %v5782, 30
  %v5784 = vshll.u32 %v5783, 30
  %v5785 = vsub.s32 %v5781, %v5784
  %vm5786 = vcmp.lt.s32.totalorder %v5785, 0
  %v5787 = vsub.s32 0, %v5785
  %v5788 = vsel %vm5786, %v5787, %v5785
  %v5789 = vclz %v5788
  %v5790 = vsub.s32 %v5789, 2
  %vm5791 = vcmp.gt.s32.totalorder 0, %v5790
  %v5792 = vsel %vm5791, 0, %v5790
  %v5793 = vsub.s32 32, %v5792
  %v5794 = vshll.u32 %v5785, %v5792
  %v5795 = vshrl.u32 %v5777, %v5793
  %v5796 = vor.u32 %v5794, %v5795
  %v5797 = vsub.s32 4294967266, %v5792
  %v5798 = vadd.s32 %v5797, 127
  %v5799 = vshll.u32 %v5798, 23
  %v5800 = vor.u32 4788187, %v5799
  %v5801 = vand.u32 2147483647, %v5800
  %v5803 = vcvt.s32.f32 %v5796
  %v5804 = vmul.f32 %v5803, %v5801
  %v5805 = vxor.u32 %v5804, 2147483648
  %v5806 = vsel %vm5723, %v5805, %v5804
  %v5807 = vsub.s32 4, %v5783
  %v5808 = vsel %vm5723, %v5807, %v5783
  %v5809 = vsel %vm5722, %v1734, %v5806
  %v5810 = vsel %vm5722, 0, %v5808
  %v5811 = vcosq.f32.pop %v5809
  %v5812 = vsinq.f32.pop %v5809
  %vm5813 = vweird.f32 %v1734
  %v5814 = vand.u32 %v5810, 3
  %vm5815 = vcmp.lt.s32.totalorder %v5814, 2
  %vm5816 = vcmp.eq.s32.totalorder %v5814, 0
  %v5817 = vxor.u32 %v5812, 2147483648
  %v5818 = vsel %vm5816, %v5811, %v5817
  %vm5819 = vcmp.eq.s32.totalorder %v5814, 2
  %v5820 = vxor.u32 %v5811, 2147483648
  %v5821 = vsel %vm5819, %v5820, %v5812
  %v5822 = vsel %vm5815, %v5818, %v5821
  %v5823 = vsel %vm5813, nan, %v5822
  %v5824 = vand.u32 2147483647, %v1735
  %vm5825 = vcmp.le.f32.partialorder %v5824, 0.7853982
  %vm5826 = vcmp.lt.s32.totalorder %v1735, 0
  %v5827 = vand.u32 %v1735, 2139095040
  %v5828 = vshrl.u32 %v5827, 23
  %v5829 = vsub.s32 %v5828, 127
  %v5830 = vand.u32 2147483647, %v1735
  %v5831 = vand.u32 %v5830, 8388607
  %v5832 = vor.u32 %v5831, 8388608
  %v5833 = vsub.s32 0, %v5832
  %v5834 = vadd.s32 %v5829, 1
  %vm5835 = vcmp.gt.s32.totalorder %v5834, 0
  %v5836 = vsel %vm5835, %v5834, 0
  %v5837 = vshrl.u32 %v5836, 5
  %v5838 = vand.u32 %v5836, 31
  %v5839 = vsub.s32 32, %v5838
  %v5840 = vshrl.u32 683565275, %v5839
  %v5841 = vshll.u32 683565275, %v5838
  %v5842 = vshrl.u32 2475754826, %v5839
  %v5843 = vor.u32 %v5841, %v5842
  %v5844 = vshll.u32 2475754826, %v5838
  %v5845 = vshrl.u32 2131351028, %v5839
  %v5846 = vor.u32 %v5844, %v5845
  %v5847 = vshll.u32 2131351028, %v5838
  %v5848 = vshrl.u32 2102212464, %v5839
  %v5849 = vor.u32 %v5847, %v5848
  %v5850 = vshll.u32 2102212464, %v5838
  %v5851 = vshrl.u32 920167782, %v5839
  %v5852 = vor.u32 %v5850, %v5851
  %v5853 = vshll.u32 920167782, %v5838
  %v5854 = vshrl.u32 1326507024, %v5839
  %v5855 = vor.u32 %v5853, %v5854
  %vm5856 = vcmp.lt.s32.totalorder %v5837, 1
  %vm5857 = vcmp.lt.s32.totalorder %v5837, 2
  %vm5858 = vcmp.lt.s32.totalorder %v5837, 3
  %vm5859 = vcmp.lt.s32.totalorder %v5837, 4
  %v5860 = vsel %vm5856, %v5840, %v5843
  %v5861 = vsel %vm5859, %v5849, 2102212464
  %v5862 = vsel %vm5858, %v5846, %v5861
  %v5863 = vsel %vm5857, %v5860, %v5862
  %v5864 = vsel %vm5856, %v5843, %v5846
  %v5865 = vsel %vm5859, %v5852, 920167782
  %v5866 = vsel %vm5858, %v5849, %v5865
  %v5867 = vsel %vm5857, %v5864, %v5866
  %v5868 = vsel %vm5856, %v5846, %v5849
  %v5869 = vsel %vm5859, %v5855, 1326507024
  %v5870 = vsel %vm5858, %v5852, %v5869
  %v5871 = vsel %vm5857, %v5868, %v5870
  %v5872 = vshll.u32 %v5832, 8
  %v5873 = vmul.u32.u64.compose %v5872, %v5871
  %v5874 = vextract.low.u32 %v5873
  %v5875 = vextract.high.u32 %v5873
  %v5876 = vmul.u32.u64.compose %v5872, %v5867
  %v5877 = vextract.low.u32 %v5876
  %v5878 = vextract.high.u32 %v5876
  %v5879 = vmul.u32 %v5872, %v5863
  %v5880 = vadd.s32 %v5875, %v5877
  %vm5881 = vc.u32 %v5875, %v5877
  %v5882 = vadd.s32 %v5878, 1
  %v5883 = vsel %vm5881, %v5882, %v5878
  %v5884 = vadd.s32 %v5879, %v5883
  %v5885 = vadd.s32 %v5884, 536870912
  %v5886 = vshrl.u32 %v5885, 30
  %v5887 = vshll.u32 %v5886, 30
  %v5888 = vsub.s32 %v5884, %v5887
  %vm5889 = vcmp.lt.s32.totalorder %v5888, 0
  %v5890 = vsub.s32 0, %v5888
  %v5891 = vsel %vm5889, %v5890, %v5888
  %v5892 = vclz %v5891
  %v5893 = vsub.s32 %v5892, 2
  %vm5894 = vcmp.gt.s32.totalorder 0, %v5893
  %v5895 = vsel %vm5894, 0, %v5893
  %v5896 = vsub.s32 32, %v5895
  %v5897 = vshll.u32 %v5888, %v5895
  %v5898 = vshrl.u32 %v5880, %v5896
  %v5899 = vor.u32 %v5897, %v5898
  %v5900 = vsub.s32 4294967266, %v5895
  %v5901 = vadd.s32 %v5900, 127
  %v5902 = vshll.u32 %v5901, 23
  %v5903 = vor.u32 4788187, %v5902
  %v5904 = vand.u32 2147483647, %v5903
  %v5906 = vcvt.s32.f32 %v5899
  %v5907 = vmul.f32 %v5906, %v5904
  %v5908 = vxor.u32 %v5907, 2147483648
  %v5909 = vsel %vm5826, %v5908, %v5907
  %v5910 = vsub.s32 4, %v5886
  %v5911 = vsel %vm5826, %v5910, %v5886
  %v5912 = vsel %vm5825, %v1735, %v5909
  %v5913 = vsel %vm5825, 0, %v5911
  %v5914 = vcosq.f32.pop %v5912
  %v5915 = vsinq.f32.pop %v5912
  %vm5916 = vweird.f32 %v1735
  %v5917 = vand.u32 %v5913, 3
  %vm5918 = vcmp.lt.s32.totalorder %v5917, 2
  %vm5919 = vcmp.eq.s32.totalorder %v5917, 0
  %v5920 = vxor.u32 %v5915, 2147483648
  %v5921 = vsel %vm5919, %v5914, %v5920
  %vm5922 = vcmp.eq.s32.totalorder %v5917, 2
  %v5923 = vxor.u32 %v5914, 2147483648
  %v5924 = vsel %vm5922, %v5923, %v5915
  %v5925 = vsel %vm5918, %v5921, %v5924
  %v5926 = vsel %vm5916, nan, %v5925
  %v5927 = vand.u32 2147483647, %v1736
  %vm5928 = vcmp.le.f32.partialorder %v5927, 0.7853982
  %vm5929 = vcmp.lt.s32.totalorder %v1736, 0
  %v5930 = vand.u32 %v1736, 2139095040
  %v5931 = vshrl.u32 %v5930, 23
  %v5932 = vsub.s32 %v5931, 127
  %v5933 = vand.u32 2147483647, %v1736
  %v5934 = vand.u32 %v5933, 8388607
  %v5935 = vor.u32 %v5934, 8388608
  %v5936 = vsub.s32 0, %v5935
  %v5937 = vadd.s32 %v5932, 1
  %vm5938 = vcmp.gt.s32.totalorder %v5937, 0
  %v5939 = vsel %vm5938, %v5937, 0
  %v5940 = vshrl.u32 %v5939, 5
  %v5941 = vand.u32 %v5939, 31
  %v5942 = vsub.s32 32, %v5941
  %v5943 = vshrl.u32 683565275, %v5942
  %v5944 = vshll.u32 683565275, %v5941
  %v5945 = vshrl.u32 2475754826, %v5942
  %v5946 = vor.u32 %v5944, %v5945
  %v5947 = vshll.u32 2475754826, %v5941
  %v5948 = vshrl.u32 2131351028, %v5942
  %v5949 = vor.u32 %v5947, %v5948
  %v5950 = vshll.u32 2131351028, %v5941
  %v5951 = vshrl.u32 2102212464, %v5942
  %v5952 = vor.u32 %v5950, %v5951
  %v5953 = vshll.u32 2102212464, %v5941
  %v5954 = vshrl.u32 920167782, %v5942
  %v5955 = vor.u32 %v5953, %v5954
  %v5956 = vshll.u32 920167782, %v5941
  %v5957 = vshrl.u32 1326507024, %v5942
  %v5958 = vor.u32 %v5956, %v5957
  %vm5959 = vcmp.lt.s32.totalorder %v5940, 1
  %vm5960 = vcmp.lt.s32.totalorder %v5940, 2
  %vm5961 = vcmp.lt.s32.totalorder %v5940, 3
  %vm5962 = vcmp.lt.s32.totalorder %v5940, 4
  %v5963 = vsel %vm5959, %v5943, %v5946
  %v5964 = vsel %vm5962, %v5952, 2102212464
  %v5965 = vsel %vm5961, %v5949, %v5964
  %v5966 = vsel %vm5960, %v5963, %v5965
  %v5967 = vsel %vm5959, %v5946, %v5949
  %v5968 = vsel %vm5962, %v5955, 920167782
  %v5969 = vsel %vm5961, %v5952, %v5968
  %v5970 = vsel %vm5960, %v5967, %v5969
  %v5971 = vsel %vm5959, %v5949, %v5952
  %v5972 = vsel %vm5962, %v5958, 1326507024
  %v5973 = vsel %vm5961, %v5955, %v5972
  %v5974 = vsel %vm5960, %v5971, %v5973
  %v5975 = vshll.u32 %v5935, 8
  %v5976 = vmul.u32.u64.compose %v5975, %v5974
  %v5977 = vextract.low.u32 %v5976
  %v5978 = vextract.high.u32 %v5976
  %v5979 = vmul.u32.u64.compose %v5975, %v5970
  %v5980 = vextract.low.u32 %v5979
  %v5981 = vextract.high.u32 %v5979
  %v5982 = vmul.u32 %v5975, %v5966
  %v5983 = vadd.s32 %v5978, %v5980
  %vm5984 = vc.u32 %v5978, %v5980
  %v5985 = vadd.s32 %v5981, 1
  %v5986 = vsel %vm5984, %v5985, %v5981
  %v5987 = vadd.s32 %v5982, %v5986
  %v5988 = vadd.s32 %v5987, 536870912
  %v5989 = vshrl.u32 %v5988, 30
  %v5990 = vshll.u32 %v5989, 30
  %v5991 = vsub.s32 %v5987, %v5990
  %vm5992 = vcmp.lt.s32.totalorder %v5991, 0
  %v5993 = vsub.s32 0, %v5991
  %v5994 = vsel %vm5992, %v5993, %v5991
  %v5995 = vclz %v5994
  %v5996 = vsub.s32 %v5995, 2
  %vm5997 = vcmp.gt.s32.totalorder 0, %v5996
  %v5998 = vsel %vm5997, 0, %v5996
  %v5999 = vsub.s32 32, %v5998
  %v6000 = vshll.u32 %v5991, %v5998
  %v6001 = vshrl.u32 %v5983, %v5999
  %v6002 = vor.u32 %v6000, %v6001
  %v6003 = vsub.s32 4294967266, %v5998
  %v6004 = vadd.s32 %v6003, 127
  %v6005 = vshll.u32 %v6004, 23
  %v6006 = vor.u32 4788187, %v6005
  %v6007 = vand.u32 2147483647, %v6006
  %v6009 = vcvt.s32.f32 %v6002
  %v6010 = vmul.f32 %v6009, %v6007
  %v6011 = vxor.u32 %v6010, 2147483648
  %v6012 = vsel %vm5929, %v6011, %v6010
  %v6013 = vsub.s32 4, %v5989
  %v6014 = vsel %vm5929, %v6013, %v5989
  %v6015 = vsel %vm5928, %v1736, %v6012
  %v6016 = vsel %vm5928, 0, %v6014
  %v6017 = vcosq.f32.pop %v6015
  %v6018 = vsinq.f32.pop %v6015
  %vm6019 = vweird.f32 %v1736
  %v6020 = vand.u32 %v6016, 3
  %vm6021 = vcmp.lt.s32.totalorder %v6020, 2
  %vm6022 = vcmp.eq.s32.totalorder %v6020, 0
  %v6023 = vxor.u32 %v6018, 2147483648
  %v6024 = vsel %vm6022, %v6017, %v6023
  %vm6025 = vcmp.eq.s32.totalorder %v6020, 2
  %v6026 = vxor.u32 %v6017, 2147483648
  %v6027 = vsel %vm6025, %v6026, %v6018
  %v6028 = vsel %vm6021, %v6024, %v6027
  %v6029 = vsel %vm6019, nan, %v6028
  %v6030 = vand.u32 2147483647, %v1737
  %vm6031 = vcmp.le.f32.partialorder %v6030, 0.7853982
  %vm6032 = vcmp.lt.s32.totalorder %v1737, 0
  %v6033 = vand.u32 %v1737, 2139095040
  %v6034 = vshrl.u32 %v6033, 23
  %v6035 = vsub.s32 %v6034, 127
  %v6036 = vand.u32 2147483647, %v1737
  %v6037 = vand.u32 %v6036, 8388607
  %v6038 = vor.u32 %v6037, 8388608
  %v6039 = vsub.s32 0, %v6038
  %v6040 = vadd.s32 %v6035, 1
  %vm6041 = vcmp.gt.s32.totalorder %v6040, 0
  %v6042 = vsel %vm6041, %v6040, 0
  %v6043 = vshrl.u32 %v6042, 5
  %v6044 = vand.u32 %v6042, 31
  %v6045 = vsub.s32 32, %v6044
  %v6046 = vshrl.u32 683565275, %v6045
  %v6047 = vshll.u32 683565275, %v6044
  %v6048 = vshrl.u32 2475754826, %v6045
  %v6049 = vor.u32 %v6047, %v6048
  %v6050 = vshll.u32 2475754826, %v6044
  %v6051 = vshrl.u32 2131351028, %v6045
  %v6052 = vor.u32 %v6050, %v6051
  %v6053 = vshll.u32 2131351028, %v6044
  %v6054 = vshrl.u32 2102212464, %v6045
  %v6055 = vor.u32 %v6053, %v6054
  %v6056 = vshll.u32 2102212464, %v6044
  %v6057 = vshrl.u32 920167782, %v6045
  %v6058 = vor.u32 %v6056, %v6057
  %v6059 = vshll.u32 920167782, %v6044
  %v6060 = vshrl.u32 1326507024, %v6045
  %v6061 = vor.u32 %v6059, %v6060
  %vm6062 = vcmp.lt.s32.totalorder %v6043, 1
  %vm6063 = vcmp.lt.s32.totalorder %v6043, 2
  %vm6064 = vcmp.lt.s32.totalorder %v6043, 3
  %vm6065 = vcmp.lt.s32.totalorder %v6043, 4
  %v6066 = vsel %vm6062, %v6046, %v6049
  %v6067 = vsel %vm6065, %v6055, 2102212464
  %v6068 = vsel %vm6064, %v6052, %v6067
  %v6069 = vsel %vm6063, %v6066, %v6068
  %v6070 = vsel %vm6062, %v6049, %v6052
  %v6071 = vsel %vm6065, %v6058, 920167782
  %v6072 = vsel %vm6064, %v6055, %v6071
  %v6073 = vsel %vm6063, %v6070, %v6072
  %v6074 = vsel %vm6062, %v6052, %v6055
  %v6075 = vsel %vm6065, %v6061, 1326507024
  %v6076 = vsel %vm6064, %v6058, %v6075
  %v6077 = vsel %vm6063, %v6074, %v6076
  %v6078 = vshll.u32 %v6038, 8
  %v6079 = vmul.u32.u64.compose %v6078, %v6077
  %v6080 = vextract.low.u32 %v6079
  %v6081 = vextract.high.u32 %v6079
  %v6082 = vmul.u32.u64.compose %v6078, %v6073
  %v6083 = vextract.low.u32 %v6082
  %v6084 = vextract.high.u32 %v6082
  %v6085 = vmul.u32 %v6078, %v6069
  %v6086 = vadd.s32 %v6081, %v6083
  %vm6087 = vc.u32 %v6081, %v6083
  %v6088 = vadd.s32 %v6084, 1
  %v6089 = vsel %vm6087, %v6088, %v6084
  %v6090 = vadd.s32 %v6085, %v6089
  %v6091 = vadd.s32 %v6090, 536870912
  %v6092 = vshrl.u32 %v6091, 30
  %v6093 = vshll.u32 %v6092, 30
  %v6094 = vsub.s32 %v6090, %v6093
  %vm6095 = vcmp.lt.s32.totalorder %v6094, 0
  %v6096 = vsub.s32 0, %v6094
  %v6097 = vsel %vm6095, %v6096, %v6094
  %v6098 = vclz %v6097
  %v6099 = vsub.s32 %v6098, 2
  %vm6100 = vcmp.gt.s32.totalorder 0, %v6099
  %v6101 = vsel %vm6100, 0, %v6099
  %v6102 = vsub.s32 32, %v6101
  %v6103 = vshll.u32 %v6094, %v6101
  %v6104 = vshrl.u32 %v6086, %v6102
  %v6105 = vor.u32 %v6103, %v6104
  %v6106 = vsub.s32 4294967266, %v6101
  %v6107 = vadd.s32 %v6106, 127
  %v6108 = vshll.u32 %v6107, 23
  %v6109 = vor.u32 4788187, %v6108
  %v6110 = vand.u32 2147483647, %v6109
  %v6112 = vcvt.s32.f32 %v6105
  %v6113 = vmul.f32 %v6112, %v6110
  %v6114 = vxor.u32 %v6113, 2147483648
  %v6115 = vsel %vm6032, %v6114, %v6113
  %v6116 = vsub.s32 4, %v6092
  %v6117 = vsel %vm6032, %v6116, %v6092
  %v6118 = vsel %vm6031, %v1737, %v6115
  %v6119 = vsel %vm6031, 0, %v6117
  %v6120 = vcosq.f32.pop %v6118
  %v6121 = vsinq.f32.pop %v6118
  %vm6122 = vweird.f32 %v1737
  %v6123 = vand.u32 %v6119, 3
  %vm6124 = vcmp.lt.s32.totalorder %v6123, 2
  %vm6125 = vcmp.eq.s32.totalorder %v6123, 0
  %v6126 = vxor.u32 %v6121, 2147483648
  %v6127 = vsel %vm6125, %v6120, %v6126
  %vm6128 = vcmp.eq.s32.totalorder %v6123, 2
  %v6129 = vxor.u32 %v6120, 2147483648
  %v6130 = vsel %vm6128, %v6129, %v6121
  %v6131 = vsel %vm6124, %v6127, %v6130
  %v6132 = vsel %vm6122, nan, %v6131
  %v6133 = vand.u32 2147483647, %v1738
  %vm6134 = vcmp.le.f32.partialorder %v6133, 0.7853982
  %vm6135 = vcmp.lt.s32.totalorder %v1738, 0
  %v6136 = vand.u32 %v1738, 2139095040
  %v6137 = vshrl.u32 %v6136, 23
  %v6138 = vsub.s32 %v6137, 127
  %v6139 = vand.u32 2147483647, %v1738
  %v6140 = vand.u32 %v6139, 8388607
  %v6141 = vor.u32 %v6140, 8388608
  %v6142 = vsub.s32 0, %v6141
  %v6143 = vadd.s32 %v6138, 1
  %vm6144 = vcmp.gt.s32.totalorder %v6143, 0
  %v6145 = vsel %vm6144, %v6143, 0
  %v6146 = vshrl.u32 %v6145, 5
  %v6147 = vand.u32 %v6145, 31
  %v6148 = vsub.s32 32, %v6147
  %v6149 = vshrl.u32 683565275, %v6148
  %v6150 = vshll.u32 683565275, %v6147
  %v6151 = vshrl.u32 2475754826, %v6148
  %v6152 = vor.u32 %v6150, %v6151
  %v6153 = vshll.u32 2475754826, %v6147
  %v6154 = vshrl.u32 2131351028, %v6148
  %v6155 = vor.u32 %v6153, %v6154
  %v6156 = vshll.u32 2131351028, %v6147
  %v6157 = vshrl.u32 2102212464, %v6148
  %v6158 = vor.u32 %v6156, %v6157
  %v6159 = vshll.u32 2102212464, %v6147
  %v6160 = vshrl.u32 920167782, %v6148
  %v6161 = vor.u32 %v6159, %v6160
  %v6162 = vshll.u32 920167782, %v6147
  %v6163 = vshrl.u32 1326507024, %v6148
  %v6164 = vor.u32 %v6162, %v6163
  %vm6165 = vcmp.lt.s32.totalorder %v6146, 1
  %vm6166 = vcmp.lt.s32.totalorder %v6146, 2
  %vm6167 = vcmp.lt.s32.totalorder %v6146, 3
  %vm6168 = vcmp.lt.s32.totalorder %v6146, 4
  %v6169 = vsel %vm6165, %v6149, %v6152
  %v6170 = vsel %vm6168, %v6158, 2102212464
  %v6171 = vsel %vm6167, %v6155, %v6170
  %v6172 = vsel %vm6166, %v6169, %v6171
  %v6173 = vsel %vm6165, %v6152, %v6155
  %v6174 = vsel %vm6168, %v6161, 920167782
  %v6175 = vsel %vm6167, %v6158, %v6174
  %v6176 = vsel %vm6166, %v6173, %v6175
  %v6177 = vsel %vm6165, %v6155, %v6158
  %v6178 = vsel %vm6168, %v6164, 1326507024
  %v6179 = vsel %vm6167, %v6161, %v6178
  %v6180 = vsel %vm6166, %v6177, %v6179
  %v6181 = vshll.u32 %v6141, 8
  %v6182 = vmul.u32.u64.compose %v6181, %v6180
  %v6183 = vextract.low.u32 %v6182
  %v6184 = vextract.high.u32 %v6182
  %v6185 = vmul.u32.u64.compose %v6181, %v6176
  %v6186 = vextract.low.u32 %v6185
  %v6187 = vextract.high.u32 %v6185
  %v6188 = vmul.u32 %v6181, %v6172
  %v6189 = vadd.s32 %v6184, %v6186
  %vm6190 = vc.u32 %v6184, %v6186
  %v6191 = vadd.s32 %v6187, 1
  %v6192 = vsel %vm6190, %v6191, %v6187
  %v6193 = vadd.s32 %v6188, %v6192
  %v6194 = vadd.s32 %v6193, 536870912
  %v6195 = vshrl.u32 %v6194, 30
  %v6196 = vshll.u32 %v6195, 30
  %v6197 = vsub.s32 %v6193, %v6196
  %vm6198 = vcmp.lt.s32.totalorder %v6197, 0
  %v6199 = vsub.s32 0, %v6197
  %v6200 = vsel %vm6198, %v6199, %v6197
  %v6201 = vclz %v6200
  %v6202 = vsub.s32 %v6201, 2
  %vm6203 = vcmp.gt.s32.totalorder 0, %v6202
  %v6204 = vsel %vm6203, 0, %v6202
  %v6205 = vsub.s32 32, %v6204
  %v6206 = vshll.u32 %v6197, %v6204
  %v6207 = vshrl.u32 %v6189, %v6205
  %v6208 = vor.u32 %v6206, %v6207
  %v6209 = vsub.s32 4294967266, %v6204
  %v6210 = vadd.s32 %v6209, 127
  %v6211 = vshll.u32 %v6210, 23
  %v6212 = vor.u32 4788187, %v6211
  %v6213 = vand.u32 2147483647, %v6212
  %v6215 = vcvt.s32.f32 %v6208
  %v6216 = vmul.f32 %v6215, %v6213
  %v6217 = vxor.u32 %v6216, 2147483648
  %v6218 = vsel %vm6135, %v6217, %v6216
  %v6219 = vsub.s32 4, %v6195
  %v6220 = vsel %vm6135, %v6219, %v6195
  %v6221 = vsel %vm6134, %v1738, %v6218
  %v6222 = vsel %vm6134, 0, %v6220
  %v6223 = vcosq.f32.pop %v6221
  %v6224 = vsinq.f32.pop %v6221
  %vm6225 = vweird.f32 %v1738
  %v6226 = vand.u32 %v6222, 3
  %vm6227 = vcmp.lt.s32.totalorder %v6226, 2
  %vm6228 = vcmp.eq.s32.totalorder %v6226, 0
  %v6229 = vxor.u32 %v6224, 2147483648
  %v6230 = vsel %vm6228, %v6223, %v6229
  %vm6231 = vcmp.eq.s32.totalorder %v6226, 2
  %v6232 = vxor.u32 %v6223, 2147483648
  %v6233 = vsel %vm6231, %v6232, %v6224
  %v6234 = vsel %vm6227, %v6230, %v6233
  %v6235 = vsel %vm6225, nan, %v6234
  %v6236 = vand.u32 2147483647, %v1739
  %vm6237 = vcmp.le.f32.partialorder %v6236, 0.7853982
  %vm6238 = vcmp.lt.s32.totalorder %v1739, 0
  %v6239 = vand.u32 %v1739, 2139095040
  %v6240 = vshrl.u32 %v6239, 23
  %v6241 = vsub.s32 %v6240, 127
  %v6242 = vand.u32 2147483647, %v1739
  %v6243 = vand.u32 %v6242, 8388607
  %v6244 = vor.u32 %v6243, 8388608
  %v6245 = vsub.s32 0, %v6244
  %v6246 = vadd.s32 %v6241, 1
  %vm6247 = vcmp.gt.s32.totalorder %v6246, 0
  %v6248 = vsel %vm6247, %v6246, 0
  %v6249 = vshrl.u32 %v6248, 5
  %v6250 = vand.u32 %v6248, 31
  %v6251 = vsub.s32 32, %v6250
  %v6252 = vshrl.u32 683565275, %v6251
  %v6253 = vshll.u32 683565275, %v6250
  %v6254 = vshrl.u32 2475754826, %v6251
  %v6255 = vor.u32 %v6253, %v6254
  %v6256 = vshll.u32 2475754826, %v6250
  %v6257 = vshrl.u32 2131351028, %v6251
  %v6258 = vor.u32 %v6256, %v6257
  %v6259 = vshll.u32 2131351028, %v6250
  %v6260 = vshrl.u32 2102212464, %v6251
  %v6261 = vor.u32 %v6259, %v6260
  %v6262 = vshll.u32 2102212464, %v6250
  %v6263 = vshrl.u32 920167782, %v6251
  %v6264 = vor.u32 %v6262, %v6263
  %v6265 = vshll.u32 920167782, %v6250
  %v6266 = vshrl.u32 1326507024, %v6251
  %v6267 = vor.u32 %v6265, %v6266
  %vm6268 = vcmp.lt.s32.totalorder %v6249, 1
  %vm6269 = vcmp.lt.s32.totalorder %v6249, 2
  %vm6270 = vcmp.lt.s32.totalorder %v6249, 3
  %vm6271 = vcmp.lt.s32.totalorder %v6249, 4
  %v6272 = vsel %vm6268, %v6252, %v6255
  %v6273 = vsel %vm6271, %v6261, 2102212464
  %v6274 = vsel %vm6270, %v6258, %v6273
  %v6275 = vsel %vm6269, %v6272, %v6274
  %v6276 = vsel %vm6268, %v6255, %v6258
  %v6277 = vsel %vm6271, %v6264, 920167782
  %v6278 = vsel %vm6270, %v6261, %v6277
  %v6279 = vsel %vm6269, %v6276, %v6278
  %v6280 = vsel %vm6268, %v6258, %v6261
  %v6281 = vsel %vm6271, %v6267, 1326507024
  %v6282 = vsel %vm6270, %v6264, %v6281
  %v6283 = vsel %vm6269, %v6280, %v6282
  %v6284 = vshll.u32 %v6244, 8
  %v6285 = vmul.u32.u64.compose %v6284, %v6283
  %v6286 = vextract.low.u32 %v6285
  %v6287 = vextract.high.u32 %v6285
  %v6288 = vmul.u32.u64.compose %v6284, %v6279
  %v6289 = vextract.low.u32 %v6288
  %v6290 = vextract.high.u32 %v6288
  %v6291 = vmul.u32 %v6284, %v6275
  %v6292 = vadd.s32 %v6287, %v6289
  %vm6293 = vc.u32 %v6287, %v6289
  %v6294 = vadd.s32 %v6290, 1
  %v6295 = vsel %vm6293, %v6294, %v6290
  %v6296 = vadd.s32 %v6291, %v6295
  %v6297 = vadd.s32 %v6296, 536870912
  %v6298 = vshrl.u32 %v6297, 30
  %v6299 = vshll.u32 %v6298, 30
  %v6300 = vsub.s32 %v6296, %v6299
  %vm6301 = vcmp.lt.s32.totalorder %v6300, 0
  %v6302 = vsub.s32 0, %v6300
  %v6303 = vsel %vm6301, %v6302, %v6300
  %v6304 = vclz %v6303
  %v6305 = vsub.s32 %v6304, 2
  %vm6306 = vcmp.gt.s32.totalorder 0, %v6305
  %v6307 = vsel %vm6306, 0, %v6305
  %v6308 = vsub.s32 32, %v6307
  %v6309 = vshll.u32 %v6300, %v6307
  %v6310 = vshrl.u32 %v6292, %v6308
  %v6311 = vor.u32 %v6309, %v6310
  %v6312 = vsub.s32 4294967266, %v6307
  %v6313 = vadd.s32 %v6312, 127
  %v6314 = vshll.u32 %v6313, 23
  %v6315 = vor.u32 4788187, %v6314
  %v6316 = vand.u32 2147483647, %v6315
  %v6318 = vcvt.s32.f32 %v6311
  %v6319 = vmul.f32 %v6318, %v6316
  %v6320 = vxor.u32 %v6319, 2147483648
  %v6321 = vsel %vm6238, %v6320, %v6319
  %v6322 = vsub.s32 4, %v6298
  %v6323 = vsel %vm6238, %v6322, %v6298
  %v6324 = vsel %vm6237, %v1739, %v6321
  %v6325 = vsel %vm6237, 0, %v6323
  %v6326 = vcosq.f32.pop %v6324
  %v6327 = vsinq.f32.pop %v6324
  %vm6328 = vweird.f32 %v1739
  %v6329 = vand.u32 %v6325, 3
  %vm6330 = vcmp.lt.s32.totalorder %v6329, 2
  %vm6331 = vcmp.eq.s32.totalorder %v6329, 0
  %v6332 = vxor.u32 %v6327, 2147483648
  %v6333 = vsel %vm6331, %v6326, %v6332
  %vm6334 = vcmp.eq.s32.totalorder %v6329, 2
  %v6335 = vxor.u32 %v6326, 2147483648
  %v6336 = vsel %vm6334, %v6335, %v6327
  %v6337 = vsel %vm6330, %v6333, %v6336
  %v6338 = vsel %vm6328, nan, %v6337
  %v6339 = vand.u32 2147483647, %v1740
  %vm6340 = vcmp.le.f32.partialorder %v6339, 0.7853982
  %vm6341 = vcmp.lt.s32.totalorder %v1740, 0
  %v6342 = vand.u32 %v1740, 2139095040
  %v6343 = vshrl.u32 %v6342, 23
  %v6344 = vsub.s32 %v6343, 127
  %v6345 = vand.u32 2147483647, %v1740
  %v6346 = vand.u32 %v6345, 8388607
  %v6347 = vor.u32 %v6346, 8388608
  %v6348 = vsub.s32 0, %v6347
  %v6349 = vadd.s32 %v6344, 1
  %vm6350 = vcmp.gt.s32.totalorder %v6349, 0
  %v6351 = vsel %vm6350, %v6349, 0
  %v6352 = vshrl.u32 %v6351, 5
  %v6353 = vand.u32 %v6351, 31
  %v6354 = vsub.s32 32, %v6353
  %v6355 = vshrl.u32 683565275, %v6354
  %v6356 = vshll.u32 683565275, %v6353
  %v6357 = vshrl.u32 2475754826, %v6354
  %v6358 = vor.u32 %v6356, %v6357
  %v6359 = vshll.u32 2475754826, %v6353
  %v6360 = vshrl.u32 2131351028, %v6354
  %v6361 = vor.u32 %v6359, %v6360
  %v6362 = vshll.u32 2131351028, %v6353
  %v6363 = vshrl.u32 2102212464, %v6354
  %v6364 = vor.u32 %v6362, %v6363
  %v6365 = vshll.u32 2102212464, %v6353
  %v6366 = vshrl.u32 920167782, %v6354
  %v6367 = vor.u32 %v6365, %v6366
  %v6368 = vshll.u32 920167782, %v6353
  %v6369 = vshrl.u32 1326507024, %v6354
  %v6370 = vor.u32 %v6368, %v6369
  %vm6371 = vcmp.lt.s32.totalorder %v6352, 1
  %vm6372 = vcmp.lt.s32.totalorder %v6352, 2
  %vm6373 = vcmp.lt.s32.totalorder %v6352, 3
  %vm6374 = vcmp.lt.s32.totalorder %v6352, 4
  %v6375 = vsel %vm6371, %v6355, %v6358
  %v6376 = vsel %vm6374, %v6364, 2102212464
  %v6377 = vsel %vm6373, %v6361, %v6376
  %v6378 = vsel %vm6372, %v6375, %v6377
  %v6379 = vsel %vm6371, %v6358, %v6361
  %v6380 = vsel %vm6374, %v6367, 920167782
  %v6381 = vsel %vm6373, %v6364, %v6380
  %v6382 = vsel %vm6372, %v6379, %v6381
  %v6383 = vsel %vm6371, %v6361, %v6364
  %v6384 = vsel %vm6374, %v6370, 1326507024
  %v6385 = vsel %vm6373, %v6367, %v6384
  %v6386 = vsel %vm6372, %v6383, %v6385
  %v6387 = vshll.u32 %v6347, 8
  %v6388 = vmul.u32.u64.compose %v6387, %v6386
  %v6389 = vextract.low.u32 %v6388
  %v6390 = vextract.high.u32 %v6388
  %v6391 = vmul.u32.u64.compose %v6387, %v6382
  %v6392 = vextract.low.u32 %v6391
  %v6393 = vextract.high.u32 %v6391
  %v6394 = vmul.u32 %v6387, %v6378
  %v6395 = vadd.s32 %v6390, %v6392
  %vm6396 = vc.u32 %v6390, %v6392
  %v6397 = vadd.s32 %v6393, 1
  %v6398 = vsel %vm6396, %v6397, %v6393
  %v6399 = vadd.s32 %v6394, %v6398
  %v6400 = vadd.s32 %v6399, 536870912
  %v6401 = vshrl.u32 %v6400, 30
  %v6402 = vshll.u32 %v6401, 30
  %v6403 = vsub.s32 %v6399, %v6402
  %vm6404 = vcmp.lt.s32.totalorder %v6403, 0
  %v6405 = vsub.s32 0, %v6403
  %v6406 = vsel %vm6404, %v6405, %v6403
  %v6407 = vclz %v6406
  %v6408 = vsub.s32 %v6407, 2
  %vm6409 = vcmp.gt.s32.totalorder 0, %v6408
  %v6410 = vsel %vm6409, 0, %v6408
  %v6411 = vsub.s32 32, %v6410
  %v6412 = vshll.u32 %v6403, %v6410
  %v6413 = vshrl.u32 %v6395, %v6411
  %v6414 = vor.u32 %v6412, %v6413
  %v6415 = vsub.s32 4294967266, %v6410
  %v6416 = vadd.s32 %v6415, 127
  %v6417 = vshll.u32 %v6416, 23
  %v6418 = vor.u32 4788187, %v6417
  %v6419 = vand.u32 2147483647, %v6418
  %v6421 = vcvt.s32.f32 %v6414
  %v6422 = vmul.f32 %v6421, %v6419
  %v6423 = vxor.u32 %v6422, 2147483648
  %v6424 = vsel %vm6341, %v6423, %v6422
  %v6425 = vsub.s32 4, %v6401
  %v6426 = vsel %vm6341, %v6425, %v6401
  %v6427 = vsel %vm6340, %v1740, %v6424
  %v6428 = vsel %vm6340, 0, %v6426
  %v6429 = vcosq.f32.pop %v6427
  %v6430 = vsinq.f32.pop %v6427
  %vm6431 = vweird.f32 %v1740
  %v6432 = vand.u32 %v6428, 3
  %vm6433 = vcmp.lt.s32.totalorder %v6432, 2
  %vm6434 = vcmp.eq.s32.totalorder %v6432, 0
  %v6435 = vxor.u32 %v6430, 2147483648
  %v6436 = vsel %vm6434, %v6429, %v6435
  %vm6437 = vcmp.eq.s32.totalorder %v6432, 2
  %v6438 = vxor.u32 %v6429, 2147483648
  %v6439 = vsel %vm6437, %v6438, %v6430
  %v6440 = vsel %vm6433, %v6436, %v6439
  %v6441 = vsel %vm6431, nan, %v6440
  %v6442 = vand.u32 2147483647, %v1741
  %vm6443 = vcmp.le.f32.partialorder %v6442, 0.7853982
  %vm6444 = vcmp.lt.s32.totalorder %v1741, 0
  %v6445 = vand.u32 %v1741, 2139095040
  %v6446 = vshrl.u32 %v6445, 23
  %v6447 = vsub.s32 %v6446, 127
  %v6448 = vand.u32 2147483647, %v1741
  %v6449 = vand.u32 %v6448, 8388607
  %v6450 = vor.u32 %v6449, 8388608
  %v6451 = vsub.s32 0, %v6450
  %v6452 = vadd.s32 %v6447, 1
  %vm6453 = vcmp.gt.s32.totalorder %v6452, 0
  %v6454 = vsel %vm6453, %v6452, 0
  %v6455 = vshrl.u32 %v6454, 5
  %v6456 = vand.u32 %v6454, 31
  %v6457 = vsub.s32 32, %v6456
  %v6458 = vshrl.u32 683565275, %v6457
  %v6459 = vshll.u32 683565275, %v6456
  %v6460 = vshrl.u32 2475754826, %v6457
  %v6461 = vor.u32 %v6459, %v6460
  %v6462 = vshll.u32 2475754826, %v6456
  %v6463 = vshrl.u32 2131351028, %v6457
  %v6464 = vor.u32 %v6462, %v6463
  %v6465 = vshll.u32 2131351028, %v6456
  %v6466 = vshrl.u32 2102212464, %v6457
  %v6467 = vor.u32 %v6465, %v6466
  %v6468 = vshll.u32 2102212464, %v6456
  %v6469 = vshrl.u32 920167782, %v6457
  %v6470 = vor.u32 %v6468, %v6469
  %v6471 = vshll.u32 920167782, %v6456
  %v6472 = vshrl.u32 1326507024, %v6457
  %v6473 = vor.u32 %v6471, %v6472
  %vm6474 = vcmp.lt.s32.totalorder %v6455, 1
  %vm6475 = vcmp.lt.s32.totalorder %v6455, 2
  %vm6476 = vcmp.lt.s32.totalorder %v6455, 3
  %vm6477 = vcmp.lt.s32.totalorder %v6455, 4
  %v6478 = vsel %vm6474, %v6458, %v6461
  %v6479 = vsel %vm6477, %v6467, 2102212464
  %v6480 = vsel %vm6476, %v6464, %v6479
  %v6481 = vsel %vm6475, %v6478, %v6480
  %v6482 = vsel %vm6474, %v6461, %v6464
  %v6483 = vsel %vm6477, %v6470, 920167782
  %v6484 = vsel %vm6476, %v6467, %v6483
  %v6485 = vsel %vm6475, %v6482, %v6484
  %v6486 = vsel %vm6474, %v6464, %v6467
  %v6487 = vsel %vm6477, %v6473, 1326507024
  %v6488 = vsel %vm6476, %v6470, %v6487
  %v6489 = vsel %vm6475, %v6486, %v6488
  %v6490 = vshll.u32 %v6450, 8
  %v6491 = vmul.u32.u64.compose %v6490, %v6489
  %v6492 = vextract.low.u32 %v6491
  %v6493 = vextract.high.u32 %v6491
  %v6494 = vmul.u32.u64.compose %v6490, %v6485
  %v6495 = vextract.low.u32 %v6494
  %v6496 = vextract.high.u32 %v6494
  %v6497 = vmul.u32 %v6490, %v6481
  %v6498 = vadd.s32 %v6493, %v6495
  %vm6499 = vc.u32 %v6493, %v6495
  %v6500 = vadd.s32 %v6496, 1
  %v6501 = vsel %vm6499, %v6500, %v6496
  %v6502 = vadd.s32 %v6497, %v6501
  %v6503 = vadd.s32 %v6502, 536870912
  %v6504 = vshrl.u32 %v6503, 30
  %v6505 = vshll.u32 %v6504, 30
  %v6506 = vsub.s32 %v6502, %v6505
  %vm6507 = vcmp.lt.s32.totalorder %v6506, 0
  %v6508 = vsub.s32 0, %v6506
  %v6509 = vsel %vm6507, %v6508, %v6506
  %v6510 = vclz %v6509
  %v6511 = vsub.s32 %v6510, 2
  %vm6512 = vcmp.gt.s32.totalorder 0, %v6511
  %v6513 = vsel %vm6512, 0, %v6511
  %v6514 = vsub.s32 32, %v6513
  %v6515 = vshll.u32 %v6506, %v6513
  %v6516 = vshrl.u32 %v6498, %v6514
  %v6517 = vor.u32 %v6515, %v6516
  %v6518 = vsub.s32 4294967266, %v6513
  %v6519 = vadd.s32 %v6518, 127
  %v6520 = vshll.u32 %v6519, 23
  %v6521 = vor.u32 4788187, %v6520
  %v6522 = vand.u32 2147483647, %v6521
  %v6524 = vcvt.s32.f32 %v6517
  %v6525 = vmul.f32 %v6524, %v6522
  %v6526 = vxor.u32 %v6525, 2147483648
  %v6527 = vsel %vm6444, %v6526, %v6525
  %v6528 = vsub.s32 4, %v6504
  %v6529 = vsel %vm6444, %v6528, %v6504
  %v6530 = vsel %vm6443, %v1741, %v6527
  %v6531 = vsel %vm6443, 0, %v6529
  %v6532 = vcosq.f32.pop %v6530
  %v6533 = vsinq.f32.pop %v6530
  %vm6534 = vweird.f32 %v1741
  %v6535 = vand.u32 %v6531, 3
  %vm6536 = vcmp.lt.s32.totalorder %v6535, 2
  %vm6537 = vcmp.eq.s32.totalorder %v6535, 0
  %v6538 = vxor.u32 %v6533, 2147483648
  %v6539 = vsel %vm6537, %v6532, %v6538
  %vm6540 = vcmp.eq.s32.totalorder %v6535, 2
  %v6541 = vxor.u32 %v6532, 2147483648
  %v6542 = vsel %vm6540, %v6541, %v6533
  %v6543 = vsel %vm6536, %v6539, %v6542
  %v6544 = vsel %vm6534, nan, %v6543
  %v6545 = vand.u32 2147483647, %v1742
  %vm6546 = vcmp.le.f32.partialorder %v6545, 0.7853982
  %vm6547 = vcmp.lt.s32.totalorder %v1742, 0
  %v6548 = vand.u32 %v1742, 2139095040
  %v6549 = vshrl.u32 %v6548, 23
  %v6550 = vsub.s32 %v6549, 127
  %v6551 = vand.u32 2147483647, %v1742
  %v6552 = vand.u32 %v6551, 8388607
  %v6553 = vor.u32 %v6552, 8388608
  %v6554 = vsub.s32 0, %v6553
  %v6555 = vadd.s32 %v6550, 1
  %vm6556 = vcmp.gt.s32.totalorder %v6555, 0
  %v6557 = vsel %vm6556, %v6555, 0
  %v6558 = vshrl.u32 %v6557, 5
  %v6559 = vand.u32 %v6557, 31
  %v6560 = vsub.s32 32, %v6559
  %v6561 = vshrl.u32 683565275, %v6560
  %v6562 = vshll.u32 683565275, %v6559
  %v6563 = vshrl.u32 2475754826, %v6560
  %v6564 = vor.u32 %v6562, %v6563
  %v6565 = vshll.u32 2475754826, %v6559
  %v6566 = vshrl.u32 2131351028, %v6560
  %v6567 = vor.u32 %v6565, %v6566
  %v6568 = vshll.u32 2131351028, %v6559
  %v6569 = vshrl.u32 2102212464, %v6560
  %v6570 = vor.u32 %v6568, %v6569
  %v6571 = vshll.u32 2102212464, %v6559
  %v6572 = vshrl.u32 920167782, %v6560
  %v6573 = vor.u32 %v6571, %v6572
  %v6574 = vshll.u32 920167782, %v6559
  %v6575 = vshrl.u32 1326507024, %v6560
  %v6576 = vor.u32 %v6574, %v6575
  %vm6577 = vcmp.lt.s32.totalorder %v6558, 1
  %vm6578 = vcmp.lt.s32.totalorder %v6558, 2
  %vm6579 = vcmp.lt.s32.totalorder %v6558, 3
  %vm6580 = vcmp.lt.s32.totalorder %v6558, 4
  %v6581 = vsel %vm6577, %v6561, %v6564
  %v6582 = vsel %vm6580, %v6570, 2102212464
  %v6583 = vsel %vm6579, %v6567, %v6582
  %v6584 = vsel %vm6578, %v6581, %v6583
  %v6585 = vsel %vm6577, %v6564, %v6567
  %v6586 = vsel %vm6580, %v6573, 920167782
  %v6587 = vsel %vm6579, %v6570, %v6586
  %v6588 = vsel %vm6578, %v6585, %v6587
  %v6589 = vsel %vm6577, %v6567, %v6570
  %v6590 = vsel %vm6580, %v6576, 1326507024
  %v6591 = vsel %vm6579, %v6573, %v6590
  %v6592 = vsel %vm6578, %v6589, %v6591
  %v6593 = vshll.u32 %v6553, 8
  %v6594 = vmul.u32.u64.compose %v6593, %v6592
  %v6595 = vextract.low.u32 %v6594
  %v6596 = vextract.high.u32 %v6594
  %v6597 = vmul.u32.u64.compose %v6593, %v6588
  %v6598 = vextract.low.u32 %v6597
  %v6599 = vextract.high.u32 %v6597
  %v6600 = vmul.u32 %v6593, %v6584
  %v6601 = vadd.s32 %v6596, %v6598
  %vm6602 = vc.u32 %v6596, %v6598
  %v6603 = vadd.s32 %v6599, 1
  %v6604 = vsel %vm6602, %v6603, %v6599
  %v6605 = vadd.s32 %v6600, %v6604
  %v6606 = vadd.s32 %v6605, 536870912
  %v6607 = vshrl.u32 %v6606, 30
  %v6608 = vshll.u32 %v6607, 30
  %v6609 = vsub.s32 %v6605, %v6608
  %vm6610 = vcmp.lt.s32.totalorder %v6609, 0
  %v6611 = vsub.s32 0, %v6609
  %v6612 = vsel %vm6610, %v6611, %v6609
  %v6613 = vclz %v6612
  %v6614 = vsub.s32 %v6613, 2
  %vm6615 = vcmp.gt.s32.totalorder 0, %v6614
  %v6616 = vsel %vm6615, 0, %v6614
  %v6617 = vsub.s32 32, %v6616
  %v6618 = vshll.u32 %v6609, %v6616
  %v6619 = vshrl.u32 %v6601, %v6617
  %v6620 = vor.u32 %v6618, %v6619
  %v6621 = vsub.s32 4294967266, %v6616
  %v6622 = vadd.s32 %v6621, 127
  %v6623 = vshll.u32 %v6622, 23
  %v6624 = vor.u32 4788187, %v6623
  %v6625 = vand.u32 2147483647, %v6624
  %v6627 = vcvt.s32.f32 %v6620
  %v6628 = vmul.f32 %v6627, %v6625
  %v6629 = vxor.u32 %v6628, 2147483648
  %v6630 = vsel %vm6547, %v6629, %v6628
  %v6631 = vsub.s32 4, %v6607
  %v6632 = vsel %vm6547, %v6631, %v6607
  %v6633 = vsel %vm6546, %v1742, %v6630
  %v6634 = vsel %vm6546, 0, %v6632
  %v6635 = vcosq.f32.pop %v6633
  %v6636 = vsinq.f32.pop %v6633
  %vm6637 = vweird.f32 %v1742
  %v6638 = vand.u32 %v6634, 3
  %vm6639 = vcmp.lt.s32.totalorder %v6638, 2
  %vm6640 = vcmp.eq.s32.totalorder %v6638, 0
  %v6641 = vxor.u32 %v6636, 2147483648
  %v6642 = vsel %vm6640, %v6635, %v6641
  %vm6643 = vcmp.eq.s32.totalorder %v6638, 2
  %v6644 = vxor.u32 %v6635, 2147483648
  %v6645 = vsel %vm6643, %v6644, %v6636
  %v6646 = vsel %vm6639, %v6642, %v6645
  %v6647 = vsel %vm6637, nan, %v6646
  %v6648 = vand.u32 2147483647, %v1743
  %vm6649 = vcmp.le.f32.partialorder %v6648, 0.7853982
  %vm6650 = vcmp.lt.s32.totalorder %v1743, 0
  %v6651 = vand.u32 %v1743, 2139095040
  %v6652 = vshrl.u32 %v6651, 23
  %v6653 = vsub.s32 %v6652, 127
  %v6654 = vand.u32 2147483647, %v1743
  %v6655 = vand.u32 %v6654, 8388607
  %v6656 = vor.u32 %v6655, 8388608
  %v6657 = vsub.s32 0, %v6656
  %v6658 = vadd.s32 %v6653, 1
  %vm6659 = vcmp.gt.s32.totalorder %v6658, 0
  %v6660 = vsel %vm6659, %v6658, 0
  %v6661 = vshrl.u32 %v6660, 5
  %v6662 = vand.u32 %v6660, 31
  %v6663 = vsub.s32 32, %v6662
  %v6664 = vshrl.u32 683565275, %v6663
  %v6665 = vshll.u32 683565275, %v6662
  %v6666 = vshrl.u32 2475754826, %v6663
  %v6667 = vor.u32 %v6665, %v6666
  %v6668 = vshll.u32 2475754826, %v6662
  %v6669 = vshrl.u32 2131351028, %v6663
  %v6670 = vor.u32 %v6668, %v6669
  %v6671 = vshll.u32 2131351028, %v6662
  %v6672 = vshrl.u32 2102212464, %v6663
  %v6673 = vor.u32 %v6671, %v6672
  %v6674 = vshll.u32 2102212464, %v6662
  %v6675 = vshrl.u32 920167782, %v6663
  %v6676 = vor.u32 %v6674, %v6675
  %v6677 = vshll.u32 920167782, %v6662
  %v6678 = vshrl.u32 1326507024, %v6663
  %v6679 = vor.u32 %v6677, %v6678
  %vm6680 = vcmp.lt.s32.totalorder %v6661, 1
  %vm6681 = vcmp.lt.s32.totalorder %v6661, 2
  %vm6682 = vcmp.lt.s32.totalorder %v6661, 3
  %vm6683 = vcmp.lt.s32.totalorder %v6661, 4
  %v6684 = vsel %vm6680, %v6664, %v6667
  %v6685 = vsel %vm6683, %v6673, 2102212464
  %v6686 = vsel %vm6682, %v6670, %v6685
  %v6687 = vsel %vm6681, %v6684, %v6686
  %v6688 = vsel %vm6680, %v6667, %v6670
  %v6689 = vsel %vm6683, %v6676, 920167782
  %v6690 = vsel %vm6682, %v6673, %v6689
  %v6691 = vsel %vm6681, %v6688, %v6690
  %v6692 = vsel %vm6680, %v6670, %v6673
  %v6693 = vsel %vm6683, %v6679, 1326507024
  %v6694 = vsel %vm6682, %v6676, %v6693
  %v6695 = vsel %vm6681, %v6692, %v6694
  %v6696 = vshll.u32 %v6656, 8
  %v6697 = vmul.u32.u64.compose %v6696, %v6695
  %v6698 = vextract.low.u32 %v6697
  %v6699 = vextract.high.u32 %v6697
  %v6700 = vmul.u32.u64.compose %v6696, %v6691
  %v6701 = vextract.low.u32 %v6700
  %v6702 = vextract.high.u32 %v6700
  %v6703 = vmul.u32 %v6696, %v6687
  %v6704 = vadd.s32 %v6699, %v6701
  %vm6705 = vc.u32 %v6699, %v6701
  %v6706 = vadd.s32 %v6702, 1
  %v6707 = vsel %vm6705, %v6706, %v6702
  %v6708 = vadd.s32 %v6703, %v6707
  %v6709 = vadd.s32 %v6708, 536870912
  %v6710 = vshrl.u32 %v6709, 30
  %v6711 = vshll.u32 %v6710, 30
  %v6712 = vsub.s32 %v6708, %v6711
  %vm6713 = vcmp.lt.s32.totalorder %v6712, 0
  %v6714 = vsub.s32 0, %v6712
  %v6715 = vsel %vm6713, %v6714, %v6712
  %v6716 = vclz %v6715
  %v6717 = vsub.s32 %v6716, 2
  %vm6718 = vcmp.gt.s32.totalorder 0, %v6717
  %v6719 = vsel %vm6718, 0, %v6717
  %v6720 = vsub.s32 32, %v6719
  %v6721 = vshll.u32 %v6712, %v6719
  %v6722 = vshrl.u32 %v6704, %v6720
  %v6723 = vor.u32 %v6721, %v6722
  %v6724 = vsub.s32 4294967266, %v6719
  %v6725 = vadd.s32 %v6724, 127
  %v6726 = vshll.u32 %v6725, 23
  %v6727 = vor.u32 4788187, %v6726
  %v6728 = vand.u32 2147483647, %v6727
  %v6730 = vcvt.s32.f32 %v6723
  %v6731 = vmul.f32 %v6730, %v6728
  %v6732 = vxor.u32 %v6731, 2147483648
  %v6733 = vsel %vm6650, %v6732, %v6731
  %v6734 = vsub.s32 4, %v6710
  %v6735 = vsel %vm6650, %v6734, %v6710
  %v6736 = vsel %vm6649, %v1743, %v6733
  %v6737 = vsel %vm6649, 0, %v6735
  %v6738 = vcosq.f32.pop %v6736
  %v6739 = vsinq.f32.pop %v6736
  %vm6740 = vweird.f32 %v1743
  %v6741 = vand.u32 %v6737, 3
  %vm6742 = vcmp.lt.s32.totalorder %v6741, 2
  %vm6743 = vcmp.eq.s32.totalorder %v6741, 0
  %v6744 = vxor.u32 %v6739, 2147483648
  %v6745 = vsel %vm6743, %v6738, %v6744
  %vm6746 = vcmp.eq.s32.totalorder %v6741, 2
  %v6747 = vxor.u32 %v6738, 2147483648
  %v6748 = vsel %vm6746, %v6747, %v6739
  %v6749 = vsel %vm6742, %v6745, %v6748
  %v6750 = vsel %vm6740, nan, %v6749
  %v6751 = vand.u32 2147483647, %v1744
  %vm6752 = vcmp.le.f32.partialorder %v6751, 0.7853982
  %vm6753 = vcmp.lt.s32.totalorder %v1744, 0
  %v6754 = vand.u32 %v1744, 2139095040
  %v6755 = vshrl.u32 %v6754, 23
  %v6756 = vsub.s32 %v6755, 127
  %v6757 = vand.u32 2147483647, %v1744
  %v6758 = vand.u32 %v6757, 8388607
  %v6759 = vor.u32 %v6758, 8388608
  %v6760 = vsub.s32 0, %v6759
  %v6761 = vadd.s32 %v6756, 1
  %vm6762 = vcmp.gt.s32.totalorder %v6761, 0
  %v6763 = vsel %vm6762, %v6761, 0
  %v6764 = vshrl.u32 %v6763, 5
  %v6765 = vand.u32 %v6763, 31
  %v6766 = vsub.s32 32, %v6765
  %v6767 = vshrl.u32 683565275, %v6766
  %v6768 = vshll.u32 683565275, %v6765
  %v6769 = vshrl.u32 2475754826, %v6766
  %v6770 = vor.u32 %v6768, %v6769
  %v6771 = vshll.u32 2475754826, %v6765
  %v6772 = vshrl.u32 2131351028, %v6766
  %v6773 = vor.u32 %v6771, %v6772
  %v6774 = vshll.u32 2131351028, %v6765
  %v6775 = vshrl.u32 2102212464, %v6766
  %v6776 = vor.u32 %v6774, %v6775
  %v6777 = vshll.u32 2102212464, %v6765
  %v6778 = vshrl.u32 920167782, %v6766
  %v6779 = vor.u32 %v6777, %v6778
  %v6780 = vshll.u32 920167782, %v6765
  %v6781 = vshrl.u32 1326507024, %v6766
  %v6782 = vor.u32 %v6780, %v6781
  %vm6783 = vcmp.lt.s32.totalorder %v6764, 1
  %vm6784 = vcmp.lt.s32.totalorder %v6764, 2
  %vm6785 = vcmp.lt.s32.totalorder %v6764, 3
  %vm6786 = vcmp.lt.s32.totalorder %v6764, 4
  %v6787 = vsel %vm6783, %v6767, %v6770
  %v6788 = vsel %vm6786, %v6776, 2102212464
  %v6789 = vsel %vm6785, %v6773, %v6788
  %v6790 = vsel %vm6784, %v6787, %v6789
  %v6791 = vsel %vm6783, %v6770, %v6773
  %v6792 = vsel %vm6786, %v6779, 920167782
  %v6793 = vsel %vm6785, %v6776, %v6792
  %v6794 = vsel %vm6784, %v6791, %v6793
  %v6795 = vsel %vm6783, %v6773, %v6776
  %v6796 = vsel %vm6786, %v6782, 1326507024
  %v6797 = vsel %vm6785, %v6779, %v6796
  %v6798 = vsel %vm6784, %v6795, %v6797
  %v6799 = vshll.u32 %v6759, 8
  %v6800 = vmul.u32.u64.compose %v6799, %v6798
  %v6801 = vextract.low.u32 %v6800
  %v6802 = vextract.high.u32 %v6800
  %v6803 = vmul.u32.u64.compose %v6799, %v6794
  %v6804 = vextract.low.u32 %v6803
  %v6805 = vextract.high.u32 %v6803
  %v6806 = vmul.u32 %v6799, %v6790
  %v6807 = vadd.s32 %v6802, %v6804
  %vm6808 = vc.u32 %v6802, %v6804
  %v6809 = vadd.s32 %v6805, 1
  %v6810 = vsel %vm6808, %v6809, %v6805
  %v6811 = vadd.s32 %v6806, %v6810
  %v6812 = vadd.s32 %v6811, 536870912
  %v6813 = vshrl.u32 %v6812, 30
  %v6814 = vshll.u32 %v6813, 30
  %v6815 = vsub.s32 %v6811, %v6814
  %vm6816 = vcmp.lt.s32.totalorder %v6815, 0
  %v6817 = vsub.s32 0, %v6815
  %v6818 = vsel %vm6816, %v6817, %v6815
  %v6819 = vclz %v6818
  %v6820 = vsub.s32 %v6819, 2
  %vm6821 = vcmp.gt.s32.totalorder 0, %v6820
  %v6822 = vsel %vm6821, 0, %v6820
  %v6823 = vsub.s32 32, %v6822
  %v6824 = vshll.u32 %v6815, %v6822
  %v6825 = vshrl.u32 %v6807, %v6823
  %v6826 = vor.u32 %v6824, %v6825
  %v6827 = vsub.s32 4294967266, %v6822
  %v6828 = vadd.s32 %v6827, 127
  %v6829 = vshll.u32 %v6828, 23
  %v6830 = vor.u32 4788187, %v6829
  %v6831 = vand.u32 2147483647, %v6830
  %v6833 = vcvt.s32.f32 %v6826
  %v6834 = vmul.f32 %v6833, %v6831
  %v6835 = vxor.u32 %v6834, 2147483648
  %v6836 = vsel %vm6753, %v6835, %v6834
  %v6837 = vsub.s32 4, %v6813
  %v6838 = vsel %vm6753, %v6837, %v6813
  %v6839 = vsel %vm6752, %v1744, %v6836
  %v6840 = vsel %vm6752, 0, %v6838
  %v6841 = vcosq.f32.pop %v6839
  %v6842 = vsinq.f32.pop %v6839
  %vm6843 = vweird.f32 %v1744
  %v6844 = vand.u32 %v6840, 3
  %vm6845 = vcmp.lt.s32.totalorder %v6844, 2
  %vm6846 = vcmp.eq.s32.totalorder %v6844, 0
  %v6847 = vxor.u32 %v6842, 2147483648
  %v6848 = vsel %vm6846, %v6841, %v6847
  %vm6849 = vcmp.eq.s32.totalorder %v6844, 2
  %v6850 = vxor.u32 %v6841, 2147483648
  %v6851 = vsel %vm6849, %v6850, %v6842
  %v6852 = vsel %vm6845, %v6848, %v6851
  %v6853 = vsel %vm6843, nan, %v6852
  %v6854 = vand.u32 2147483647, %v1745
  %vm6855 = vcmp.le.f32.partialorder %v6854, 0.7853982
  %vm6856 = vcmp.lt.s32.totalorder %v1745, 0
  %v6857 = vand.u32 %v1745, 2139095040
  %v6858 = vshrl.u32 %v6857, 23
  %v6859 = vsub.s32 %v6858, 127
  %v6860 = vand.u32 2147483647, %v1745
  %v6861 = vand.u32 %v6860, 8388607
  %v6862 = vor.u32 %v6861, 8388608
  %v6863 = vsub.s32 0, %v6862
  %v6864 = vadd.s32 %v6859, 1
  %vm6865 = vcmp.gt.s32.totalorder %v6864, 0
  %v6866 = vsel %vm6865, %v6864, 0
  %v6867 = vshrl.u32 %v6866, 5
  %v6868 = vand.u32 %v6866, 31
  %v6869 = vsub.s32 32, %v6868
  %v6870 = vshrl.u32 683565275, %v6869
  %v6871 = vshll.u32 683565275, %v6868
  %v6872 = vshrl.u32 2475754826, %v6869
  %v6873 = vor.u32 %v6871, %v6872
  %v6874 = vshll.u32 2475754826, %v6868
  %v6875 = vshrl.u32 2131351028, %v6869
  %v6876 = vor.u32 %v6874, %v6875
  %v6877 = vshll.u32 2131351028, %v6868
  %v6878 = vshrl.u32 2102212464, %v6869
  %v6879 = vor.u32 %v6877, %v6878
  %v6880 = vshll.u32 2102212464, %v6868
  %v6881 = vshrl.u32 920167782, %v6869
  %v6882 = vor.u32 %v6880, %v6881
  %v6883 = vshll.u32 920167782, %v6868
  %v6884 = vshrl.u32 1326507024, %v6869
  %v6885 = vor.u32 %v6883, %v6884
  %vm6886 = vcmp.lt.s32.totalorder %v6867, 1
  %vm6887 = vcmp.lt.s32.totalorder %v6867, 2
  %vm6888 = vcmp.lt.s32.totalorder %v6867, 3
  %vm6889 = vcmp.lt.s32.totalorder %v6867, 4
  %v6890 = vsel %vm6886, %v6870, %v6873
  %v6891 = vsel %vm6889, %v6879, 2102212464
  %v6892 = vsel %vm6888, %v6876, %v6891
  %v6893 = vsel %vm6887, %v6890, %v6892
  %v6894 = vsel %vm6886, %v6873, %v6876
  %v6895 = vsel %vm6889, %v6882, 920167782
  %v6896 = vsel %vm6888, %v6879, %v6895
  %v6897 = vsel %vm6887, %v6894, %v6896
  %v6898 = vsel %vm6886, %v6876, %v6879
  %v6899 = vsel %vm6889, %v6885, 1326507024
  %v6900 = vsel %vm6888, %v6882, %v6899
  %v6901 = vsel %vm6887, %v6898, %v6900
  %v6902 = vshll.u32 %v6862, 8
  %v6903 = vmul.u32.u64.compose %v6902, %v6901
  %v6904 = vextract.low.u32 %v6903
  %v6905 = vextract.high.u32 %v6903
  %v6906 = vmul.u32.u64.compose %v6902, %v6897
  %v6907 = vextract.low.u32 %v6906
  %v6908 = vextract.high.u32 %v6906
  %v6909 = vmul.u32 %v6902, %v6893
  %v6910 = vadd.s32 %v6905, %v6907
  %vm6911 = vc.u32 %v6905, %v6907
  %v6912 = vadd.s32 %v6908, 1
  %v6913 = vsel %vm6911, %v6912, %v6908
  %v6914 = vadd.s32 %v6909, %v6913
  %v6915 = vadd.s32 %v6914, 536870912
  %v6916 = vshrl.u32 %v6915, 30
  %v6917 = vshll.u32 %v6916, 30
  %v6918 = vsub.s32 %v6914, %v6917
  %vm6919 = vcmp.lt.s32.totalorder %v6918, 0
  %v6920 = vsub.s32 0, %v6918
  %v6921 = vsel %vm6919, %v6920, %v6918
  %v6922 = vclz %v6921
  %v6923 = vsub.s32 %v6922, 2
  %vm6924 = vcmp.gt.s32.totalorder 0, %v6923
  %v6925 = vsel %vm6924, 0, %v6923
  %v6926 = vsub.s32 32, %v6925
  %v6927 = vshll.u32 %v6918, %v6925
  %v6928 = vshrl.u32 %v6910, %v6926
  %v6929 = vor.u32 %v6927, %v6928
  %v6930 = vsub.s32 4294967266, %v6925
  %v6931 = vadd.s32 %v6930, 127
  %v6932 = vshll.u32 %v6931, 23
  %v6933 = vor.u32 4788187, %v6932
  %v6934 = vand.u32 2147483647, %v6933
  %v6936 = vcvt.s32.f32 %v6929
  %v6937 = vmul.f32 %v6936, %v6934
  %v6938 = vxor.u32 %v6937, 2147483648
  %v6939 = vsel %vm6856, %v6938, %v6937
  %v6940 = vsub.s32 4, %v6916
  %v6941 = vsel %vm6856, %v6940, %v6916
  %v6942 = vsel %vm6855, %v1745, %v6939
  %v6943 = vsel %vm6855, 0, %v6941
  %v6944 = vcosq.f32.pop %v6942
  %v6945 = vsinq.f32.pop %v6942
  %vm6946 = vweird.f32 %v1745
  %v6947 = vand.u32 %v6943, 3
  %vm6948 = vcmp.lt.s32.totalorder %v6947, 2
  %vm6949 = vcmp.eq.s32.totalorder %v6947, 0
  %v6950 = vxor.u32 %v6945, 2147483648
  %v6951 = vsel %vm6949, %v6944, %v6950
  %vm6952 = vcmp.eq.s32.totalorder %v6947, 2
  %v6953 = vxor.u32 %v6944, 2147483648
  %v6954 = vsel %vm6952, %v6953, %v6945
  %v6955 = vsel %vm6948, %v6951, %v6954
  %v6956 = vsel %vm6946, nan, %v6955
  %v6957 = vand.u32 2147483647, %v1746
  %vm6958 = vcmp.le.f32.partialorder %v6957, 0.7853982
  %vm6959 = vcmp.lt.s32.totalorder %v1746, 0
  %v6960 = vand.u32 %v1746, 2139095040
  %v6961 = vshrl.u32 %v6960, 23
  %v6962 = vsub.s32 %v6961, 127
  %v6963 = vand.u32 2147483647, %v1746
  %v6964 = vand.u32 %v6963, 8388607
  %v6965 = vor.u32 %v6964, 8388608
  %v6966 = vsub.s32 0, %v6965
  %v6967 = vadd.s32 %v6962, 1
  %vm6968 = vcmp.gt.s32.totalorder %v6967, 0
  %v6969 = vsel %vm6968, %v6967, 0
  %v6970 = vshrl.u32 %v6969, 5
  %v6971 = vand.u32 %v6969, 31
  %v6972 = vsub.s32 32, %v6971
  %v6973 = vshrl.u32 683565275, %v6972
  %v6974 = vshll.u32 683565275, %v6971
  %v6975 = vshrl.u32 2475754826, %v6972
  %v6976 = vor.u32 %v6974, %v6975
  %v6977 = vshll.u32 2475754826, %v6971
  %v6978 = vshrl.u32 2131351028, %v6972
  %v6979 = vor.u32 %v6977, %v6978
  %v6980 = vshll.u32 2131351028, %v6971
  %v6981 = vshrl.u32 2102212464, %v6972
  %v6982 = vor.u32 %v6980, %v6981
  %v6983 = vshll.u32 2102212464, %v6971
  %v6984 = vshrl.u32 920167782, %v6972
  %v6985 = vor.u32 %v6983, %v6984
  %v6986 = vshll.u32 920167782, %v6971
  %v6987 = vshrl.u32 1326507024, %v6972
  %v6988 = vor.u32 %v6986, %v6987
  %vm6989 = vcmp.lt.s32.totalorder %v6970, 1
  %vm6990 = vcmp.lt.s32.totalorder %v6970, 2
  %vm6991 = vcmp.lt.s32.totalorder %v6970, 3
  %vm6992 = vcmp.lt.s32.totalorder %v6970, 4
  %v6993 = vsel %vm6989, %v6973, %v6976
  %v6994 = vsel %vm6992, %v6982, 2102212464
  %v6995 = vsel %vm6991, %v6979, %v6994
  %v6996 = vsel %vm6990, %v6993, %v6995
  %v6997 = vsel %vm6989, %v6976, %v6979
  %v6998 = vsel %vm6992, %v6985, 920167782
  %v6999 = vsel %vm6991, %v6982, %v6998
  %v7000 = vsel %vm6990, %v6997, %v6999
  %v7001 = vsel %vm6989, %v6979, %v6982
  %v7002 = vsel %vm6992, %v6988, 1326507024
  %v7003 = vsel %vm6991, %v6985, %v7002
  %v7004 = vsel %vm6990, %v7001, %v7003
  %v7005 = vshll.u32 %v6965, 8
  %v7006 = vmul.u32.u64.compose %v7005, %v7004
  %v7007 = vextract.low.u32 %v7006
  %v7008 = vextract.high.u32 %v7006
  %v7009 = vmul.u32.u64.compose %v7005, %v7000
  %v7010 = vextract.low.u32 %v7009
  %v7011 = vextract.high.u32 %v7009
  %v7012 = vmul.u32 %v7005, %v6996
  %v7013 = vadd.s32 %v7008, %v7010
  %vm7014 = vc.u32 %v7008, %v7010
  %v7015 = vadd.s32 %v7011, 1
  %v7016 = vsel %vm7014, %v7015, %v7011
  %v7017 = vadd.s32 %v7012, %v7016
  %v7018 = vadd.s32 %v7017, 536870912
  %v7019 = vshrl.u32 %v7018, 30
  %v7020 = vshll.u32 %v7019, 30
  %v7021 = vsub.s32 %v7017, %v7020
  %vm7022 = vcmp.lt.s32.totalorder %v7021, 0
  %v7023 = vsub.s32 0, %v7021
  %v7024 = vsel %vm7022, %v7023, %v7021
  %v7025 = vclz %v7024
  %v7026 = vsub.s32 %v7025, 2
  %vm7027 = vcmp.gt.s32.totalorder 0, %v7026
  %v7028 = vsel %vm7027, 0, %v7026
  %v7029 = vsub.s32 32, %v7028
  %v7030 = vshll.u32 %v7021, %v7028
  %v7031 = vshrl.u32 %v7013, %v7029
  %v7032 = vor.u32 %v7030, %v7031
  %v7033 = vsub.s32 4294967266, %v7028
  %v7034 = vadd.s32 %v7033, 127
  %v7035 = vshll.u32 %v7034, 23
  %v7036 = vor.u32 4788187, %v7035
  %v7037 = vand.u32 2147483647, %v7036
  %v7039 = vcvt.s32.f32 %v7032
  %v7040 = vmul.f32 %v7039, %v7037
  %v7041 = vxor.u32 %v7040, 2147483648
  %v7042 = vsel %vm6959, %v7041, %v7040
  %v7043 = vsub.s32 4, %v7019
  %v7044 = vsel %vm6959, %v7043, %v7019
  %v7045 = vsel %vm6958, %v1746, %v7042
  %v7046 = vsel %vm6958, 0, %v7044
  %v7047 = vcosq.f32.pop %v7045
  %v7048 = vsinq.f32.pop %v7045
  %vm7049 = vweird.f32 %v1746
  %v7050 = vand.u32 %v7046, 3
  %vm7051 = vcmp.lt.s32.totalorder %v7050, 2
  %vm7052 = vcmp.eq.s32.totalorder %v7050, 0
  %v7053 = vxor.u32 %v7048, 2147483648
  %v7054 = vsel %vm7052, %v7047, %v7053
  %vm7055 = vcmp.eq.s32.totalorder %v7050, 2
  %v7056 = vxor.u32 %v7047, 2147483648
  %v7057 = vsel %vm7055, %v7056, %v7048
  %v7058 = vsel %vm7051, %v7054, %v7057
  %v7059 = vsel %vm7049, nan, %v7058
  %v7060 = vand.u32 2147483647, %v1747
  %vm7061 = vcmp.le.f32.partialorder %v7060, 0.7853982
  %vm7062 = vcmp.lt.s32.totalorder %v1747, 0
  %v7063 = vand.u32 %v1747, 2139095040
  %v7064 = vshrl.u32 %v7063, 23
  %v7065 = vsub.s32 %v7064, 127
  %v7066 = vand.u32 2147483647, %v1747
  %v7067 = vand.u32 %v7066, 8388607
  %v7068 = vor.u32 %v7067, 8388608
  %v7069 = vsub.s32 0, %v7068
  %v7070 = vadd.s32 %v7065, 1
  %vm7071 = vcmp.gt.s32.totalorder %v7070, 0
  %v7072 = vsel %vm7071, %v7070, 0
  %v7073 = vshrl.u32 %v7072, 5
  %v7074 = vand.u32 %v7072, 31
  %v7075 = vsub.s32 32, %v7074
  %v7076 = vshrl.u32 683565275, %v7075
  %v7077 = vshll.u32 683565275, %v7074
  %v7078 = vshrl.u32 2475754826, %v7075
  %v7079 = vor.u32 %v7077, %v7078
  %v7080 = vshll.u32 2475754826, %v7074
  %v7081 = vshrl.u32 2131351028, %v7075
  %v7082 = vor.u32 %v7080, %v7081
  %v7083 = vshll.u32 2131351028, %v7074
  %v7084 = vshrl.u32 2102212464, %v7075
  %v7085 = vor.u32 %v7083, %v7084
  %v7086 = vshll.u32 2102212464, %v7074
  %v7087 = vshrl.u32 920167782, %v7075
  %v7088 = vor.u32 %v7086, %v7087
  %v7089 = vshll.u32 920167782, %v7074
  %v7090 = vshrl.u32 1326507024, %v7075
  %v7091 = vor.u32 %v7089, %v7090
  %vm7092 = vcmp.lt.s32.totalorder %v7073, 1
  %vm7093 = vcmp.lt.s32.totalorder %v7073, 2
  %vm7094 = vcmp.lt.s32.totalorder %v7073, 3
  %vm7095 = vcmp.lt.s32.totalorder %v7073, 4
  %v7096 = vsel %vm7092, %v7076, %v7079
  %v7097 = vsel %vm7095, %v7085, 2102212464
  %v7098 = vsel %vm7094, %v7082, %v7097
  %v7099 = vsel %vm7093, %v7096, %v7098
  %v7100 = vsel %vm7092, %v7079, %v7082
  %v7101 = vsel %vm7095, %v7088, 920167782
  %v7102 = vsel %vm7094, %v7085, %v7101
  %v7103 = vsel %vm7093, %v7100, %v7102
  %v7104 = vsel %vm7092, %v7082, %v7085
  %v7105 = vsel %vm7095, %v7091, 1326507024
  %v7106 = vsel %vm7094, %v7088, %v7105
  %v7107 = vsel %vm7093, %v7104, %v7106
  %v7108 = vshll.u32 %v7068, 8
  %v7109 = vmul.u32.u64.compose %v7108, %v7107
  %v7110 = vextract.low.u32 %v7109
  %v7111 = vextract.high.u32 %v7109
  %v7112 = vmul.u32.u64.compose %v7108, %v7103
  %v7113 = vextract.low.u32 %v7112
  %v7114 = vextract.high.u32 %v7112
  %v7115 = vmul.u32 %v7108, %v7099
  %v7116 = vadd.s32 %v7111, %v7113
  %vm7117 = vc.u32 %v7111, %v7113
  %v7118 = vadd.s32 %v7114, 1
  %v7119 = vsel %vm7117, %v7118, %v7114
  %v7120 = vadd.s32 %v7115, %v7119
  %v7121 = vadd.s32 %v7120, 536870912
  %v7122 = vshrl.u32 %v7121, 30
  %v7123 = vshll.u32 %v7122, 30
  %v7124 = vsub.s32 %v7120, %v7123
  %vm7125 = vcmp.lt.s32.totalorder %v7124, 0
  %v7126 = vsub.s32 0, %v7124
  %v7127 = vsel %vm7125, %v7126, %v7124
  %v7128 = vclz %v7127
  %v7129 = vsub.s32 %v7128, 2
  %vm7130 = vcmp.gt.s32.totalorder 0, %v7129
  %v7131 = vsel %vm7130, 0, %v7129
  %v7132 = vsub.s32 32, %v7131
  %v7133 = vshll.u32 %v7124, %v7131
  %v7134 = vshrl.u32 %v7116, %v7132
  %v7135 = vor.u32 %v7133, %v7134
  %v7136 = vsub.s32 4294967266, %v7131
  %v7137 = vadd.s32 %v7136, 127
  %v7138 = vshll.u32 %v7137, 23
  %v7139 = vor.u32 4788187, %v7138
  %v7140 = vand.u32 2147483647, %v7139
  %v7142 = vcvt.s32.f32 %v7135
  %v7143 = vmul.f32 %v7142, %v7140
  %v7144 = vxor.u32 %v7143, 2147483648
  %v7145 = vsel %vm7062, %v7144, %v7143
  %v7146 = vsub.s32 4, %v7122
  %v7147 = vsel %vm7062, %v7146, %v7122
  %v7148 = vsel %vm7061, %v1747, %v7145
  %v7149 = vsel %vm7061, 0, %v7147
  %v7150 = vcosq.f32.pop %v7148
  %v7151 = vsinq.f32.pop %v7148
  %vm7152 = vweird.f32 %v1747
  %v7153 = vand.u32 %v7149, 3
  %vm7154 = vcmp.lt.s32.totalorder %v7153, 2
  %vm7155 = vcmp.eq.s32.totalorder %v7153, 0
  %v7156 = vxor.u32 %v7151, 2147483648
  %v7157 = vsel %vm7155, %v7150, %v7156
  %vm7158 = vcmp.eq.s32.totalorder %v7153, 2
  %v7159 = vxor.u32 %v7150, 2147483648
  %v7160 = vsel %vm7158, %v7159, %v7151
  %v7161 = vsel %vm7154, %v7157, %v7160
  %v7162 = vsel %vm7152, nan, %v7161
  %v7163 = vand.u32 2147483647, %v1748
  %vm7164 = vcmp.le.f32.partialorder %v7163, 0.7853982
  %vm7165 = vcmp.lt.s32.totalorder %v1748, 0
  %v7166 = vand.u32 %v1748, 2139095040
  %v7167 = vshrl.u32 %v7166, 23
  %v7168 = vsub.s32 %v7167, 127
  %v7169 = vand.u32 2147483647, %v1748
  %v7170 = vand.u32 %v7169, 8388607
  %v7171 = vor.u32 %v7170, 8388608
  %v7172 = vsub.s32 0, %v7171
  %v7173 = vadd.s32 %v7168, 1
  %vm7174 = vcmp.gt.s32.totalorder %v7173, 0
  %v7175 = vsel %vm7174, %v7173, 0
  %v7176 = vshrl.u32 %v7175, 5
  %v7177 = vand.u32 %v7175, 31
  %v7178 = vsub.s32 32, %v7177
  %v7179 = vshrl.u32 683565275, %v7178
  %v7180 = vshll.u32 683565275, %v7177
  %v7181 = vshrl.u32 2475754826, %v7178
  %v7182 = vor.u32 %v7180, %v7181
  %v7183 = vshll.u32 2475754826, %v7177
  %v7184 = vshrl.u32 2131351028, %v7178
  %v7185 = vor.u32 %v7183, %v7184
  %v7186 = vshll.u32 2131351028, %v7177
  %v7187 = vshrl.u32 2102212464, %v7178
  %v7188 = vor.u32 %v7186, %v7187
  %v7189 = vshll.u32 2102212464, %v7177
  %v7190 = vshrl.u32 920167782, %v7178
  %v7191 = vor.u32 %v7189, %v7190
  %v7192 = vshll.u32 920167782, %v7177
  %v7193 = vshrl.u32 1326507024, %v7178
  %v7194 = vor.u32 %v7192, %v7193
  %vm7195 = vcmp.lt.s32.totalorder %v7176, 1
  %vm7196 = vcmp.lt.s32.totalorder %v7176, 2
  %vm7197 = vcmp.lt.s32.totalorder %v7176, 3
  %vm7198 = vcmp.lt.s32.totalorder %v7176, 4
  %v7199 = vsel %vm7195, %v7179, %v7182
  %v7200 = vsel %vm7198, %v7188, 2102212464
  %v7201 = vsel %vm7197, %v7185, %v7200
  %v7202 = vsel %vm7196, %v7199, %v7201
  %v7203 = vsel %vm7195, %v7182, %v7185
  %v7204 = vsel %vm7198, %v7191, 920167782
  %v7205 = vsel %vm7197, %v7188, %v7204
  %v7206 = vsel %vm7196, %v7203, %v7205
  %v7207 = vsel %vm7195, %v7185, %v7188
  %v7208 = vsel %vm7198, %v7194, 1326507024
  %v7209 = vsel %vm7197, %v7191, %v7208
  %v7210 = vsel %vm7196, %v7207, %v7209
  %v7211 = vshll.u32 %v7171, 8
  %v7212 = vmul.u32.u64.compose %v7211, %v7210
  %v7213 = vextract.low.u32 %v7212
  %v7214 = vextract.high.u32 %v7212
  %v7215 = vmul.u32.u64.compose %v7211, %v7206
  %v7216 = vextract.low.u32 %v7215
  %v7217 = vextract.high.u32 %v7215
  %v7218 = vmul.u32 %v7211, %v7202
  %v7219 = vadd.s32 %v7214, %v7216
  %vm7220 = vc.u32 %v7214, %v7216
  %v7221 = vadd.s32 %v7217, 1
  %v7222 = vsel %vm7220, %v7221, %v7217
  %v7223 = vadd.s32 %v7218, %v7222
  %v7224 = vadd.s32 %v7223, 536870912
  %v7225 = vshrl.u32 %v7224, 30
  %v7226 = vshll.u32 %v7225, 30
  %v7227 = vsub.s32 %v7223, %v7226
  %vm7228 = vcmp.lt.s32.totalorder %v7227, 0
  %v7229 = vsub.s32 0, %v7227
  %v7230 = vsel %vm7228, %v7229, %v7227
  %v7231 = vclz %v7230
  %v7232 = vsub.s32 %v7231, 2
  %vm7233 = vcmp.gt.s32.totalorder 0, %v7232
  %v7234 = vsel %vm7233, 0, %v7232
  %v7235 = vsub.s32 32, %v7234
  %v7236 = vshll.u32 %v7227, %v7234
  %v7237 = vshrl.u32 %v7219, %v7235
  %v7238 = vor.u32 %v7236, %v7237
  %v7239 = vsub.s32 4294967266, %v7234
  %v7240 = vadd.s32 %v7239, 127
  %v7241 = vshll.u32 %v7240, 23
  %v7242 = vor.u32 4788187, %v7241
  %v7243 = vand.u32 2147483647, %v7242
  %v7245 = vcvt.s32.f32 %v7238
  %v7246 = vmul.f32 %v7245, %v7243
  %v7247 = vxor.u32 %v7246, 2147483648
  %v7248 = vsel %vm7165, %v7247, %v7246
  %v7249 = vsub.s32 4, %v7225
  %v7250 = vsel %vm7165, %v7249, %v7225
  %v7251 = vsel %vm7164, %v1748, %v7248
  %v7252 = vsel %vm7164, 0, %v7250
  %v7253 = vcosq.f32.pop %v7251
  %v7254 = vsinq.f32.pop %v7251
  %vm7255 = vweird.f32 %v1748
  %v7256 = vand.u32 %v7252, 3
  %vm7257 = vcmp.lt.s32.totalorder %v7256, 2
  %vm7258 = vcmp.eq.s32.totalorder %v7256, 0
  %v7259 = vxor.u32 %v7254, 2147483648
  %v7260 = vsel %vm7258, %v7253, %v7259
  %vm7261 = vcmp.eq.s32.totalorder %v7256, 2
  %v7262 = vxor.u32 %v7253, 2147483648
  %v7263 = vsel %vm7261, %v7262, %v7254
  %v7264 = vsel %vm7257, %v7260, %v7263
  %v7265 = vsel %vm7255, nan, %v7264
  %v7266 = vand.u32 2147483647, %v1749
  %vm7267 = vcmp.le.f32.partialorder %v7266, 0.7853982
  %vm7268 = vcmp.lt.s32.totalorder %v1749, 0
  %v7269 = vand.u32 %v1749, 2139095040
  %v7270 = vshrl.u32 %v7269, 23
  %v7271 = vsub.s32 %v7270, 127
  %v7272 = vand.u32 2147483647, %v1749
  %v7273 = vand.u32 %v7272, 8388607
  %v7274 = vor.u32 %v7273, 8388608
  %v7275 = vsub.s32 0, %v7274
  %v7276 = vadd.s32 %v7271, 1
  %vm7277 = vcmp.gt.s32.totalorder %v7276, 0
  %v7278 = vsel %vm7277, %v7276, 0
  %v7279 = vshrl.u32 %v7278, 5
  %v7280 = vand.u32 %v7278, 31
  %v7281 = vsub.s32 32, %v7280
  %v7282 = vshrl.u32 683565275, %v7281
  %v7283 = vshll.u32 683565275, %v7280
  %v7284 = vshrl.u32 2475754826, %v7281
  %v7285 = vor.u32 %v7283, %v7284
  %v7286 = vshll.u32 2475754826, %v7280
  %v7287 = vshrl.u32 2131351028, %v7281
  %v7288 = vor.u32 %v7286, %v7287
  %v7289 = vshll.u32 2131351028, %v7280
  %v7290 = vshrl.u32 2102212464, %v7281
  %v7291 = vor.u32 %v7289, %v7290
  %v7292 = vshll.u32 2102212464, %v7280
  %v7293 = vshrl.u32 920167782, %v7281
  %v7294 = vor.u32 %v7292, %v7293
  %v7295 = vshll.u32 920167782, %v7280
  %v7296 = vshrl.u32 1326507024, %v7281
  %v7297 = vor.u32 %v7295, %v7296
  %vm7298 = vcmp.lt.s32.totalorder %v7279, 1
  %vm7299 = vcmp.lt.s32.totalorder %v7279, 2
  %vm7300 = vcmp.lt.s32.totalorder %v7279, 3
  %vm7301 = vcmp.lt.s32.totalorder %v7279, 4
  %v7302 = vsel %vm7298, %v7282, %v7285
  %v7303 = vsel %vm7301, %v7291, 2102212464
  %v7304 = vsel %vm7300, %v7288, %v7303
  %v7305 = vsel %vm7299, %v7302, %v7304
  %v7306 = vsel %vm7298, %v7285, %v7288
  %v7307 = vsel %vm7301, %v7294, 920167782
  %v7308 = vsel %vm7300, %v7291, %v7307
  %v7309 = vsel %vm7299, %v7306, %v7308
  %v7310 = vsel %vm7298, %v7288, %v7291
  %v7311 = vsel %vm7301, %v7297, 1326507024
  %v7312 = vsel %vm7300, %v7294, %v7311
  %v7313 = vsel %vm7299, %v7310, %v7312
  %v7314 = vshll.u32 %v7274, 8
  %v7315 = vmul.u32.u64.compose %v7314, %v7313
  %v7316 = vextract.low.u32 %v7315
  %v7317 = vextract.high.u32 %v7315
  %v7318 = vmul.u32.u64.compose %v7314, %v7309
  %v7319 = vextract.low.u32 %v7318
  %v7320 = vextract.high.u32 %v7318
  %v7321 = vmul.u32 %v7314, %v7305
  %v7322 = vadd.s32 %v7317, %v7319
  %vm7323 = vc.u32 %v7317, %v7319
  %v7324 = vadd.s32 %v7320, 1
  %v7325 = vsel %vm7323, %v7324, %v7320
  %v7326 = vadd.s32 %v7321, %v7325
  %v7327 = vadd.s32 %v7326, 536870912
  %v7328 = vshrl.u32 %v7327, 30
  %v7329 = vshll.u32 %v7328, 30
  %v7330 = vsub.s32 %v7326, %v7329
  %vm7331 = vcmp.lt.s32.totalorder %v7330, 0
  %v7332 = vsub.s32 0, %v7330
  %v7333 = vsel %vm7331, %v7332, %v7330
  %v7334 = vclz %v7333
  %v7335 = vsub.s32 %v7334, 2
  %vm7336 = vcmp.gt.s32.totalorder 0, %v7335
  %v7337 = vsel %vm7336, 0, %v7335
  %v7338 = vsub.s32 32, %v7337
  %v7339 = vshll.u32 %v7330, %v7337
  %v7340 = vshrl.u32 %v7322, %v7338
  %v7341 = vor.u32 %v7339, %v7340
  %v7342 = vsub.s32 4294967266, %v7337
  %v7343 = vadd.s32 %v7342, 127
  %v7344 = vshll.u32 %v7343, 23
  %v7345 = vor.u32 4788187, %v7344
  %v7346 = vand.u32 2147483647, %v7345
  %v7348 = vcvt.s32.f32 %v7341
  %v7349 = vmul.f32 %v7348, %v7346
  %v7350 = vxor.u32 %v7349, 2147483648
  %v7351 = vsel %vm7268, %v7350, %v7349
  %v7352 = vsub.s32 4, %v7328
  %v7353 = vsel %vm7268, %v7352, %v7328
  %v7354 = vsel %vm7267, %v1749, %v7351
  %v7355 = vsel %vm7267, 0, %v7353
  %v7356 = vcosq.f32.pop %v7354
  %v7357 = vsinq.f32.pop %v7354
  %vm7358 = vweird.f32 %v1749
  %v7359 = vand.u32 %v7355, 3
  %vm7360 = vcmp.lt.s32.totalorder %v7359, 2
  %vm7361 = vcmp.eq.s32.totalorder %v7359, 0
  %v7362 = vxor.u32 %v7357, 2147483648
  %v7363 = vsel %vm7361, %v7356, %v7362
  %vm7364 = vcmp.eq.s32.totalorder %v7359, 2
  %v7365 = vxor.u32 %v7356, 2147483648
  %v7366 = vsel %vm7364, %v7365, %v7357
  %v7367 = vsel %vm7360, %v7363, %v7366
  %v7368 = vsel %vm7358, nan, %v7367
  %v7369 = vand.u32 2147483647, %v1750
  %vm7370 = vcmp.le.f32.partialorder %v7369, 0.7853982
  %vm7371 = vcmp.lt.s32.totalorder %v1750, 0
  %v7372 = vand.u32 %v1750, 2139095040
  %v7373 = vshrl.u32 %v7372, 23
  %v7374 = vsub.s32 %v7373, 127
  %v7375 = vand.u32 2147483647, %v1750
  %v7376 = vand.u32 %v7375, 8388607
  %v7377 = vor.u32 %v7376, 8388608
  %v7378 = vsub.s32 0, %v7377
  %v7379 = vadd.s32 %v7374, 1
  %vm7380 = vcmp.gt.s32.totalorder %v7379, 0
  %v7381 = vsel %vm7380, %v7379, 0
  %v7382 = vshrl.u32 %v7381, 5
  %v7383 = vand.u32 %v7381, 31
  %v7384 = vsub.s32 32, %v7383
  %v7385 = vshrl.u32 683565275, %v7384
  %v7386 = vshll.u32 683565275, %v7383
  %v7387 = vshrl.u32 2475754826, %v7384
  %v7388 = vor.u32 %v7386, %v7387
  %v7389 = vshll.u32 2475754826, %v7383
  %v7390 = vshrl.u32 2131351028, %v7384
  %v7391 = vor.u32 %v7389, %v7390
  %v7392 = vshll.u32 2131351028, %v7383
  %v7393 = vshrl.u32 2102212464, %v7384
  %v7394 = vor.u32 %v7392, %v7393
  %v7395 = vshll.u32 2102212464, %v7383
  %v7396 = vshrl.u32 920167782, %v7384
  %v7397 = vor.u32 %v7395, %v7396
  %v7398 = vshll.u32 920167782, %v7383
  %v7399 = vshrl.u32 1326507024, %v7384
  %v7400 = vor.u32 %v7398, %v7399
  %vm7401 = vcmp.lt.s32.totalorder %v7382, 1
  %vm7402 = vcmp.lt.s32.totalorder %v7382, 2
  %vm7403 = vcmp.lt.s32.totalorder %v7382, 3
  %vm7404 = vcmp.lt.s32.totalorder %v7382, 4
  %v7405 = vsel %vm7401, %v7385, %v7388
  %v7406 = vsel %vm7404, %v7394, 2102212464
  %v7407 = vsel %vm7403, %v7391, %v7406
  %v7408 = vsel %vm7402, %v7405, %v7407
  %v7409 = vsel %vm7401, %v7388, %v7391
  %v7410 = vsel %vm7404, %v7397, 920167782
  %v7411 = vsel %vm7403, %v7394, %v7410
  %v7412 = vsel %vm7402, %v7409, %v7411
  %v7413 = vsel %vm7401, %v7391, %v7394
  %v7414 = vsel %vm7404, %v7400, 1326507024
  %v7415 = vsel %vm7403, %v7397, %v7414
  %v7416 = vsel %vm7402, %v7413, %v7415
  %v7417 = vshll.u32 %v7377, 8
  %v7418 = vmul.u32.u64.compose %v7417, %v7416
  %v7419 = vextract.low.u32 %v7418
  %v7420 = vextract.high.u32 %v7418
  %v7421 = vmul.u32.u64.compose %v7417, %v7412
  %v7422 = vextract.low.u32 %v7421
  %v7423 = vextract.high.u32 %v7421
  %v7424 = vmul.u32 %v7417, %v7408
  %v7425 = vadd.s32 %v7420, %v7422
  %vm7426 = vc.u32 %v7420, %v7422
  %v7427 = vadd.s32 %v7423, 1
  %v7428 = vsel %vm7426, %v7427, %v7423
  %v7429 = vadd.s32 %v7424, %v7428
  %v7430 = vadd.s32 %v7429, 536870912
  %v7431 = vshrl.u32 %v7430, 30
  %v7432 = vshll.u32 %v7431, 30
  %v7433 = vsub.s32 %v7429, %v7432
  %vm7434 = vcmp.lt.s32.totalorder %v7433, 0
  %v7435 = vsub.s32 0, %v7433
  %v7436 = vsel %vm7434, %v7435, %v7433
  %v7437 = vclz %v7436
  %v7438 = vsub.s32 %v7437, 2
  %vm7439 = vcmp.gt.s32.totalorder 0, %v7438
  %v7440 = vsel %vm7439, 0, %v7438
  %v7441 = vsub.s32 32, %v7440
  %v7442 = vshll.u32 %v7433, %v7440
  %v7443 = vshrl.u32 %v7425, %v7441
  %v7444 = vor.u32 %v7442, %v7443
  %v7445 = vsub.s32 4294967266, %v7440
  %v7446 = vadd.s32 %v7445, 127
  %v7447 = vshll.u32 %v7446, 23
  %v7448 = vor.u32 4788187, %v7447
  %v7449 = vand.u32 2147483647, %v7448
  %v7451 = vcvt.s32.f32 %v7444
  %v7452 = vmul.f32 %v7451, %v7449
  %v7453 = vxor.u32 %v7452, 2147483648
  %v7454 = vsel %vm7371, %v7453, %v7452
  %v7455 = vsub.s32 4, %v7431
  %v7456 = vsel %vm7371, %v7455, %v7431
  %v7457 = vsel %vm7370, %v1750, %v7454
  %v7458 = vsel %vm7370, 0, %v7456
  %v7459 = vcosq.f32.pop %v7457
  %v7460 = vsinq.f32.pop %v7457
  %vm7461 = vweird.f32 %v1750
  %v7462 = vand.u32 %v7458, 3
  %vm7463 = vcmp.lt.s32.totalorder %v7462, 2
  %vm7464 = vcmp.eq.s32.totalorder %v7462, 0
  %v7465 = vxor.u32 %v7460, 2147483648
  %v7466 = vsel %vm7464, %v7459, %v7465
  %vm7467 = vcmp.eq.s32.totalorder %v7462, 2
  %v7468 = vxor.u32 %v7459, 2147483648
  %v7469 = vsel %vm7467, %v7468, %v7460
  %v7470 = vsel %vm7463, %v7466, %v7469
  %v7471 = vsel %vm7461, nan, %v7470
  %v7472 = vand.u32 2147483647, %v1751
  %vm7473 = vcmp.le.f32.partialorder %v7472, 0.7853982
  %vm7474 = vcmp.lt.s32.totalorder %v1751, 0
  %v7475 = vand.u32 %v1751, 2139095040
  %v7476 = vshrl.u32 %v7475, 23
  %v7477 = vsub.s32 %v7476, 127
  %v7478 = vand.u32 2147483647, %v1751
  %v7479 = vand.u32 %v7478, 8388607
  %v7480 = vor.u32 %v7479, 8388608
  %v7481 = vsub.s32 0, %v7480
  %v7482 = vadd.s32 %v7477, 1
  %vm7483 = vcmp.gt.s32.totalorder %v7482, 0
  %v7484 = vsel %vm7483, %v7482, 0
  %v7485 = vshrl.u32 %v7484, 5
  %v7486 = vand.u32 %v7484, 31
  %v7487 = vsub.s32 32, %v7486
  %v7488 = vshrl.u32 683565275, %v7487
  %v7489 = vshll.u32 683565275, %v7486
  %v7490 = vshrl.u32 2475754826, %v7487
  %v7491 = vor.u32 %v7489, %v7490
  %v7492 = vshll.u32 2475754826, %v7486
  %v7493 = vshrl.u32 2131351028, %v7487
  %v7494 = vor.u32 %v7492, %v7493
  %v7495 = vshll.u32 2131351028, %v7486
  %v7496 = vshrl.u32 2102212464, %v7487
  %v7497 = vor.u32 %v7495, %v7496
  %v7498 = vshll.u32 2102212464, %v7486
  %v7499 = vshrl.u32 920167782, %v7487
  %v7500 = vor.u32 %v7498, %v7499
  %v7501 = vshll.u32 920167782, %v7486
  %v7502 = vshrl.u32 1326507024, %v7487
  %v7503 = vor.u32 %v7501, %v7502
  %vm7504 = vcmp.lt.s32.totalorder %v7485, 1
  %vm7505 = vcmp.lt.s32.totalorder %v7485, 2
  %vm7506 = vcmp.lt.s32.totalorder %v7485, 3
  %vm7507 = vcmp.lt.s32.totalorder %v7485, 4
  %v7508 = vsel %vm7504, %v7488, %v7491
  %v7509 = vsel %vm7507, %v7497, 2102212464
  %v7510 = vsel %vm7506, %v7494, %v7509
  %v7511 = vsel %vm7505, %v7508, %v7510
  %v7512 = vsel %vm7504, %v7491, %v7494
  %v7513 = vsel %vm7507, %v7500, 920167782
  %v7514 = vsel %vm7506, %v7497, %v7513
  %v7515 = vsel %vm7505, %v7512, %v7514
  %v7516 = vsel %vm7504, %v7494, %v7497
  %v7517 = vsel %vm7507, %v7503, 1326507024
  %v7518 = vsel %vm7506, %v7500, %v7517
  %v7519 = vsel %vm7505, %v7516, %v7518
  %v7520 = vshll.u32 %v7480, 8
  %v7521 = vmul.u32.u64.compose %v7520, %v7519
  %v7522 = vextract.low.u32 %v7521
  %v7523 = vextract.high.u32 %v7521
  %v7524 = vmul.u32.u64.compose %v7520, %v7515
  %v7525 = vextract.low.u32 %v7524
  %v7526 = vextract.high.u32 %v7524
  %v7527 = vmul.u32 %v7520, %v7511
  %v7528 = vadd.s32 %v7523, %v7525
  %vm7529 = vc.u32 %v7523, %v7525
  %v7530 = vadd.s32 %v7526, 1
  %v7531 = vsel %vm7529, %v7530, %v7526
  %v7532 = vadd.s32 %v7527, %v7531
  %v7533 = vadd.s32 %v7532, 536870912
  %v7534 = vshrl.u32 %v7533, 30
  %v7535 = vshll.u32 %v7534, 30
  %v7536 = vsub.s32 %v7532, %v7535
  %vm7537 = vcmp.lt.s32.totalorder %v7536, 0
  %v7538 = vsub.s32 0, %v7536
  %v7539 = vsel %vm7537, %v7538, %v7536
  %v7540 = vclz %v7539
  %v7541 = vsub.s32 %v7540, 2
  %vm7542 = vcmp.gt.s32.totalorder 0, %v7541
  %v7543 = vsel %vm7542, 0, %v7541
  %v7544 = vsub.s32 32, %v7543
  %v7545 = vshll.u32 %v7536, %v7543
  %v7546 = vshrl.u32 %v7528, %v7544
  %v7547 = vor.u32 %v7545, %v7546
  %v7548 = vsub.s32 4294967266, %v7543
  %v7549 = vadd.s32 %v7548, 127
  %v7550 = vshll.u32 %v7549, 23
  %v7551 = vor.u32 4788187, %v7550
  %v7552 = vand.u32 2147483647, %v7551
  %v7554 = vcvt.s32.f32 %v7547
  %v7555 = vmul.f32 %v7554, %v7552
  %v7556 = vxor.u32 %v7555, 2147483648
  %v7557 = vsel %vm7474, %v7556, %v7555
  %v7558 = vsub.s32 4, %v7534
  %v7559 = vsel %vm7474, %v7558, %v7534
  %v7560 = vsel %vm7473, %v1751, %v7557
  %v7561 = vsel %vm7473, 0, %v7559
  %v7562 = vcosq.f32.pop %v7560
  %v7563 = vsinq.f32.pop %v7560
  %vm7564 = vweird.f32 %v1751
  %v7565 = vand.u32 %v7561, 3
  %vm7566 = vcmp.lt.s32.totalorder %v7565, 2
  %vm7567 = vcmp.eq.s32.totalorder %v7565, 0
  %v7568 = vxor.u32 %v7563, 2147483648
  %v7569 = vsel %vm7567, %v7562, %v7568
  %vm7570 = vcmp.eq.s32.totalorder %v7565, 2
  %v7571 = vxor.u32 %v7562, 2147483648
  %v7572 = vsel %vm7570, %v7571, %v7563
  %v7573 = vsel %vm7566, %v7569, %v7572
  %v7574 = vsel %vm7564, nan, %v7573
  %v7575 = vand.u32 2147483647, %v1752
  %vm7576 = vcmp.le.f32.partialorder %v7575, 0.7853982
  %vm7577 = vcmp.lt.s32.totalorder %v1752, 0
  %v7578 = vand.u32 %v1752, 2139095040
  %v7579 = vshrl.u32 %v7578, 23
  %v7580 = vsub.s32 %v7579, 127
  %v7581 = vand.u32 2147483647, %v1752
  %v7582 = vand.u32 %v7581, 8388607
  %v7583 = vor.u32 %v7582, 8388608
  %v7584 = vsub.s32 0, %v7583
  %v7585 = vadd.s32 %v7580, 1
  %vm7586 = vcmp.gt.s32.totalorder %v7585, 0
  %v7587 = vsel %vm7586, %v7585, 0
  %v7588 = vshrl.u32 %v7587, 5
  %v7589 = vand.u32 %v7587, 31
  %v7590 = vsub.s32 32, %v7589
  %v7591 = vshrl.u32 683565275, %v7590
  %v7592 = vshll.u32 683565275, %v7589
  %v7593 = vshrl.u32 2475754826, %v7590
  %v7594 = vor.u32 %v7592, %v7593
  %v7595 = vshll.u32 2475754826, %v7589
  %v7596 = vshrl.u32 2131351028, %v7590
  %v7597 = vor.u32 %v7595, %v7596
  %v7598 = vshll.u32 2131351028, %v7589
  %v7599 = vshrl.u32 2102212464, %v7590
  %v7600 = vor.u32 %v7598, %v7599
  %v7601 = vshll.u32 2102212464, %v7589
  %v7602 = vshrl.u32 920167782, %v7590
  %v7603 = vor.u32 %v7601, %v7602
  %v7604 = vshll.u32 920167782, %v7589
  %v7605 = vshrl.u32 1326507024, %v7590
  %v7606 = vor.u32 %v7604, %v7605
  %vm7607 = vcmp.lt.s32.totalorder %v7588, 1
  %vm7608 = vcmp.lt.s32.totalorder %v7588, 2
  %vm7609 = vcmp.lt.s32.totalorder %v7588, 3
  %vm7610 = vcmp.lt.s32.totalorder %v7588, 4
  %v7611 = vsel %vm7607, %v7591, %v7594
  %v7612 = vsel %vm7610, %v7600, 2102212464
  %v7613 = vsel %vm7609, %v7597, %v7612
  %v7614 = vsel %vm7608, %v7611, %v7613
  %v7615 = vsel %vm7607, %v7594, %v7597
  %v7616 = vsel %vm7610, %v7603, 920167782
  %v7617 = vsel %vm7609, %v7600, %v7616
  %v7618 = vsel %vm7608, %v7615, %v7617
  %v7619 = vsel %vm7607, %v7597, %v7600
  %v7620 = vsel %vm7610, %v7606, 1326507024
  %v7621 = vsel %vm7609, %v7603, %v7620
  %v7622 = vsel %vm7608, %v7619, %v7621
  %v7623 = vshll.u32 %v7583, 8
  %v7624 = vmul.u32.u64.compose %v7623, %v7622
  %v7625 = vextract.low.u32 %v7624
  %v7626 = vextract.high.u32 %v7624
  %v7627 = vmul.u32.u64.compose %v7623, %v7618
  %v7628 = vextract.low.u32 %v7627
  %v7629 = vextract.high.u32 %v7627
  %v7630 = vmul.u32 %v7623, %v7614
  %v7631 = vadd.s32 %v7626, %v7628
  %vm7632 = vc.u32 %v7626, %v7628
  %v7633 = vadd.s32 %v7629, 1
  %v7634 = vsel %vm7632, %v7633, %v7629
  %v7635 = vadd.s32 %v7630, %v7634
  %v7636 = vadd.s32 %v7635, 536870912
  %v7637 = vshrl.u32 %v7636, 30
  %v7638 = vshll.u32 %v7637, 30
  %v7639 = vsub.s32 %v7635, %v7638
  %vm7640 = vcmp.lt.s32.totalorder %v7639, 0
  %v7641 = vsub.s32 0, %v7639
  %v7642 = vsel %vm7640, %v7641, %v7639
  %v7643 = vclz %v7642
  %v7644 = vsub.s32 %v7643, 2
  %vm7645 = vcmp.gt.s32.totalorder 0, %v7644
  %v7646 = vsel %vm7645, 0, %v7644
  %v7647 = vsub.s32 32, %v7646
  %v7648 = vshll.u32 %v7639, %v7646
  %v7649 = vshrl.u32 %v7631, %v7647
  %v7650 = vor.u32 %v7648, %v7649
  %v7651 = vsub.s32 4294967266, %v7646
  %v7652 = vadd.s32 %v7651, 127
  %v7653 = vshll.u32 %v7652, 23
  %v7654 = vor.u32 4788187, %v7653
  %v7655 = vand.u32 2147483647, %v7654
  %v7657 = vcvt.s32.f32 %v7650
  %v7658 = vmul.f32 %v7657, %v7655
  %v7659 = vxor.u32 %v7658, 2147483648
  %v7660 = vsel %vm7577, %v7659, %v7658
  %v7661 = vsub.s32 4, %v7637
  %v7662 = vsel %vm7577, %v7661, %v7637
  %v7663 = vsel %vm7576, %v1752, %v7660
  %v7664 = vsel %vm7576, 0, %v7662
  %v7665 = vcosq.f32.pop %v7663
  %v7666 = vsinq.f32.pop %v7663
  %vm7667 = vweird.f32 %v1752
  %v7668 = vand.u32 %v7664, 3
  %vm7669 = vcmp.lt.s32.totalorder %v7668, 2
  %vm7670 = vcmp.eq.s32.totalorder %v7668, 0
  %v7671 = vxor.u32 %v7666, 2147483648
  %v7672 = vsel %vm7670, %v7665, %v7671
  %vm7673 = vcmp.eq.s32.totalorder %v7668, 2
  %v7674 = vxor.u32 %v7665, 2147483648
  %v7675 = vsel %vm7673, %v7674, %v7666
  %v7676 = vsel %vm7669, %v7672, %v7675
  %v7677 = vsel %vm7667, nan, %v7676
  %v7678 = vand.u32 2147483647, %v1753
  %vm7679 = vcmp.le.f32.partialorder %v7678, 0.7853982
  %vm7680 = vcmp.lt.s32.totalorder %v1753, 0
  %v7681 = vand.u32 %v1753, 2139095040
  %v7682 = vshrl.u32 %v7681, 23
  %v7683 = vsub.s32 %v7682, 127
  %v7684 = vand.u32 2147483647, %v1753
  %v7685 = vand.u32 %v7684, 8388607
  %v7686 = vor.u32 %v7685, 8388608
  %v7687 = vsub.s32 0, %v7686
  %v7688 = vadd.s32 %v7683, 1
  %vm7689 = vcmp.gt.s32.totalorder %v7688, 0
  %v7690 = vsel %vm7689, %v7688, 0
  %v7691 = vshrl.u32 %v7690, 5
  %v7692 = vand.u32 %v7690, 31
  %v7693 = vsub.s32 32, %v7692
  %v7694 = vshrl.u32 683565275, %v7693
  %v7695 = vshll.u32 683565275, %v7692
  %v7696 = vshrl.u32 2475754826, %v7693
  %v7697 = vor.u32 %v7695, %v7696
  %v7698 = vshll.u32 2475754826, %v7692
  %v7699 = vshrl.u32 2131351028, %v7693
  %v7700 = vor.u32 %v7698, %v7699
  %v7701 = vshll.u32 2131351028, %v7692
  %v7702 = vshrl.u32 2102212464, %v7693
  %v7703 = vor.u32 %v7701, %v7702
  %v7704 = vshll.u32 2102212464, %v7692
  %v7705 = vshrl.u32 920167782, %v7693
  %v7706 = vor.u32 %v7704, %v7705
  %v7707 = vshll.u32 920167782, %v7692
  %v7708 = vshrl.u32 1326507024, %v7693
  %v7709 = vor.u32 %v7707, %v7708
  %vm7710 = vcmp.lt.s32.totalorder %v7691, 1
  %vm7711 = vcmp.lt.s32.totalorder %v7691, 2
  %vm7712 = vcmp.lt.s32.totalorder %v7691, 3
  %vm7713 = vcmp.lt.s32.totalorder %v7691, 4
  %v7714 = vsel %vm7710, %v7694, %v7697
  %v7715 = vsel %vm7713, %v7703, 2102212464
  %v7716 = vsel %vm7712, %v7700, %v7715
  %v7717 = vsel %vm7711, %v7714, %v7716
  %v7718 = vsel %vm7710, %v7697, %v7700
  %v7719 = vsel %vm7713, %v7706, 920167782
  %v7720 = vsel %vm7712, %v7703, %v7719
  %v7721 = vsel %vm7711, %v7718, %v7720
  %v7722 = vsel %vm7710, %v7700, %v7703
  %v7723 = vsel %vm7713, %v7709, 1326507024
  %v7724 = vsel %vm7712, %v7706, %v7723
  %v7725 = vsel %vm7711, %v7722, %v7724
  %v7726 = vshll.u32 %v7686, 8
  %v7727 = vmul.u32.u64.compose %v7726, %v7725
  %v7728 = vextract.low.u32 %v7727
  %v7729 = vextract.high.u32 %v7727
  %v7730 = vmul.u32.u64.compose %v7726, %v7721
  %v7731 = vextract.low.u32 %v7730
  %v7732 = vextract.high.u32 %v7730
  %v7733 = vmul.u32 %v7726, %v7717
  %v7734 = vadd.s32 %v7729, %v7731
  %vm7735 = vc.u32 %v7729, %v7731
  %v7736 = vadd.s32 %v7732, 1
  %v7737 = vsel %vm7735, %v7736, %v7732
  %v7738 = vadd.s32 %v7733, %v7737
  %v7739 = vadd.s32 %v7738, 536870912
  %v7740 = vshrl.u32 %v7739, 30
  %v7741 = vshll.u32 %v7740, 30
  %v7742 = vsub.s32 %v7738, %v7741
  %vm7743 = vcmp.lt.s32.totalorder %v7742, 0
  %v7744 = vsub.s32 0, %v7742
  %v7745 = vsel %vm7743, %v7744, %v7742
  %v7746 = vclz %v7745
  %v7747 = vsub.s32 %v7746, 2
  %vm7748 = vcmp.gt.s32.totalorder 0, %v7747
  %v7749 = vsel %vm7748, 0, %v7747
  %v7750 = vsub.s32 32, %v7749
  %v7751 = vshll.u32 %v7742, %v7749
  %v7752 = vshrl.u32 %v7734, %v7750
  %v7753 = vor.u32 %v7751, %v7752
  %v7754 = vsub.s32 4294967266, %v7749
  %v7755 = vadd.s32 %v7754, 127
  %v7756 = vshll.u32 %v7755, 23
  %v7757 = vor.u32 4788187, %v7756
  %v7758 = vand.u32 2147483647, %v7757
  %v7760 = vcvt.s32.f32 %v7753
  %v7761 = vmul.f32 %v7760, %v7758
  %v7762 = vxor.u32 %v7761, 2147483648
  %v7763 = vsel %vm7680, %v7762, %v7761
  %v7764 = vsub.s32 4, %v7740
  %v7765 = vsel %vm7680, %v7764, %v7740
  %v7766 = vsel %vm7679, %v1753, %v7763
  %v7767 = vsel %vm7679, 0, %v7765
  %v7768 = vcosq.f32.pop %v7766
  %v7769 = vsinq.f32.pop %v7766
  %vm7770 = vweird.f32 %v1753
  %v7771 = vand.u32 %v7767, 3
  %vm7772 = vcmp.lt.s32.totalorder %v7771, 2
  %vm7773 = vcmp.eq.s32.totalorder %v7771, 0
  %v7774 = vxor.u32 %v7769, 2147483648
  %v7775 = vsel %vm7773, %v7768, %v7774
  %vm7776 = vcmp.eq.s32.totalorder %v7771, 2
  %v7777 = vxor.u32 %v7768, 2147483648
  %v7778 = vsel %vm7776, %v7777, %v7769
  %v7779 = vsel %vm7772, %v7775, %v7778
  %v7780 = vsel %vm7770, nan, %v7779
  %v7781 = vand.u32 2147483647, %v1754
  %vm7782 = vcmp.le.f32.partialorder %v7781, 0.7853982
  %vm7783 = vcmp.lt.s32.totalorder %v1754, 0
  %v7784 = vand.u32 %v1754, 2139095040
  %v7785 = vshrl.u32 %v7784, 23
  %v7786 = vsub.s32 %v7785, 127
  %v7787 = vand.u32 2147483647, %v1754
  %v7788 = vand.u32 %v7787, 8388607
  %v7789 = vor.u32 %v7788, 8388608
  %v7790 = vsub.s32 0, %v7789
  %v7791 = vadd.s32 %v7786, 1
  %vm7792 = vcmp.gt.s32.totalorder %v7791, 0
  %v7793 = vsel %vm7792, %v7791, 0
  %v7794 = vshrl.u32 %v7793, 5
  %v7795 = vand.u32 %v7793, 31
  %v7796 = vsub.s32 32, %v7795
  %v7797 = vshrl.u32 683565275, %v7796
  %v7798 = vshll.u32 683565275, %v7795
  %v7799 = vshrl.u32 2475754826, %v7796
  %v7800 = vor.u32 %v7798, %v7799
  %v7801 = vshll.u32 2475754826, %v7795
  %v7802 = vshrl.u32 2131351028, %v7796
  %v7803 = vor.u32 %v7801, %v7802
  %v7804 = vshll.u32 2131351028, %v7795
  %v7805 = vshrl.u32 2102212464, %v7796
  %v7806 = vor.u32 %v7804, %v7805
  %v7807 = vshll.u32 2102212464, %v7795
  %v7808 = vshrl.u32 920167782, %v7796
  %v7809 = vor.u32 %v7807, %v7808
  %v7810 = vshll.u32 920167782, %v7795
  %v7811 = vshrl.u32 1326507024, %v7796
  %v7812 = vor.u32 %v7810, %v7811
  %vm7813 = vcmp.lt.s32.totalorder %v7794, 1
  %vm7814 = vcmp.lt.s32.totalorder %v7794, 2
  %vm7815 = vcmp.lt.s32.totalorder %v7794, 3
  %vm7816 = vcmp.lt.s32.totalorder %v7794, 4
  %v7817 = vsel %vm7813, %v7797, %v7800
  %v7818 = vsel %vm7816, %v7806, 2102212464
  %v7819 = vsel %vm7815, %v7803, %v7818
  %v7820 = vsel %vm7814, %v7817, %v7819
  %v7821 = vsel %vm7813, %v7800, %v7803
  %v7822 = vsel %vm7816, %v7809, 920167782
  %v7823 = vsel %vm7815, %v7806, %v7822
  %v7824 = vsel %vm7814, %v7821, %v7823
  %v7825 = vsel %vm7813, %v7803, %v7806
  %v7826 = vsel %vm7816, %v7812, 1326507024
  %v7827 = vsel %vm7815, %v7809, %v7826
  %v7828 = vsel %vm7814, %v7825, %v7827
  %v7829 = vshll.u32 %v7789, 8
  %v7830 = vmul.u32.u64.compose %v7829, %v7828
  %v7831 = vextract.low.u32 %v7830
  %v7832 = vextract.high.u32 %v7830
  %v7833 = vmul.u32.u64.compose %v7829, %v7824
  %v7834 = vextract.low.u32 %v7833
  %v7835 = vextract.high.u32 %v7833
  %v7836 = vmul.u32 %v7829, %v7820
  %v7837 = vadd.s32 %v7832, %v7834
  %vm7838 = vc.u32 %v7832, %v7834
  %v7839 = vadd.s32 %v7835, 1
  %v7840 = vsel %vm7838, %v7839, %v7835
  %v7841 = vadd.s32 %v7836, %v7840
  %v7842 = vadd.s32 %v7841, 536870912
  %v7843 = vshrl.u32 %v7842, 30
  %v7844 = vshll.u32 %v7843, 30
  %v7845 = vsub.s32 %v7841, %v7844
  %vm7846 = vcmp.lt.s32.totalorder %v7845, 0
  %v7847 = vsub.s32 0, %v7845
  %v7848 = vsel %vm7846, %v7847, %v7845
  %v7849 = vclz %v7848
  %v7850 = vsub.s32 %v7849, 2
  %vm7851 = vcmp.gt.s32.totalorder 0, %v7850
  %v7852 = vsel %vm7851, 0, %v7850
  %v7853 = vsub.s32 32, %v7852
  %v7854 = vshll.u32 %v7845, %v7852
  %v7855 = vshrl.u32 %v7837, %v7853
  %v7856 = vor.u32 %v7854, %v7855
  %v7857 = vsub.s32 4294967266, %v7852
  %v7858 = vadd.s32 %v7857, 127
  %v7859 = vshll.u32 %v7858, 23
  %v7860 = vor.u32 4788187, %v7859
  %v7861 = vand.u32 2147483647, %v7860
  %v7863 = vcvt.s32.f32 %v7856
  %v7864 = vmul.f32 %v7863, %v7861
  %v7865 = vxor.u32 %v7864, 2147483648
  %v7866 = vsel %vm7783, %v7865, %v7864
  %v7867 = vsub.s32 4, %v7843
  %v7868 = vsel %vm7783, %v7867, %v7843
  %v7869 = vsel %vm7782, %v1754, %v7866
  %v7870 = vsel %vm7782, 0, %v7868
  %v7871 = vcosq.f32.pop %v7869
  %v7872 = vsinq.f32.pop %v7869
  %vm7873 = vweird.f32 %v1754
  %v7874 = vand.u32 %v7870, 3
  %vm7875 = vcmp.lt.s32.totalorder %v7874, 2
  %vm7876 = vcmp.eq.s32.totalorder %v7874, 0
  %v7877 = vxor.u32 %v7872, 2147483648
  %v7878 = vsel %vm7876, %v7871, %v7877
  %vm7879 = vcmp.eq.s32.totalorder %v7874, 2
  %v7880 = vxor.u32 %v7871, 2147483648
  %v7881 = vsel %vm7879, %v7880, %v7872
  %v7882 = vsel %vm7875, %v7878, %v7881
  %v7883 = vsel %vm7873, nan, %v7882
  %v7884 = vand.u32 2147483647, %v1755
  %vm7885 = vcmp.le.f32.partialorder %v7884, 0.7853982
  %vm7886 = vcmp.lt.s32.totalorder %v1755, 0
  %v7887 = vand.u32 %v1755, 2139095040
  %v7888 = vshrl.u32 %v7887, 23
  %v7889 = vsub.s32 %v7888, 127
  %v7890 = vand.u32 2147483647, %v1755
  %v7891 = vand.u32 %v7890, 8388607
  %v7892 = vor.u32 %v7891, 8388608
  %v7893 = vsub.s32 0, %v7892
  %v7894 = vadd.s32 %v7889, 1
  %vm7895 = vcmp.gt.s32.totalorder %v7894, 0
  %v7896 = vsel %vm7895, %v7894, 0
  %v7897 = vshrl.u32 %v7896, 5
  %v7898 = vand.u32 %v7896, 31
  %v7899 = vsub.s32 32, %v7898
  %v7900 = vshrl.u32 683565275, %v7899
  %v7901 = vshll.u32 683565275, %v7898
  %v7902 = vshrl.u32 2475754826, %v7899
  %v7903 = vor.u32 %v7901, %v7902
  %v7904 = vshll.u32 2475754826, %v7898
  %v7905 = vshrl.u32 2131351028, %v7899
  %v7906 = vor.u32 %v7904, %v7905
  %v7907 = vshll.u32 2131351028, %v7898
  %v7908 = vshrl.u32 2102212464, %v7899
  %v7909 = vor.u32 %v7907, %v7908
  %v7910 = vshll.u32 2102212464, %v7898
  %v7911 = vshrl.u32 920167782, %v7899
  %v7912 = vor.u32 %v7910, %v7911
  %v7913 = vshll.u32 920167782, %v7898
  %v7914 = vshrl.u32 1326507024, %v7899
  %v7915 = vor.u32 %v7913, %v7914
  %vm7916 = vcmp.lt.s32.totalorder %v7897, 1
  %vm7917 = vcmp.lt.s32.totalorder %v7897, 2
  %vm7918 = vcmp.lt.s32.totalorder %v7897, 3
  %vm7919 = vcmp.lt.s32.totalorder %v7897, 4
  %v7920 = vsel %vm7916, %v7900, %v7903
  %v7921 = vsel %vm7919, %v7909, 2102212464
  %v7922 = vsel %vm7918, %v7906, %v7921
  %v7923 = vsel %vm7917, %v7920, %v7922
  %v7924 = vsel %vm7916, %v7903, %v7906
  %v7925 = vsel %vm7919, %v7912, 920167782
  %v7926 = vsel %vm7918, %v7909, %v7925
  %v7927 = vsel %vm7917, %v7924, %v7926
  %v7928 = vsel %vm7916, %v7906, %v7909
  %v7929 = vsel %vm7919, %v7915, 1326507024
  %v7930 = vsel %vm7918, %v7912, %v7929
  %v7931 = vsel %vm7917, %v7928, %v7930
  %v7932 = vshll.u32 %v7892, 8
  %v7933 = vmul.u32.u64.compose %v7932, %v7931
  %v7934 = vextract.low.u32 %v7933
  %v7935 = vextract.high.u32 %v7933
  %v7936 = vmul.u32.u64.compose %v7932, %v7927
  %v7937 = vextract.low.u32 %v7936
  %v7938 = vextract.high.u32 %v7936
  %v7939 = vmul.u32 %v7932, %v7923
  %v7940 = vadd.s32 %v7935, %v7937
  %vm7941 = vc.u32 %v7935, %v7937
  %v7942 = vadd.s32 %v7938, 1
  %v7943 = vsel %vm7941, %v7942, %v7938
  %v7944 = vadd.s32 %v7939, %v7943
  %v7945 = vadd.s32 %v7944, 536870912
  %v7946 = vshrl.u32 %v7945, 30
  %v7947 = vshll.u32 %v7946, 30
  %v7948 = vsub.s32 %v7944, %v7947
  %vm7949 = vcmp.lt.s32.totalorder %v7948, 0
  %v7950 = vsub.s32 0, %v7948
  %v7951 = vsel %vm7949, %v7950, %v7948
  %v7952 = vclz %v7951
  %v7953 = vsub.s32 %v7952, 2
  %vm7954 = vcmp.gt.s32.totalorder 0, %v7953
  %v7955 = vsel %vm7954, 0, %v7953
  %v7956 = vsub.s32 32, %v7955
  %v7957 = vshll.u32 %v7948, %v7955
  %v7958 = vshrl.u32 %v7940, %v7956
  %v7959 = vor.u32 %v7957, %v7958
  %v7960 = vsub.s32 4294967266, %v7955
  %v7961 = vadd.s32 %v7960, 127
  %v7962 = vshll.u32 %v7961, 23
  %v7963 = vor.u32 4788187, %v7962
  %v7964 = vand.u32 2147483647, %v7963
  %v7966 = vcvt.s32.f32 %v7959
  %v7967 = vmul.f32 %v7966, %v7964
  %v7968 = vxor.u32 %v7967, 2147483648
  %v7969 = vsel %vm7886, %v7968, %v7967
  %v7970 = vsub.s32 4, %v7946
  %v7971 = vsel %vm7886, %v7970, %v7946
  %v7972 = vsel %vm7885, %v1755, %v7969
  %v7973 = vsel %vm7885, 0, %v7971
  %v7974 = vcosq.f32.pop %v7972
  %v7975 = vsinq.f32.pop %v7972
  %vm7976 = vweird.f32 %v1755
  %v7977 = vand.u32 %v7973, 3
  %vm7978 = vcmp.lt.s32.totalorder %v7977, 2
  %vm7979 = vcmp.eq.s32.totalorder %v7977, 0
  %v7980 = vxor.u32 %v7975, 2147483648
  %v7981 = vsel %vm7979, %v7974, %v7980
  %vm7982 = vcmp.eq.s32.totalorder %v7977, 2
  %v7983 = vxor.u32 %v7974, 2147483648
  %v7984 = vsel %vm7982, %v7983, %v7975
  %v7985 = vsel %vm7978, %v7981, %v7984
  %v7986 = vsel %vm7976, nan, %v7985
  %v7987 = vand.u32 2147483647, %v1756
  %vm7988 = vcmp.le.f32.partialorder %v7987, 0.7853982
  %vm7989 = vcmp.lt.s32.totalorder %v1756, 0
  %v7990 = vand.u32 %v1756, 2139095040
  %v7991 = vshrl.u32 %v7990, 23
  %v7992 = vsub.s32 %v7991, 127
  %v7993 = vand.u32 2147483647, %v1756
  %v7994 = vand.u32 %v7993, 8388607
  %v7995 = vor.u32 %v7994, 8388608
  %v7996 = vsub.s32 0, %v7995
  %v7997 = vadd.s32 %v7992, 1
  %vm7998 = vcmp.gt.s32.totalorder %v7997, 0
  %v7999 = vsel %vm7998, %v7997, 0
  %v8000 = vshrl.u32 %v7999, 5
  %v8001 = vand.u32 %v7999, 31
  %v8002 = vsub.s32 32, %v8001
  %v8003 = vshrl.u32 683565275, %v8002
  %v8004 = vshll.u32 683565275, %v8001
  %v8005 = vshrl.u32 2475754826, %v8002
  %v8006 = vor.u32 %v8004, %v8005
  %v8007 = vshll.u32 2475754826, %v8001
  %v8008 = vshrl.u32 2131351028, %v8002
  %v8009 = vor.u32 %v8007, %v8008
  %v8010 = vshll.u32 2131351028, %v8001
  %v8011 = vshrl.u32 2102212464, %v8002
  %v8012 = vor.u32 %v8010, %v8011
  %v8013 = vshll.u32 2102212464, %v8001
  %v8014 = vshrl.u32 920167782, %v8002
  %v8015 = vor.u32 %v8013, %v8014
  %v8016 = vshll.u32 920167782, %v8001
  %v8017 = vshrl.u32 1326507024, %v8002
  %v8018 = vor.u32 %v8016, %v8017
  %vm8019 = vcmp.lt.s32.totalorder %v8000, 1
  %vm8020 = vcmp.lt.s32.totalorder %v8000, 2
  %vm8021 = vcmp.lt.s32.totalorder %v8000, 3
  %vm8022 = vcmp.lt.s32.totalorder %v8000, 4
  %v8023 = vsel %vm8019, %v8003, %v8006
  %v8024 = vsel %vm8022, %v8012, 2102212464
  %v8025 = vsel %vm8021, %v8009, %v8024
  %v8026 = vsel %vm8020, %v8023, %v8025
  %v8027 = vsel %vm8019, %v8006, %v8009
  %v8028 = vsel %vm8022, %v8015, 920167782
  %v8029 = vsel %vm8021, %v8012, %v8028
  %v8030 = vsel %vm8020, %v8027, %v8029
  %v8031 = vsel %vm8019, %v8009, %v8012
  %v8032 = vsel %vm8022, %v8018, 1326507024
  %v8033 = vsel %vm8021, %v8015, %v8032
  %v8034 = vsel %vm8020, %v8031, %v8033
  %v8035 = vshll.u32 %v7995, 8
  %v8036 = vmul.u32.u64.compose %v8035, %v8034
  %v8037 = vextract.low.u32 %v8036
  %v8038 = vextract.high.u32 %v8036
  %v8039 = vmul.u32.u64.compose %v8035, %v8030
  %v8040 = vextract.low.u32 %v8039
  %v8041 = vextract.high.u32 %v8039
  %v8042 = vmul.u32 %v8035, %v8026
  %v8043 = vadd.s32 %v8038, %v8040
  %vm8044 = vc.u32 %v8038, %v8040
  %v8045 = vadd.s32 %v8041, 1
  %v8046 = vsel %vm8044, %v8045, %v8041
  %v8047 = vadd.s32 %v8042, %v8046
  %v8048 = vadd.s32 %v8047, 536870912
  %v8049 = vshrl.u32 %v8048, 30
  %v8050 = vshll.u32 %v8049, 30
  %v8051 = vsub.s32 %v8047, %v8050
  %vm8052 = vcmp.lt.s32.totalorder %v8051, 0
  %v8053 = vsub.s32 0, %v8051
  %v8054 = vsel %vm8052, %v8053, %v8051
  %v8055 = vclz %v8054
  %v8056 = vsub.s32 %v8055, 2
  %vm8057 = vcmp.gt.s32.totalorder 0, %v8056
  %v8058 = vsel %vm8057, 0, %v8056
  %v8059 = vsub.s32 32, %v8058
  %v8060 = vshll.u32 %v8051, %v8058
  %v8061 = vshrl.u32 %v8043, %v8059
  %v8062 = vor.u32 %v8060, %v8061
  %v8063 = vsub.s32 4294967266, %v8058
  %v8064 = vadd.s32 %v8063, 127
  %v8065 = vshll.u32 %v8064, 23
  %v8066 = vor.u32 4788187, %v8065
  %v8067 = vand.u32 2147483647, %v8066
  %v8069 = vcvt.s32.f32 %v8062
  %v8070 = vmul.f32 %v8069, %v8067
  %v8071 = vxor.u32 %v8070, 2147483648
  %v8072 = vsel %vm7989, %v8071, %v8070
  %v8073 = vsub.s32 4, %v8049
  %v8074 = vsel %vm7989, %v8073, %v8049
  %v8075 = vsel %vm7988, %v1756, %v8072
  %v8076 = vsel %vm7988, 0, %v8074
  %v8077 = vcosq.f32.pop %v8075
  %v8078 = vsinq.f32.pop %v8075
  %vm8079 = vweird.f32 %v1756
  %v8080 = vand.u32 %v8076, 3
  %vm8081 = vcmp.lt.s32.totalorder %v8080, 2
  %vm8082 = vcmp.eq.s32.totalorder %v8080, 0
  %v8083 = vxor.u32 %v8078, 2147483648
  %v8084 = vsel %vm8082, %v8077, %v8083
  %vm8085 = vcmp.eq.s32.totalorder %v8080, 2
  %v8086 = vxor.u32 %v8077, 2147483648
  %v8087 = vsel %vm8085, %v8086, %v8078
  %v8088 = vsel %vm8081, %v8084, %v8087
  %v8089 = vsel %vm8079, nan, %v8088
  %v8090 = vand.u32 2147483647, %v1757
  %vm8091 = vcmp.le.f32.partialorder %v8090, 0.7853982
  %vm8092 = vcmp.lt.s32.totalorder %v1757, 0
  %v8093 = vand.u32 %v1757, 2139095040
  %v8094 = vshrl.u32 %v8093, 23
  %v8095 = vsub.s32 %v8094, 127
  %v8096 = vand.u32 2147483647, %v1757
  %v8097 = vand.u32 %v8096, 8388607
  %v8098 = vor.u32 %v8097, 8388608
  %v8099 = vsub.s32 0, %v8098
  %v8100 = vadd.s32 %v8095, 1
  %vm8101 = vcmp.gt.s32.totalorder %v8100, 0
  %v8102 = vsel %vm8101, %v8100, 0
  %v8103 = vshrl.u32 %v8102, 5
  %v8104 = vand.u32 %v8102, 31
  %v8105 = vsub.s32 32, %v8104
  %v8106 = vshrl.u32 683565275, %v8105
  %v8107 = vshll.u32 683565275, %v8104
  %v8108 = vshrl.u32 2475754826, %v8105
  %v8109 = vor.u32 %v8107, %v8108
  %v8110 = vshll.u32 2475754826, %v8104
  %v8111 = vshrl.u32 2131351028, %v8105
  %v8112 = vor.u32 %v8110, %v8111
  %v8113 = vshll.u32 2131351028, %v8104
  %v8114 = vshrl.u32 2102212464, %v8105
  %v8115 = vor.u32 %v8113, %v8114
  %v8116 = vshll.u32 2102212464, %v8104
  %v8117 = vshrl.u32 920167782, %v8105
  %v8118 = vor.u32 %v8116, %v8117
  %v8119 = vshll.u32 920167782, %v8104
  %v8120 = vshrl.u32 1326507024, %v8105
  %v8121 = vor.u32 %v8119, %v8120
  %vm8122 = vcmp.lt.s32.totalorder %v8103, 1
  %vm8123 = vcmp.lt.s32.totalorder %v8103, 2
  %vm8124 = vcmp.lt.s32.totalorder %v8103, 3
  %vm8125 = vcmp.lt.s32.totalorder %v8103, 4
  %v8126 = vsel %vm8122, %v8106, %v8109
  %v8127 = vsel %vm8125, %v8115, 2102212464
  %v8128 = vsel %vm8124, %v8112, %v8127
  %v8129 = vsel %vm8123, %v8126, %v8128
  %v8130 = vsel %vm8122, %v8109, %v8112
  %v8131 = vsel %vm8125, %v8118, 920167782
  %v8132 = vsel %vm8124, %v8115, %v8131
  %v8133 = vsel %vm8123, %v8130, %v8132
  %v8134 = vsel %vm8122, %v8112, %v8115
  %v8135 = vsel %vm8125, %v8121, 1326507024
  %v8136 = vsel %vm8124, %v8118, %v8135
  %v8137 = vsel %vm8123, %v8134, %v8136
  %v8138 = vshll.u32 %v8098, 8
  %v8139 = vmul.u32.u64.compose %v8138, %v8137
  %v8140 = vextract.low.u32 %v8139
  %v8141 = vextract.high.u32 %v8139
  %v8142 = vmul.u32.u64.compose %v8138, %v8133
  %v8143 = vextract.low.u32 %v8142
  %v8144 = vextract.high.u32 %v8142
  %v8145 = vmul.u32 %v8138, %v8129
  %v8146 = vadd.s32 %v8141, %v8143
  %vm8147 = vc.u32 %v8141, %v8143
  %v8148 = vadd.s32 %v8144, 1
  %v8149 = vsel %vm8147, %v8148, %v8144
  %v8150 = vadd.s32 %v8145, %v8149
  %v8151 = vadd.s32 %v8150, 536870912
  %v8152 = vshrl.u32 %v8151, 30
  %v8153 = vshll.u32 %v8152, 30
  %v8154 = vsub.s32 %v8150, %v8153
  %vm8155 = vcmp.lt.s32.totalorder %v8154, 0
  %v8156 = vsub.s32 0, %v8154
  %v8157 = vsel %vm8155, %v8156, %v8154
  %v8158 = vclz %v8157
  %v8159 = vsub.s32 %v8158, 2
  %vm8160 = vcmp.gt.s32.totalorder 0, %v8159
  %v8161 = vsel %vm8160, 0, %v8159
  %v8162 = vsub.s32 32, %v8161
  %v8163 = vshll.u32 %v8154, %v8161
  %v8164 = vshrl.u32 %v8146, %v8162
  %v8165 = vor.u32 %v8163, %v8164
  %v8166 = vsub.s32 4294967266, %v8161
  %v8167 = vadd.s32 %v8166, 127
  %v8168 = vshll.u32 %v8167, 23
  %v8169 = vor.u32 4788187, %v8168
  %v8170 = vand.u32 2147483647, %v8169
  %v8172 = vcvt.s32.f32 %v8165
  %v8173 = vmul.f32 %v8172, %v8170
  %v8174 = vxor.u32 %v8173, 2147483648
  %v8175 = vsel %vm8092, %v8174, %v8173
  %v8176 = vsub.s32 4, %v8152
  %v8177 = vsel %vm8092, %v8176, %v8152
  %v8178 = vsel %vm8091, %v1757, %v8175
  %v8179 = vsel %vm8091, 0, %v8177
  %v8180 = vcosq.f32.pop %v8178
  %v8181 = vsinq.f32.pop %v8178
  %vm8182 = vweird.f32 %v1757
  %v8183 = vand.u32 %v8179, 3
  %vm8184 = vcmp.lt.s32.totalorder %v8183, 2
  %vm8185 = vcmp.eq.s32.totalorder %v8183, 0
  %v8186 = vxor.u32 %v8181, 2147483648
  %v8187 = vsel %vm8185, %v8180, %v8186
  %vm8188 = vcmp.eq.s32.totalorder %v8183, 2
  %v8189 = vxor.u32 %v8180, 2147483648
  %v8190 = vsel %vm8188, %v8189, %v8181
  %v8191 = vsel %vm8184, %v8187, %v8190
  %v8192 = vsel %vm8182, nan, %v8191
  %v8193 = vand.u32 2147483647, %v1758
  %vm8194 = vcmp.le.f32.partialorder %v8193, 0.7853982
  %vm8195 = vcmp.lt.s32.totalorder %v1758, 0
  %v8196 = vand.u32 %v1758, 2139095040
  %v8197 = vshrl.u32 %v8196, 23
  %v8198 = vsub.s32 %v8197, 127
  %v8199 = vand.u32 2147483647, %v1758
  %v8200 = vand.u32 %v8199, 8388607
  %v8201 = vor.u32 %v8200, 8388608
  %v8202 = vsub.s32 0, %v8201
  %v8203 = vadd.s32 %v8198, 1
  %vm8204 = vcmp.gt.s32.totalorder %v8203, 0
  %v8205 = vsel %vm8204, %v8203, 0
  %v8206 = vshrl.u32 %v8205, 5
  %v8207 = vand.u32 %v8205, 31
  %v8208 = vsub.s32 32, %v8207
  %v8209 = vshrl.u32 683565275, %v8208
  %v8210 = vshll.u32 683565275, %v8207
  %v8211 = vshrl.u32 2475754826, %v8208
  %v8212 = vor.u32 %v8210, %v8211
  %v8213 = vshll.u32 2475754826, %v8207
  %v8214 = vshrl.u32 2131351028, %v8208
  %v8215 = vor.u32 %v8213, %v8214
  %v8216 = vshll.u32 2131351028, %v8207
  %v8217 = vshrl.u32 2102212464, %v8208
  %v8218 = vor.u32 %v8216, %v8217
  %v8219 = vshll.u32 2102212464, %v8207
  %v8220 = vshrl.u32 920167782, %v8208
  %v8221 = vor.u32 %v8219, %v8220
  %v8222 = vshll.u32 920167782, %v8207
  %v8223 = vshrl.u32 1326507024, %v8208
  %v8224 = vor.u32 %v8222, %v8223
  %vm8225 = vcmp.lt.s32.totalorder %v8206, 1
  %vm8226 = vcmp.lt.s32.totalorder %v8206, 2
  %vm8227 = vcmp.lt.s32.totalorder %v8206, 3
  %vm8228 = vcmp.lt.s32.totalorder %v8206, 4
  %v8229 = vsel %vm8225, %v8209, %v8212
  %v8230 = vsel %vm8228, %v8218, 2102212464
  %v8231 = vsel %vm8227, %v8215, %v8230
  %v8232 = vsel %vm8226, %v8229, %v8231
  %v8233 = vsel %vm8225, %v8212, %v8215
  %v8234 = vsel %vm8228, %v8221, 920167782
  %v8235 = vsel %vm8227, %v8218, %v8234
  %v8236 = vsel %vm8226, %v8233, %v8235
  %v8237 = vsel %vm8225, %v8215, %v8218
  %v8238 = vsel %vm8228, %v8224, 1326507024
  %v8239 = vsel %vm8227, %v8221, %v8238
  %v8240 = vsel %vm8226, %v8237, %v8239
  %v8241 = vshll.u32 %v8201, 8
  %v8242 = vmul.u32.u64.compose %v8241, %v8240
  %v8243 = vextract.low.u32 %v8242
  %v8244 = vextract.high.u32 %v8242
  %v8245 = vmul.u32.u64.compose %v8241, %v8236
  %v8246 = vextract.low.u32 %v8245
  %v8247 = vextract.high.u32 %v8245
  %v8248 = vmul.u32 %v8241, %v8232
  %v8249 = vadd.s32 %v8244, %v8246
  %vm8250 = vc.u32 %v8244, %v8246
  %v8251 = vadd.s32 %v8247, 1
  %v8252 = vsel %vm8250, %v8251, %v8247
  %v8253 = vadd.s32 %v8248, %v8252
  %v8254 = vadd.s32 %v8253, 536870912
  %v8255 = vshrl.u32 %v8254, 30
  %v8256 = vshll.u32 %v8255, 30
  %v8257 = vsub.s32 %v8253, %v8256
  %vm8258 = vcmp.lt.s32.totalorder %v8257, 0
  %v8259 = vsub.s32 0, %v8257
  %v8260 = vsel %vm8258, %v8259, %v8257
  %v8261 = vclz %v8260
  %v8262 = vsub.s32 %v8261, 2
  %vm8263 = vcmp.gt.s32.totalorder 0, %v8262
  %v8264 = vsel %vm8263, 0, %v8262
  %v8265 = vsub.s32 32, %v8264
  %v8266 = vshll.u32 %v8257, %v8264
  %v8267 = vshrl.u32 %v8249, %v8265
  %v8268 = vor.u32 %v8266, %v8267
  %v8269 = vsub.s32 4294967266, %v8264
  %v8270 = vadd.s32 %v8269, 127
  %v8271 = vshll.u32 %v8270, 23
  %v8272 = vor.u32 4788187, %v8271
  %v8273 = vand.u32 2147483647, %v8272
  %v8275 = vcvt.s32.f32 %v8268
  %v8276 = vmul.f32 %v8275, %v8273
  %v8277 = vxor.u32 %v8276, 2147483648
  %v8278 = vsel %vm8195, %v8277, %v8276
  %v8279 = vsub.s32 4, %v8255
  %v8280 = vsel %vm8195, %v8279, %v8255
  %v8281 = vsel %vm8194, %v1758, %v8278
  %v8282 = vsel %vm8194, 0, %v8280
  %v8283 = vcosq.f32.pop %v8281
  %v8284 = vsinq.f32.pop %v8281
  %vm8285 = vweird.f32 %v1758
  %v8286 = vand.u32 %v8282, 3
  %vm8287 = vcmp.lt.s32.totalorder %v8286, 2
  %vm8288 = vcmp.eq.s32.totalorder %v8286, 0
  %v8289 = vxor.u32 %v8284, 2147483648
  %v8290 = vsel %vm8288, %v8283, %v8289
  %vm8291 = vcmp.eq.s32.totalorder %v8286, 2
  %v8292 = vxor.u32 %v8283, 2147483648
  %v8293 = vsel %vm8291, %v8292, %v8284
  %v8294 = vsel %vm8287, %v8290, %v8293
  %v8295 = vsel %vm8285, nan, %v8294
  %v8296 = vand.u32 2147483647, %v1759
  %vm8297 = vcmp.le.f32.partialorder %v8296, 0.7853982
  %vm8298 = vcmp.lt.s32.totalorder %v1759, 0
  %v8299 = vand.u32 %v1759, 2139095040
  %v8300 = vshrl.u32 %v8299, 23
  %v8301 = vsub.s32 %v8300, 127
  %v8302 = vand.u32 2147483647, %v1759
  %v8303 = vand.u32 %v8302, 8388607
  %v8304 = vor.u32 %v8303, 8388608
  %v8305 = vsub.s32 0, %v8304
  %v8306 = vadd.s32 %v8301, 1
  %vm8307 = vcmp.gt.s32.totalorder %v8306, 0
  %v8308 = vsel %vm8307, %v8306, 0
  %v8309 = vshrl.u32 %v8308, 5
  %v8310 = vand.u32 %v8308, 31
  %v8311 = vsub.s32 32, %v8310
  %v8312 = vshrl.u32 683565275, %v8311
  %v8313 = vshll.u32 683565275, %v8310
  %v8314 = vshrl.u32 2475754826, %v8311
  %v8315 = vor.u32 %v8313, %v8314
  %v8316 = vshll.u32 2475754826, %v8310
  %v8317 = vshrl.u32 2131351028, %v8311
  %v8318 = vor.u32 %v8316, %v8317
  %v8319 = vshll.u32 2131351028, %v8310
  %v8320 = vshrl.u32 2102212464, %v8311
  %v8321 = vor.u32 %v8319, %v8320
  %v8322 = vshll.u32 2102212464, %v8310
  %v8323 = vshrl.u32 920167782, %v8311
  %v8324 = vor.u32 %v8322, %v8323
  %v8325 = vshll.u32 920167782, %v8310
  %v8326 = vshrl.u32 1326507024, %v8311
  %v8327 = vor.u32 %v8325, %v8326
  %vm8328 = vcmp.lt.s32.totalorder %v8309, 1
  %vm8329 = vcmp.lt.s32.totalorder %v8309, 2
  %vm8330 = vcmp.lt.s32.totalorder %v8309, 3
  %vm8331 = vcmp.lt.s32.totalorder %v8309, 4
  %v8332 = vsel %vm8328, %v8312, %v8315
  %v8333 = vsel %vm8331, %v8321, 2102212464
  %v8334 = vsel %vm8330, %v8318, %v8333
  %v8335 = vsel %vm8329, %v8332, %v8334
  %v8336 = vsel %vm8328, %v8315, %v8318
  %v8337 = vsel %vm8331, %v8324, 920167782
  %v8338 = vsel %vm8330, %v8321, %v8337
  %v8339 = vsel %vm8329, %v8336, %v8338
  %v8340 = vsel %vm8328, %v8318, %v8321
  %v8341 = vsel %vm8331, %v8327, 1326507024
  %v8342 = vsel %vm8330, %v8324, %v8341
  %v8343 = vsel %vm8329, %v8340, %v8342
  %v8344 = vshll.u32 %v8304, 8
  %v8345 = vmul.u32.u64.compose %v8344, %v8343
  %v8346 = vextract.low.u32 %v8345
  %v8347 = vextract.high.u32 %v8345
  %v8348 = vmul.u32.u64.compose %v8344, %v8339
  %v8349 = vextract.low.u32 %v8348
  %v8350 = vextract.high.u32 %v8348
  %v8351 = vmul.u32 %v8344, %v8335
  %v8352 = vadd.s32 %v8347, %v8349
  %vm8353 = vc.u32 %v8347, %v8349
  %v8354 = vadd.s32 %v8350, 1
  %v8355 = vsel %vm8353, %v8354, %v8350
  %v8356 = vadd.s32 %v8351, %v8355
  %v8357 = vadd.s32 %v8356, 536870912
  %v8358 = vshrl.u32 %v8357, 30
  %v8359 = vshll.u32 %v8358, 30
  %v8360 = vsub.s32 %v8356, %v8359
  %vm8361 = vcmp.lt.s32.totalorder %v8360, 0
  %v8362 = vsub.s32 0, %v8360
  %v8363 = vsel %vm8361, %v8362, %v8360
  %v8364 = vclz %v8363
  %v8365 = vsub.s32 %v8364, 2
  %vm8366 = vcmp.gt.s32.totalorder 0, %v8365
  %v8367 = vsel %vm8366, 0, %v8365
  %v8368 = vsub.s32 32, %v8367
  %v8369 = vshll.u32 %v8360, %v8367
  %v8370 = vshrl.u32 %v8352, %v8368
  %v8371 = vor.u32 %v8369, %v8370
  %v8372 = vsub.s32 4294967266, %v8367
  %v8373 = vadd.s32 %v8372, 127
  %v8374 = vshll.u32 %v8373, 23
  %v8375 = vor.u32 4788187, %v8374
  %v8376 = vand.u32 2147483647, %v8375
  %v8378 = vcvt.s32.f32 %v8371
  %v8379 = vmul.f32 %v8378, %v8376
  %v8380 = vxor.u32 %v8379, 2147483648
  %v8381 = vsel %vm8298, %v8380, %v8379
  %v8382 = vsub.s32 4, %v8358
  %v8383 = vsel %vm8298, %v8382, %v8358
  %v8384 = vsel %vm8297, %v1759, %v8381
  %v8385 = vsel %vm8297, 0, %v8383
  %v8386 = vcosq.f32.pop %v8384
  %v8387 = vsinq.f32.pop %v8384
  %vm8388 = vweird.f32 %v1759
  %v8389 = vand.u32 %v8385, 3
  %vm8390 = vcmp.lt.s32.totalorder %v8389, 2
  %vm8391 = vcmp.eq.s32.totalorder %v8389, 0
  %v8392 = vxor.u32 %v8387, 2147483648
  %v8393 = vsel %vm8391, %v8386, %v8392
  %vm8394 = vcmp.eq.s32.totalorder %v8389, 2
  %v8395 = vxor.u32 %v8386, 2147483648
  %v8396 = vsel %vm8394, %v8395, %v8387
  %v8397 = vsel %vm8390, %v8393, %v8396
  %v8398 = vsel %vm8388, nan, %v8397
  %v8399 = vsel %vm1774, 1, 0
  %vm8400 = vcmp.eq.s32.totalorder %v8399, 1
  %v8401 = vsel %vm8400, %v1878, %v5205
  %v8402 = vsel %vm8400, %v1982, %v5308
  %v8403 = vsel %vm8400, %v2086, %v5411
  %v8404 = vsel %vm8400, %v2190, %v5514
  %v8405 = vsel %vm8400, %v2294, %v5617
  %v8406 = vsel %vm8400, %v2398, %v5720
  %v8407 = vsel %vm8400, %v2502, %v5823
  %v8408 = vsel %vm8400, %v2606, %v5926
  %v8409 = vsel %vm8400, %v2710, %v6029
  %v8410 = vsel %vm8400, %v2814, %v6132
  %v8411 = vsel %vm8400, %v2918, %v6235
  %v8412 = vsel %vm8400, %v3022, %v6338
  %v8413 = vsel %vm8400, %v3126, %v6441
  %v8414 = vsel %vm8400, %v3230, %v6544
  %v8415 = vsel %vm8400, %v3334, %v6647
  %v8416 = vsel %vm8400, %v3438, %v6750
  %v8417 = vsel %vm8400, %v3542, %v6853
  %v8418 = vsel %vm8400, %v3646, %v6956
  %v8419 = vsel %vm8400, %v3750, %v7059
  %v8420 = vsel %vm8400, %v3854, %v7162
  %v8421 = vsel %vm8400, %v3958, %v7265
  %v8422 = vsel %vm8400, %v4062, %v7368
  %v8423 = vsel %vm8400, %v4166, %v7471
  %v8424 = vsel %vm8400, %v4270, %v7574
  %v8425 = vsel %vm8400, %v4374, %v7677
  %v8426 = vsel %vm8400, %v4478, %v7780
  %v8427 = vsel %vm8400, %v4582, %v7883
  %v8428 = vsel %vm8400, %v4686, %v7986
  %v8429 = vsel %vm8400, %v4790, %v8089
  %v8430 = vsel %vm8400, %v4894, %v8192
  %v8431 = vsel %vm8400, %v4998, %v8295
  %v8432 = vsel %vm8400, %v5102, %v8398
  %8465 = vrot.lane.b32.xlu0 %v8401, 3
  %v8466 = vpop.permute.xlu0 %8465
  %8467 = vrot.lane.b32.xlu0 %v8402, 3
  %v8468 = vpop.permute.xlu0 %8467
  %8469 = vrot.lane.b32.xlu0 %v8403, 3
  %v8470 = vpop.permute.xlu0 %8469
  %8471 = vrot.lane.b32.xlu0 %v8404, 3
  %v8472 = vpop.permute.xlu0 %8471
  %8473 = vrot.lane.b32.xlu0 %v8405, 3
  %v8474 = vpop.permute.xlu0 %8473
  %8475 = vrot.lane.b32.xlu0 %v8406, 3
  %v8476 = vpop.permute.xlu0 %8475
  %8477 = vrot.lane.b32.xlu0 %v8407, 3
  %v8478 = vpop.permute.xlu0 %8477
  %8479 = vrot.lane.b32.xlu0 %v8408, 3
  %v8480 = vpop.permute.xlu0 %8479
  %8481 = vrot.lane.b32.xlu0 %v8409, 3
  %v8482 = vpop.permute.xlu0 %8481
  %8483 = vrot.lane.b32.xlu0 %v8410, 3
  %v8484 = vpop.permute.xlu0 %8483
  %8485 = vrot.lane.b32.xlu0 %v8411, 3
  %v8486 = vpop.permute.xlu0 %8485
  %8487 = vrot.lane.b32.xlu0 %v8412, 3
  %v8488 = vpop.permute.xlu0 %8487
  %8489 = vrot.lane.b32.xlu0 %v8413, 3
  %v8490 = vpop.permute.xlu0 %8489
  %8491 = vrot.lane.b32.xlu0 %v8414, 3
  %v8492 = vpop.permute.xlu0 %8491
  %8493 = vrot.lane.b32.xlu0 %v8415, 3
  %v8494 = vpop.permute.xlu0 %8493
  %8495 = vrot.lane.b32.xlu0 %v8416, 3
  %v8496 = vpop.permute.xlu0 %8495
  %8497 = vrot.lane.b32.xlu0 %v8417, 3
  %v8498 = vpop.permute.xlu0 %8497
  %8499 = vrot.lane.b32.xlu0 %v8418, 3
  %v8500 = vpop.permute.xlu0 %8499
  %8501 = vrot.lane.b32.xlu0 %v8419, 3
  %v8502 = vpop.permute.xlu0 %8501
  %8503 = vrot.lane.b32.xlu0 %v8420, 3
  %v8504 = vpop.permute.xlu0 %8503
  %8505 = vrot.lane.b32.xlu0 %v8421, 3
  %v8506 = vpop.permute.xlu0 %8505
  %8507 = vrot.lane.b32.xlu0 %v8422, 3
  %v8508 = vpop.permute.xlu0 %8507
  %8509 = vrot.lane.b32.xlu0 %v8423, 3
  %v8510 = vpop.permute.xlu0 %8509
  %8511 = vrot.lane.b32.xlu0 %v8424, 3
  %v8512 = vpop.permute.xlu0 %8511
  %8513 = vrot.lane.b32.xlu0 %v8425, 3
  %v8514 = vpop.permute.xlu0 %8513
  %8515 = vrot.lane.b32.xlu0 %v8426, 3
  %v8516 = vpop.permute.xlu0 %8515
  %8517 = vrot.lane.b32.xlu0 %v8427, 3
  %v8518 = vpop.permute.xlu0 %8517
  %8519 = vrot.lane.b32.xlu0 %v8428, 3
  %v8520 = vpop.permute.xlu0 %8519
  %8521 = vrot.lane.b32.xlu0 %v8429, 3
  %v8522 = vpop.permute.xlu0 %8521
  %8523 = vrot.lane.b32.xlu0 %v8430, 3
  %v8524 = vpop.permute.xlu0 %8523
  %8525 = vrot.lane.b32.xlu0 %v8431, 3
  %v8526 = vpop.permute.xlu0 %8525
  %8527 = vrot.lane.b32.xlu0 %v8432, 3
  %v8528 = vpop.permute.xlu0 %8527
  %v8561 = vsel %vm430, %v11, %v8466
  %v8562 = vsel %vm430, %v12, %v8468
  %v8563 = vsel %vm430, %v13, %v8470
  %v8564 = vsel %vm430, %v14, %v8472
  %v8565 = vsel %vm430, %v15, %v8474
  %v8566 = vsel %vm430, %v16, %v8476
  %v8567 = vsel %vm430, %v17, %v8478
  %v8568 = vsel %vm430, %v18, %v8480
  %v8569 = vsel %vm430, %v19, %v8482
  %v8570 = vsel %vm430, %v20, %v8484
  %v8571 = vsel %vm430, %v21, %v8486
  %v8572 = vsel %vm430, %v22, %v8488
  %v8573 = vsel %vm430, %v23, %v8490
  %v8574 = vsel %vm430, %v24, %v8492
  %v8575 = vsel %vm430, %v25, %v8494
  %v8576 = vsel %vm430, %v26, %v8496
  %v8577 = vsel %vm430, %v27, %v8498
  %v8578 = vsel %vm430, %v28, %v8500
  %v8579 = vsel %vm430, %v29, %v8502
  %v8580 = vsel %vm430, %v30, %v8504
  %v8581 = vsel %vm430, %v31, %v8506
  %v8582 = vsel %vm430, %v32, %v8508
  %v8583 = vsel %vm430, %v33, %v8510
  %v8584 = vsel %vm430, %v34, %v8512
  %v8585 = vsel %vm430, %v35, %v8514
  %v8586 = vsel %vm430, %v36, %v8516
  %v8587 = vsel %vm430, %v37, %v8518
  %v8588 = vsel %vm430, %v38, %v8520
  %v8589 = vsel %vm430, %v39, %v8522
  %v8590 = vsel %vm430, %v40, %v8524
  %v8591 = vsel %vm430, %v41, %v8526
  %v8592 = vsel %vm430, %v42, %v8528
  %vm8593 = vcmask 515072
  %8594 = vst.msk [vmem:[%s2] sm:$0xff] %vm8593, %v8561
  %8595 = vst.msk [vmem:[%s2 + $0x8] sm:$0xff] %vm8593, %v8562
  %8596 = vst.msk [vmem:[%s2 + $0x10] sm:$0xff] %vm8593, %v8563
  %8597 = vst.msk [vmem:[%s2 + $0x18] sm:$0xff] %vm8593, %v8564
  %8598 = vst.msk [vmem:[%s2 + $0x20] sm:$0xff] %vm8593, %v8565
  %8599 = vst.msk [vmem:[%s2 + $0x28] sm:$0xff] %vm8593, %v8566
  %8600 = vst.msk [vmem:[%s2 + $0x30] sm:$0xff] %vm8593, %v8567
  %8601 = vst.msk [vmem:[%s2 + $0x38] sm:$0xff] %vm8593, %v8568
  %8602 = vst.msk [vmem:[%s2 + $0x40] sm:$0xff] %vm8593, %v8569
  %8603 = vst.msk [vmem:[%s2 + $0x48] sm:$0xff] %vm8593, %v8570
  %8604 = vst.msk [vmem:[%s2 + $0x50] sm:$0xff] %vm8593, %v8571
  %8605 = vst.msk [vmem:[%s2 + $0x58] sm:$0xff] %vm8593, %v8572
  %8606 = vst.msk [vmem:[%s2 + $0x60] sm:$0xff] %vm8593, %v8573
  %8607 = vst.msk [vmem:[%s2 + $0x68] sm:$0xff] %vm8593, %v8574
  %8608 = vst.msk [vmem:[%s2 + $0x70] sm:$0xff] %vm8593, %v8575
  %8609 = vst.msk [vmem:[%s2 + $0x78] sm:$0xff] %vm8593, %v8576
  %8610 = vst.msk [vmem:[%s2 + $0x80] sm:$0xff] %vm8593, %v8577
  %8611 = vst.msk [vmem:[%s2 + $0x88] sm:$0xff] %vm8593, %v8578
  %8612 = vst.msk [vmem:[%s2 + $0x90] sm:$0xff] %vm8593, %v8579
  %8613 = vst.msk [vmem:[%s2 + $0x98] sm:$0xff] %vm8593, %v8580
  %8614 = vst.msk [vmem:[%s2 + $0xa0] sm:$0xff] %vm8593, %v8581
  %8615 = vst.msk [vmem:[%s2 + $0xa8] sm:$0xff] %vm8593, %v8582
  %8616 = vst.msk [vmem:[%s2 + $0xb0] sm:$0xff] %vm8593, %v8583
  %8617 = vst.msk [vmem:[%s2 + $0xb8] sm:$0xff] %vm8593, %v8584
  %8618 = vst.msk [vmem:[%s2 + $0xc0] sm:$0xff] %vm8593, %v8585
  %8619 = vst.msk [vmem:[%s2 + $0xc8] sm:$0xff] %vm8593, %v8586
  %8620 = vst.msk [vmem:[%s2 + $0xd0] sm:$0xff] %vm8593, %v8587
  %8621 = vst.msk [vmem:[%s2 + $0xd8] sm:$0xff] %vm8593, %v8588
  %8622 = vst.msk [vmem:[%s2 + $0xe0] sm:$0xff] %vm8593, %v8589
  %8623 = vst.msk [vmem:[%s2 + $0xe8] sm:$0xff] %vm8593, %v8590
  %8624 = vst.msk [vmem:[%s2 + $0xf0] sm:$0xff] %vm8593, %v8591
  %8625 = vst.msk [vmem:[%s2 + $0xf8] sm:$0xff] %vm8593, %v8592
  // Predicated region
  $region10: #{tpu_custom_call.1} parent=0 // pred_check
    _
  $region11: #{tpu_custom_call.1} parent=0 // pred_check_branch
    %8627 = sbr.rel (0) target = $region13
  $region12: #{tpu_custom_call.1} parent=0 // pred_region
    _
  $region13: #{tpu_custom_call.1} parent=0 // pred_fallthru
    _
  // Predicated region
  $region14: #{tpu_custom_call.1} parent=0 // pred_check
    _
  $region15: #{tpu_custom_call.1} parent=0 // pred_check_branch
    %8629 = sbr.rel (0) target = $region17
  $region16: #{tpu_custom_call.1} parent=0 // pred_region
    _
  $region17: #{tpu_custom_call.1} parent=0 // pred_fallthru
    _

</llo_original>
